<compile_context>
chip_gen: v6e
topology: v6e:2x2x1
jax: 0.10.0
libtpu: 0.0.40
codegen_flags: <defaults>
</compile_context>

<pallas_src>
import functools

import jax
import jax.numpy as jnp
import numpy as np
from jax.experimental import pallas as pl
from jax.experimental.pallas import tpu as pltpu

EPS = 1e-5
ACT_DTYPE = jnp.bfloat16

candidateNameList = ["skip_connect", "avg_pool_3x3", "relu_conv_bn_3x3"]


# ----------------------------------------------------------------------------
# Pallas kernels
# ----------------------------------------------------------------------------
def _matmul_bn_kernel(a_ref, w_ref, s_ref, b_ref, o_ref, *, apply_relu):
    """o = ((relu?(a) @ w) * s + b).astype(out); a,w bf16, f32 acc/epilogue."""
    a = a_ref[...]
    if apply_relu:
        # ReLU in f32 (v5e VPU has no bf16 path); MXU consumes bf16.
        a = jnp.maximum(a.astype(jnp.float32), 0.0).astype(jnp.bfloat16)
    y = jnp.dot(a, w_ref[...], preferred_element_type=jnp.float32)
    o_ref[...] = (y * s_ref[...] + b_ref[...]).astype(o_ref.dtype)


def _pool3x3_s1_kernel(x_ref, mul_ref, add_ref, o_ref, *, Ho, Wo, C):
    """3x3/stride-1 avg-pool + BN on a lane-dense padded slab.

    x:[N, Hp, Wp*C] bf16 (read once); 9 taps are static in-kernel slices.
    mul:[1, Ho, Wo*C] f32 (scale / count), add:[1, 1, Wo*C] f32, o bf16.
    """
    x = x_ref[...].astype(jnp.float32)
    acc = None
    for i in range(3):
        for j in range(3):
            t = x[:, i:i + Ho, j * C:j * C + Wo * C]
            acc = t if acc is None else acc + t
    o_ref[...] = (acc * mul_ref[...] + add_ref[...]).astype(o_ref.dtype)


def _pool3x3_taps_kernel(p_ref, mul_ref, add_ref, o_ref):
    """Strided (stride-2) pool path: p:[9, N, Ho, Wo*C] bf16 pre-gathered."""
    acc = p_ref[0].astype(jnp.float32)
    for k in range(1, 9):
        acc = acc + p_ref[k].astype(jnp.float32)
    o_ref[...] = (acc * mul_ref[...] + add_ref[...]).astype(o_ref.dtype)


def _gap_fc_kernel(x_ref, w_ref, b_ref, o_ref, *, inv_hw):
    """Fused AdaptiveAvgPool2d(1) + Linear; in-kernel HW reduction (no pool
    matrix).  x:[N, HW, C] bf16, w:[C, classes] bf16, b:[1, classes] f32."""
    x = x_ref[...].astype(jnp.float32)
    pooled = jnp.sum(x, axis=1) * inv_hw                       # [N, C] f32
    o_ref[...] = jnp.dot(pooled.astype(jnp.bfloat16), w_ref[...],
                         preferred_element_type=jnp.float32) + b_ref[...]


# ----------------------------------------------------------------------------
# Pallas wrappers
# ----------------------------------------------------------------------------
def fused_matmul(a, w, scale, shift, apply_relu=False, out_dtype=ACT_DTYPE):
    """((relu?(a) @ w) * scale + shift) -> bf16 ; a:[M,K], w:[K,N] bf16."""
    a = a.astype(jnp.bfloat16)
    w = w.astype(jnp.bfloat16)
    M, K = a.shape
    Nc = w.shape[1]
    s = scale.reshape(1, Nc).astype(jnp.float32)
    b = shift.reshape(1, Nc).astype(jnp.float32)
    kernel = functools.partial(_matmul_bn_kernel, apply_relu=apply_relu)

    # Row tiling: single full block for tiny M; 2-way split for medium M
    # (uses both v7x TensorCores, one extra pipeline step on v5e/v6e);
    # 1024-row tiles only for very large M.
    if M >= 4096:
        tm = 1024
    elif M >= 256 and M % 32 == 0:
        tm = M // 2
    else:
        tm = M
    Mp = -(-M // tm) * tm
    a_p = a if Mp == M else jnp.pad(a, ((0, Mp - M), (0, 0)))

    out = pl.pallas_call(
        kernel,
        out_shape=jax.ShapeDtypeStruct((Mp, Nc), out_dtype),
        grid=(Mp // tm,),
        in_specs=[
            pl.BlockSpec((tm, K), lambda i: (i, 0)),
            pl.BlockSpec((K, Nc), lambda i: (0, 0)),
            pl.BlockSpec((1, Nc), lambda i: (0, 0)),
            pl.BlockSpec((1, Nc), lambda i: (0, 0)),
        ],
        out_specs=pl.BlockSpec((tm, Nc), lambda i: (i, 0)),
        compiler_params=pltpu.CompilerParams(
            dimension_semantics=("parallel",)),
    )(a_p, w, s, b)
    # NOTE: zero-padded rows hold shift-only garbage; sliced off here.
    return out if Mp == M else out[:M]


def gap_fc(x, w_mat, bias):
    """AdaptiveAvgPool2d(1) + Linear, fused.  x: NHWC bf16."""
    N_, H, W, C = x.shape
    HW = H * W
    xr = x.astype(jnp.bfloat16).reshape(N_, HW, C)
    ncls = w_mat.shape[1]
    b = bias.reshape(1, ncls).astype(jnp.float32)
    return pl.pallas_call(
        functools.partial(_gap_fc_kernel, inv_hw=1.0 / HW),
        out_shape=jax.ShapeDtypeStruct((N_, ncls), jnp.float32),
        grid=(1,),
        in_specs=[
            pl.BlockSpec((N_, HW, C), lambda i: (0, 0, 0)),
            pl.BlockSpec((C, ncls), lambda i: (0, 0)),
            pl.BlockSpec((1, ncls), lambda i: (0, 0)),
        ],
        out_specs=pl.BlockSpec((N_, ncls), lambda i: (0, 0)),
    )(xr, w_mat, b)


# ----------------------------------------------------------------------------
# Glue: taps, conv / pool wrappers (reshapes + tiny parameter prep only)
# ----------------------------------------------------------------------------
def extract_taps(x, kh, kw, stride, pad):
    """x: [N,H,W,C] -> list of kh*kw shifted windows, each [N,Ho,Wo,C]."""
    N_, H, W, C = x.shape
    if pad:
        x = jnp.pad(x, ((0, 0), (pad, pad), (pad, pad), (0, 0)))
    Hp, Wp = H + 2 * pad, W + 2 * pad
    Ho = (Hp - kh) // stride + 1
    Wo = (Wp - kw) // stride + 1
    taps = []
    for i in range(kh):
        for j in range(kw):
            taps.append(x[:, i:i + stride * (Ho - 1) + 1:stride,
                          j:j + stride * (Wo - 1) + 1:stride, :])
    return taps, Ho, Wo


def conv2d_bn(x, p, relu_before):
    """(optional ReLU) -> Conv2d(no bias) -> BN(eval).  x: NHWC bf16."""
    N_, H, W, C = x.shape
    w_mat = p["w_mat"]
    k, stride, pad = p["k"], p["stride"], p["pad"]
    Cout = w_mat.shape[1]
    Kw = w_mat.shape[0]
    if k == 1:
        xs = x if stride == 1 else x[:, ::stride, ::stride, :]
        Ho, Wo = xs.shape[1], xs.shape[2]
        a = xs.reshape(N_ * Ho * Wo, C)
        if C < Kw:
            a = jnp.pad(a, ((0, 0), (0, Kw - C)))
    else:
        taps, Ho, Wo = extract_taps(x, k, k, stride, pad)
        M = N_ * Ho * Wo
        cols = [t.reshape(M, C) for t in taps]          # bf16 im2col columns
        if k * k * C < Kw:                              # fold K pad into concat
            cols.append(jnp.zeros((M, Kw - k * k * C), x.dtype))
        a = jnp.concatenate(cols, axis=1)
    y = fused_matmul(a, w_mat, p["scale"], p["shift"], apply_relu=relu_before)
    return y.reshape(N_, Ho, Wo, Cout)


def avg_pool_3x3_bn(x, scale, shift, stride):
    """AvgPool2d(3, stride, padding=1, count_include_pad=False) -> BN(eval)."""
    N_, H, W, C = x.shape
    Ho = (H + 2 - 3) // stride + 1
    Wo = (W + 2 - 3) // stride + 1
    L = Wo * C
    # count_include_pad=False divisor: static -> numpy constant at trace time.
    ones = np.pad(np.ones((H, W), np.float32), ((1, 1), (1, 1)))
    counts = np.zeros((Ho, Wo), np.float32)
    for i in range(3):
        for j in range(3):
            counts += ones[i:i + stride * (Ho - 1) + 1:stride,
                           j:j + stride * (Wo - 1) + 1:stride]
    mul = (scale.reshape(1, 1, 1, C).astype(jnp.float32)
           / jnp.asarray(counts).reshape(1, Ho, Wo, 1)).reshape(1, Ho, L)
    add = jnp.tile(shift.reshape(1, 1, C).astype(jnp.float32),
                   (1, Wo, 1)).reshape(1, 1, L)
    x = x.astype(jnp.bfloat16)

    if stride == 1:
        xp = jnp.pad(x, ((0, 0), (1, 1), (1, 1), (0, 0)))
        xs = xp.reshape(N_, H + 2, (W + 2) * C)        # lane-dense padded slab
        out = pl.pallas_call(
            functools.partial(_pool3x3_s1_kernel, Ho=Ho, Wo=Wo, C=C),
            out_shape=jax.ShapeDtypeStruct((N_, Ho, L), x.dtype),
            grid=(1,),
            in_specs=[
                pl.BlockSpec((N_, H + 2, (W + 2) * C), lambda i: (0, 0, 0)),
                pl.BlockSpec((1, Ho, L), lambda i: (0, 0, 0)),
                pl.BlockSpec((1, 1, L), lambda i: (0, 0, 0)),
            ],
            out_specs=pl.BlockSpec((N_, Ho, L), lambda i: (0, 0, 0)),
        )(xs, mul, add)
    else:
        taps, _, _ = extract_taps(x, 3, 3, stride, 1)
        p = jnp.stack([t.reshape(N_, Ho, L) for t in taps], axis=0)
        out = pl.pallas_call(
            _pool3x3_taps_kernel,
            out_shape=jax.ShapeDtypeStruct((N_, Ho, L), x.dtype),
            grid=(1,),
            in_specs=[
                pl.BlockSpec((9, N_, Ho, L), lambda i: (0, 0, 0, 0)),
                pl.BlockSpec((1, Ho, L), lambda i: (0, 0, 0)),
                pl.BlockSpec((1, 1, L), lambda i: (0, 0, 0)),
            ],
            out_specs=pl.BlockSpec((N_, Ho, L), lambda i: (0, 0, 0)),
        )(p, mul, add)
    return out.reshape(N_, Ho, Wo, C)


# ----------------------------------------------------------------------------
# Deterministic parameter init (PyTorch eval-mode BN defaults)
# ----------------------------------------------------------------------------
class KeyGen:
    def __init__(self, seed=0):
        self.key = jax.random.PRNGKey(seed)

    def next(self):
        self.key, sub = jax.random.split(self.key)
        return sub


def init_bn(C, affine=True):
    # Eval-mode defaults: running_mean=0, running_var=1, gamma=1, beta=0.
    return {"gamma": jnp.ones((C,), jnp.float32),
            "beta": jnp.zeros((C,), jnp.float32),
            "mean": jnp.zeros((C,), jnp.float32),
            "var": jnp.ones((C,), jnp.float32)}


def bn_scale_shift(bn):
    scale = bn["gamma"] / jnp.sqrt(bn["var"] + EPS)
    shift = bn["beta"] - bn["mean"] * scale
    return scale, shift


def make_conv(kg, Cin, Cout, k, stride, pad, bn_affine=True):
    w = jax.random.normal(kg.next(), (Cout, Cin, k, k), jnp.float32) * 0.1
    # [Cout,Cin,kh,kw] -> [kh*kw*Cin, Cout]; matches (tap, channel) im2col
    # column order; pad K to a multiple of 16 once at init; bf16 for the MXU.
    w_mat = w.transpose(2, 3, 1, 0).reshape(k * k * Cin, Cout)
    Kraw = k * k * Cin
    Kpad = -(-Kraw // 16) * 16
    if Kpad > Kraw:
        w_mat = jnp.pad(w_mat, ((0, Kpad - Kraw), (0, 0)))
    sc, sh = bn_scale_shift(init_bn(Cout, bn_affine))
    return {"w_mat": w_mat.astype(jnp.bfloat16), "scale": sc, "shift": sh,
            "k": k, "stride": stride, "pad": pad}


def init_fact_reduce(kg, Cin, Cout, affine):
    """FactorizedReduce fused into one matmul: block-diag [2*Cin, Cout]."""
    assert Cout % 2 == 0
    h = Cout // 2
    w1 = jax.random.normal(kg.next(), (h, Cin, 1, 1), jnp.float32) * 0.1
    w2 = jax.random.normal(kg.next(), (h, Cin, 1, 1), jnp.float32) * 0.1
    w1m = w1.reshape(h, Cin).T                       # [Cin, h]
    w2m = w2.reshape(h, Cin).T
    z = jnp.zeros((Cin, h), jnp.float32)
    w_mat = jnp.concatenate(
        [jnp.concatenate([w1m, z], axis=1),
         jnp.concatenate([z, w2m], axis=1)], axis=0)  # [2*Cin, Cout]
    sc, sh = bn_scale_shift(init_bn(Cout, affine))
    return {"w_mat": w_mat.astype(jnp.bfloat16), "scale": sc, "shift": sh}


def relu_conv_bn_forward(p, x):
    return conv2d_bn(x, p, relu_before=True)


def fact_reduce_forward(p, x):
    # relu(x) shared by both strided 1x1 convs; channel-concat + BN folded
    # into one block-diagonal matmul (single launch, full-width output).
    xe = x[:, ::2, ::2, :]
    xo = x[:, 1::2, 1::2, :]
    a4 = jnp.concatenate([xe, xo], axis=-1)            # [N, Ho, Wo, 2*Cin]
    N_, Ho, Wo, K2 = a4.shape
    a = a4.reshape(N_ * Ho * Wo, K2)
    Kw = p["w_mat"].shape[0]
    if K2 < Kw:
        a = jnp.pad(a, ((0, 0), (0, Kw - K2)))
    Cout = p["w_mat"].shape[1]
    y = fused_matmul(a, p["w_mat"], p["scale"], p["shift"], apply_relu=True)
    return y.reshape(N_, Ho, Wo, Cout)


def init_mixed_op(kg, C, stride):
    ops = []
    for name in candidateNameList:
        if name == "skip_connect":
            params = None if stride == 1 else init_fact_reduce(kg, C, C, affine=False)
        elif name == "avg_pool_3x3":
            sc, sh = bn_scale_shift(init_bn(C, affine=False))
            params = {"scale": sc, "shift": sh}   # pool followed by BN(affine=False)
        else:  # relu_conv_bn_3x3
            params = make_conv(kg, C, C, 3, stride, 1, bn_affine=False)
        ops.append({"name": name, "stride": stride, "params": params})
    return ops


def mixed_op_forward(op_list, active_idx, x):
    op = op_list[active_idx]
    name, stride, p = op["name"], op["stride"], op["params"]
    if name == "skip_connect":
        return x if stride == 1 else fact_reduce_forward(p, x)
    if name == "avg_pool_3x3":
        return avg_pool_3x3_bn(x, p["scale"], p["shift"], stride)
    return relu_conv_bn_forward(p, x)


def init_cell(kg, prev_prev_C, prev_C, cur_C, bCurReduction, bPrevReduction,
              cellSize=4, newStateLen=4):
    cell = {"cellSize": cellSize, "newStateLen": newStateLen}
    if bPrevReduction:
        cell["pre0"] = ("fr", init_fact_reduce(kg, prev_prev_C, cur_C, affine=False))
    else:
        cell["pre0"] = ("rcb", make_conv(kg, prev_prev_C, cur_C, 1, 1, 0, bn_affine=False))
    cell["pre1"] = ("rcb", make_conv(kg, prev_C, cur_C, 1, 1, 0, bn_affine=False))
    ops = []
    for i in range(cellSize):
        for j in range(2 + i):
            stride = 2 if (bCurReduction and j < 2) else 1
            ops.append(init_mixed_op(kg, cur_C, stride))
    cell["ops"] = ops
    # deterministic arch (equivalent of setCellArch with randomType=False)
    cell["op_arch"] = [k % len(candidateNameList) for k in range(len(ops))]
    cell["edge_arch"] = [[1, 1] + [0] * i for i in range(cellSize)]
    return cell


def preproc_forward(pre, x):
    kind, p = pre
    return fact_reduce_forward(p, x) if kind == "fr" else relu_conv_bn_forward(p, x)


def cell_forward(cell, s0, s1):
    s0 = preproc_forward(cell["pre0"], s0)
    s1 = preproc_forward(cell["pre1"], s1)
    states = [s0, s1]
    offset = 0
    for ci in range(cell["cellSize"]):
        tmp = []
        for oi, st in enumerate(states):
            idx = offset + oi
            tmp.append(mixed_op_forward(cell["ops"][idx], cell["op_arch"][idx], st))
        offset += len(states)
        sel = [k for k, e in enumerate(cell["edge_arch"][ci]) if e == 1]
        new_state = tmp[sel[0]]
        for k in sel[1:]:
            new_state = new_state + tmp[k]
        states.append(new_state)
    return jnp.concatenate(states[-cell["newStateLen"]:], axis=-1)


def init_genenet(kg, C=8, stemC=16, channelFactor=4, num_classes=10, layerNum=3,
                 cellSize=4):
    net = {"num_classes": num_classes}
    net["stem"] = make_conv(kg, 3, stemC, 3, 1, 1, bn_affine=True)
    cells = []
    prev_prev_C, prev_C, cur_C = stemC, stemC, C
    bPrevReduction = False
    for li in range(layerNum):
        if li in [layerNum // 3, 2 * layerNum // 3]:
            cur_C *= 2
            bCur = True
        else:
            bCur = False
        cells.append(init_cell(kg, prev_prev_C, prev_C, cur_C, bCur, bPrevReduction,
                               cellSize=cellSize))
        bPrevReduction = bCur
        prev_prev_C, prev_C = prev_C, channelFactor * cur_C
    net["cells"] = cells
    fc_w = jax.random.normal(kg.next(), (num_classes, prev_C), jnp.float32) * 0.1
    net["fc_w_mat"] = fc_w.T.astype(jnp.bfloat16)
    net["fc_b"] = jnp.zeros((num_classes,), jnp.float32)
    # TODO(synk): auxiliary head + drop_path are training-only branches; eval
    # forward (self.training == False) returns only `logits`, so they are not
    # computed here.
    return net


def genenet_forward(net, x_nchw):
    # NCHW -> NHWC once up front; activations stay bf16 NHWC between kernels.
    x = x_nchw.transpose(0, 2, 3, 1).astype(ACT_DTYPE)
    st = net["stem"]
    s0 = s1 = conv2d_bn(x, st, relu_before=False)
    for cell in net["cells"]:
        s0, s1 = s1, cell_forward(cell, s0, s1)
    return gap_fc(s1, net["fc_w_mat"], net["fc_b"])   # [N, num_classes] f32


if __name__ == "__main__":
    kg = KeyGen(0)
    num_classes = 10
    net = init_genenet(kg, C=8, stemC=16, channelFactor=4, num_classes=num_classes,
                       layerNum=3, cellSize=4)
    x = jax.random.normal(jax.random.PRNGKey(0), (2, 3, 16, 16), jnp.float32)

    fwd = jax.jit(lambda inp: genenet_forward(net, inp))
    logits = fwd(x)
    jax.block_until_ready(logits)
    assert logits.shape == (2, num_classes), logits.shape
    assert bool(jnp.all(jnp.isfinite(logits)))
    print("KERNEL_OK")
</pallas_src>

<mosaic_0001>
module attributes {stable_mosaic.version = 11 : i64} {
  func.func @_matmul_bn_kernel(%arg0: i32, %arg1: memref<256x32xbf16, #tpu.memory_space<vmem>>, %arg2: memref<32x16xbf16, #tpu.memory_space<vmem>>, %arg3: memref<1x16xf32, #tpu.memory_space<vmem>>, %arg4: memref<1x16xf32, #tpu.memory_space<vmem>>, %arg5: memref<256x16xbf16, #tpu.memory_space<vmem>>) attributes {dimension_semantics = [#tpu.dimension_semantics<parallel>], iteration_bounds = array<i64: 2>, scalar_prefetch = 0 : i64, scratch_operands = 0 : i64, tpu.core_type = #tpu.core_type<tc>, window_params = [{transform_indices = @transform_0, window_bounds = array<i64: 256, 32>}, {pipeline_mode = #tpu.pipeline_mode<synchronous>, transform_indices = @transform_1, window_bounds = array<i64: 32, 16>}, {pipeline_mode = #tpu.pipeline_mode<synchronous>, transform_indices = @transform_2, window_bounds = array<i64: 1, 16>}, {pipeline_mode = #tpu.pipeline_mode<synchronous>, transform_indices = @transform_3, window_bounds = array<i64: 1, 16>}, {transform_indices = @transform_4, window_bounds = array<i64: 256, 16>}]} {
    %c0 = arith.constant 0 : index
    %c0_0 = arith.constant 0 : index
    %0 = vector.load %arg1[%c0, %c0_0] : memref<256x32xbf16, #tpu.memory_space<vmem>>, vector<256x32xbf16>
    %c0_1 = arith.constant 0 : index
    %c0_2 = arith.constant 0 : index
    %1 = vector.load %arg2[%c0_1, %c0_2] : memref<32x16xbf16, #tpu.memory_space<vmem>>, vector<32x16xbf16>
    %cst = arith.constant dense<0.000000e+00> : vector<256x16xf32>
    %2 = tpu.matmul %0, %1, %cst {dimension_numbers = #tpu.dot_dimension_numbers<[1], [0], [0], [1], [0, 0, 1, 1], [], []>} : vector<256x32xbf16>, vector<32x16xbf16>, vector<256x16xf32> -> vector<256x16xf32>
    %c0_3 = arith.constant 0 : index
    %c0_4 = arith.constant 0 : index
    %3 = vector.load %arg3[%c0_3, %c0_4] : memref<1x16xf32, #tpu.memory_space<vmem>>, vector<1x16xf32>
    %4 = vector.broadcast %3 : vector<1x16xf32> to vector<256x16xf32>
    %5 = arith.mulf %2, %4 : vector<256x16xf32>
    %c0_5 = arith.constant 0 : index
    %c0_6 = arith.constant 0 : index
    %6 = vector.load %arg4[%c0_5, %c0_6] : memref<1x16xf32, #tpu.memory_space<vmem>>, vector<1x16xf32>
    %7 = vector.broadcast %6 : vector<1x16xf32> to vector<256x16xf32>
    %8 = arith.addf %5, %7 : vector<256x16xf32>
    %9 = arith.truncf %8 : vector<256x16xf32> to vector<256x16xbf16>
    %c0_7 = arith.constant 0 : index
    %c0_8 = arith.constant 0 : index
    %10 = vector.load %arg5[%c0_7, %c0_8] : memref<256x16xbf16, #tpu.memory_space<vmem>>, vector<256x16xbf16>
    tpu.vector_store %arg5[%c0_7, %c0_8], %9 {strides = array<i32>} : memref<256x16xbf16, #tpu.memory_space<vmem>>, vector<256x16xbf16>,
    return
  }
  func.func @transform_0(%arg0: i32) -> (i32, i32) {
    %c0_i32 = arith.constant 0 : i32
    %c0_i32_0 = arith.constant 0 : i32
    return %arg0, %c0_i32 : i32, i32
  }
  func.func @transform_1(%arg0: i32) -> (i32, i32) {
    %c0_i32 = arith.constant 0 : i32
    %c0_i32_0 = arith.constant 0 : i32
    %c0_i32_1 = arith.constant 0 : i32
    return %c0_i32, %c0_i32_0 : i32, i32
  }
  func.func @transform_2(%arg0: i32) -> (i32, i32) {
    %c0_i32 = arith.constant 0 : i32
    %c0_i32_0 = arith.constant 0 : i32
    %c0_i32_1 = arith.constant 0 : i32
    return %c0_i32, %c0_i32_0 : i32, i32
  }
  func.func @transform_3(%arg0: i32) -> (i32, i32) {
    %c0_i32 = arith.constant 0 : i32
    %c0_i32_0 = arith.constant 0 : i32
    %c0_i32_1 = arith.constant 0 : i32
    return %c0_i32, %c0_i32_0 : i32, i32
  }
  func.func @transform_4(%arg0: i32) -> (i32, i32) {
    %c0_i32 = arith.constant 0 : i32
    %c0_i32_0 = arith.constant 0 : i32
    return %arg0, %c0_i32 : i32, i32
  }
}

module attributes {stable_mosaic.version = 11 : i64} {
  func.func @_matmul_bn_kernel(%arg0: i32, %arg1: memref<256x16xbf16, #tpu.memory_space<vmem>>, %arg2: memref<16x8xbf16, #tpu.memory_space<vmem>>, %arg3: memref<1x8xf32, #tpu.memory_space<vmem>>, %arg4: memref<1x8xf32, #tpu.memory_space<vmem>>, %arg5: memref<256x8xbf16, #tpu.memory_space<vmem>>) attributes {dimension_semantics = [#tpu.dimension_semantics<parallel>], iteration_bounds = array<i64: 2>, scalar_prefetch = 0 : i64, scratch_operands = 0 : i64, tpu.core_type = #tpu.core_type<tc>, window_params = [{transform_indices = @transform_0, window_bounds = array<i64: 256, 16>}, {pipeline_mode = #tpu.pipeline_mode<synchronous>, transform_indices = @transform_1, window_bounds = array<i64: 16, 8>}, {pipeline_mode = #tpu.pipeline_mode<synchronous>, transform_indices = @transform_2, window_bounds = array<i64: 1, 8>}, {pipeline_mode = #tpu.pipeline_mode<synchronous>, transform_indices = @transform_3, window_bounds = array<i64: 1, 8>}, {transform_indices = @transform_4, window_bounds = array<i64: 256, 8>}]} {
    %c0 = arith.constant 0 : index
    %c0_0 = arith.constant 0 : index
    %0 = vector.load %arg1[%c0, %c0_0] : memref<256x16xbf16, #tpu.memory_space<vmem>>, vector<256x16xbf16>
    %1 = arith.extf %0 : vector<256x16xbf16> to vector<256x16xf32>
    %cst = arith.constant 0.000000e+00 : f32
    %2 = vector.broadcast %cst : f32 to vector<256x16xf32>
    %3 = arith.maximumf %1, %2 : vector<256x16xf32>
    %4 = arith.truncf %3 : vector<256x16xf32> to vector<256x16xbf16>
    %c0_1 = arith.constant 0 : index
    %c0_2 = arith.constant 0 : index
    %5 = vector.load %arg2[%c0_1, %c0_2] : memref<16x8xbf16, #tpu.memory_space<vmem>>, vector<16x8xbf16>
    %cst_3 = arith.constant dense<0.000000e+00> : vector<256x8xf32>
    %6 = tpu.matmul %4, %5, %cst_3 {dimension_numbers = #tpu.dot_dimension_numbers<[1], [0], [0], [1], [0, 0, 1, 1], [], []>} : vector<256x16xbf16>, vector<16x8xbf16>, vector<256x8xf32> -> vector<256x8xf32>
    %c0_4 = arith.constant 0 : index
    %c0_5 = arith.constant 0 : index
    %7 = vector.load %arg3[%c0_4, %c0_5] : memref<1x8xf32, #tpu.memory_space<vmem>>, vector<1x8xf32>
    %8 = vector.broadcast %7 : vector<1x8xf32> to vector<256x8xf32>
    %9 = arith.mulf %6, %8 : vector<256x8xf32>
    %c0_6 = arith.constant 0 : index
    %c0_7 = arith.constant 0 : index
    %10 = vector.load %arg4[%c0_6, %c0_7] : memref<1x8xf32, #tpu.memory_space<vmem>>, vector<1x8xf32>
    %11 = vector.broadcast %10 : vector<1x8xf32> to vector<256x8xf32>
    %12 = arith.addf %9, %11 : vector<256x8xf32>
    %13 = arith.truncf %12 : vector<256x8xf32> to vector<256x8xbf16>
    %c0_8 = arith.constant 0 : index
    %c0_9 = arith.constant 0 : index
    %14 = vector.load %arg5[%c0_8, %c0_9] : memref<256x8xbf16, #tpu.memory_space<vmem>>, vector<256x8xbf16>
    tpu.vector_store %arg5[%c0_8, %c0_9], %13 {strides = array<i32>} : memref<256x8xbf16, #tpu.memory_space<vmem>>, vector<256x8xbf16>,
    return
  }
  func.func @transform_0(%arg0: i32) -> (i32, i32) {
    %c0_i32 = arith.constant 0 : i32
    %c0_i32_0 = arith.constant 0 : i32
    return %arg0, %c0_i32 : i32, i32
  }
  func.func @transform_1(%arg0: i32) -> (i32, i32) {
    %c0_i32 = arith.constant 0 : i32
    %c0_i32_0 = arith.constant 0 : i32
    %c0_i32_1 = arith.constant 0 : i32
    return %c0_i32, %c0_i32_0 : i32, i32
  }
  func.func @transform_2(%arg0: i32) -> (i32, i32) {
    %c0_i32 = arith.constant 0 : i32
    %c0_i32_0 = arith.constant 0 : i32
    %c0_i32_1 = arith.constant 0 : i32
    return %c0_i32, %c0_i32_0 : i32, i32
  }
  func.func @transform_3(%arg0: i32) -> (i32, i32) {
    %c0_i32 = arith.constant 0 : i32
    %c0_i32_0 = arith.constant 0 : i32
    %c0_i32_1 = arith.constant 0 : i32
    return %c0_i32, %c0_i32_0 : i32, i32
  }
  func.func @transform_4(%arg0: i32) -> (i32, i32) {
    %c0_i32 = arith.constant 0 : i32
    %c0_i32_0 = arith.constant 0 : i32
    return %arg0, %c0_i32 : i32, i32
  }
}

module attributes {stable_mosaic.version = 11 : i64} {
  func.func @_matmul_bn_kernel(%arg0: i32, %arg1: memref<256x80xbf16, #tpu.memory_space<vmem>>, %arg2: memref<80x8xbf16, #tpu.memory_space<vmem>>, %arg3: memref<1x8xf32, #tpu.memory_space<vmem>>, %arg4: memref<1x8xf32, #tpu.memory_space<vmem>>, %arg5: memref<256x8xbf16, #tpu.memory_space<vmem>>) attributes {dimension_semantics = [#tpu.dimension_semantics<parallel>], iteration_bounds = array<i64: 2>, scalar_prefetch = 0 : i64, scratch_operands = 0 : i64, tpu.core_type = #tpu.core_type<tc>, window_params = [{transform_indices = @transform_0, window_bounds = array<i64: 256, 80>}, {pipeline_mode = #tpu.pipeline_mode<synchronous>, transform_indices = @transform_1, window_bounds = array<i64: 80, 8>}, {pipeline_mode = #tpu.pipeline_mode<synchronous>, transform_indices = @transform_2, window_bounds = array<i64: 1, 8>}, {pipeline_mode = #tpu.pipeline_mode<synchronous>, transform_indices = @transform_3, window_bounds = array<i64: 1, 8>}, {transform_indices = @transform_4, window_bounds = array<i64: 256, 8>}]} {
    %c0 = arith.constant 0 : index
    %c0_0 = arith.constant 0 : index
    %0 = vector.load %arg1[%c0, %c0_0] : memref<256x80xbf16, #tpu.memory_space<vmem>>, vector<256x80xbf16>
    %1 = arith.extf %0 : vector<256x80xbf16> to vector<256x80xf32>
    %cst = arith.constant 0.000000e+00 : f32
    %2 = vector.broadcast %cst : f32 to vector<256x80xf32>
    %3 = arith.maximumf %1, %2 : vector<256x80xf32>
    %4 = arith.truncf %3 : vector<256x80xf32> to vector<256x80xbf16>
    %c0_1 = arith.constant 0 : index
    %c0_2 = arith.constant 0 : index
    %5 = vector.load %arg2[%c0_1, %c0_2] : memref<80x8xbf16, #tpu.memory_space<vmem>>, vector<80x8xbf16>
    %cst_3 = arith.constant dense<0.000000e+00> : vector<256x8xf32>
    %6 = tpu.matmul %4, %5, %cst_3 {dimension_numbers = #tpu.dot_dimension_numbers<[1], [0], [0], [1], [0, 0, 1, 1], [], []>} : vector<256x80xbf16>, vector<80x8xbf16>, vector<256x8xf32> -> vector<256x8xf32>
    %c0_4 = arith.constant 0 : index
    %c0_5 = arith.constant 0 : index
    %7 = vector.load %arg3[%c0_4, %c0_5] : memref<1x8xf32, #tpu.memory_space<vmem>>, vector<1x8xf32>
    %8 = vector.broadcast %7 : vector<1x8xf32> to vector<256x8xf32>
    %9 = arith.mulf %6, %8 : vector<256x8xf32>
    %c0_6 = arith.constant 0 : index
    %c0_7 = arith.constant 0 : index
    %10 = vector.load %arg4[%c0_6, %c0_7] : memref<1x8xf32, #tpu.memory_space<vmem>>, vector<1x8xf32>
    %11 = vector.broadcast %10 : vector<1x8xf32> to vector<256x8xf32>
    %12 = arith.addf %9, %11 : vector<256x8xf32>
    %13 = arith.truncf %12 : vector<256x8xf32> to vector<256x8xbf16>
    %c0_8 = arith.constant 0 : index
    %c0_9 = arith.constant 0 : index
    %14 = vector.load %arg5[%c0_8, %c0_9] : memref<256x8xbf16, #tpu.memory_space<vmem>>, vector<256x8xbf16>
    tpu.vector_store %arg5[%c0_8, %c0_9], %13 {strides = array<i32>} : memref<256x8xbf16, #tpu.memory_space<vmem>>, vector<256x8xbf16>,
    return
  }
  func.func @transform_0(%arg0: i32) -> (i32, i32) {
    %c0_i32 = arith.constant 0 : i32
    %c0_i32_0 = arith.constant 0 : i32
    return %arg0, %c0_i32 : i32, i32
  }
  func.func @transform_1(%arg0: i32) -> (i32, i32) {
    %c0_i32 = arith.constant 0 : i32
    %c0_i32_0 = arith.constant 0 : i32
    %c0_i32_1 = arith.constant 0 : i32
    return %c0_i32, %c0_i32_0 : i32, i32
  }
  func.func @transform_2(%arg0: i32) -> (i32, i32) {
    %c0_i32 = arith.constant 0 : i32
    %c0_i32_0 = arith.constant 0 : i32
    %c0_i32_1 = arith.constant 0 : i32
    return %c0_i32, %c0_i32_0 : i32, i32
  }
  func.func @transform_3(%arg0: i32) -> (i32, i32) {
    %c0_i32 = arith.constant 0 : i32
    %c0_i32_0 = arith.constant 0 : i32
    %c0_i32_1 = arith.constant 0 : i32
    return %c0_i32, %c0_i32_0 : i32, i32
  }
  func.func @transform_4(%arg0: i32) -> (i32, i32) {
    %c0_i32 = arith.constant 0 : i32
    %c0_i32_0 = arith.constant 0 : i32
    return %arg0, %c0_i32 : i32, i32
  }
}

module attributes {stable_mosaic.version = 11 : i64} {
  func.func @_pool3x3_s1_kernel(%arg0: i32, %arg1: memref<2x18x144xbf16, #tpu.memory_space<vmem>>, %arg2: memref<1x16x128xf32, #tpu.memory_space<vmem>>, %arg3: memref<1x1x128xf32, #tpu.memory_space<vmem>>, %arg4: memref<2x16x128xbf16, #tpu.memory_space<vmem>>) attributes {dimension_semantics = [#tpu.dimension_semantics<arbitrary>], iteration_bounds = array<i64: 1>, scalar_prefetch = 0 : i64, scratch_operands = 0 : i64, tpu.core_type = #tpu.core_type<tc>, window_params = [{pipeline_mode = #tpu.pipeline_mode<synchronous>, transform_indices = @transform_0, window_bounds = array<i64: 2, 18, 144>}, {pipeline_mode = #tpu.pipeline_mode<synchronous>, transform_indices = @transform_1, window_bounds = array<i64: 1, 16, 128>}, {pipeline_mode = #tpu.pipeline_mode<synchronous>, transform_indices = @transform_2, window_bounds = array<i64: 1, 1, 128>}, {pipeline_mode = #tpu.pipeline_mode<synchronous>, transform_indices = @transform_3, window_bounds = array<i64: 2, 16, 128>}]} {
    %c0 = arith.constant 0 : index
    %c0_0 = arith.constant 0 : index
    %c0_1 = arith.constant 0 : index
    %0 = vector.load %arg1[%c0, %c0_0, %c0_1] : memref<2x18x144xbf16, #tpu.memory_space<vmem>>, vector<2x18x144xbf16>
    %1 = arith.extf %0 : vector<2x18x144xbf16> to vector<2x18x144xf32>
    %2 = vector.extract_strided_slice %1 {offsets = [0, 0, 0], sizes = [2, 16, 128], strides = [1, 1, 1]} : vector<2x18x144xf32> to vector<2x16x128xf32>
    %3 = vector.extract_strided_slice %1 {offsets = [0, 0, 8], sizes = [2, 16, 128], strides = [1, 1, 1]} : vector<2x18x144xf32> to vector<2x16x128xf32>
    %4 = arith.addf %2, %3 : vector<2x16x128xf32>
    %5 = vector.extract_strided_slice %1 {offsets = [0, 0, 16], sizes = [2, 16, 128], strides = [1, 1, 1]} : vector<2x18x144xf32> to vector<2x16x128xf32>
    %6 = arith.addf %4, %5 : vector<2x16x128xf32>
    %7 = vector.extract_strided_slice %1 {offsets = [0, 1, 0], sizes = [2, 16, 128], strides = [1, 1, 1]} : vector<2x18x144xf32> to vector<2x16x128xf32>
    %8 = arith.addf %6, %7 : vector<2x16x128xf32>
    %9 = vector.extract_strided_slice %1 {offsets = [0, 1, 8], sizes = [2, 16, 128], strides = [1, 1, 1]} : vector<2x18x144xf32> to vector<2x16x128xf32>
    %10 = arith.addf %8, %9 : vector<2x16x128xf32>
    %11 = vector.extract_strided_slice %1 {offsets = [0, 1, 16], sizes = [2, 16, 128], strides = [1, 1, 1]} : vector<2x18x144xf32> to vector<2x16x128xf32>
    %12 = arith.addf %10, %11 : vector<2x16x128xf32>
    %13 = vector.extract_strided_slice %1 {offsets = [0, 2, 0], sizes = [2, 16, 128], strides = [1, 1, 1]} : vector<2x18x144xf32> to vector<2x16x128xf32>
    %14 = arith.addf %12, %13 : vector<2x16x128xf32>
    %15 = vector.extract_strided_slice %1 {offsets = [0, 2, 8], sizes = [2, 16, 128], strides = [1, 1, 1]} : vector<2x18x144xf32> to vector<2x16x128xf32>
    %16 = arith.addf %14, %15 : vector<2x16x128xf32>
    %17 = vector.extract_strided_slice %1 {offsets = [0, 2, 16], sizes = [2, 16, 128], strides = [1, 1, 1]} : vector<2x18x144xf32> to vector<2x16x128xf32>
    %18 = arith.addf %16, %17 : vector<2x16x128xf32>
    %c0_2 = arith.constant 0 : index
    %c0_3 = arith.constant 0 : index
    %c0_4 = arith.constant 0 : index
    %19 = vector.load %arg2[%c0_2, %c0_3, %c0_4] : memref<1x16x128xf32, #tpu.memory_space<vmem>>, vector<1x16x128xf32>
    %20 = vector.broadcast %19 : vector<1x16x128xf32> to vector<2x16x128xf32>
    %21 = arith.mulf %18, %20 : vector<2x16x128xf32>
    %c0_5 = arith.constant 0 : index
    %c0_6 = arith.constant 0 : index
    %c0_7 = arith.constant 0 : index
    %22 = vector.load %arg3[%c0_5, %c0_6, %c0_7] : memref<1x1x128xf32, #tpu.memory_space<vmem>>, vector<1x1x128xf32>
    %23 = vector.broadcast %22 : vector<1x1x128xf32> to vector<2x16x128xf32>
    %24 = arith.addf %21, %23 : vector<2x16x128xf32>
    %25 = arith.truncf %24 : vector<2x16x128xf32> to vector<2x16x128xbf16>
    %c0_8 = arith.constant 0 : index
    %c0_9 = arith.constant 0 : index
    %c0_10 = arith.constant 0 : index
    %26 = vector.load %arg4[%c0_8, %c0_9, %c0_10] : memref<2x16x128xbf16, #tpu.memory_space<vmem>>, vector<2x16x128xbf16>
    tpu.vector_store %arg4[%c0_8, %c0_9, %c0_10], %25 {strides = array<i32>} : memref<2x16x128xbf16, #tpu.memory_space<vmem>>, vector<2x16x128xbf16>,
    return
  }
  func.func @transform_0(%arg0: i32) -> (i32, i32, i32) {
    %c0_i32 = arith.constant 0 : i32
    %c0_i32_0 = arith.constant 0 : i32
    %c0_i32_1 = arith.constant 0 : i32
    %c0_i32_2 = arith.constant 0 : i32
    return %c0_i32, %c0_i32_0, %c0_i32_1 : i32, i32, i32
  }
  func.func @transform_1(%arg0: i32) -> (i32, i32, i32) {
    %c0_i32 = arith.constant 0 : i32
    %c0_i32_0 = arith.constant 0 : i32
    %c0_i32_1 = arith.constant 0 : i32
    %c0_i32_2 = arith.constant 0 : i32
    return %c0_i32, %c0_i32_0, %c0_i32_1 : i32, i32, i32
  }
  func.func @transform_2(%arg0: i32) -> (i32, i32, i32) {
    %c0_i32 = arith.constant 0 : i32
    %c0_i32_0 = arith.constant 0 : i32
    %c0_i32_1 = arith.constant 0 : i32
    %c0_i32_2 = arith.constant 0 : i32
    return %c0_i32, %c0_i32_0, %c0_i32_1 : i32, i32, i32
  }
  func.func @transform_3(%arg0: i32) -> (i32, i32, i32) {
    %c0_i32 = arith.constant 0 : i32
    %c0_i32_0 = arith.constant 0 : i32
    %c0_i32_1 = arith.constant 0 : i32
    %c0_i32_2 = arith.constant 0 : i32
    return %c0_i32, %c0_i32_0, %c0_i32_1 : i32, i32, i32
  }
}

module attributes {stable_mosaic.version = 11 : i64} {
  func.func @_matmul_bn_kernel(%arg0: i32, %arg1: memref<256x32xbf16, #tpu.memory_space<vmem>>, %arg2: memref<32x16xbf16, #tpu.memory_space<vmem>>, %arg3: memref<1x16xf32, #tpu.memory_space<vmem>>, %arg4: memref<1x16xf32, #tpu.memory_space<vmem>>, %arg5: memref<256x16xbf16, #tpu.memory_space<vmem>>) attributes {dimension_semantics = [#tpu.dimension_semantics<parallel>], iteration_bounds = array<i64: 2>, scalar_prefetch = 0 : i64, scratch_operands = 0 : i64, tpu.core_type = #tpu.core_type<tc>, window_params = [{transform_indices = @transform_0, window_bounds = array<i64: 256, 32>}, {pipeline_mode = #tpu.pipeline_mode<synchronous>, transform_indices = @transform_1, window_bounds = array<i64: 32, 16>}, {pipeline_mode = #tpu.pipeline_mode<synchronous>, transform_indices = @transform_2, window_bounds = array<i64: 1, 16>}, {pipeline_mode = #tpu.pipeline_mode<synchronous>, transform_indices = @transform_3, window_bounds = array<i64: 1, 16>}, {transform_indices = @transform_4, window_bounds = array<i64: 256, 16>}]} {
    %c0 = arith.constant 0 : index
    %c0_0 = arith.constant 0 : index
    %0 = vector.load %arg1[%c0, %c0_0] : memref<256x32xbf16, #tpu.memory_space<vmem>>, vector<256x32xbf16>
    %1 = arith.extf %0 : vector<256x32xbf16> to vector<256x32xf32>
    %cst = arith.constant 0.000000e+00 : f32
    %2 = vector.broadcast %cst : f32 to vector<256x32xf32>
    %3 = arith.maximumf %1, %2 : vector<256x32xf32>
    %4 = arith.truncf %3 : vector<256x32xf32> to vector<256x32xbf16>
    %c0_1 = arith.constant 0 : index
    %c0_2 = arith.constant 0 : index
    %5 = vector.load %arg2[%c0_1, %c0_2] : memref<32x16xbf16, #tpu.memory_space<vmem>>, vector<32x16xbf16>
    %cst_3 = arith.constant dense<0.000000e+00> : vector<256x16xf32>
    %6 = tpu.matmul %4, %5, %cst_3 {dimension_numbers = #tpu.dot_dimension_numbers<[1], [0], [0], [1], [0, 0, 1, 1], [], []>} : vector<256x32xbf16>, vector<32x16xbf16>, vector<256x16xf32> -> vector<256x16xf32>
    %c0_4 = arith.constant 0 : index
    %c0_5 = arith.constant 0 : index
    %7 = vector.load %arg3[%c0_4, %c0_5] : memref<1x16xf32, #tpu.memory_space<vmem>>, vector<1x16xf32>
    %8 = vector.broadcast %7 : vector<1x16xf32> to vector<256x16xf32>
    %9 = arith.mulf %6, %8 : vector<256x16xf32>
    %c0_6 = arith.constant 0 : index
    %c0_7 = arith.constant 0 : index
    %10 = vector.load %arg4[%c0_6, %c0_7] : memref<1x16xf32, #tpu.memory_space<vmem>>, vector<1x16xf32>
    %11 = vector.broadcast %10 : vector<1x16xf32> to vector<256x16xf32>
    %12 = arith.addf %9, %11 : vector<256x16xf32>
    %13 = arith.truncf %12 : vector<256x16xf32> to vector<256x16xbf16>
    %c0_8 = arith.constant 0 : index
    %c0_9 = arith.constant 0 : index
    %14 = vector.load %arg5[%c0_8, %c0_9] : memref<256x16xbf16, #tpu.memory_space<vmem>>, vector<256x16xbf16>
    tpu.vector_store %arg5[%c0_8, %c0_9], %13 {strides = array<i32>} : memref<256x16xbf16, #tpu.memory_space<vmem>>, vector<256x16xbf16>,
    return
  }
  func.func @transform_0(%arg0: i32) -> (i32, i32) {
    %c0_i32 = arith.constant 0 : i32
    %c0_i32_0 = arith.constant 0 : i32
    return %arg0, %c0_i32 : i32, i32
  }
  func.func @transform_1(%arg0: i32) -> (i32, i32) {
    %c0_i32 = arith.constant 0 : i32
    %c0_i32_0 = arith.constant 0 : i32
    %c0_i32_1 = arith.constant 0 : i32
    return %c0_i32, %c0_i32_0 : i32, i32
  }
  func.func @transform_2(%arg0: i32) -> (i32, i32) {
    %c0_i32 = arith.constant 0 : i32
    %c0_i32_0 = arith.constant 0 : i32
    %c0_i32_1 = arith.constant 0 : i32
    return %c0_i32, %c0_i32_0 : i32, i32
  }
  func.func @transform_3(%arg0: i32) -> (i32, i32) {
    %c0_i32 = arith.constant 0 : i32
    %c0_i32_0 = arith.constant 0 : i32
    %c0_i32_1 = arith.constant 0 : i32
    return %c0_i32, %c0_i32_0 : i32, i32
  }
  func.func @transform_4(%arg0: i32) -> (i32, i32) {
    %c0_i32 = arith.constant 0 : i32
    %c0_i32_0 = arith.constant 0 : i32
    return %arg0, %c0_i32 : i32, i32
  }
}

module attributes {stable_mosaic.version = 11 : i64} {
  func.func @_matmul_bn_kernel(%arg0: i32, %arg1: memref<128x32xbf16, #tpu.memory_space<vmem>>, %arg2: memref<32x16xbf16, #tpu.memory_space<vmem>>, %arg3: memref<1x16xf32, #tpu.memory_space<vmem>>, %arg4: memref<1x16xf32, #tpu.memory_space<vmem>>, %arg5: memref<128x16xbf16, #tpu.memory_space<vmem>>) attributes {dimension_semantics = [#tpu.dimension_semantics<parallel>], iteration_bounds = array<i64: 1>, scalar_prefetch = 0 : i64, scratch_operands = 0 : i64, tpu.core_type = #tpu.core_type<tc>, window_params = [{transform_indices = @transform_0, window_bounds = array<i64: 128, 32>}, {pipeline_mode = #tpu.pipeline_mode<synchronous>, transform_indices = @transform_1, window_bounds = array<i64: 32, 16>}, {pipeline_mode = #tpu.pipeline_mode<synchronous>, transform_indices = @transform_2, window_bounds = array<i64: 1, 16>}, {pipeline_mode = #tpu.pipeline_mode<synchronous>, transform_indices = @transform_3, window_bounds = array<i64: 1, 16>}, {transform_indices = @transform_4, window_bounds = array<i64: 128, 16>}]} {
    %c0 = arith.constant 0 : index
    %c0_0 = arith.constant 0 : index
    %0 = vector.load %arg1[%c0, %c0_0] : memref<128x32xbf16, #tpu.memory_space<vmem>>, vector<128x32xbf16>
    %1 = arith.extf %0 : vector<128x32xbf16> to vector<128x32xf32>
    %cst = arith.constant 0.000000e+00 : f32
    %2 = vector.broadcast %cst : f32 to vector<128x32xf32>
    %3 = arith.maximumf %1, %2 : vector<128x32xf32>
    %4 = arith.truncf %3 : vector<128x32xf32> to vector<128x32xbf16>
    %c0_1 = arith.constant 0 : index
    %c0_2 = arith.constant 0 : index
    %5 = vector.load %arg2[%c0_1, %c0_2] : memref<32x16xbf16, #tpu.memory_space<vmem>>, vector<32x16xbf16>
    %cst_3 = arith.constant dense<0.000000e+00> : vector<128x16xf32>
    %6 = tpu.matmul %4, %5, %cst_3 {dimension_numbers = #tpu.dot_dimension_numbers<[1], [0], [0], [1], [0, 0, 1, 1], [], []>} : vector<128x32xbf16>, vector<32x16xbf16>, vector<128x16xf32> -> vector<128x16xf32>
    %c0_4 = arith.constant 0 : index
    %c0_5 = arith.constant 0 : index
    %7 = vector.load %arg3[%c0_4, %c0_5] : memref<1x16xf32, #tpu.memory_space<vmem>>, vector<1x16xf32>
    %8 = vector.broadcast %7 : vector<1x16xf32> to vector<128x16xf32>
    %9 = arith.mulf %6, %8 : vector<128x16xf32>
    %c0_6 = arith.constant 0 : index
    %c0_7 = arith.constant 0 : index
    %10 = vector.load %arg4[%c0_6, %c0_7] : memref<1x16xf32, #tpu.memory_space<vmem>>, vector<1x16xf32>
    %11 = vector.broadcast %10 : vector<1x16xf32> to vector<128x16xf32>
    %12 = arith.addf %9, %11 : vector<128x16xf32>
    %13 = arith.truncf %12 : vector<128x16xf32> to vector<128x16xbf16>
    %c0_8 = arith.constant 0 : index
    %c0_9 = arith.constant 0 : index
    %14 = vector.load %arg5[%c0_8, %c0_9] : memref<128x16xbf16, #tpu.memory_space<vmem>>, vector<128x16xbf16>
    tpu.vector_store %arg5[%c0_8, %c0_9], %13 {strides = array<i32>} : memref<128x16xbf16, #tpu.memory_space<vmem>>, vector<128x16xbf16>,
    return
  }
  func.func @transform_0(%arg0: i32) -> (i32, i32) {
    %c0_i32 = arith.constant 0 : i32
    %c0_i32_0 = arith.constant 0 : i32
    return %arg0, %c0_i32 : i32, i32
  }
  func.func @transform_1(%arg0: i32) -> (i32, i32) {
    %c0_i32 = arith.constant 0 : i32
    %c0_i32_0 = arith.constant 0 : i32
    %c0_i32_1 = arith.constant 0 : i32
    return %c0_i32, %c0_i32_0 : i32, i32
  }
  func.func @transform_2(%arg0: i32) -> (i32, i32) {
    %c0_i32 = arith.constant 0 : i32
    %c0_i32_0 = arith.constant 0 : i32
    %c0_i32_1 = arith.constant 0 : i32
    return %c0_i32, %c0_i32_0 : i32, i32
  }
  func.func @transform_3(%arg0: i32) -> (i32, i32) {
    %c0_i32 = arith.constant 0 : i32
    %c0_i32_0 = arith.constant 0 : i32
    %c0_i32_1 = arith.constant 0 : i32
    return %c0_i32, %c0_i32_0 : i32, i32
  }
  func.func @transform_4(%arg0: i32) -> (i32, i32) {
    %c0_i32 = arith.constant 0 : i32
    %c0_i32_0 = arith.constant 0 : i32
    return %arg0, %c0_i32 : i32, i32
  }
}

module attributes {stable_mosaic.version = 11 : i64} {
  func.func @_matmul_bn_kernel(%arg0: i32, %arg1: memref<256x16xbf16, #tpu.memory_space<vmem>>, %arg2: memref<16x16xbf16, #tpu.memory_space<vmem>>, %arg3: memref<1x16xf32, #tpu.memory_space<vmem>>, %arg4: memref<1x16xf32, #tpu.memory_space<vmem>>, %arg5: memref<256x16xbf16, #tpu.memory_space<vmem>>) attributes {dimension_semantics = [#tpu.dimension_semantics<parallel>], iteration_bounds = array<i64: 2>, scalar_prefetch = 0 : i64, scratch_operands = 0 : i64, tpu.core_type = #tpu.core_type<tc>, window_params = [{transform_indices = @transform_0, window_bounds = array<i64: 256, 16>}, {pipeline_mode = #tpu.pipeline_mode<synchronous>, transform_indices = @transform_1, window_bounds = array<i64: 16, 16>}, {pipeline_mode = #tpu.pipeline_mode<synchronous>, transform_indices = @transform_2, window_bounds = array<i64: 1, 16>}, {pipeline_mode = #tpu.pipeline_mode<synchronous>, transform_indices = @transform_3, window_bounds = array<i64: 1, 16>}, {transform_indices = @transform_4, window_bounds = array<i64: 256, 16>}]} {
    %c0 = arith.constant 0 : index
    %c0_0 = arith.constant 0 : index
    %0 = vector.load %arg1[%c0, %c0_0] : memref<256x16xbf16, #tpu.memory_space<vmem>>, vector<256x16xbf16>
    %1 = arith.extf %0 : vector<256x16xbf16> to vector<256x16xf32>
    %cst = arith.constant 0.000000e+00 : f32
    %2 = vector.broadcast %cst : f32 to vector<256x16xf32>
    %3 = arith.maximumf %1, %2 : vector<256x16xf32>
    %4 = arith.truncf %3 : vector<256x16xf32> to vector<256x16xbf16>
    %c0_1 = arith.constant 0 : index
    %c0_2 = arith.constant 0 : index
    %5 = vector.load %arg2[%c0_1, %c0_2] : memref<16x16xbf16, #tpu.memory_space<vmem>>, vector<16x16xbf16>
    %cst_3 = arith.constant dense<0.000000e+00> : vector<256x16xf32>
    %6 = tpu.matmul %4, %5, %cst_3 {dimension_numbers = #tpu.dot_dimension_numbers<[1], [0], [0], [1], [0, 0, 1, 1], [], []>} : vector<256x16xbf16>, vector<16x16xbf16>, vector<256x16xf32> -> vector<256x16xf32>
    %c0_4 = arith.constant 0 : index
    %c0_5 = arith.constant 0 : index
    %7 = vector.load %arg3[%c0_4, %c0_5] : memref<1x16xf32, #tpu.memory_space<vmem>>, vector<1x16xf32>
    %8 = vector.broadcast %7 : vector<1x16xf32> to vector<256x16xf32>
    %9 = arith.mulf %6, %8 : vector<256x16xf32>
    %c0_6 = arith.constant 0 : index
    %c0_7 = arith.constant 0 : index
    %10 = vector.load %arg4[%c0_6, %c0_7] : memref<1x16xf32, #tpu.memory_space<vmem>>, vector<1x16xf32>
    %11 = vector.broadcast %10 : vector<1x16xf32> to vector<256x16xf32>
    %12 = arith.addf %9, %11 : vector<256x16xf32>
    %13 = arith.truncf %12 : vector<256x16xf32> to vector<256x16xbf16>
    %c0_8 = arith.constant 0 : index
    %c0_9 = arith.constant 0 : index
    %14 = vector.load %arg5[%c0_8, %c0_9] : memref<256x16xbf16, #tpu.memory_space<vmem>>, vector<256x16xbf16>
    tpu.vector_store %arg5[%c0_8, %c0_9], %13 {strides = array<i32>} : memref<256x16xbf16, #tpu.memory_space<vmem>>, vector<256x16xbf16>,
    return
  }
  func.func @transform_0(%arg0: i32) -> (i32, i32) {
    %c0_i32 = arith.constant 0 : i32
    %c0_i32_0 = arith.constant 0 : i32
    return %arg0, %c0_i32 : i32, i32
  }
  func.func @transform_1(%arg0: i32) -> (i32, i32) {
    %c0_i32 = arith.constant 0 : i32
    %c0_i32_0 = arith.constant 0 : i32
    %c0_i32_1 = arith.constant 0 : i32
    return %c0_i32, %c0_i32_0 : i32, i32
  }
  func.func @transform_2(%arg0: i32) -> (i32, i32) {
    %c0_i32 = arith.constant 0 : i32
    %c0_i32_0 = arith.constant 0 : i32
    %c0_i32_1 = arith.constant 0 : i32
    return %c0_i32, %c0_i32_0 : i32, i32
  }
  func.func @transform_3(%arg0: i32) -> (i32, i32) {
    %c0_i32 = arith.constant 0 : i32
    %c0_i32_0 = arith.constant 0 : i32
    %c0_i32_1 = arith.constant 0 : i32
    return %c0_i32, %c0_i32_0 : i32, i32
  }
  func.func @transform_4(%arg0: i32) -> (i32, i32) {
    %c0_i32 = arith.constant 0 : i32
    %c0_i32_0 = arith.constant 0 : i32
    return %arg0, %c0_i32 : i32, i32
  }
}

module attributes {stable_mosaic.version = 11 : i64} {
  func.func @_matmul_bn_kernel(%arg0: i32, %arg1: memref<128x144xbf16, #tpu.memory_space<vmem>>, %arg2: memref<144x16xbf16, #tpu.memory_space<vmem>>, %arg3: memref<1x16xf32, #tpu.memory_space<vmem>>, %arg4: memref<1x16xf32, #tpu.memory_space<vmem>>, %arg5: memref<128x16xbf16, #tpu.memory_space<vmem>>) attributes {dimension_semantics = [#tpu.dimension_semantics<parallel>], iteration_bounds = array<i64: 1>, scalar_prefetch = 0 : i64, scratch_operands = 0 : i64, tpu.core_type = #tpu.core_type<tc>, window_params = [{transform_indices = @transform_0, window_bounds = array<i64: 128, 144>}, {pipeline_mode = #tpu.pipeline_mode<synchronous>, transform_indices = @transform_1, window_bounds = array<i64: 144, 16>}, {pipeline_mode = #tpu.pipeline_mode<synchronous>, transform_indices = @transform_2, window_bounds = array<i64: 1, 16>}, {pipeline_mode = #tpu.pipeline_mode<synchronous>, transform_indices = @transform_3, window_bounds = array<i64: 1, 16>}, {transform_indices = @transform_4, window_bounds = array<i64: 128, 16>}]} {
    %c0 = arith.constant 0 : index
    %c0_0 = arith.constant 0 : index
    %0 = vector.load %arg1[%c0, %c0_0] : memref<128x144xbf16, #tpu.memory_space<vmem>>, vector<128x144xbf16>
    %1 = arith.extf %0 : vector<128x144xbf16> to vector<128x144xf32>
    %cst = arith.constant 0.000000e+00 : f32
    %2 = vector.broadcast %cst : f32 to vector<128x144xf32>
    %3 = arith.maximumf %1, %2 : vector<128x144xf32>
    %4 = arith.truncf %3 : vector<128x144xf32> to vector<128x144xbf16>
    %c0_1 = arith.constant 0 : index
    %c0_2 = arith.constant 0 : index
    %5 = vector.load %arg2[%c0_1, %c0_2] : memref<144x16xbf16, #tpu.memory_space<vmem>>, vector<144x16xbf16>
    %cst_3 = arith.constant dense<0.000000e+00> : vector<128x16xf32>
    %6 = tpu.matmul %4, %5, %cst_3 {dimension_numbers = #tpu.dot_dimension_numbers<[1], [0], [0], [1], [0, 0, 1, 1], [], []>} : vector<128x144xbf16>, vector<144x16xbf16>, vector<128x16xf32> -> vector<128x16xf32>
    %c0_4 = arith.constant 0 : index
    %c0_5 = arith.constant 0 : index
    %7 = vector.load %arg3[%c0_4, %c0_5] : memref<1x16xf32, #tpu.memory_space<vmem>>, vector<1x16xf32>
    %8 = vector.broadcast %7 : vector<1x16xf32> to vector<128x16xf32>
    %9 = arith.mulf %6, %8 : vector<128x16xf32>
    %c0_6 = arith.constant 0 : index
    %c0_7 = arith.constant 0 : index
    %10 = vector.load %arg4[%c0_6, %c0_7] : memref<1x16xf32, #tpu.memory_space<vmem>>, vector<1x16xf32>
    %11 = vector.broadcast %10 : vector<1x16xf32> to vector<128x16xf32>
    %12 = arith.addf %9, %11 : vector<128x16xf32>
    %13 = arith.truncf %12 : vector<128x16xf32> to vector<128x16xbf16>
    %c0_8 = arith.constant 0 : index
    %c0_9 = arith.constant 0 : index
    %14 = vector.load %arg5[%c0_8, %c0_9] : memref<128x16xbf16, #tpu.memory_space<vmem>>, vector<128x16xbf16>
    tpu.vector_store %arg5[%c0_8, %c0_9], %13 {strides = array<i32>} : memref<128x16xbf16, #tpu.memory_space<vmem>>, vector<128x16xbf16>,
    return
  }
  func.func @transform_0(%arg0: i32) -> (i32, i32) {
    %c0_i32 = arith.constant 0 : i32
    %c0_i32_0 = arith.constant 0 : i32
    return %arg0, %c0_i32 : i32, i32
  }
  func.func @transform_1(%arg0: i32) -> (i32, i32) {
    %c0_i32 = arith.constant 0 : i32
    %c0_i32_0 = arith.constant 0 : i32
    %c0_i32_1 = arith.constant 0 : i32
    return %c0_i32, %c0_i32_0 : i32, i32
  }
  func.func @transform_2(%arg0: i32) -> (i32, i32) {
    %c0_i32 = arith.constant 0 : i32
    %c0_i32_0 = arith.constant 0 : i32
    %c0_i32_1 = arith.constant 0 : i32
    return %c0_i32, %c0_i32_0 : i32, i32
  }
  func.func @transform_3(%arg0: i32) -> (i32, i32) {
    %c0_i32 = arith.constant 0 : i32
    %c0_i32_0 = arith.constant 0 : i32
    %c0_i32_1 = arith.constant 0 : i32
    return %c0_i32, %c0_i32_0 : i32, i32
  }
  func.func @transform_4(%arg0: i32) -> (i32, i32) {
    %c0_i32 = arith.constant 0 : i32
    %c0_i32_0 = arith.constant 0 : i32
    return %arg0, %c0_i32 : i32, i32
  }
}

module attributes {stable_mosaic.version = 11 : i64} {
  func.func @_pool3x3_taps_kernel(%arg0: i32, %arg1: memref<9x2x8x128xbf16, #tpu.memory_space<vmem>>, %arg2: memref<1x8x128xf32, #tpu.memory_space<vmem>>, %arg3: memref<1x1x128xf32, #tpu.memory_space<vmem>>, %arg4: memref<2x8x128xbf16, #tpu.memory_space<vmem>>) attributes {dimension_semantics = [#tpu.dimension_semantics<arbitrary>], iteration_bounds = array<i64: 1>, scalar_prefetch = 0 : i64, scratch_operands = 0 : i64, tpu.core_type = #tpu.core_type<tc>, window_params = [{pipeline_mode = #tpu.pipeline_mode<synchronous>, transform_indices = @transform_0, window_bounds = array<i64: 9, 2, 8, 128>}, {pipeline_mode = #tpu.pipeline_mode<synchronous>, transform_indices = @transform_1, window_bounds = array<i64: 1, 8, 128>}, {pipeline_mode = #tpu.pipeline_mode<synchronous>, transform_indices = @transform_2, window_bounds = array<i64: 1, 1, 128>}, {pipeline_mode = #tpu.pipeline_mode<synchronous>, transform_indices = @transform_3, window_bounds = array<i64: 2, 8, 128>}]} {
    %c0 = arith.constant 0 : index
    %c0_0 = arith.constant 0 : index
    %c0_1 = arith.constant 0 : index
    %c0_2 = arith.constant 0 : index
    %0 = vector.load %arg1[%c0, %c0_0, %c0_1, %c0_2] : memref<9x2x8x128xbf16, #tpu.memory_space<vmem>>, vector<1x2x8x128xbf16>
    %1 = vector.shape_cast %0 : vector<1x2x8x128xbf16> to vector<2x8x128xbf16>
    %2 = arith.extf %1 : vector<2x8x128xbf16> to vector<2x8x128xf32>
    %c1 = arith.constant 1 : index
    %c0_3 = arith.constant 0 : index
    %c0_4 = arith.constant 0 : index
    %c0_5 = arith.constant 0 : index
    %3 = vector.load %arg1[%c1, %c0_3, %c0_4, %c0_5] : memref<9x2x8x128xbf16, #tpu.memory_space<vmem>>, vector<1x2x8x128xbf16>
    %4 = vector.shape_cast %3 : vector<1x2x8x128xbf16> to vector<2x8x128xbf16>
    %5 = arith.extf %4 : vector<2x8x128xbf16> to vector<2x8x128xf32>
    %6 = arith.addf %2, %5 : vector<2x8x128xf32>
    %c2 = arith.constant 2 : index
    %c0_6 = arith.constant 0 : index
    %c0_7 = arith.constant 0 : index
    %c0_8 = arith.constant 0 : index
    %7 = vector.load %arg1[%c2, %c0_6, %c0_7, %c0_8] : memref<9x2x8x128xbf16, #tpu.memory_space<vmem>>, vector<1x2x8x128xbf16>
    %8 = vector.shape_cast %7 : vector<1x2x8x128xbf16> to vector<2x8x128xbf16>
    %9 = arith.extf %8 : vector<2x8x128xbf16> to vector<2x8x128xf32>
    %10 = arith.addf %6, %9 : vector<2x8x128xf32>
    %c3 = arith.constant 3 : index
    %c0_9 = arith.constant 0 : index
    %c0_10 = arith.constant 0 : index
    %c0_11 = arith.constant 0 : index
    %11 = vector.load %arg1[%c3, %c0_9, %c0_10, %c0_11] : memref<9x2x8x128xbf16, #tpu.memory_space<vmem>>, vector<1x2x8x128xbf16>
    %12 = vector.shape_cast %11 : vector<1x2x8x128xbf16> to vector<2x8x128xbf16>
    %13 = arith.extf %12 : vector<2x8x128xbf16> to vector<2x8x128xf32>
    %14 = arith.addf %10, %13 : vector<2x8x128xf32>
    %c4 = arith.constant 4 : index
    %c0_12 = arith.constant 0 : index
    %c0_13 = arith.constant 0 : index
    %c0_14 = arith.constant 0 : index
    %15 = vector.load %arg1[%c4, %c0_12, %c0_13, %c0_14] : memref<9x2x8x128xbf16, #tpu.memory_space<vmem>>, vector<1x2x8x128xbf16>
    %16 = vector.shape_cast %15 : vector<1x2x8x128xbf16> to vector<2x8x128xbf16>
    %17 = arith.extf %16 : vector<2x8x128xbf16> to vector<2x8x128xf32>
    %18 = arith.addf %14, %17 : vector<2x8x128xf32>
    %c5 = arith.constant 5 : index
    %c0_15 = arith.constant 0 : index
    %c0_16 = arith.constant 0 : index
    %c0_17 = arith.constant 0 : index
    %19 = vector.load %arg1[%c5, %c0_15, %c0_16, %c0_17] : memref<9x2x8x128xbf16, #tpu.memory_space<vmem>>, vector<1x2x8x128xbf16>
    %20 = vector.shape_cast %19 : vector<1x2x8x128xbf16> to vector<2x8x128xbf16>
    %21 = arith.extf %20 : vector<2x8x128xbf16> to vector<2x8x128xf32>
    %22 = arith.addf %18, %21 : vector<2x8x128xf32>
    %c6 = arith.constant 6 : index
    %c0_18 = arith.constant 0 : index
    %c0_19 = arith.constant 0 : index
    %c0_20 = arith.constant 0 : index
    %23 = vector.load %arg1[%c6, %c0_18, %c0_19, %c0_20] : memref<9x2x8x128xbf16, #tpu.memory_space<vmem>>, vector<1x2x8x128xbf16>
    %24 = vector.shape_cast %23 : vector<1x2x8x128xbf16> to vector<2x8x128xbf16>
    %25 = arith.extf %24 : vector<2x8x128xbf16> to vector<2x8x128xf32>
    %26 = arith.addf %22, %25 : vector<2x8x128xf32>
    %c7 = arith.constant 7 : index
    %c0_21 = arith.constant 0 : index
    %c0_22 = arith.constant 0 : index
    %c0_23 = arith.constant 0 : index
    %27 = vector.load %arg1[%c7, %c0_21, %c0_22, %c0_23] : memref<9x2x8x128xbf16, #tpu.memory_space<vmem>>, vector<1x2x8x128xbf16>
    %28 = vector.shape_cast %27 : vector<1x2x8x128xbf16> to vector<2x8x128xbf16>
    %29 = arith.extf %28 : vector<2x8x128xbf16> to vector<2x8x128xf32>
    %30 = arith.addf %26, %29 : vector<2x8x128xf32>
    %c8 = arith.constant 8 : index
    %c0_24 = arith.constant 0 : index
    %c0_25 = arith.constant 0 : index
    %c0_26 = arith.constant 0 : index
    %31 = vector.load %arg1[%c8, %c0_24, %c0_25, %c0_26] : memref<9x2x8x128xbf16, #tpu.memory_space<vmem>>, vector<1x2x8x128xbf16>
    %32 = vector.shape_cast %31 : vector<1x2x8x128xbf16> to vector<2x8x128xbf16>
    %33 = arith.extf %32 : vector<2x8x128xbf16> to vector<2x8x128xf32>
    %34 = arith.addf %30, %33 : vector<2x8x128xf32>
    %c0_27 = arith.constant 0 : index
    %c0_28 = arith.constant 0 : index
    %c0_29 = arith.constant 0 : index
    %35 = vector.load %arg2[%c0_27, %c0_28, %c0_29] : memref<1x8x128xf32, #tpu.memory_space<vmem>>, vector<1x8x128xf32>
    %36 = vector.broadcast %35 : vector<1x8x128xf32> to vector<2x8x128xf32>
    %37 = arith.mulf %34, %36 : vector<2x8x128xf32>
    %c0_30 = arith.constant 0 : index
    %c0_31 = arith.constant 0 : index
    %c0_32 = arith.constant 0 : index
    %38 = vector.load %arg3[%c0_30, %c0_31, %c0_32] : memref<1x1x128xf32, #tpu.memory_space<vmem>>, vector<1x1x128xf32>
    %39 = vector.broadcast %38 : vector<1x1x128xf32> to vector<2x8x128xf32>
    %40 = arith.addf %37, %39 : vector<2x8x128xf32>
    %41 = arith.truncf %40 : vector<2x8x128xf32> to vector<2x8x128xbf16>
    %c0_33 = arith.constant 0 : index
    %c0_34 = arith.constant 0 : index
    %c0_35 = arith.constant 0 : index
    %42 = vector.load %arg4[%c0_33, %c0_34, %c0_35] : memref<2x8x128xbf16, #tpu.memory_space<vmem>>, vector<2x8x128xbf16>
    tpu.vector_store %arg4[%c0_33, %c0_34, %c0_35], %41 {strides = array<i32>} : memref<2x8x128xbf16, #tpu.memory_space<vmem>>, vector<2x8x128xbf16>,
    return
  }
  func.func @transform_0(%arg0: i32) -> (i32, i32, i32, i32) {
    %c0_i32 = arith.constant 0 : i32
    %c0_i32_0 = arith.constant 0 : i32
    %c0_i32_1 = arith.constant 0 : i32
    %c0_i32_2 = arith.constant 0 : i32
    %c0_i32_3 = arith.constant 0 : i32
    return %c0_i32, %c0_i32_0, %c0_i32_1, %c0_i32_2 : i32, i32, i32, i32
  }
  func.func @transform_1(%arg0: i32) -> (i32, i32, i32) {
    %c0_i32 = arith.constant 0 : i32
    %c0_i32_0 = arith.constant 0 : i32
    %c0_i32_1 = arith.constant 0 : i32
    %c0_i32_2 = arith.constant 0 : i32
    return %c0_i32, %c0_i32_0, %c0_i32_1 : i32, i32, i32
  }
  func.func @transform_2(%arg0: i32) -> (i32, i32, i32) {
    %c0_i32 = arith.constant 0 : i32
    %c0_i32_0 = arith.constant 0 : i32
    %c0_i32_1 = arith.constant 0 : i32
    %c0_i32_2 = arith.constant 0 : i32
    return %c0_i32, %c0_i32_0, %c0_i32_1 : i32, i32, i32
  }
  func.func @transform_3(%arg0: i32) -> (i32, i32, i32) {
    %c0_i32 = arith.constant 0 : i32
    %c0_i32_0 = arith.constant 0 : i32
    %c0_i32_1 = arith.constant 0 : i32
    %c0_i32_2 = arith.constant 0 : i32
    return %c0_i32, %c0_i32_0, %c0_i32_1 : i32, i32, i32
  }
}

module attributes {stable_mosaic.version = 11 : i64} {
  func.func @_matmul_bn_kernel(%arg0: i32, %arg1: memref<128x64xbf16, #tpu.memory_space<vmem>>, %arg2: memref<64x32xbf16, #tpu.memory_space<vmem>>, %arg3: memref<1x32xf32, #tpu.memory_space<vmem>>, %arg4: memref<1x32xf32, #tpu.memory_space<vmem>>, %arg5: memref<128x32xbf16, #tpu.memory_space<vmem>>) attributes {dimension_semantics = [#tpu.dimension_semantics<parallel>], iteration_bounds = array<i64: 1>, scalar_prefetch = 0 : i64, scratch_operands = 0 : i64, tpu.core_type = #tpu.core_type<tc>, window_params = [{transform_indices = @transform_0, window_bounds = array<i64: 128, 64>}, {pipeline_mode = #tpu.pipeline_mode<synchronous>, transform_indices = @transform_1, window_bounds = array<i64: 64, 32>}, {pipeline_mode = #tpu.pipeline_mode<synchronous>, transform_indices = @transform_2, window_bounds = array<i64: 1, 32>}, {pipeline_mode = #tpu.pipeline_mode<synchronous>, transform_indices = @transform_3, window_bounds = array<i64: 1, 32>}, {transform_indices = @transform_4, window_bounds = array<i64: 128, 32>}]} {
    %c0 = arith.constant 0 : index
    %c0_0 = arith.constant 0 : index
    %0 = vector.load %arg1[%c0, %c0_0] : memref<128x64xbf16, #tpu.memory_space<vmem>>, vector<128x64xbf16>
    %1 = arith.extf %0 : vector<128x64xbf16> to vector<128x64xf32>
    %cst = arith.constant 0.000000e+00 : f32
    %2 = vector.broadcast %cst : f32 to vector<128x64xf32>
    %3 = arith.maximumf %1, %2 : vector<128x64xf32>
    %4 = arith.truncf %3 : vector<128x64xf32> to vector<128x64xbf16>
    %c0_1 = arith.constant 0 : index
    %c0_2 = arith.constant 0 : index
    %5 = vector.load %arg2[%c0_1, %c0_2] : memref<64x32xbf16, #tpu.memory_space<vmem>>, vector<64x32xbf16>
    %cst_3 = arith.constant dense<0.000000e+00> : vector<128x32xf32>
    %6 = tpu.matmul %4, %5, %cst_3 {dimension_numbers = #tpu.dot_dimension_numbers<[1], [0], [0], [1], [0, 0, 1, 1], [], []>} : vector<128x64xbf16>, vector<64x32xbf16>, vector<128x32xf32> -> vector<128x32xf32>
    %c0_4 = arith.constant 0 : index
    %c0_5 = arith.constant 0 : index
    %7 = vector.load %arg3[%c0_4, %c0_5] : memref<1x32xf32, #tpu.memory_space<vmem>>, vector<1x32xf32>
    %8 = vector.broadcast %7 : vector<1x32xf32> to vector<128x32xf32>
    %9 = arith.mulf %6, %8 : vector<128x32xf32>
    %c0_6 = arith.constant 0 : index
    %c0_7 = arith.constant 0 : index
    %10 = vector.load %arg4[%c0_6, %c0_7] : memref<1x32xf32, #tpu.memory_space<vmem>>, vector<1x32xf32>
    %11 = vector.broadcast %10 : vector<1x32xf32> to vector<128x32xf32>
    %12 = arith.addf %9, %11 : vector<128x32xf32>
    %13 = arith.truncf %12 : vector<128x32xf32> to vector<128x32xbf16>
    %c0_8 = arith.constant 0 : index
    %c0_9 = arith.constant 0 : index
    %14 = vector.load %arg5[%c0_8, %c0_9] : memref<128x32xbf16, #tpu.memory_space<vmem>>, vector<128x32xbf16>
    tpu.vector_store %arg5[%c0_8, %c0_9], %13 {strides = array<i32>} : memref<128x32xbf16, #tpu.memory_space<vmem>>, vector<128x32xbf16>,
    return
  }
  func.func @transform_0(%arg0: i32) -> (i32, i32) {
    %c0_i32 = arith.constant 0 : i32
    %c0_i32_0 = arith.constant 0 : i32
    return %arg0, %c0_i32 : i32, i32
  }
  func.func @transform_1(%arg0: i32) -> (i32, i32) {
    %c0_i32 = arith.constant 0 : i32
    %c0_i32_0 = arith.constant 0 : i32
    %c0_i32_1 = arith.constant 0 : i32
    return %c0_i32, %c0_i32_0 : i32, i32
  }
  func.func @transform_2(%arg0: i32) -> (i32, i32) {
    %c0_i32 = arith.constant 0 : i32
    %c0_i32_0 = arith.constant 0 : i32
    %c0_i32_1 = arith.constant 0 : i32
    return %c0_i32, %c0_i32_0 : i32, i32
  }
  func.func @transform_3(%arg0: i32) -> (i32, i32) {
    %c0_i32 = arith.constant 0 : i32
    %c0_i32_0 = arith.constant 0 : i32
    %c0_i32_1 = arith.constant 0 : i32
    return %c0_i32, %c0_i32_0 : i32, i32
  }
  func.func @transform_4(%arg0: i32) -> (i32, i32) {
    %c0_i32 = arith.constant 0 : i32
    %c0_i32_0 = arith.constant 0 : i32
    return %arg0, %c0_i32 : i32, i32
  }
}

module attributes {stable_mosaic.version = 11 : i64} {
  func.func @_matmul_bn_kernel(%arg0: i32, %arg1: memref<32x64xbf16, #tpu.memory_space<vmem>>, %arg2: memref<64x32xbf16, #tpu.memory_space<vmem>>, %arg3: memref<1x32xf32, #tpu.memory_space<vmem>>, %arg4: memref<1x32xf32, #tpu.memory_space<vmem>>, %arg5: memref<32x32xbf16, #tpu.memory_space<vmem>>) attributes {dimension_semantics = [#tpu.dimension_semantics<parallel>], iteration_bounds = array<i64: 1>, scalar_prefetch = 0 : i64, scratch_operands = 0 : i64, tpu.core_type = #tpu.core_type<tc>, window_params = [{transform_indices = @transform_0, window_bounds = array<i64: 32, 64>}, {pipeline_mode = #tpu.pipeline_mode<synchronous>, transform_indices = @transform_1, window_bounds = array<i64: 64, 32>}, {pipeline_mode = #tpu.pipeline_mode<synchronous>, transform_indices = @transform_2, window_bounds = array<i64: 1, 32>}, {pipeline_mode = #tpu.pipeline_mode<synchronous>, transform_indices = @transform_3, window_bounds = array<i64: 1, 32>}, {transform_indices = @transform_4, window_bounds = array<i64: 32, 32>}]} {
    %c0 = arith.constant 0 : index
    %c0_0 = arith.constant 0 : index
    %0 = vector.load %arg1[%c0, %c0_0] : memref<32x64xbf16, #tpu.memory_space<vmem>>, vector<32x64xbf16>
    %1 = arith.extf %0 : vector<32x64xbf16> to vector<32x64xf32>
    %cst = arith.constant 0.000000e+00 : f32
    %2 = vector.broadcast %cst : f32 to vector<32x64xf32>
    %3 = arith.maximumf %1, %2 : vector<32x64xf32>
    %4 = arith.truncf %3 : vector<32x64xf32> to vector<32x64xbf16>
    %c0_1 = arith.constant 0 : index
    %c0_2 = arith.constant 0 : index
    %5 = vector.load %arg2[%c0_1, %c0_2] : memref<64x32xbf16, #tpu.memory_space<vmem>>, vector<64x32xbf16>
    %cst_3 = arith.constant dense<0.000000e+00> : vector<32x32xf32>
    %6 = tpu.matmul %4, %5, %cst_3 {dimension_numbers = #tpu.dot_dimension_numbers<[1], [0], [0], [1], [0, 0, 1, 1], [], []>} : vector<32x64xbf16>, vector<64x32xbf16>, vector<32x32xf32> -> vector<32x32xf32>
    %c0_4 = arith.constant 0 : index
    %c0_5 = arith.constant 0 : index
    %7 = vector.load %arg3[%c0_4, %c0_5] : memref<1x32xf32, #tpu.memory_space<vmem>>, vector<1x32xf32>
    %8 = vector.broadcast %7 : vector<1x32xf32> to vector<32x32xf32>
    %9 = arith.mulf %6, %8 : vector<32x32xf32>
    %c0_6 = arith.constant 0 : index
    %c0_7 = arith.constant 0 : index
    %10 = vector.load %arg4[%c0_6, %c0_7] : memref<1x32xf32, #tpu.memory_space<vmem>>, vector<1x32xf32>
    %11 = vector.broadcast %10 : vector<1x32xf32> to vector<32x32xf32>
    %12 = arith.addf %9, %11 : vector<32x32xf32>
    %13 = arith.truncf %12 : vector<32x32xf32> to vector<32x32xbf16>
    %c0_8 = arith.constant 0 : index
    %c0_9 = arith.constant 0 : index
    %14 = vector.load %arg5[%c0_8, %c0_9] : memref<32x32xbf16, #tpu.memory_space<vmem>>, vector<32x32xbf16>
    tpu.vector_store %arg5[%c0_8, %c0_9], %13 {strides = array<i32>} : memref<32x32xbf16, #tpu.memory_space<vmem>>, vector<32x32xbf16>,
    return
  }
  func.func @transform_0(%arg0: i32) -> (i32, i32) {
    %c0_i32 = arith.constant 0 : i32
    %c0_i32_0 = arith.constant 0 : i32
    return %arg0, %c0_i32 : i32, i32
  }
  func.func @transform_1(%arg0: i32) -> (i32, i32) {
    %c0_i32 = arith.constant 0 : i32
    %c0_i32_0 = arith.constant 0 : i32
    %c0_i32_1 = arith.constant 0 : i32
    return %c0_i32, %c0_i32_0 : i32, i32
  }
  func.func @transform_2(%arg0: i32) -> (i32, i32) {
    %c0_i32 = arith.constant 0 : i32
    %c0_i32_0 = arith.constant 0 : i32
    %c0_i32_1 = arith.constant 0 : i32
    return %c0_i32, %c0_i32_0 : i32, i32
  }
  func.func @transform_3(%arg0: i32) -> (i32, i32) {
    %c0_i32 = arith.constant 0 : i32
    %c0_i32_0 = arith.constant 0 : i32
    %c0_i32_1 = arith.constant 0 : i32
    return %c0_i32, %c0_i32_0 : i32, i32
  }
  func.func @transform_4(%arg0: i32) -> (i32, i32) {
    %c0_i32 = arith.constant 0 : i32
    %c0_i32_0 = arith.constant 0 : i32
    return %arg0, %c0_i32 : i32, i32
  }
}

module attributes {stable_mosaic.version = 11 : i64} {
  func.func @_matmul_bn_kernel(%arg0: i32, %arg1: memref<32x288xbf16, #tpu.memory_space<vmem>>, %arg2: memref<288x32xbf16, #tpu.memory_space<vmem>>, %arg3: memref<1x32xf32, #tpu.memory_space<vmem>>, %arg4: memref<1x32xf32, #tpu.memory_space<vmem>>, %arg5: memref<32x32xbf16, #tpu.memory_space<vmem>>) attributes {dimension_semantics = [#tpu.dimension_semantics<parallel>], iteration_bounds = array<i64: 1>, scalar_prefetch = 0 : i64, scratch_operands = 0 : i64, tpu.core_type = #tpu.core_type<tc>, window_params = [{transform_indices = @transform_0, window_bounds = array<i64: 32, 288>}, {pipeline_mode = #tpu.pipeline_mode<synchronous>, transform_indices = @transform_1, window_bounds = array<i64: 288, 32>}, {pipeline_mode = #tpu.pipeline_mode<synchronous>, transform_indices = @transform_2, window_bounds = array<i64: 1, 32>}, {pipeline_mode = #tpu.pipeline_mode<synchronous>, transform_indices = @transform_3, window_bounds = array<i64: 1, 32>}, {transform_indices = @transform_4, window_bounds = array<i64: 32, 32>}]} {
    %c0 = arith.constant 0 : index
    %c0_0 = arith.constant 0 : index
    %0 = vector.load %arg1[%c0, %c0_0] : memref<32x288xbf16, #tpu.memory_space<vmem>>, vector<32x288xbf16>
    %1 = arith.extf %0 : vector<32x288xbf16> to vector<32x288xf32>
    %cst = arith.constant 0.000000e+00 : f32
    %2 = vector.broadcast %cst : f32 to vector<32x288xf32>
    %3 = arith.maximumf %1, %2 : vector<32x288xf32>
    %4 = arith.truncf %3 : vector<32x288xf32> to vector<32x288xbf16>
    %c0_1 = arith.constant 0 : index
    %c0_2 = arith.constant 0 : index
    %5 = vector.load %arg2[%c0_1, %c0_2] : memref<288x32xbf16, #tpu.memory_space<vmem>>, vector<288x32xbf16>
    %cst_3 = arith.constant dense<0.000000e+00> : vector<32x32xf32>
    %6 = tpu.matmul %4, %5, %cst_3 {dimension_numbers = #tpu.dot_dimension_numbers<[1], [0], [0], [1], [0, 0, 1, 1], [], []>} : vector<32x288xbf16>, vector<288x32xbf16>, vector<32x32xf32> -> vector<32x32xf32>
    %c0_4 = arith.constant 0 : index
    %c0_5 = arith.constant 0 : index
    %7 = vector.load %arg3[%c0_4, %c0_5] : memref<1x32xf32, #tpu.memory_space<vmem>>, vector<1x32xf32>
    %8 = vector.broadcast %7 : vector<1x32xf32> to vector<32x32xf32>
    %9 = arith.mulf %6, %8 : vector<32x32xf32>
    %c0_6 = arith.constant 0 : index
    %c0_7 = arith.constant 0 : index
    %10 = vector.load %arg4[%c0_6, %c0_7] : memref<1x32xf32, #tpu.memory_space<vmem>>, vector<1x32xf32>
    %11 = vector.broadcast %10 : vector<1x32xf32> to vector<32x32xf32>
    %12 = arith.addf %9, %11 : vector<32x32xf32>
    %13 = arith.truncf %12 : vector<32x32xf32> to vector<32x32xbf16>
    %c0_8 = arith.constant 0 : index
    %c0_9 = arith.constant 0 : index
    %14 = vector.load %arg5[%c0_8, %c0_9] : memref<32x32xbf16, #tpu.memory_space<vmem>>, vector<32x32xbf16>
    tpu.vector_store %arg5[%c0_8, %c0_9], %13 {strides = array<i32>} : memref<32x32xbf16, #tpu.memory_space<vmem>>, vector<32x32xbf16>,
    return
  }
  func.func @transform_0(%arg0: i32) -> (i32, i32) {
    %c0_i32 = arith.constant 0 : i32
    %c0_i32_0 = arith.constant 0 : i32
    return %arg0, %c0_i32 : i32, i32
  }
  func.func @transform_1(%arg0: i32) -> (i32, i32) {
    %c0_i32 = arith.constant 0 : i32
    %c0_i32_0 = arith.constant 0 : i32
    %c0_i32_1 = arith.constant 0 : i32
    return %c0_i32, %c0_i32_0 : i32, i32
  }
  func.func @transform_2(%arg0: i32) -> (i32, i32) {
    %c0_i32 = arith.constant 0 : i32
    %c0_i32_0 = arith.constant 0 : i32
    %c0_i32_1 = arith.constant 0 : i32
    return %c0_i32, %c0_i32_0 : i32, i32
  }
  func.func @transform_3(%arg0: i32) -> (i32, i32) {
    %c0_i32 = arith.constant 0 : i32
    %c0_i32_0 = arith.constant 0 : i32
    %c0_i32_1 = arith.constant 0 : i32
    return %c0_i32, %c0_i32_0 : i32, i32
  }
  func.func @transform_4(%arg0: i32) -> (i32, i32) {
    %c0_i32 = arith.constant 0 : i32
    %c0_i32_0 = arith.constant 0 : i32
    return %arg0, %c0_i32 : i32, i32
  }
}

module attributes {stable_mosaic.version = 11 : i64} {
  func.func @_pool3x3_taps_kernel(%arg0: i32, %arg1: memref<9x2x4x128xbf16, #tpu.memory_space<vmem>>, %arg2: memref<1x4x128xf32, #tpu.memory_space<vmem>>, %arg3: memref<1x1x128xf32, #tpu.memory_space<vmem>>, %arg4: memref<2x4x128xbf16, #tpu.memory_space<vmem>>) attributes {dimension_semantics = [#tpu.dimension_semantics<arbitrary>], iteration_bounds = array<i64: 1>, scalar_prefetch = 0 : i64, scratch_operands = 0 : i64, tpu.core_type = #tpu.core_type<tc>, window_params = [{pipeline_mode = #tpu.pipeline_mode<synchronous>, transform_indices = @transform_0, window_bounds = array<i64: 9, 2, 4, 128>}, {pipeline_mode = #tpu.pipeline_mode<synchronous>, transform_indices = @transform_1, window_bounds = array<i64: 1, 4, 128>}, {pipeline_mode = #tpu.pipeline_mode<synchronous>, transform_indices = @transform_2, window_bounds = array<i64: 1, 1, 128>}, {pipeline_mode = #tpu.pipeline_mode<synchronous>, transform_indices = @transform_3, window_bounds = array<i64: 2, 4, 128>}]} {
    %c0 = arith.constant 0 : index
    %c0_0 = arith.constant 0 : index
    %c0_1 = arith.constant 0 : index
    %c0_2 = arith.constant 0 : index
    %0 = vector.load %arg1[%c0, %c0_0, %c0_1, %c0_2] : memref<9x2x4x128xbf16, #tpu.memory_space<vmem>>, vector<1x2x4x128xbf16>
    %1 = vector.shape_cast %0 : vector<1x2x4x128xbf16> to vector<2x4x128xbf16>
    %2 = arith.extf %1 : vector<2x4x128xbf16> to vector<2x4x128xf32>
    %c1 = arith.constant 1 : index
    %c0_3 = arith.constant 0 : index
    %c0_4 = arith.constant 0 : index
    %c0_5 = arith.constant 0 : index
    %3 = vector.load %arg1[%c1, %c0_3, %c0_4, %c0_5] : memref<9x2x4x128xbf16, #tpu.memory_space<vmem>>, vector<1x2x4x128xbf16>
    %4 = vector.shape_cast %3 : vector<1x2x4x128xbf16> to vector<2x4x128xbf16>
    %5 = arith.extf %4 : vector<2x4x128xbf16> to vector<2x4x128xf32>
    %6 = arith.addf %2, %5 : vector<2x4x128xf32>
    %c2 = arith.constant 2 : index
    %c0_6 = arith.constant 0 : index
    %c0_7 = arith.constant 0 : index
    %c0_8 = arith.constant 0 : index
    %7 = vector.load %arg1[%c2, %c0_6, %c0_7, %c0_8] : memref<9x2x4x128xbf16, #tpu.memory_space<vmem>>, vector<1x2x4x128xbf16>
    %8 = vector.shape_cast %7 : vector<1x2x4x128xbf16> to vector<2x4x128xbf16>
    %9 = arith.extf %8 : vector<2x4x128xbf16> to vector<2x4x128xf32>
    %10 = arith.addf %6, %9 : vector<2x4x128xf32>
    %c3 = arith.constant 3 : index
    %c0_9 = arith.constant 0 : index
    %c0_10 = arith.constant 0 : index
    %c0_11 = arith.constant 0 : index
    %11 = vector.load %arg1[%c3, %c0_9, %c0_10, %c0_11] : memref<9x2x4x128xbf16, #tpu.memory_space<vmem>>, vector<1x2x4x128xbf16>
    %12 = vector.shape_cast %11 : vector<1x2x4x128xbf16> to vector<2x4x128xbf16>
    %13 = arith.extf %12 : vector<2x4x128xbf16> to vector<2x4x128xf32>
    %14 = arith.addf %10, %13 : vector<2x4x128xf32>
    %c4 = arith.constant 4 : index
    %c0_12 = arith.constant 0 : index
    %c0_13 = arith.constant 0 : index
    %c0_14 = arith.constant 0 : index
    %15 = vector.load %arg1[%c4, %c0_12, %c0_13, %c0_14] : memref<9x2x4x128xbf16, #tpu.memory_space<vmem>>, vector<1x2x4x128xbf16>
    %16 = vector.shape_cast %15 : vector<1x2x4x128xbf16> to vector<2x4x128xbf16>
    %17 = arith.extf %16 : vector<2x4x128xbf16> to vector<2x4x128xf32>
    %18 = arith.addf %14, %17 : vector<2x4x128xf32>
    %c5 = arith.constant 5 : index
    %c0_15 = arith.constant 0 : index
    %c0_16 = arith.constant 0 : index
    %c0_17 = arith.constant 0 : index
    %19 = vector.load %arg1[%c5, %c0_15, %c0_16, %c0_17] : memref<9x2x4x128xbf16, #tpu.memory_space<vmem>>, vector<1x2x4x128xbf16>
    %20 = vector.shape_cast %19 : vector<1x2x4x128xbf16> to vector<2x4x128xbf16>
    %21 = arith.extf %20 : vector<2x4x128xbf16> to vector<2x4x128xf32>
    %22 = arith.addf %18, %21 : vector<2x4x128xf32>
    %c6 = arith.constant 6 : index
    %c0_18 = arith.constant 0 : index
    %c0_19 = arith.constant 0 : index
    %c0_20 = arith.constant 0 : index
    %23 = vector.load %arg1[%c6, %c0_18, %c0_19, %c0_20] : memref<9x2x4x128xbf16, #tpu.memory_space<vmem>>, vector<1x2x4x128xbf16>
    %24 = vector.shape_cast %23 : vector<1x2x4x128xbf16> to vector<2x4x128xbf16>
    %25 = arith.extf %24 : vector<2x4x128xbf16> to vector<2x4x128xf32>
    %26 = arith.addf %22, %25 : vector<2x4x128xf32>
    %c7 = arith.constant 7 : index
    %c0_21 = arith.constant 0 : index
    %c0_22 = arith.constant 0 : index
    %c0_23 = arith.constant 0 : index
    %27 = vector.load %arg1[%c7, %c0_21, %c0_22, %c0_23] : memref<9x2x4x128xbf16, #tpu.memory_space<vmem>>, vector<1x2x4x128xbf16>
    %28 = vector.shape_cast %27 : vector<1x2x4x128xbf16> to vector<2x4x128xbf16>
    %29 = arith.extf %28 : vector<2x4x128xbf16> to vector<2x4x128xf32>
    %30 = arith.addf %26, %29 : vector<2x4x128xf32>
    %c8 = arith.constant 8 : index
    %c0_24 = arith.constant 0 : index
    %c0_25 = arith.constant 0 : index
    %c0_26 = arith.constant 0 : index
    %31 = vector.load %arg1[%c8, %c0_24, %c0_25, %c0_26] : memref<9x2x4x128xbf16, #tpu.memory_space<vmem>>, vector<1x2x4x128xbf16>
    %32 = vector.shape_cast %31 : vector<1x2x4x128xbf16> to vector<2x4x128xbf16>
    %33 = arith.extf %32 : vector<2x4x128xbf16> to vector<2x4x128xf32>
    %34 = arith.addf %30, %33 : vector<2x4x128xf32>
    %c0_27 = arith.constant 0 : index
    %c0_28 = arith.constant 0 : index
    %c0_29 = arith.constant 0 : index
    %35 = vector.load %arg2[%c0_27, %c0_28, %c0_29] : memref<1x4x128xf32, #tpu.memory_space<vmem>>, vector<1x4x128xf32>
    %36 = vector.broadcast %35 : vector<1x4x128xf32> to vector<2x4x128xf32>
    %37 = arith.mulf %34, %36 : vector<2x4x128xf32>
    %c0_30 = arith.constant 0 : index
    %c0_31 = arith.constant 0 : index
    %c0_32 = arith.constant 0 : index
    %38 = vector.load %arg3[%c0_30, %c0_31, %c0_32] : memref<1x1x128xf32, #tpu.memory_space<vmem>>, vector<1x1x128xf32>
    %39 = vector.broadcast %38 : vector<1x1x128xf32> to vector<2x4x128xf32>
    %40 = arith.addf %37, %39 : vector<2x4x128xf32>
    %41 = arith.truncf %40 : vector<2x4x128xf32> to vector<2x4x128xbf16>
    %c0_33 = arith.constant 0 : index
    %c0_34 = arith.constant 0 : index
    %c0_35 = arith.constant 0 : index
    %42 = vector.load %arg4[%c0_33, %c0_34, %c0_35] : memref<2x4x128xbf16, #tpu.memory_space<vmem>>, vector<2x4x128xbf16>
    tpu.vector_store %arg4[%c0_33, %c0_34, %c0_35], %41 {strides = array<i32>} : memref<2x4x128xbf16, #tpu.memory_space<vmem>>, vector<2x4x128xbf16>,
    return
  }
  func.func @transform_0(%arg0: i32) -> (i32, i32, i32, i32) {
    %c0_i32 = arith.constant 0 : i32
    %c0_i32_0 = arith.constant 0 : i32
    %c0_i32_1 = arith.constant 0 : i32
    %c0_i32_2 = arith.constant 0 : i32
    %c0_i32_3 = arith.constant 0 : i32
    return %c0_i32, %c0_i32_0, %c0_i32_1, %c0_i32_2 : i32, i32, i32, i32
  }
  func.func @transform_1(%arg0: i32) -> (i32, i32, i32) {
    %c0_i32 = arith.constant 0 : i32
    %c0_i32_0 = arith.constant 0 : i32
    %c0_i32_1 = arith.constant 0 : i32
    %c0_i32_2 = arith.constant 0 : i32
    return %c0_i32, %c0_i32_0, %c0_i32_1 : i32, i32, i32
  }
  func.func @transform_2(%arg0: i32) -> (i32, i32, i32) {
    %c0_i32 = arith.constant 0 : i32
    %c0_i32_0 = arith.constant 0 : i32
    %c0_i32_1 = arith.constant 0 : i32
    %c0_i32_2 = arith.constant 0 : i32
    return %c0_i32, %c0_i32_0, %c0_i32_1 : i32, i32, i32
  }
  func.func @transform_3(%arg0: i32) -> (i32, i32, i32) {
    %c0_i32 = arith.constant 0 : i32
    %c0_i32_0 = arith.constant 0 : i32
    %c0_i32_1 = arith.constant 0 : i32
    %c0_i32_2 = arith.constant 0 : i32
    return %c0_i32, %c0_i32_0, %c0_i32_1 : i32, i32, i32
  }
}

module attributes {stable_mosaic.version = 11 : i64} {
  func.func @_gap_fc_kernel(%arg0: i32, %arg1: memref<2x16x128xbf16, #tpu.memory_space<vmem>>, %arg2: memref<128x10xbf16, #tpu.memory_space<vmem>>, %arg3: memref<1x10xf32, #tpu.memory_space<vmem>>, %arg4: memref<2x10xf32, #tpu.memory_space<vmem>>) attributes {dimension_semantics = [#tpu.dimension_semantics<arbitrary>], iteration_bounds = array<i64: 1>, scalar_prefetch = 0 : i64, scratch_operands = 0 : i64, tpu.core_type = #tpu.core_type<tc>, window_params = [{pipeline_mode = #tpu.pipeline_mode<synchronous>, transform_indices = @transform_0, window_bounds = array<i64: 2, 16, 128>}, {pipeline_mode = #tpu.pipeline_mode<synchronous>, transform_indices = @transform_1, window_bounds = array<i64: 128, 10>}, {pipeline_mode = #tpu.pipeline_mode<synchronous>, transform_indices = @transform_2, window_bounds = array<i64: 1, 10>}, {pipeline_mode = #tpu.pipeline_mode<synchronous>, transform_indices = @transform_3, window_bounds = array<i64: 2, 10>}]} {
    %c0 = arith.constant 0 : index
    %c0_0 = arith.constant 0 : index
    %c0_1 = arith.constant 0 : index
    %0 = vector.load %arg1[%c0, %c0_0, %c0_1] : memref<2x16x128xbf16, #tpu.memory_space<vmem>>, vector<2x16x128xbf16>
    %1 = arith.extf %0 : vector<2x16x128xbf16> to vector<2x16x128xf32>
    %cst = arith.constant dense<0.000000e+00> : vector<2x128xf32>
    %2 = vector.multi_reduction <add>, %1, %cst [1] : vector<2x16x128xf32> to vector<2x128xf32>
    %cst_2 = arith.constant 6.250000e-02 : f32
    %3 = vector.broadcast %cst_2 : f32 to vector<2x128xf32>
    %4 = arith.mulf %2, %3 : vector<2x128xf32>
    %5 = arith.truncf %4 : vector<2x128xf32> to vector<2x128xbf16>
    %c0_3 = arith.constant 0 : index
    %c0_4 = arith.constant 0 : index
    %6 = vector.load %arg2[%c0_3, %c0_4] : memref<128x10xbf16, #tpu.memory_space<vmem>>, vector<128x10xbf16>
    %cst_5 = arith.constant dense<0.000000e+00> : vector<2x10xf32>
    %7 = tpu.matmul %5, %6, %cst_5 {dimension_numbers = #tpu.dot_dimension_numbers<[1], [0], [0], [1], [0, 0, 1, 1], [], []>} : vector<2x128xbf16>, vector<128x10xbf16>, vector<2x10xf32> -> vector<2x10xf32>
    %c0_6 = arith.constant 0 : index
    %c0_7 = arith.constant 0 : index
    %8 = vector.load %arg3[%c0_6, %c0_7] : memref<1x10xf32, #tpu.memory_space<vmem>>, vector<1x10xf32>
    %9 = vector.broadcast %8 : vector<1x10xf32> to vector<2x10xf32>
    %10 = arith.addf %7, %9 : vector<2x10xf32>
    %c0_8 = arith.constant 0 : index
    %c0_9 = arith.constant 0 : index
    %11 = vector.load %arg4[%c0_8, %c0_9] : memref<2x10xf32, #tpu.memory_space<vmem>>, vector<2x10xf32>
    tpu.vector_store %arg4[%c0_8, %c0_9], %10 {strides = array<i32>} : memref<2x10xf32, #tpu.memory_space<vmem>>, vector<2x10xf32>,
    return
  }
  func.func @transform_0(%arg0: i32) -> (i32, i32, i32) {
    %c0_i32 = arith.constant 0 : i32
    %c0_i32_0 = arith.constant 0 : i32
    %c0_i32_1 = arith.constant 0 : i32
    %c0_i32_2 = arith.constant 0 : i32
    return %c0_i32, %c0_i32_0, %c0_i32_1 : i32, i32, i32
  }
  func.func @transform_1(%arg0: i32) -> (i32, i32) {
    %c0_i32 = arith.constant 0 : i32
    %c0_i32_0 = arith.constant 0 : i32
    %c0_i32_1 = arith.constant 0 : i32
    return %c0_i32, %c0_i32_0 : i32, i32
  }
  func.func @transform_2(%arg0: i32) -> (i32, i32) {
    %c0_i32 = arith.constant 0 : i32
    %c0_i32_0 = arith.constant 0 : i32
    %c0_i32_1 = arith.constant 0 : i32
    return %c0_i32, %c0_i32_0 : i32, i32
  }
  func.func @transform_3(%arg0: i32) -> (i32, i32) {
    %c0_i32 = arith.constant 0 : i32
    %c0_i32_0 = arith.constant 0 : i32
    %c0_i32_1 = arith.constant 0 : i32
    return %c0_i32, %c0_i32_0 : i32, i32
  }
}

</mosaic_0001>

<llo_original>
// kernel: _lambda_.29
$region0: #{_lambda_.29}
  #allocation0 [shape = 'u32[]', space=smem, size = 0x4, offset = 0x4, fixed_abs, tag = 'smem constant byte address 0x4 - core index']
  #allocation1 [shape = 'u32[144,128]{1,0:T(1,128)}', space=vmem, size = 0x12000, scoped, tag = 'internal scratch']
  %s0 = inlined_call_operand.vmem [shape: bf16[512,16], index: 0, kind: input, shape index: {}]
  %s1 = inlined_call_operand.vmem [shape: bf16[16,8], index: 1, kind: input, shape index: {}]
  %s2 = inlined_call_operand.vmem [shape: f32[1,8], index: 2, kind: input, shape index: {}]
  %s3 = inlined_call_operand.vmem [shape: f32[1,8], index: 3, kind: input, shape index: {}]
  %s4 = inlined_call_operand.vmem [shape: bf16[512,8], index: 4, kind: output, shape index: {}]
  %s5 = sld [smem:[#allocation0]]
  $region49: #{_lambda_.29} parent=0
    _
  %s7 = ssub.s32 1, %s5
  %s8 = scalar_select 0, %s7, %s5
  loop: start=0, step=1, limit=4
  $region2: #{_lambda_.29} parent=0 // loop_pre_header
    _
  $region3: #{_lambda_.29} parent=0 // loop_header
    %s10 = sphi 0, %s14
    %p11 = scmp.ge.s32.totalorder %s10, 4
    %s20 = sphi 0, %s22
    %s23 = sphi 0, %s20
    %s24 = sphi 0, %s23
    %s40 = sphi 0, %s24
    %s44 = sphi 0, %s44
    %s46 = sphi 0, %s44
    %s47 = sphi 0, %s46
    %s61 = sphi 0, %s47
    %s65 = sphi 0, %s65
    %s67 = sphi 0, %s65
    %s68 = sphi 0, %s67
    %s82 = sphi 0, %s68
    %s86 = sphi 0, %s86
    %s88 = sphi 0, %s86
    %s89 = sphi 0, %s88
    %s103 = sphi 0, %s89
    %s109 = sphi 0, %s111
    %s112 = sphi 0, %s109
    %s113 = sphi 0, %s112
    %s129 = sphi 0, %s113
  $region4: #{_lambda_.29} parent=0 // loop_header_branch
    %13 = sbr.rel (%p11) target = $region8
  $region5: #{_lambda_.29} parent=0 // loop_body
    %s15 = ssub.s32 %s10, 1
    %s16 = ssub.s32 %s10, 2
    %s17 = sadd.s32 %s10, 1
    %s18 = ssub.s32 %s10, %s17
    %p19 = scmp.eq.s32.totalorder %s18, 0
    %s21 = sadd.s32 %s20, 1
    %s22 = scalar_select %p19, %s20, %s21
    %p25 = pneg %p19
    %p26 = scmp.eq.s32.totalorder %s10, 1
    %p27 = por %p25, %p26
    %p28 = scmp.ne.s32.totalorder %s20, %s23
    %p29 = scmp.eq.s32.totalorder %s10, 0
    %p30 = por %p28, %p29
    %p31 = scmp.ne.s32.totalorder %s20, %s23
    %p32 = scmp.eq.s32.totalorder %s15, 1
    %p33 = por %p31, %p32
    %p34 = scmp.ne.s32.totalorder %s23, %s24
    %p35 = scmp.eq.s32.totalorder %s15, 0
    %p36 = por %p34, %p35
    %p37 = scmp.ne.s32.totalorder %s23, %s24
    %p38 = scmp.eq.s32.totalorder %s16, 1
    %p39 = por %p37, %p38
    %p41 = scmp.ne.s32.totalorder %s24, %s40
    %p42 = scmp.eq.s32.totalorder %s16, 0
    %p43 = por %p41, %p42
    %s45 = sadd.s32 %s44, 1
    %p48 = scmp.eq.s32.totalorder %s10, 1
    %p49 = scmp.ne.s32.totalorder %s44, %s46
    %p50 = scmp.eq.s32.totalorder %s10, 0
    %p51 = por %p49, %p50
    %p52 = scmp.ne.s32.totalorder %s44, %s46
    %p53 = scmp.eq.s32.totalorder %s15, 1
    %p54 = por %p52, %p53
    %p55 = scmp.ne.s32.totalorder %s46, %s47
    %p56 = scmp.eq.s32.totalorder %s15, 0
    %p57 = por %p55, %p56
    %p58 = scmp.ne.s32.totalorder %s46, %s47
    %p59 = scmp.eq.s32.totalorder %s16, 1
    %p60 = por %p58, %p59
    %p62 = scmp.ne.s32.totalorder %s47, %s61
    %p63 = scmp.eq.s32.totalorder %s16, 0
    %p64 = por %p62, %p63
    %s66 = sadd.s32 %s65, 1
    %p69 = scmp.eq.s32.totalorder %s10, 1
    %p70 = scmp.ne.s32.totalorder %s65, %s67
    %p71 = scmp.eq.s32.totalorder %s10, 0
    %p72 = por %p70, %p71
    %p73 = scmp.ne.s32.totalorder %s65, %s67
    %p74 = scmp.eq.s32.totalorder %s15, 1
    %p75 = por %p73, %p74
    %p76 = scmp.ne.s32.totalorder %s67, %s68
    %p77 = scmp.eq.s32.totalorder %s15, 0
    %p78 = por %p76, %p77
    %p79 = scmp.ne.s32.totalorder %s67, %s68
    %p80 = scmp.eq.s32.totalorder %s16, 1
    %p81 = por %p79, %p80
    %p83 = scmp.ne.s32.totalorder %s68, %s82
    %p84 = scmp.eq.s32.totalorder %s16, 0
    %p85 = por %p83, %p84
    %s87 = sadd.s32 %s86, 1
    %p90 = scmp.eq.s32.totalorder %s10, 1
    %p91 = scmp.ne.s32.totalorder %s86, %s88
    %p92 = scmp.eq.s32.totalorder %s10, 0
    %p93 = por %p91, %p92
    %p94 = scmp.ne.s32.totalorder %s86, %s88
    %p95 = scmp.eq.s32.totalorder %s15, 1
    %p96 = por %p94, %p95
    %p97 = scmp.ne.s32.totalorder %s88, %s89
    %p98 = scmp.eq.s32.totalorder %s15, 0
    %p99 = por %p97, %p98
    %p100 = scmp.ne.s32.totalorder %s88, %s89
    %p101 = scmp.eq.s32.totalorder %s16, 1
    %p102 = por %p100, %p101
    %p104 = scmp.ne.s32.totalorder %s89, %s103
    %p105 = scmp.eq.s32.totalorder %s16, 0
    %p106 = por %p104, %p105
    %s107 = ssub.s32 %s10, %s17
    %p108 = scmp.eq.s32.totalorder %s107, 0
    %s110 = sadd.s32 %s109, 1
    %s111 = scalar_select %p108, %s109, %s110
    %p114 = pneg %p108
    %p115 = scmp.eq.s32.totalorder %s10, 1
    %p116 = por %p114, %p115
    %p117 = scmp.ne.s32.totalorder %s109, %s112
    %p118 = scmp.eq.s32.totalorder %s10, 0
    %p119 = por %p117, %p118
    %p120 = scmp.ne.s32.totalorder %s109, %s112
    %p121 = scmp.eq.s32.totalorder %s15, 1
    %p122 = por %p120, %p121
    %p123 = scmp.ne.s32.totalorder %s112, %s113
    %p124 = scmp.eq.s32.totalorder %s15, 0
    %p125 = por %p123, %p124
    %p126 = scmp.ne.s32.totalorder %s112, %s113
    %p127 = scmp.eq.s32.totalorder %s16, 1
    %p128 = por %p126, %p127
    %p130 = scmp.ne.s32.totalorder %s113, %s129
    %p131 = scmp.eq.s32.totalorder %s16, 0
    %p132 = por %p130, %p131
    %p133 = scmp.le.s32.totalorder 1, %s10
    %p134 = scmp.lt.s32.totalorder %s10, 3
    %p135 = pnand %p133, %p134
    %p136 = pneg %p135
    // Predicated region
    $region9: #{_lambda_.29} parent=5 // pred_check
      _
    $region10: #{_lambda_.29} parent=5 // pred_check_branch
      %138 = sbr.rel (%p135) target = $region12
    $region11: #{_lambda_.29} parent=5 // pred_region
      %s139 = ssub.s32 %s10, 1
      // Predicated region
      $region13: #{_lambda_.29} parent=11 // pred_check
        %p140 = pneg %p57
      $region14: #{_lambda_.29} parent=11 // pred_check_branch
        %142 = sbr.rel (%p140) target = $region16
      $region15: #{_lambda_.29} parent=11 // pred_region
        _
      $region16: #{_lambda_.29} parent=11 // pred_fallthru
        _
      // Predicated region
      $region17: #{_lambda_.29} parent=11 // pred_check
        %p143 = pneg %p78
      $region18: #{_lambda_.29} parent=11 // pred_check_branch
        %145 = sbr.rel (%p143) target = $region20
      $region19: #{_lambda_.29} parent=11 // pred_region
        _
      $region20: #{_lambda_.29} parent=11 // pred_fallthru
        _
      // Predicated region
      $region21: #{_lambda_.29} parent=11 // pred_check
        %p146 = pneg %p99
      $region22: #{_lambda_.29} parent=11 // pred_check_branch
        %148 = sbr.rel (%p146) target = $region24
      $region23: #{_lambda_.29} parent=11 // pred_region
        _
      $region24: #{_lambda_.29} parent=11 // pred_fallthru
        _
    $region12: #{_lambda_.29} parent=5 // pred_fallthru
      _
    %p149 = scmp.lt.s32.totalorder %s10, 2
    // Predicated region
    $region25: #{_lambda_.29} parent=5 // pred_check
      %p150 = pneg %p149
    $region26: #{_lambda_.29} parent=5 // pred_check_branch
      %152 = sbr.rel (%p150) target = $region28
    $region27: #{_lambda_.29} parent=5 // pred_region
      // Predicated region
      $region29: #{_lambda_.29} parent=27 // pred_check
        %p153 = pneg %p30
      $region30: #{_lambda_.29} parent=27 // pred_check_branch
        %155 = sbr.rel (%p153) target = $region32
      $region31: #{_lambda_.29} parent=27 // pred_region
        %s156 = smul.u32 32, %s10
        %p157 = scmp.lt.s32.totalorder %s156, 63
        %s158 = scalar_select %p157, %s156, 63
        %s159 = smul.addr %s158, 4
        %s160 = scalar_lea.vmem %s0, %s159
        %s161 = smul.u32 32, %s10
      $region32: #{_lambda_.29} parent=27 // pred_fallthru
        _
    $region28: #{_lambda_.29} parent=5 // pred_fallthru
      _
    %p162 = scmp.le.s32.totalorder 1, %s10
    %p163 = scmp.lt.s32.totalorder %s10, 3
    %p164 = pnand %p162, %p163
    %p165 = pneg %p164
    // Predicated region
    $region33: #{_lambda_.29} parent=5 // pred_check
      _
    $region34: #{_lambda_.29} parent=5 // pred_check_branch
      %167 = sbr.rel (%p164) target = $region36
    $region35: #{_lambda_.29} parent=5 // pred_region
      %s168 = ssub.s32 %s10, 1
      %s169 = smul.u32 32, %s15
      %p170 = scmp.lt.s32.totalorder %s169, 63
      %s171 = scalar_select %p170, %s169, 63
      %s172 = smul.addr %s171, 4
      %s173 = scalar_lea.vmem %s0, %s172
      %p174 = pneg %p36
      %p175 = pneg %p33
      %p176 = pneg %p57
      %p177 = pneg %p54
      %p178 = pneg %p78
      %p179 = pneg %p75
      %p180 = pneg %p99
      %p181 = pneg %p96
      %p182 = pneg %p125
      %p183 = pneg %p122
      %s184 = smul.u32 32, %s15
      %p185 = scmp.lt.s32.totalorder %s184, 63
      %s186 = scalar_select %p185, %s184, 63
      %s187 = smul.addr %s186, 4
      %s188 = scalar_lea.vmem %s4, %s187
      %s189 = smul.u32 32, %s15
      %p190 = scmp.lt.s32.totalorder %s189, 63
      %s191 = scalar_select %p190, %s189, 63
      %s192 = smul.addr %s191, 4
      %s193 = scalar_lea.vmem %s0, %s192
      %s194 = smul.u32 32, %s15
      %s195 = smul.u32 32, %s15
      %p196 = scmp.lt.s32.totalorder %s195, 63
      %s197 = scalar_select %p196, %s195, 63
      %s198 = smul.addr %s197, 4
      %s199 = scalar_lea.vmem %s4, %s198
      %s200 = smul.u32 32, %s15
      %v202 = vld [vmem:[%s193] sm:$0xf]
      %v203 = vld [vmem:[%s193 + $0x4] sm:$0xf]
      %v204 = vld [vmem:[%s193 + $0x8] sm:$0xf]
      %v205 = vld [vmem:[%s193 + $0xc] sm:$0xf]
      %v206 = vld [vmem:[%s193 + $0x10] sm:$0xf]
      %v207 = vld [vmem:[%s193 + $0x14] sm:$0xf]
      %v208 = vld [vmem:[%s193 + $0x18] sm:$0xf]
      %v209 = vld [vmem:[%s193 + $0x1c] sm:$0xf]
      %v210 = vld [vmem:[%s193 + $0x20] sm:$0xf]
      %v211 = vld [vmem:[%s193 + $0x24] sm:$0xf]
      %v212 = vld [vmem:[%s193 + $0x28] sm:$0xf]
      %v213 = vld [vmem:[%s193 + $0x2c] sm:$0xf]
      %v214 = vld [vmem:[%s193 + $0x30] sm:$0xf]
      %v215 = vld [vmem:[%s193 + $0x34] sm:$0xf]
      %v216 = vld [vmem:[%s193 + $0x38] sm:$0xf]
      %v217 = vld [vmem:[%s193 + $0x3c] sm:$0xf]
      %v218 = vld [vmem:[%s193 + $0x40] sm:$0xf]
      %v219 = vld [vmem:[%s193 + $0x44] sm:$0xf]
      %v220 = vld [vmem:[%s193 + $0x48] sm:$0xf]
      %v221 = vld [vmem:[%s193 + $0x4c] sm:$0xf]
      %v222 = vld [vmem:[%s193 + $0x50] sm:$0xf]
      %v223 = vld [vmem:[%s193 + $0x54] sm:$0xf]
      %v224 = vld [vmem:[%s193 + $0x58] sm:$0xf]
      %v225 = vld [vmem:[%s193 + $0x5c] sm:$0xf]
      %v226 = vld [vmem:[%s193 + $0x60] sm:$0xf]
      %v227 = vld [vmem:[%s193 + $0x64] sm:$0xf]
      %v228 = vld [vmem:[%s193 + $0x68] sm:$0xf]
      %v229 = vld [vmem:[%s193 + $0x6c] sm:$0xf]
      %v230 = vld [vmem:[%s193 + $0x70] sm:$0xf]
      %v231 = vld [vmem:[%s193 + $0x74] sm:$0xf]
      %v232 = vld [vmem:[%s193 + $0x78] sm:$0xf]
      %v233 = vld [vmem:[%s193 + $0x7c] sm:$0xf]
      %v234 = vunpack.c.l.bf16 %v202
      %v235 = vunpack.c.l.bf16 %v203
      %v236 = vunpack.c.l.bf16 %v204
      %v237 = vunpack.c.l.bf16 %v205
      %v238 = vunpack.c.l.bf16 %v206
      %v239 = vunpack.c.l.bf16 %v207
      %v240 = vunpack.c.l.bf16 %v208
      %v241 = vunpack.c.l.bf16 %v209
      %v242 = vunpack.c.l.bf16 %v210
      %v243 = vunpack.c.l.bf16 %v211
      %v244 = vunpack.c.l.bf16 %v212
      %v245 = vunpack.c.l.bf16 %v213
      %v246 = vunpack.c.l.bf16 %v214
      %v247 = vunpack.c.l.bf16 %v215
      %v248 = vunpack.c.l.bf16 %v216
      %v249 = vunpack.c.l.bf16 %v217
      %v250 = vunpack.c.l.bf16 %v218
      %v251 = vunpack.c.l.bf16 %v219
      %v252 = vunpack.c.l.bf16 %v220
      %v253 = vunpack.c.l.bf16 %v221
      %v254 = vunpack.c.l.bf16 %v222
      %v255 = vunpack.c.l.bf16 %v223
      %v256 = vunpack.c.l.bf16 %v224
      %v257 = vunpack.c.l.bf16 %v225
      %v258 = vunpack.c.l.bf16 %v226
      %v259 = vunpack.c.l.bf16 %v227
      %v260 = vunpack.c.l.bf16 %v228
      %v261 = vunpack.c.l.bf16 %v229
      %v262 = vunpack.c.l.bf16 %v230
      %v263 = vunpack.c.l.bf16 %v231
      %v264 = vunpack.c.l.bf16 %v232
      %v265 = vunpack.c.l.bf16 %v233
      %v266 = vmax.f32 %v234, 0.0
      %v267 = vmax.f32 %v235, 0.0
      %v268 = vmax.f32 %v236, 0.0
      %v269 = vmax.f32 %v237, 0.0
      %v270 = vmax.f32 %v238, 0.0
      %v271 = vmax.f32 %v239, 0.0
      %v272 = vmax.f32 %v240, 0.0
      %v273 = vmax.f32 %v241, 0.0
      %v274 = vmax.f32 %v242, 0.0
      %v275 = vmax.f32 %v243, 0.0
      %v276 = vmax.f32 %v244, 0.0
      %v277 = vmax.f32 %v245, 0.0
      %v278 = vmax.f32 %v246, 0.0
      %v279 = vmax.f32 %v247, 0.0
      %v280 = vmax.f32 %v248, 0.0
      %v281 = vmax.f32 %v249, 0.0
      %v282 = vmax.f32 %v250, 0.0
      %v283 = vmax.f32 %v251, 0.0
      %v284 = vmax.f32 %v252, 0.0
      %v285 = vmax.f32 %v253, 0.0
      %v286 = vmax.f32 %v254, 0.0
      %v287 = vmax.f32 %v255, 0.0
      %v288 = vmax.f32 %v256, 0.0
      %v289 = vmax.f32 %v257, 0.0
      %v290 = vmax.f32 %v258, 0.0
      %v291 = vmax.f32 %v259, 0.0
      %v292 = vmax.f32 %v260, 0.0
      %v293 = vmax.f32 %v261, 0.0
      %v294 = vmax.f32 %v262, 0.0
      %v295 = vmax.f32 %v263, 0.0
      %v296 = vmax.f32 %v264, 0.0
      %v297 = vmax.f32 %v265, 0.0
      %v298 = vpack.c.bf16 %v267, %v266
      %v299 = vpack.c.bf16 %v269, %v268
      %v300 = vpack.c.bf16 %v271, %v270
      %v301 = vpack.c.bf16 %v273, %v272
      %v302 = vpack.c.bf16 %v275, %v274
      %v303 = vpack.c.bf16 %v277, %v276
      %v304 = vpack.c.bf16 %v279, %v278
      %v305 = vpack.c.bf16 %v281, %v280
      %v306 = vpack.c.bf16 %v283, %v282
      %v307 = vpack.c.bf16 %v285, %v284
      %v308 = vpack.c.bf16 %v287, %v286
      %v309 = vpack.c.bf16 %v289, %v288
      %v310 = vpack.c.bf16 %v291, %v290
      %v311 = vpack.c.bf16 %v293, %v292
      %v312 = vpack.c.bf16 %v295, %v294
      %v313 = vpack.c.bf16 %v297, %v296
      %v314 = vld [vmem:[%s1] sm:$0xf]
      %v315 = vld [vmem:[%s1 + $0x4] sm:$0xf]
      %v318 = vunpack.c.l.b16 %v314
      %v319 = vunpack.c.l.b16 %v315
      %v320 = vpack.c.b16 %v319, %v318
      %vm322 = vcmask 130048
      %v324 = vsel %vm322, %v298, 0
      %v327 = vsel %vm322, %v299, 0
      %v330 = vsel %vm322, %v300, 0
      %v333 = vsel %vm322, %v301, 0
      %v336 = vsel %vm322, %v302, 0
      %v339 = vsel %vm322, %v303, 0
      %v342 = vsel %vm322, %v304, 0
      %v345 = vsel %vm322, %v305, 0
      %v348 = vsel %vm322, %v306, 0
      %v351 = vsel %vm322, %v307, 0
      %v354 = vsel %vm322, %v308, 0
      %v357 = vsel %vm322, %v309, 0
      %v360 = vsel %vm322, %v310, 0
      %v363 = vsel %vm322, %v311, 0
      %v366 = vsel %vm322, %v312, 0
      %v369 = vsel %vm322, %v313, 0
      %371 = vmatprep.subr.bf16.mxu0 0
      %372 = vmatpush1.bf16.msra.mxu0 0
      %373 = vmatprep.subr.bf16.mxu0 0
      %374 = vmatpush1.bf16.msra.mxu0 0
      %375 = vmatprep.subr.bf16.mxu0 0
      %376 = vmatpush1.bf16.msra.mxu0 0
      %377 = vmatprep.subr.bf16.mxu0 0
      %378 = vmatpush1.bf16.msra.mxu0 0
      %379 = vmatprep.subr.bf16.mxu0 0
      %380 = vmatpush1.bf16.msra.mxu0 0
      %381 = vmatprep.subr.bf16.mxu0 0
      %382 = vmatpush1.bf16.msra.mxu0 0
      %383 = vmatprep.subr.bf16.mxu0 0
      %384 = vmatpush1.bf16.msra.mxu0 0
      %385 = vmatprep.subr.bf16.mxu0 0
      %386 = vmatpush1.bf16.msra.mxu0 %v320
      %387 = vmatprep.subr.bf16.mxu0 0
      %388 = vmatpush2.bf16.msra.mxu0 0
      %389 = vmatprep.subr.bf16.mxu0 0
      %390 = vmatpush2.bf16.msra.mxu0 0
      %391 = vmatprep.subr.bf16.mxu0 0
      %392 = vmatpush2.bf16.msra.mxu0 0
      %393 = vmatprep.subr.bf16.mxu0 0
      %394 = vmatpush2.bf16.msra.mxu0 0
      %395 = vmatprep.subr.bf16.mxu0 0
      %396 = vmatpush2.bf16.msra.mxu0 0
      %397 = vmatprep.subr.bf16.mxu0 0
      %398 = vmatpush2.bf16.msra.mxu0 0
      %399 = vmatprep.subr.bf16.mxu0 0
      %400 = vmatpush2.bf16.msra.mxu0 0
      %401 = vmatprep.subr.bf16.mxu0 0
      %402 = vmatpush2.bf16.msra.mxu0 0
      %403 = vmatprep.mubr.bf16.mxu0 0
      %404 = vmatmul.mubr.bf16.gmra.mxu0 %v324
      %v405 = vpop.f32.mrf.mxu0
      %v406 = vadd.f32 0.0, %v405
      %v407 = vpop.f32.mrf.mxu0
      %v408 = vpop.f32.mrf.mxu0
      %v409 = vadd.f32 0.0, %v408
      %v410 = vpop.f32.mrf.mxu0
      %411 = vmatprep.mubr.bf16.mxu0 0
      %412 = vmatmul.mubr.bf16.gmra.mxu0 %v327
      %v413 = vpop.f32.mrf.mxu0
      %v414 = vadd.f32 0.0, %v413
      %v415 = vpop.f32.mrf.mxu0
      %v416 = vpop.f32.mrf.mxu0
      %v417 = vadd.f32 0.0, %v416
      %v418 = vpop.f32.mrf.mxu0
      %419 = vmatprep.mubr.bf16.mxu0 0
      %420 = vmatmul.mubr.bf16.gmra.mxu0 %v330
      %v421 = vpop.f32.mrf.mxu0
      %v422 = vadd.f32 0.0, %v421
      %v423 = vpop.f32.mrf.mxu0
      %v424 = vpop.f32.mrf.mxu0
      %v425 = vadd.f32 0.0, %v424
      %v426 = vpop.f32.mrf.mxu0
      %427 = vmatprep.mubr.bf16.mxu0 0
      %428 = vmatmul.mubr.bf16.gmra.mxu0 %v333
      %v429 = vpop.f32.mrf.mxu0
      %v430 = vadd.f32 0.0, %v429
      %v431 = vpop.f32.mrf.mxu0
      %v432 = vpop.f32.mrf.mxu0
      %v433 = vadd.f32 0.0, %v432
      %v434 = vpop.f32.mrf.mxu0
      %435 = vmatprep.mubr.bf16.mxu0 0
      %436 = vmatmul.mubr.bf16.gmra.mxu0 %v336
      %v437 = vpop.f32.mrf.mxu0
      %v438 = vadd.f32 0.0, %v437
      %v439 = vpop.f32.mrf.mxu0
      %v440 = vpop.f32.mrf.mxu0
      %v441 = vadd.f32 0.0, %v440
      %v442 = vpop.f32.mrf.mxu0
      %443 = vmatprep.mubr.bf16.mxu0 0
      %444 = vmatmul.mubr.bf16.gmra.mxu0 %v339
      %v445 = vpop.f32.mrf.mxu0
      %v446 = vadd.f32 0.0, %v445
      %v447 = vpop.f32.mrf.mxu0
      %v448 = vpop.f32.mrf.mxu0
      %v449 = vadd.f32 0.0, %v448
      %v450 = vpop.f32.mrf.mxu0
      %451 = vmatprep.mubr.bf16.mxu0 0
      %452 = vmatmul.mubr.bf16.gmra.mxu0 %v342
      %v453 = vpop.f32.mrf.mxu0
      %v454 = vadd.f32 0.0, %v453
      %v455 = vpop.f32.mrf.mxu0
      %v456 = vpop.f32.mrf.mxu0
      %v457 = vadd.f32 0.0, %v456
      %v458 = vpop.f32.mrf.mxu0
      %459 = vmatprep.mubr.bf16.mxu0 0
      %460 = vmatmul.mubr.bf16.gmra.mxu0 %v345
      %v461 = vpop.f32.mrf.mxu0
      %v462 = vadd.f32 0.0, %v461
      %v463 = vpop.f32.mrf.mxu0
      %v464 = vpop.f32.mrf.mxu0
      %v465 = vadd.f32 0.0, %v464
      %v466 = vpop.f32.mrf.mxu0
      %467 = vmatprep.mubr.bf16.mxu0 0
      %468 = vmatmul.mubr.bf16.gmra.mxu0 %v348
      %v469 = vpop.f32.mrf.mxu0
      %v470 = vadd.f32 0.0, %v469
      %v471 = vpop.f32.mrf.mxu0
      %v472 = vpop.f32.mrf.mxu0
      %v473 = vadd.f32 0.0, %v472
      %v474 = vpop.f32.mrf.mxu0
      %475 = vmatprep.mubr.bf16.mxu0 0
      %476 = vmatmul.mubr.bf16.gmra.mxu0 %v351
      %v477 = vpop.f32.mrf.mxu0
      %v478 = vadd.f32 0.0, %v477
      %v479 = vpop.f32.mrf.mxu0
      %v480 = vpop.f32.mrf.mxu0
      %v481 = vadd.f32 0.0, %v480
      %v482 = vpop.f32.mrf.mxu0
      %483 = vmatprep.mubr.bf16.mxu0 0
      %484 = vmatmul.mubr.bf16.gmra.mxu0 %v354
      %v485 = vpop.f32.mrf.mxu0
      %v486 = vadd.f32 0.0, %v485
      %v487 = vpop.f32.mrf.mxu0
      %v488 = vpop.f32.mrf.mxu0
      %v489 = vadd.f32 0.0, %v488
      %v490 = vpop.f32.mrf.mxu0
      %491 = vmatprep.mubr.bf16.mxu0 0
      %492 = vmatmul.mubr.bf16.gmra.mxu0 %v357
      %v493 = vpop.f32.mrf.mxu0
      %v494 = vadd.f32 0.0, %v493
      %v495 = vpop.f32.mrf.mxu0
      %v496 = vpop.f32.mrf.mxu0
      %v497 = vadd.f32 0.0, %v496
      %v498 = vpop.f32.mrf.mxu0
      %499 = vmatprep.mubr.bf16.mxu0 0
      %500 = vmatmul.mubr.bf16.gmra.mxu0 %v360
      %v501 = vpop.f32.mrf.mxu0
      %v502 = vadd.f32 0.0, %v501
      %v503 = vpop.f32.mrf.mxu0
      %v504 = vpop.f32.mrf.mxu0
      %v505 = vadd.f32 0.0, %v504
      %v506 = vpop.f32.mrf.mxu0
      %507 = vmatprep.mubr.bf16.mxu0 0
      %508 = vmatmul.mubr.bf16.gmra.mxu0 %v363
      %v509 = vpop.f32.mrf.mxu0
      %v510 = vadd.f32 0.0, %v509
      %v511 = vpop.f32.mrf.mxu0
      %v512 = vpop.f32.mrf.mxu0
      %v513 = vadd.f32 0.0, %v512
      %v514 = vpop.f32.mrf.mxu0
      %515 = vmatprep.mubr.bf16.mxu0 0
      %516 = vmatmul.mubr.bf16.gmra.mxu0 %v366
      %v517 = vpop.f32.mrf.mxu0
      %v518 = vadd.f32 0.0, %v517
      %v519 = vpop.f32.mrf.mxu0
      %v520 = vpop.f32.mrf.mxu0
      %v521 = vadd.f32 0.0, %v520
      %v522 = vpop.f32.mrf.mxu0
      %523 = vmatprep.mubr.bf16.mxu0 0
      %524 = vmatmul.mubr.bf16.gmra.mxu0 %v369
      %v525 = vpop.f32.mrf.mxu0
      %v526 = vadd.f32 0.0, %v525
      %v527 = vpop.f32.mrf.mxu0
      %v528 = vpop.f32.mrf.mxu0
      %v529 = vadd.f32 0.0, %v528
      %v530 = vpop.f32.mrf.mxu0
      %531 = vdwg.mxu0
      %v532 = vld [vmem:[%s2] sm:$0x1]
      %v534 = vlaneseq
      %v535 = vshrl.u32 %v534, 7
      %v536 = vsub.s32 0, %v535
      %v537 = vrot.slane %v532, %v536
      %v539 = vmul.f32 %v406, %v537
      %v540 = vmul.f32 %v409, %v537
      %v541 = vmul.f32 %v414, %v537
      %v542 = vmul.f32 %v417, %v537
      %v543 = vmul.f32 %v422, %v537
      %v544 = vmul.f32 %v425, %v537
      %v545 = vmul.f32 %v430, %v537
      %v546 = vmul.f32 %v433, %v537
      %v547 = vmul.f32 %v438, %v537
      %v548 = vmul.f32 %v441, %v537
      %v549 = vmul.f32 %v446, %v537
      %v550 = vmul.f32 %v449, %v537
      %v551 = vmul.f32 %v454, %v537
      %v552 = vmul.f32 %v457, %v537
      %v553 = vmul.f32 %v462, %v537
      %v554 = vmul.f32 %v465, %v537
      %v555 = vmul.f32 %v470, %v537
      %v556 = vmul.f32 %v473, %v537
      %v557 = vmul.f32 %v478, %v537
      %v558 = vmul.f32 %v481, %v537
      %v559 = vmul.f32 %v486, %v537
      %v560 = vmul.f32 %v489, %v537
      %v561 = vmul.f32 %v494, %v537
      %v562 = vmul.f32 %v497, %v537
      %v563 = vmul.f32 %v502, %v537
      %v564 = vmul.f32 %v505, %v537
      %v565 = vmul.f32 %v510, %v537
      %v566 = vmul.f32 %v513, %v537
      %v567 = vmul.f32 %v518, %v537
      %v568 = vmul.f32 %v521, %v537
      %v569 = vmul.f32 %v526, %v537
      %v570 = vmul.f32 %v529, %v537
      %v571 = vld [vmem:[%s3] sm:$0x1]
      %v573 = vlaneseq
      %v574 = vshrl.u32 %v573, 7
      %v575 = vsub.s32 0, %v574
      %v576 = vrot.slane %v571, %v575
      %v578 = vadd.f32 %v539, %v576
      %v579 = vadd.f32 %v540, %v576
      %v580 = vadd.f32 %v541, %v576
      %v581 = vadd.f32 %v542, %v576
      %v582 = vadd.f32 %v543, %v576
      %v583 = vadd.f32 %v544, %v576
      %v584 = vadd.f32 %v545, %v576
      %v585 = vadd.f32 %v546, %v576
      %v586 = vadd.f32 %v547, %v576
      %v587 = vadd.f32 %v548, %v576
      %v588 = vadd.f32 %v549, %v576
      %v589 = vadd.f32 %v550, %v576
      %v590 = vadd.f32 %v551, %v576
      %v591 = vadd.f32 %v552, %v576
      %v592 = vadd.f32 %v553, %v576
      %v593 = vadd.f32 %v554, %v576
      %v594 = vadd.f32 %v555, %v576
      %v595 = vadd.f32 %v556, %v576
      %v596 = vadd.f32 %v557, %v576
      %v597 = vadd.f32 %v558, %v576
      %v598 = vadd.f32 %v559, %v576
      %v599 = vadd.f32 %v560, %v576
      %v600 = vadd.f32 %v561, %v576
      %v601 = vadd.f32 %v562, %v576
      %v602 = vadd.f32 %v563, %v576
      %v603 = vadd.f32 %v564, %v576
      %v604 = vadd.f32 %v565, %v576
      %v605 = vadd.f32 %v566, %v576
      %v606 = vadd.f32 %v567, %v576
      %v607 = vadd.f32 %v568, %v576
      %v608 = vadd.f32 %v569, %v576
      %v609 = vadd.f32 %v570, %v576
      %v610 = vpack.c.bf16 %v579, %v578
      %v611 = vpack.c.bf16 %v581, %v580
      %v612 = vpack.c.bf16 %v583, %v582
      %v613 = vpack.c.bf16 %v585, %v584
      %v614 = vpack.c.bf16 %v587, %v586
      %v615 = vpack.c.bf16 %v589, %v588
      %v616 = vpack.c.bf16 %v591, %v590
      %v617 = vpack.c.bf16 %v593, %v592
      %v618 = vpack.c.bf16 %v595, %v594
      %v619 = vpack.c.bf16 %v597, %v596
      %v620 = vpack.c.bf16 %v599, %v598
      %v621 = vpack.c.bf16 %v601, %v600
      %v622 = vpack.c.bf16 %v603, %v602
      %v623 = vpack.c.bf16 %v605, %v604
      %v624 = vpack.c.bf16 %v607, %v606
      %v625 = vpack.c.bf16 %v609, %v608
      %v642 = vunpack.c.l.b16 %v610
      %v643 = vunpack.c.h.b16 %v610
      %v644 = vunpack.c.l.b16 %v611
      %v645 = vunpack.c.h.b16 %v611
      %v646 = vunpack.c.l.b16 %v612
      %v647 = vunpack.c.h.b16 %v612
      %v648 = vunpack.c.l.b16 %v613
      %v649 = vunpack.c.h.b16 %v613
      %v650 = vunpack.c.l.b16 %v614
      %v651 = vunpack.c.h.b16 %v614
      %v652 = vunpack.c.l.b16 %v615
      %v653 = vunpack.c.h.b16 %v615
      %v654 = vunpack.c.l.b16 %v616
      %v655 = vunpack.c.h.b16 %v616
      %v656 = vunpack.c.l.b16 %v617
      %v657 = vunpack.c.h.b16 %v617
      %v658 = vunpack.c.l.b16 %v618
      %v659 = vunpack.c.h.b16 %v618
      %v660 = vunpack.c.l.b16 %v619
      %v661 = vunpack.c.h.b16 %v619
      %v662 = vunpack.c.l.b16 %v620
      %v663 = vunpack.c.h.b16 %v620
      %v664 = vunpack.c.l.b16 %v621
      %v665 = vunpack.c.h.b16 %v621
      %v666 = vunpack.c.l.b16 %v622
      %v667 = vunpack.c.h.b16 %v622
      %v668 = vunpack.c.l.b16 %v623
      %v669 = vunpack.c.h.b16 %v623
      %v670 = vunpack.c.l.b16 %v624
      %v671 = vunpack.c.h.b16 %v624
      %v672 = vunpack.c.l.b16 %v625
      %v673 = vunpack.c.h.b16 %v625
      %v674 = vpack.c.b16 %v642, %v642
      %v675 = vpack.c.b16 %v643, %v643
      %v676 = vpack.c.b16 %v644, %v644
      %v677 = vpack.c.b16 %v645, %v645
      %v678 = vpack.c.b16 %v646, %v646
      %v679 = vpack.c.b16 %v647, %v647
      %v680 = vpack.c.b16 %v648, %v648
      %v681 = vpack.c.b16 %v649, %v649
      %v682 = vpack.c.b16 %v650, %v650
      %v683 = vpack.c.b16 %v651, %v651
      %v684 = vpack.c.b16 %v652, %v652
      %v685 = vpack.c.b16 %v653, %v653
      %v686 = vpack.c.b16 %v654, %v654
      %v687 = vpack.c.b16 %v655, %v655
      %v688 = vpack.c.b16 %v656, %v656
      %v689 = vpack.c.b16 %v657, %v657
      %v690 = vpack.c.b16 %v658, %v658
      %v691 = vpack.c.b16 %v659, %v659
      %v692 = vpack.c.b16 %v660, %v660
      %v693 = vpack.c.b16 %v661, %v661
      %v694 = vpack.c.b16 %v662, %v662
      %v695 = vpack.c.b16 %v663, %v663
      %v696 = vpack.c.b16 %v664, %v664
      %v697 = vpack.c.b16 %v665, %v665
      %v698 = vpack.c.b16 %v666, %v666
      %v699 = vpack.c.b16 %v667, %v667
      %v700 = vpack.c.b16 %v668, %v668
      %v701 = vpack.c.b16 %v669, %v669
      %v702 = vpack.c.b16 %v670, %v670
      %v703 = vpack.c.b16 %v671, %v671
      %v704 = vpack.c.b16 %v672, %v672
      %v705 = vpack.c.b16 %v673, %v673
      %vm738 = vcmask 60416
      %739 = vst.msk [vmem:[%s199] sm:$0xf] %vm738, %v674
      %740 = vst.msk [vmem:[%s199 + $0x4] sm:$0xf] %vm738, %v675
      %741 = vst.msk [vmem:[%s199 + $0x8] sm:$0xf] %vm738, %v676
      %742 = vst.msk [vmem:[%s199 + $0xc] sm:$0xf] %vm738, %v677
      %743 = vst.msk [vmem:[%s199 + $0x10] sm:$0xf] %vm738, %v678
      %744 = vst.msk [vmem:[%s199 + $0x14] sm:$0xf] %vm738, %v679
      %745 = vst.msk [vmem:[%s199 + $0x18] sm:$0xf] %vm738, %v680
      %746 = vst.msk [vmem:[%s199 + $0x1c] sm:$0xf] %vm738, %v681
      %747 = vst.msk [vmem:[%s199 + $0x20] sm:$0xf] %vm738, %v682
      %748 = vst.msk [vmem:[%s199 + $0x24] sm:$0xf] %vm738, %v683
      %749 = vst.msk [vmem:[%s199 + $0x28] sm:$0xf] %vm738, %v684
      %750 = vst.msk [vmem:[%s199 + $0x2c] sm:$0xf] %vm738, %v685
      %751 = vst.msk [vmem:[%s199 + $0x30] sm:$0xf] %vm738, %v686
      %752 = vst.msk [vmem:[%s199 + $0x34] sm:$0xf] %vm738, %v687
      %753 = vst.msk [vmem:[%s199 + $0x38] sm:$0xf] %vm738, %v688
      %754 = vst.msk [vmem:[%s199 + $0x3c] sm:$0xf] %vm738, %v689
      %755 = vst.msk [vmem:[%s199 + $0x40] sm:$0xf] %vm738, %v690
      %756 = vst.msk [vmem:[%s199 + $0x44] sm:$0xf] %vm738, %v691
      %757 = vst.msk [vmem:[%s199 + $0x48] sm:$0xf] %vm738, %v692
      %758 = vst.msk [vmem:[%s199 + $0x4c] sm:$0xf] %vm738, %v693
      %759 = vst.msk [vmem:[%s199 + $0x50] sm:$0xf] %vm738, %v694
      %760 = vst.msk [vmem:[%s199 + $0x54] sm:$0xf] %vm738, %v695
      %761 = vst.msk [vmem:[%s199 + $0x58] sm:$0xf] %vm738, %v696
      %762 = vst.msk [vmem:[%s199 + $0x5c] sm:$0xf] %vm738, %v697
      %763 = vst.msk [vmem:[%s199 + $0x60] sm:$0xf] %vm738, %v698
      %764 = vst.msk [vmem:[%s199 + $0x64] sm:$0xf] %vm738, %v699
      %765 = vst.msk [vmem:[%s199 + $0x68] sm:$0xf] %vm738, %v700
      %766 = vst.msk [vmem:[%s199 + $0x6c] sm:$0xf] %vm738, %v701
      %767 = vst.msk [vmem:[%s199 + $0x70] sm:$0xf] %vm738, %v702
      %768 = vst.msk [vmem:[%s199 + $0x74] sm:$0xf] %vm738, %v703
      %769 = vst.msk [vmem:[%s199 + $0x78] sm:$0xf] %vm738, %v704
      %770 = vst.msk [vmem:[%s199 + $0x7c] sm:$0xf] %vm738, %v705
      %s771 = smul.u32 32, %s15
      %p772 = scmp.lt.s32.totalorder %s771, 63
      %s773 = scalar_select %p772, %s771, 63
      %s774 = smul.addr %s773, 4
      %s775 = scalar_lea.vmem %s4, %s774
      // Predicated region
      $region37: #{_lambda_.29} parent=35 // pred_check
        %p776 = pneg %p122
      $region38: #{_lambda_.29} parent=35 // pred_check_branch
        %778 = sbr.rel (%p776) target = $region40
      $region39: #{_lambda_.29} parent=35 // pred_region
        %s779 = smul.u32 32, %s15
      $region40: #{_lambda_.29} parent=35 // pred_fallthru
        _
    $region36: #{_lambda_.29} parent=5 // pred_fallthru
      _
    %p780 = scmp.le.s32.totalorder 2, %s10
    // Predicated region
    $region41: #{_lambda_.29} parent=5 // pred_check
      %p781 = pneg %p780
    $region42: #{_lambda_.29} parent=5 // pred_check_branch
      %783 = sbr.rel (%p781) target = $region44
    $region43: #{_lambda_.29} parent=5 // pred_region
      %s784 = ssub.s32 %s10, 2
      // Predicated region
      $region45: #{_lambda_.29} parent=43 // pred_check
        %p785 = pneg %p128
      $region46: #{_lambda_.29} parent=43 // pred_check_branch
        %787 = sbr.rel (%p785) target = $region48
      $region47: #{_lambda_.29} parent=43 // pred_region
        %s788 = smul.u32 32, %s16
        %p789 = scmp.lt.s32.totalorder %s788, 63
        %s790 = scalar_select %p789, %s788, 63
        %s791 = smul.addr %s790, 4
        %s792 = scalar_lea.vmem %s4, %s791
      $region48: #{_lambda_.29} parent=43 // pred_fallthru
        _
    $region44: #{_lambda_.29} parent=5 // pred_fallthru
      _
  $region6: #{_lambda_.29} parent=0 // loop_footer
    %s14 = sadd.s32 1, %s10
  $region7: #{_lambda_.29} parent=0 // loop_footer_branch
    %9 = sbr.rel target = $region3
  $region8: #{_lambda_.29} parent=0 // loop_exit
    _

// kernel: _lambda_.28
$region0: #{_lambda_.28}
  #allocation0 [shape = 'u32[]', space=smem, size = 0x4, offset = 0x4, fixed_abs, tag = 'smem constant byte address 0x4 - core index']
  #allocation1 [shape = 'u32[144,128]{1,0:T(1,128)}', space=vmem, size = 0x12000, scoped, tag = 'internal scratch']
  %s0 = inlined_call_operand.vmem [shape: bf16[512,32], index: 0, kind: input, shape index: {}]
  %s1 = inlined_call_operand.vmem [shape: bf16[32,16], index: 1, kind: input, shape index: {}]
  %s2 = inlined_call_operand.vmem [shape: f32[1,16], index: 2, kind: input, shape index: {}]
  %s3 = inlined_call_operand.vmem [shape: f32[1,16], index: 3, kind: input, shape index: {}]
  %s4 = inlined_call_operand.vmem [shape: bf16[512,16], index: 4, kind: output, shape index: {}]
  %s5 = sld [smem:[#allocation0]]
  $region49: #{_lambda_.28} parent=0
    _
  %s7 = ssub.s32 1, %s5
  %s8 = scalar_select 0, %s7, %s5
  loop: start=0, step=1, limit=4
  $region2: #{_lambda_.28} parent=0 // loop_pre_header
    _
  $region3: #{_lambda_.28} parent=0 // loop_header
    %s10 = sphi 0, %s14
    %p11 = scmp.ge.s32.totalorder %s10, 4
    %s20 = sphi 0, %s22
    %s23 = sphi 0, %s20
    %s24 = sphi 0, %s23
    %s40 = sphi 0, %s24
    %s44 = sphi 0, %s44
    %s46 = sphi 0, %s44
    %s47 = sphi 0, %s46
    %s61 = sphi 0, %s47
    %s65 = sphi 0, %s65
    %s67 = sphi 0, %s65
    %s68 = sphi 0, %s67
    %s82 = sphi 0, %s68
    %s86 = sphi 0, %s86
    %s88 = sphi 0, %s86
    %s89 = sphi 0, %s88
    %s103 = sphi 0, %s89
    %s109 = sphi 0, %s111
    %s112 = sphi 0, %s109
    %s113 = sphi 0, %s112
    %s129 = sphi 0, %s113
  $region4: #{_lambda_.28} parent=0 // loop_header_branch
    %13 = sbr.rel (%p11) target = $region8
  $region5: #{_lambda_.28} parent=0 // loop_body
    %s15 = ssub.s32 %s10, 1
    %s16 = ssub.s32 %s10, 2
    %s17 = sadd.s32 %s10, 1
    %s18 = ssub.s32 %s10, %s17
    %p19 = scmp.eq.s32.totalorder %s18, 0
    %s21 = sadd.s32 %s20, 1
    %s22 = scalar_select %p19, %s20, %s21
    %p25 = pneg %p19
    %p26 = scmp.eq.s32.totalorder %s10, 1
    %p27 = por %p25, %p26
    %p28 = scmp.ne.s32.totalorder %s20, %s23
    %p29 = scmp.eq.s32.totalorder %s10, 0
    %p30 = por %p28, %p29
    %p31 = scmp.ne.s32.totalorder %s20, %s23
    %p32 = scmp.eq.s32.totalorder %s15, 1
    %p33 = por %p31, %p32
    %p34 = scmp.ne.s32.totalorder %s23, %s24
    %p35 = scmp.eq.s32.totalorder %s15, 0
    %p36 = por %p34, %p35
    %p37 = scmp.ne.s32.totalorder %s23, %s24
    %p38 = scmp.eq.s32.totalorder %s16, 1
    %p39 = por %p37, %p38
    %p41 = scmp.ne.s32.totalorder %s24, %s40
    %p42 = scmp.eq.s32.totalorder %s16, 0
    %p43 = por %p41, %p42
    %s45 = sadd.s32 %s44, 1
    %p48 = scmp.eq.s32.totalorder %s10, 1
    %p49 = scmp.ne.s32.totalorder %s44, %s46
    %p50 = scmp.eq.s32.totalorder %s10, 0
    %p51 = por %p49, %p50
    %p52 = scmp.ne.s32.totalorder %s44, %s46
    %p53 = scmp.eq.s32.totalorder %s15, 1
    %p54 = por %p52, %p53
    %p55 = scmp.ne.s32.totalorder %s46, %s47
    %p56 = scmp.eq.s32.totalorder %s15, 0
    %p57 = por %p55, %p56
    %p58 = scmp.ne.s32.totalorder %s46, %s47
    %p59 = scmp.eq.s32.totalorder %s16, 1
    %p60 = por %p58, %p59
    %p62 = scmp.ne.s32.totalorder %s47, %s61
    %p63 = scmp.eq.s32.totalorder %s16, 0
    %p64 = por %p62, %p63
    %s66 = sadd.s32 %s65, 1
    %p69 = scmp.eq.s32.totalorder %s10, 1
    %p70 = scmp.ne.s32.totalorder %s65, %s67
    %p71 = scmp.eq.s32.totalorder %s10, 0
    %p72 = por %p70, %p71
    %p73 = scmp.ne.s32.totalorder %s65, %s67
    %p74 = scmp.eq.s32.totalorder %s15, 1
    %p75 = por %p73, %p74
    %p76 = scmp.ne.s32.totalorder %s67, %s68
    %p77 = scmp.eq.s32.totalorder %s15, 0
    %p78 = por %p76, %p77
    %p79 = scmp.ne.s32.totalorder %s67, %s68
    %p80 = scmp.eq.s32.totalorder %s16, 1
    %p81 = por %p79, %p80
    %p83 = scmp.ne.s32.totalorder %s68, %s82
    %p84 = scmp.eq.s32.totalorder %s16, 0
    %p85 = por %p83, %p84
    %s87 = sadd.s32 %s86, 1
    %p90 = scmp.eq.s32.totalorder %s10, 1
    %p91 = scmp.ne.s32.totalorder %s86, %s88
    %p92 = scmp.eq.s32.totalorder %s10, 0
    %p93 = por %p91, %p92
    %p94 = scmp.ne.s32.totalorder %s86, %s88
    %p95 = scmp.eq.s32.totalorder %s15, 1
    %p96 = por %p94, %p95
    %p97 = scmp.ne.s32.totalorder %s88, %s89
    %p98 = scmp.eq.s32.totalorder %s15, 0
    %p99 = por %p97, %p98
    %p100 = scmp.ne.s32.totalorder %s88, %s89
    %p101 = scmp.eq.s32.totalorder %s16, 1
    %p102 = por %p100, %p101
    %p104 = scmp.ne.s32.totalorder %s89, %s103
    %p105 = scmp.eq.s32.totalorder %s16, 0
    %p106 = por %p104, %p105
    %s107 = ssub.s32 %s10, %s17
    %p108 = scmp.eq.s32.totalorder %s107, 0
    %s110 = sadd.s32 %s109, 1
    %s111 = scalar_select %p108, %s109, %s110
    %p114 = pneg %p108
    %p115 = scmp.eq.s32.totalorder %s10, 1
    %p116 = por %p114, %p115
    %p117 = scmp.ne.s32.totalorder %s109, %s112
    %p118 = scmp.eq.s32.totalorder %s10, 0
    %p119 = por %p117, %p118
    %p120 = scmp.ne.s32.totalorder %s109, %s112
    %p121 = scmp.eq.s32.totalorder %s15, 1
    %p122 = por %p120, %p121
    %p123 = scmp.ne.s32.totalorder %s112, %s113
    %p124 = scmp.eq.s32.totalorder %s15, 0
    %p125 = por %p123, %p124
    %p126 = scmp.ne.s32.totalorder %s112, %s113
    %p127 = scmp.eq.s32.totalorder %s16, 1
    %p128 = por %p126, %p127
    %p130 = scmp.ne.s32.totalorder %s113, %s129
    %p131 = scmp.eq.s32.totalorder %s16, 0
    %p132 = por %p130, %p131
    %p133 = scmp.le.s32.totalorder 1, %s10
    %p134 = scmp.lt.s32.totalorder %s10, 3
    %p135 = pnand %p133, %p134
    %p136 = pneg %p135
    // Predicated region
    $region9: #{_lambda_.28} parent=5 // pred_check
      _
    $region10: #{_lambda_.28} parent=5 // pred_check_branch
      %138 = sbr.rel (%p135) target = $region12
    $region11: #{_lambda_.28} parent=5 // pred_region
      %s139 = ssub.s32 %s10, 1
      // Predicated region
      $region13: #{_lambda_.28} parent=11 // pred_check
        %p140 = pneg %p57
      $region14: #{_lambda_.28} parent=11 // pred_check_branch
        %142 = sbr.rel (%p140) target = $region16
      $region15: #{_lambda_.28} parent=11 // pred_region
        _
      $region16: #{_lambda_.28} parent=11 // pred_fallthru
        _
      // Predicated region
      $region17: #{_lambda_.28} parent=11 // pred_check
        %p143 = pneg %p78
      $region18: #{_lambda_.28} parent=11 // pred_check_branch
        %145 = sbr.rel (%p143) target = $region20
      $region19: #{_lambda_.28} parent=11 // pred_region
        _
      $region20: #{_lambda_.28} parent=11 // pred_fallthru
        _
      // Predicated region
      $region21: #{_lambda_.28} parent=11 // pred_check
        %p146 = pneg %p99
      $region22: #{_lambda_.28} parent=11 // pred_check_branch
        %148 = sbr.rel (%p146) target = $region24
      $region23: #{_lambda_.28} parent=11 // pred_region
        _
      $region24: #{_lambda_.28} parent=11 // pred_fallthru
        _
    $region12: #{_lambda_.28} parent=5 // pred_fallthru
      _
    %p149 = scmp.lt.s32.totalorder %s10, 2
    // Predicated region
    $region25: #{_lambda_.28} parent=5 // pred_check
      %p150 = pneg %p149
    $region26: #{_lambda_.28} parent=5 // pred_check_branch
      %152 = sbr.rel (%p150) target = $region28
    $region27: #{_lambda_.28} parent=5 // pred_region
      // Predicated region
      $region29: #{_lambda_.28} parent=27 // pred_check
        %p153 = pneg %p30
      $region30: #{_lambda_.28} parent=27 // pred_check_branch
        %155 = sbr.rel (%p153) target = $region32
      $region31: #{_lambda_.28} parent=27 // pred_region
        %s156 = smul.u32 32, %s10
        %p157 = scmp.lt.s32.totalorder %s156, 63
        %s158 = scalar_select %p157, %s156, 63
        %s159 = smul.addr %s158, 4
        %s160 = scalar_lea.vmem %s0, %s159
        %s161 = smul.u32 32, %s10
      $region32: #{_lambda_.28} parent=27 // pred_fallthru
        _
    $region28: #{_lambda_.28} parent=5 // pred_fallthru
      _
    %p162 = scmp.le.s32.totalorder 1, %s10
    %p163 = scmp.lt.s32.totalorder %s10, 3
    %p164 = pnand %p162, %p163
    %p165 = pneg %p164
    // Predicated region
    $region33: #{_lambda_.28} parent=5 // pred_check
      _
    $region34: #{_lambda_.28} parent=5 // pred_check_branch
      %167 = sbr.rel (%p164) target = $region36
    $region35: #{_lambda_.28} parent=5 // pred_region
      %s168 = ssub.s32 %s10, 1
      %s169 = smul.u32 32, %s15
      %p170 = scmp.lt.s32.totalorder %s169, 63
      %s171 = scalar_select %p170, %s169, 63
      %s172 = smul.addr %s171, 4
      %s173 = scalar_lea.vmem %s0, %s172
      %p174 = pneg %p36
      %p175 = pneg %p33
      %p176 = pneg %p57
      %p177 = pneg %p54
      %p178 = pneg %p78
      %p179 = pneg %p75
      %p180 = pneg %p99
      %p181 = pneg %p96
      %p182 = pneg %p125
      %p183 = pneg %p122
      %s184 = smul.u32 32, %s15
      %p185 = scmp.lt.s32.totalorder %s184, 63
      %s186 = scalar_select %p185, %s184, 63
      %s187 = smul.addr %s186, 4
      %s188 = scalar_lea.vmem %s4, %s187
      %s189 = smul.u32 32, %s15
      %p190 = scmp.lt.s32.totalorder %s189, 63
      %s191 = scalar_select %p190, %s189, 63
      %s192 = smul.addr %s191, 4
      %s193 = scalar_lea.vmem %s0, %s192
      %s194 = smul.u32 32, %s15
      %s195 = smul.u32 32, %s15
      %p196 = scmp.lt.s32.totalorder %s195, 63
      %s197 = scalar_select %p196, %s195, 63
      %s198 = smul.addr %s197, 4
      %s199 = scalar_lea.vmem %s4, %s198
      %s200 = smul.u32 32, %s15
      %v202 = vld [vmem:[%s193] sm:$0xf]
      %v203 = vld [vmem:[%s193 + $0x4] sm:$0xf]
      %v204 = vld [vmem:[%s193 + $0x8] sm:$0xf]
      %v205 = vld [vmem:[%s193 + $0xc] sm:$0xf]
      %v206 = vld [vmem:[%s193 + $0x10] sm:$0xf]
      %v207 = vld [vmem:[%s193 + $0x14] sm:$0xf]
      %v208 = vld [vmem:[%s193 + $0x18] sm:$0xf]
      %v209 = vld [vmem:[%s193 + $0x1c] sm:$0xf]
      %v210 = vld [vmem:[%s193 + $0x20] sm:$0xf]
      %v211 = vld [vmem:[%s193 + $0x24] sm:$0xf]
      %v212 = vld [vmem:[%s193 + $0x28] sm:$0xf]
      %v213 = vld [vmem:[%s193 + $0x2c] sm:$0xf]
      %v214 = vld [vmem:[%s193 + $0x30] sm:$0xf]
      %v215 = vld [vmem:[%s193 + $0x34] sm:$0xf]
      %v216 = vld [vmem:[%s193 + $0x38] sm:$0xf]
      %v217 = vld [vmem:[%s193 + $0x3c] sm:$0xf]
      %v218 = vld [vmem:[%s193 + $0x40] sm:$0xf]
      %v219 = vld [vmem:[%s193 + $0x44] sm:$0xf]
      %v220 = vld [vmem:[%s193 + $0x48] sm:$0xf]
      %v221 = vld [vmem:[%s193 + $0x4c] sm:$0xf]
      %v222 = vld [vmem:[%s193 + $0x50] sm:$0xf]
      %v223 = vld [vmem:[%s193 + $0x54] sm:$0xf]
      %v224 = vld [vmem:[%s193 + $0x58] sm:$0xf]
      %v225 = vld [vmem:[%s193 + $0x5c] sm:$0xf]
      %v226 = vld [vmem:[%s193 + $0x60] sm:$0xf]
      %v227 = vld [vmem:[%s193 + $0x64] sm:$0xf]
      %v228 = vld [vmem:[%s193 + $0x68] sm:$0xf]
      %v229 = vld [vmem:[%s193 + $0x6c] sm:$0xf]
      %v230 = vld [vmem:[%s193 + $0x70] sm:$0xf]
      %v231 = vld [vmem:[%s193 + $0x74] sm:$0xf]
      %v232 = vld [vmem:[%s193 + $0x78] sm:$0xf]
      %v233 = vld [vmem:[%s193 + $0x7c] sm:$0xf]
      %v234 = vld [vmem:[%s1] sm:$0xf]
      %v235 = vld [vmem:[%s1 + $0x4] sm:$0xf]
      %v236 = vld [vmem:[%s1 + $0x8] sm:$0xf]
      %v237 = vld [vmem:[%s1 + $0xc] sm:$0xf]
      %v270 = vunpack.c.l.b16 %v202
      %v271 = vunpack.c.l.b16 %v203
      %v272 = vunpack.c.l.b16 %v204
      %v273 = vunpack.c.l.b16 %v205
      %v274 = vunpack.c.l.b16 %v206
      %v275 = vunpack.c.l.b16 %v207
      %v276 = vunpack.c.l.b16 %v208
      %v277 = vunpack.c.l.b16 %v209
      %v278 = vunpack.c.l.b16 %v210
      %v279 = vunpack.c.l.b16 %v211
      %v280 = vunpack.c.l.b16 %v212
      %v281 = vunpack.c.l.b16 %v213
      %v282 = vunpack.c.l.b16 %v214
      %v283 = vunpack.c.l.b16 %v215
      %v284 = vunpack.c.l.b16 %v216
      %v285 = vunpack.c.l.b16 %v217
      %v286 = vunpack.c.l.b16 %v218
      %v287 = vunpack.c.l.b16 %v219
      %v288 = vunpack.c.l.b16 %v220
      %v289 = vunpack.c.l.b16 %v221
      %v290 = vunpack.c.l.b16 %v222
      %v291 = vunpack.c.l.b16 %v223
      %v292 = vunpack.c.l.b16 %v224
      %v293 = vunpack.c.l.b16 %v225
      %v294 = vunpack.c.l.b16 %v226
      %v295 = vunpack.c.l.b16 %v227
      %v296 = vunpack.c.l.b16 %v228
      %v297 = vunpack.c.l.b16 %v229
      %v298 = vunpack.c.l.b16 %v230
      %v299 = vunpack.c.l.b16 %v231
      %v300 = vunpack.c.l.b16 %v232
      %v301 = vunpack.c.l.b16 %v233
      %v302 = vpack.c.b16 %v271, %v270
      %v303 = vpack.c.b16 %v273, %v272
      %v304 = vpack.c.b16 %v275, %v274
      %v305 = vpack.c.b16 %v277, %v276
      %v306 = vpack.c.b16 %v279, %v278
      %v307 = vpack.c.b16 %v281, %v280
      %v308 = vpack.c.b16 %v283, %v282
      %v309 = vpack.c.b16 %v285, %v284
      %v310 = vpack.c.b16 %v287, %v286
      %v311 = vpack.c.b16 %v289, %v288
      %v312 = vpack.c.b16 %v291, %v290
      %v313 = vpack.c.b16 %v293, %v292
      %v314 = vpack.c.b16 %v295, %v294
      %v315 = vpack.c.b16 %v297, %v296
      %v316 = vpack.c.b16 %v299, %v298
      %v317 = vpack.c.b16 %v301, %v300
      %v322 = vunpack.c.l.b16 %v234
      %v323 = vunpack.c.l.b16 %v235
      %v324 = vunpack.c.l.b16 %v236
      %v325 = vunpack.c.l.b16 %v237
      %v326 = vpack.c.b16 %v323, %v322
      %v327 = vpack.c.b16 %v325, %v324
      %vm330 = vcmask 261120
      %v332 = vsel %vm330, %v302, 0
      %v335 = vsel %vm330, %v303, 0
      %v338 = vsel %vm330, %v304, 0
      %v341 = vsel %vm330, %v305, 0
      %v344 = vsel %vm330, %v306, 0
      %v347 = vsel %vm330, %v307, 0
      %v350 = vsel %vm330, %v308, 0
      %v353 = vsel %vm330, %v309, 0
      %v356 = vsel %vm330, %v310, 0
      %v359 = vsel %vm330, %v311, 0
      %v362 = vsel %vm330, %v312, 0
      %v365 = vsel %vm330, %v313, 0
      %v368 = vsel %vm330, %v314, 0
      %v371 = vsel %vm330, %v315, 0
      %v374 = vsel %vm330, %v316, 0
      %v377 = vsel %vm330, %v317, 0
      %379 = vmatprep.subr.bf16.mxu0 0
      %380 = vmatpush1.bf16.msra.mxu0 0
      %381 = vmatprep.subr.bf16.mxu0 0
      %382 = vmatpush1.bf16.msra.mxu0 0
      %383 = vmatprep.subr.bf16.mxu0 0
      %384 = vmatpush1.bf16.msra.mxu0 0
      %385 = vmatprep.subr.bf16.mxu0 0
      %386 = vmatpush1.bf16.msra.mxu0 0
      %387 = vmatprep.subr.bf16.mxu0 0
      %388 = vmatpush1.bf16.msra.mxu0 0
      %389 = vmatprep.subr.bf16.mxu0 0
      %390 = vmatpush1.bf16.msra.mxu0 0
      %391 = vmatprep.subr.bf16.mxu0 0
      %392 = vmatpush1.bf16.msra.mxu0 %v327
      %393 = vmatprep.subr.bf16.mxu0 0
      %394 = vmatpush1.bf16.msra.mxu0 %v326
      %395 = vmatprep.subr.bf16.mxu0 0
      %396 = vmatpush2.bf16.msra.mxu0 0
      %397 = vmatprep.subr.bf16.mxu0 0
      %398 = vmatpush2.bf16.msra.mxu0 0
      %399 = vmatprep.subr.bf16.mxu0 0
      %400 = vmatpush2.bf16.msra.mxu0 0
      %401 = vmatprep.subr.bf16.mxu0 0
      %402 = vmatpush2.bf16.msra.mxu0 0
      %403 = vmatprep.subr.bf16.mxu0 0
      %404 = vmatpush2.bf16.msra.mxu0 0
      %405 = vmatprep.subr.bf16.mxu0 0
      %406 = vmatpush2.bf16.msra.mxu0 0
      %407 = vmatprep.subr.bf16.mxu0 0
      %408 = vmatpush2.bf16.msra.mxu0 0
      %409 = vmatprep.subr.bf16.mxu0 0
      %410 = vmatpush2.bf16.msra.mxu0 0
      %411 = vmatprep.mubr.bf16.mxu0 0
      %412 = vmatmul.mubr.bf16.gmra.mxu0 %v332
      %v413 = vpop.f32.mrf.mxu0
      %v414 = vadd.f32 0.0, %v413
      %v415 = vpop.f32.mrf.mxu0
      %v416 = vpop.f32.mrf.mxu0
      %v417 = vadd.f32 0.0, %v416
      %v418 = vpop.f32.mrf.mxu0
      %419 = vmatprep.mubr.bf16.mxu0 0
      %420 = vmatmul.mubr.bf16.gmra.mxu0 %v335
      %v421 = vpop.f32.mrf.mxu0
      %v422 = vadd.f32 0.0, %v421
      %v423 = vpop.f32.mrf.mxu0
      %v424 = vpop.f32.mrf.mxu0
      %v425 = vadd.f32 0.0, %v424
      %v426 = vpop.f32.mrf.mxu0
      %427 = vmatprep.mubr.bf16.mxu0 0
      %428 = vmatmul.mubr.bf16.gmra.mxu0 %v338
      %v429 = vpop.f32.mrf.mxu0
      %v430 = vadd.f32 0.0, %v429
      %v431 = vpop.f32.mrf.mxu0
      %v432 = vpop.f32.mrf.mxu0
      %v433 = vadd.f32 0.0, %v432
      %v434 = vpop.f32.mrf.mxu0
      %435 = vmatprep.mubr.bf16.mxu0 0
      %436 = vmatmul.mubr.bf16.gmra.mxu0 %v341
      %v437 = vpop.f32.mrf.mxu0
      %v438 = vadd.f32 0.0, %v437
      %v439 = vpop.f32.mrf.mxu0
      %v440 = vpop.f32.mrf.mxu0
      %v441 = vadd.f32 0.0, %v440
      %v442 = vpop.f32.mrf.mxu0
      %443 = vmatprep.mubr.bf16.mxu0 0
      %444 = vmatmul.mubr.bf16.gmra.mxu0 %v344
      %v445 = vpop.f32.mrf.mxu0
      %v446 = vadd.f32 0.0, %v445
      %v447 = vpop.f32.mrf.mxu0
      %v448 = vpop.f32.mrf.mxu0
      %v449 = vadd.f32 0.0, %v448
      %v450 = vpop.f32.mrf.mxu0
      %451 = vmatprep.mubr.bf16.mxu0 0
      %452 = vmatmul.mubr.bf16.gmra.mxu0 %v347
      %v453 = vpop.f32.mrf.mxu0
      %v454 = vadd.f32 0.0, %v453
      %v455 = vpop.f32.mrf.mxu0
      %v456 = vpop.f32.mrf.mxu0
      %v457 = vadd.f32 0.0, %v456
      %v458 = vpop.f32.mrf.mxu0
      %459 = vmatprep.mubr.bf16.mxu0 0
      %460 = vmatmul.mubr.bf16.gmra.mxu0 %v350
      %v461 = vpop.f32.mrf.mxu0
      %v462 = vadd.f32 0.0, %v461
      %v463 = vpop.f32.mrf.mxu0
      %v464 = vpop.f32.mrf.mxu0
      %v465 = vadd.f32 0.0, %v464
      %v466 = vpop.f32.mrf.mxu0
      %467 = vmatprep.mubr.bf16.mxu0 0
      %468 = vmatmul.mubr.bf16.gmra.mxu0 %v353
      %v469 = vpop.f32.mrf.mxu0
      %v470 = vadd.f32 0.0, %v469
      %v471 = vpop.f32.mrf.mxu0
      %v472 = vpop.f32.mrf.mxu0
      %v473 = vadd.f32 0.0, %v472
      %v474 = vpop.f32.mrf.mxu0
      %475 = vmatprep.mubr.bf16.mxu0 0
      %476 = vmatmul.mubr.bf16.gmra.mxu0 %v356
      %v477 = vpop.f32.mrf.mxu0
      %v478 = vadd.f32 0.0, %v477
      %v479 = vpop.f32.mrf.mxu0
      %v480 = vpop.f32.mrf.mxu0
      %v481 = vadd.f32 0.0, %v480
      %v482 = vpop.f32.mrf.mxu0
      %483 = vmatprep.mubr.bf16.mxu0 0
      %484 = vmatmul.mubr.bf16.gmra.mxu0 %v359
      %v485 = vpop.f32.mrf.mxu0
      %v486 = vadd.f32 0.0, %v485
      %v487 = vpop.f32.mrf.mxu0
      %v488 = vpop.f32.mrf.mxu0
      %v489 = vadd.f32 0.0, %v488
      %v490 = vpop.f32.mrf.mxu0
      %491 = vmatprep.mubr.bf16.mxu0 0
      %492 = vmatmul.mubr.bf16.gmra.mxu0 %v362
      %v493 = vpop.f32.mrf.mxu0
      %v494 = vadd.f32 0.0, %v493
      %v495 = vpop.f32.mrf.mxu0
      %v496 = vpop.f32.mrf.mxu0
      %v497 = vadd.f32 0.0, %v496
      %v498 = vpop.f32.mrf.mxu0
      %499 = vmatprep.mubr.bf16.mxu0 0
      %500 = vmatmul.mubr.bf16.gmra.mxu0 %v365
      %v501 = vpop.f32.mrf.mxu0
      %v502 = vadd.f32 0.0, %v501
      %v503 = vpop.f32.mrf.mxu0
      %v504 = vpop.f32.mrf.mxu0
      %v505 = vadd.f32 0.0, %v504
      %v506 = vpop.f32.mrf.mxu0
      %507 = vmatprep.mubr.bf16.mxu0 0
      %508 = vmatmul.mubr.bf16.gmra.mxu0 %v368
      %v509 = vpop.f32.mrf.mxu0
      %v510 = vadd.f32 0.0, %v509
      %v511 = vpop.f32.mrf.mxu0
      %v512 = vpop.f32.mrf.mxu0
      %v513 = vadd.f32 0.0, %v512
      %v514 = vpop.f32.mrf.mxu0
      %515 = vmatprep.mubr.bf16.mxu0 0
      %516 = vmatmul.mubr.bf16.gmra.mxu0 %v371
      %v517 = vpop.f32.mrf.mxu0
      %v518 = vadd.f32 0.0, %v517
      %v519 = vpop.f32.mrf.mxu0
      %v520 = vpop.f32.mrf.mxu0
      %v521 = vadd.f32 0.0, %v520
      %v522 = vpop.f32.mrf.mxu0
      %523 = vmatprep.mubr.bf16.mxu0 0
      %524 = vmatmul.mubr.bf16.gmra.mxu0 %v374
      %v525 = vpop.f32.mrf.mxu0
      %v526 = vadd.f32 0.0, %v525
      %v527 = vpop.f32.mrf.mxu0
      %v528 = vpop.f32.mrf.mxu0
      %v529 = vadd.f32 0.0, %v528
      %v530 = vpop.f32.mrf.mxu0
      %531 = vmatprep.mubr.bf16.mxu0 0
      %532 = vmatmul.mubr.bf16.gmra.mxu0 %v377
      %v533 = vpop.f32.mrf.mxu0
      %v534 = vadd.f32 0.0, %v533
      %v535 = vpop.f32.mrf.mxu0
      %v536 = vpop.f32.mrf.mxu0
      %v537 = vadd.f32 0.0, %v536
      %v538 = vpop.f32.mrf.mxu0
      %539 = vdwg.mxu0
      %v540 = vld [vmem:[%s2] sm:$0x1]
      %v542 = vlaneseq
      %v543 = vshrl.u32 %v542, 7
      %v544 = vsub.s32 0, %v543
      %v545 = vrot.slane %v540, %v544
      %v547 = vmul.f32 %v414, %v545
      %v548 = vmul.f32 %v417, %v545
      %v549 = vmul.f32 %v422, %v545
      %v550 = vmul.f32 %v425, %v545
      %v551 = vmul.f32 %v430, %v545
      %v552 = vmul.f32 %v433, %v545
      %v553 = vmul.f32 %v438, %v545
      %v554 = vmul.f32 %v441, %v545
      %v555 = vmul.f32 %v446, %v545
      %v556 = vmul.f32 %v449, %v545
      %v557 = vmul.f32 %v454, %v545
      %v558 = vmul.f32 %v457, %v545
      %v559 = vmul.f32 %v462, %v545
      %v560 = vmul.f32 %v465, %v545
      %v561 = vmul.f32 %v470, %v545
      %v562 = vmul.f32 %v473, %v545
      %v563 = vmul.f32 %v478, %v545
      %v564 = vmul.f32 %v481, %v545
      %v565 = vmul.f32 %v486, %v545
      %v566 = vmul.f32 %v489, %v545
      %v567 = vmul.f32 %v494, %v545
      %v568 = vmul.f32 %v497, %v545
      %v569 = vmul.f32 %v502, %v545
      %v570 = vmul.f32 %v505, %v545
      %v571 = vmul.f32 %v510, %v545
      %v572 = vmul.f32 %v513, %v545
      %v573 = vmul.f32 %v518, %v545
      %v574 = vmul.f32 %v521, %v545
      %v575 = vmul.f32 %v526, %v545
      %v576 = vmul.f32 %v529, %v545
      %v577 = vmul.f32 %v534, %v545
      %v578 = vmul.f32 %v537, %v545
      %v579 = vld [vmem:[%s3] sm:$0x1]
      %v581 = vlaneseq
      %v582 = vshrl.u32 %v581, 7
      %v583 = vsub.s32 0, %v582
      %v584 = vrot.slane %v579, %v583
      %v586 = vadd.f32 %v547, %v584
      %v587 = vadd.f32 %v548, %v584
      %v588 = vadd.f32 %v549, %v584
      %v589 = vadd.f32 %v550, %v584
      %v590 = vadd.f32 %v551, %v584
      %v591 = vadd.f32 %v552, %v584
      %v592 = vadd.f32 %v553, %v584
      %v593 = vadd.f32 %v554, %v584
      %v594 = vadd.f32 %v555, %v584
      %v595 = vadd.f32 %v556, %v584
      %v596 = vadd.f32 %v557, %v584
      %v597 = vadd.f32 %v558, %v584
      %v598 = vadd.f32 %v559, %v584
      %v599 = vadd.f32 %v560, %v584
      %v600 = vadd.f32 %v561, %v584
      %v601 = vadd.f32 %v562, %v584
      %v602 = vadd.f32 %v563, %v584
      %v603 = vadd.f32 %v564, %v584
      %v604 = vadd.f32 %v565, %v584
      %v605 = vadd.f32 %v566, %v584
      %v606 = vadd.f32 %v567, %v584
      %v607 = vadd.f32 %v568, %v584
      %v608 = vadd.f32 %v569, %v584
      %v609 = vadd.f32 %v570, %v584
      %v610 = vadd.f32 %v571, %v584
      %v611 = vadd.f32 %v572, %v584
      %v612 = vadd.f32 %v573, %v584
      %v613 = vadd.f32 %v574, %v584
      %v614 = vadd.f32 %v575, %v584
      %v615 = vadd.f32 %v576, %v584
      %v616 = vadd.f32 %v577, %v584
      %v617 = vadd.f32 %v578, %v584
      %v618 = vpack.c.bf16 %v587, %v586
      %v619 = vpack.c.bf16 %v589, %v588
      %v620 = vpack.c.bf16 %v591, %v590
      %v621 = vpack.c.bf16 %v593, %v592
      %v622 = vpack.c.bf16 %v595, %v594
      %v623 = vpack.c.bf16 %v597, %v596
      %v624 = vpack.c.bf16 %v599, %v598
      %v625 = vpack.c.bf16 %v601, %v600
      %v626 = vpack.c.bf16 %v603, %v602
      %v627 = vpack.c.bf16 %v605, %v604
      %v628 = vpack.c.bf16 %v607, %v606
      %v629 = vpack.c.bf16 %v609, %v608
      %v630 = vpack.c.bf16 %v611, %v610
      %v631 = vpack.c.bf16 %v613, %v612
      %v632 = vpack.c.bf16 %v615, %v614
      %v633 = vpack.c.bf16 %v617, %v616
      %v650 = vunpack.c.l.b16 %v618
      %v651 = vunpack.c.h.b16 %v618
      %v652 = vunpack.c.l.b16 %v619
      %v653 = vunpack.c.h.b16 %v619
      %v654 = vunpack.c.l.b16 %v620
      %v655 = vunpack.c.h.b16 %v620
      %v656 = vunpack.c.l.b16 %v621
      %v657 = vunpack.c.h.b16 %v621
      %v658 = vunpack.c.l.b16 %v622
      %v659 = vunpack.c.h.b16 %v622
      %v660 = vunpack.c.l.b16 %v623
      %v661 = vunpack.c.h.b16 %v623
      %v662 = vunpack.c.l.b16 %v624
      %v663 = vunpack.c.h.b16 %v624
      %v664 = vunpack.c.l.b16 %v625
      %v665 = vunpack.c.h.b16 %v625
      %v666 = vunpack.c.l.b16 %v626
      %v667 = vunpack.c.h.b16 %v626
      %v668 = vunpack.c.l.b16 %v627
      %v669 = vunpack.c.h.b16 %v627
      %v670 = vunpack.c.l.b16 %v628
      %v671 = vunpack.c.h.b16 %v628
      %v672 = vunpack.c.l.b16 %v629
      %v673 = vunpack.c.h.b16 %v629
      %v674 = vunpack.c.l.b16 %v630
      %v675 = vunpack.c.h.b16 %v630
      %v676 = vunpack.c.l.b16 %v631
      %v677 = vunpack.c.h.b16 %v631
      %v678 = vunpack.c.l.b16 %v632
      %v679 = vunpack.c.h.b16 %v632
      %v680 = vunpack.c.l.b16 %v633
      %v681 = vunpack.c.h.b16 %v633
      %v682 = vpack.c.b16 %v650, %v650
      %v683 = vpack.c.b16 %v651, %v651
      %v684 = vpack.c.b16 %v652, %v652
      %v685 = vpack.c.b16 %v653, %v653
      %v686 = vpack.c.b16 %v654, %v654
      %v687 = vpack.c.b16 %v655, %v655
      %v688 = vpack.c.b16 %v656, %v656
      %v689 = vpack.c.b16 %v657, %v657
      %v690 = vpack.c.b16 %v658, %v658
      %v691 = vpack.c.b16 %v659, %v659
      %v692 = vpack.c.b16 %v660, %v660
      %v693 = vpack.c.b16 %v661, %v661
      %v694 = vpack.c.b16 %v662, %v662
      %v695 = vpack.c.b16 %v663, %v663
      %v696 = vpack.c.b16 %v664, %v664
      %v697 = vpack.c.b16 %v665, %v665
      %v698 = vpack.c.b16 %v666, %v666
      %v699 = vpack.c.b16 %v667, %v667
      %v700 = vpack.c.b16 %v668, %v668
      %v701 = vpack.c.b16 %v669, %v669
      %v702 = vpack.c.b16 %v670, %v670
      %v703 = vpack.c.b16 %v671, %v671
      %v704 = vpack.c.b16 %v672, %v672
      %v705 = vpack.c.b16 %v673, %v673
      %v706 = vpack.c.b16 %v674, %v674
      %v707 = vpack.c.b16 %v675, %v675
      %v708 = vpack.c.b16 %v676, %v676
      %v709 = vpack.c.b16 %v677, %v677
      %v710 = vpack.c.b16 %v678, %v678
      %v711 = vpack.c.b16 %v679, %v679
      %v712 = vpack.c.b16 %v680, %v680
      %v713 = vpack.c.b16 %v681, %v681
      %vm746 = vcmask 125952
      %747 = vst.msk [vmem:[%s199] sm:$0xf] %vm746, %v682
      %748 = vst.msk [vmem:[%s199 + $0x4] sm:$0xf] %vm746, %v683
      %749 = vst.msk [vmem:[%s199 + $0x8] sm:$0xf] %vm746, %v684
      %750 = vst.msk [vmem:[%s199 + $0xc] sm:$0xf] %vm746, %v685
      %751 = vst.msk [vmem:[%s199 + $0x10] sm:$0xf] %vm746, %v686
      %752 = vst.msk [vmem:[%s199 + $0x14] sm:$0xf] %vm746, %v687
      %753 = vst.msk [vmem:[%s199 + $0x18] sm:$0xf] %vm746, %v688
      %754 = vst.msk [vmem:[%s199 + $0x1c] sm:$0xf] %vm746, %v689
      %755 = vst.msk [vmem:[%s199 + $0x20] sm:$0xf] %vm746, %v690
      %756 = vst.msk [vmem:[%s199 + $0x24] sm:$0xf] %vm746, %v691
      %757 = vst.msk [vmem:[%s199 + $0x28] sm:$0xf] %vm746, %v692
      %758 = vst.msk [vmem:[%s199 + $0x2c] sm:$0xf] %vm746, %v693
      %759 = vst.msk [vmem:[%s199 + $0x30] sm:$0xf] %vm746, %v694
      %760 = vst.msk [vmem:[%s199 + $0x34] sm:$0xf] %vm746, %v695
      %761 = vst.msk [vmem:[%s199 + $0x38] sm:$0xf] %vm746, %v696
      %762 = vst.msk [vmem:[%s199 + $0x3c] sm:$0xf] %vm746, %v697
      %763 = vst.msk [vmem:[%s199 + $0x40] sm:$0xf] %vm746, %v698
      %764 = vst.msk [vmem:[%s199 + $0x44] sm:$0xf] %vm746, %v699
      %765 = vst.msk [vmem:[%s199 + $0x48] sm:$0xf] %vm746, %v700
      %766 = vst.msk [vmem:[%s199 + $0x4c] sm:$0xf] %vm746, %v701
      %767 = vst.msk [vmem:[%s199 + $0x50] sm:$0xf] %vm746, %v702
      %768 = vst.msk [vmem:[%s199 + $0x54] sm:$0xf] %vm746, %v703
      %769 = vst.msk [vmem:[%s199 + $0x58] sm:$0xf] %vm746, %v704
      %770 = vst.msk [vmem:[%s199 + $0x5c] sm:$0xf] %vm746, %v705
      %771 = vst.msk [vmem:[%s199 + $0x60] sm:$0xf] %vm746, %v706
      %772 = vst.msk [vmem:[%s199 + $0x64] sm:$0xf] %vm746, %v707
      %773 = vst.msk [vmem:[%s199 + $0x68] sm:$0xf] %vm746, %v708
      %774 = vst.msk [vmem:[%s199 + $0x6c] sm:$0xf] %vm746, %v709
      %775 = vst.msk [vmem:[%s199 + $0x70] sm:$0xf] %vm746, %v710
      %776 = vst.msk [vmem:[%s199 + $0x74] sm:$0xf] %vm746, %v711
      %777 = vst.msk [vmem:[%s199 + $0x78] sm:$0xf] %vm746, %v712
      %778 = vst.msk [vmem:[%s199 + $0x7c] sm:$0xf] %vm746, %v713
      %s779 = smul.u32 32, %s15
      %p780 = scmp.lt.s32.totalorder %s779, 63
      %s781 = scalar_select %p780, %s779, 63
      %s782 = smul.addr %s781, 4
      %s783 = scalar_lea.vmem %s4, %s782
      // Predicated region
      $region37: #{_lambda_.28} parent=35 // pred_check
        %p784 = pneg %p122
      $region38: #{_lambda_.28} parent=35 // pred_check_branch
        %786 = sbr.rel (%p784) target = $region40
      $region39: #{_lambda_.28} parent=35 // pred_region
        %s787 = smul.u32 32, %s15
      $region40: #{_lambda_.28} parent=35 // pred_fallthru
        _
    $region36: #{_lambda_.28} parent=5 // pred_fallthru
      _
    %p788 = scmp.le.s32.totalorder 2, %s10
    // Predicated region
    $region41: #{_lambda_.28} parent=5 // pred_check
      %p789 = pneg %p788
    $region42: #{_lambda_.28} parent=5 // pred_check_branch
      %791 = sbr.rel (%p789) target = $region44
    $region43: #{_lambda_.28} parent=5 // pred_region
      %s792 = ssub.s32 %s10, 2
      // Predicated region
      $region45: #{_lambda_.28} parent=43 // pred_check
        %p793 = pneg %p128
      $region46: #{_lambda_.28} parent=43 // pred_check_branch
        %795 = sbr.rel (%p793) target = $region48
      $region47: #{_lambda_.28} parent=43 // pred_region
        %s796 = smul.u32 32, %s16
        %p797 = scmp.lt.s32.totalorder %s796, 63
        %s798 = scalar_select %p797, %s796, 63
        %s799 = smul.addr %s798, 4
        %s800 = scalar_lea.vmem %s4, %s799
      $region48: #{_lambda_.28} parent=43 // pred_fallthru
        _
    $region44: #{_lambda_.28} parent=5 // pred_fallthru
      _
  $region6: #{_lambda_.28} parent=0 // loop_footer
    %s14 = sadd.s32 1, %s10
  $region7: #{_lambda_.28} parent=0 // loop_footer_branch
    %9 = sbr.rel target = $region3
  $region8: #{_lambda_.28} parent=0 // loop_exit
    _

// kernel: _lambda_.33
$region0: #{_lambda_.33}
  #allocation0 [shape = 'u32[]', space=smem, size = 0x4, offset = 0x4, fixed_abs, tag = 'smem constant byte address 0x4 - core index']
  #allocation1 [shape = 'u32[144,128]{1,0:T(1,128)}', space=vmem, size = 0x12000, scoped, tag = 'internal scratch']
  %s0 = inlined_call_operand.vmem [shape: bf16[512,80], index: 0, kind: input, shape index: {}]
  %s1 = inlined_call_operand.vmem [shape: bf16[80,8], index: 1, kind: input, shape index: {}]
  %s2 = inlined_call_operand.vmem [shape: f32[1,8], index: 2, kind: input, shape index: {}]
  %s3 = inlined_call_operand.vmem [shape: f32[1,8], index: 3, kind: input, shape index: {}]
  %s4 = inlined_call_operand.vmem [shape: bf16[512,8], index: 4, kind: output, shape index: {}]
  %s5 = sld [smem:[#allocation0]]
  $region49: #{_lambda_.33} parent=0
    _
  %s7 = ssub.s32 1, %s5
  %s8 = scalar_select 0, %s7, %s5
  loop: start=0, step=1, limit=4
  $region2: #{_lambda_.33} parent=0 // loop_pre_header
    _
  $region3: #{_lambda_.33} parent=0 // loop_header
    %s10 = sphi 0, %s14
    %p11 = scmp.ge.s32.totalorder %s10, 4
    %s20 = sphi 0, %s22
    %s23 = sphi 0, %s20
    %s24 = sphi 0, %s23
    %s40 = sphi 0, %s24
    %s44 = sphi 0, %s44
    %s46 = sphi 0, %s44
    %s47 = sphi 0, %s46
    %s61 = sphi 0, %s47
    %s65 = sphi 0, %s65
    %s67 = sphi 0, %s65
    %s68 = sphi 0, %s67
    %s82 = sphi 0, %s68
    %s86 = sphi 0, %s86
    %s88 = sphi 0, %s86
    %s89 = sphi 0, %s88
    %s103 = sphi 0, %s89
    %s109 = sphi 0, %s111
    %s112 = sphi 0, %s109
    %s113 = sphi 0, %s112
    %s129 = sphi 0, %s113
  $region4: #{_lambda_.33} parent=0 // loop_header_branch
    %13 = sbr.rel (%p11) target = $region8
  $region5: #{_lambda_.33} parent=0 // loop_body
    %s15 = ssub.s32 %s10, 1
    %s16 = ssub.s32 %s10, 2
    %s17 = sadd.s32 %s10, 1
    %s18 = ssub.s32 %s10, %s17
    %p19 = scmp.eq.s32.totalorder %s18, 0
    %s21 = sadd.s32 %s20, 1
    %s22 = scalar_select %p19, %s20, %s21
    %p25 = pneg %p19
    %p26 = scmp.eq.s32.totalorder %s10, 1
    %p27 = por %p25, %p26
    %p28 = scmp.ne.s32.totalorder %s20, %s23
    %p29 = scmp.eq.s32.totalorder %s10, 0
    %p30 = por %p28, %p29
    %p31 = scmp.ne.s32.totalorder %s20, %s23
    %p32 = scmp.eq.s32.totalorder %s15, 1
    %p33 = por %p31, %p32
    %p34 = scmp.ne.s32.totalorder %s23, %s24
    %p35 = scmp.eq.s32.totalorder %s15, 0
    %p36 = por %p34, %p35
    %p37 = scmp.ne.s32.totalorder %s23, %s24
    %p38 = scmp.eq.s32.totalorder %s16, 1
    %p39 = por %p37, %p38
    %p41 = scmp.ne.s32.totalorder %s24, %s40
    %p42 = scmp.eq.s32.totalorder %s16, 0
    %p43 = por %p41, %p42
    %s45 = sadd.s32 %s44, 1
    %p48 = scmp.eq.s32.totalorder %s10, 1
    %p49 = scmp.ne.s32.totalorder %s44, %s46
    %p50 = scmp.eq.s32.totalorder %s10, 0
    %p51 = por %p49, %p50
    %p52 = scmp.ne.s32.totalorder %s44, %s46
    %p53 = scmp.eq.s32.totalorder %s15, 1
    %p54 = por %p52, %p53
    %p55 = scmp.ne.s32.totalorder %s46, %s47
    %p56 = scmp.eq.s32.totalorder %s15, 0
    %p57 = por %p55, %p56
    %p58 = scmp.ne.s32.totalorder %s46, %s47
    %p59 = scmp.eq.s32.totalorder %s16, 1
    %p60 = por %p58, %p59
    %p62 = scmp.ne.s32.totalorder %s47, %s61
    %p63 = scmp.eq.s32.totalorder %s16, 0
    %p64 = por %p62, %p63
    %s66 = sadd.s32 %s65, 1
    %p69 = scmp.eq.s32.totalorder %s10, 1
    %p70 = scmp.ne.s32.totalorder %s65, %s67
    %p71 = scmp.eq.s32.totalorder %s10, 0
    %p72 = por %p70, %p71
    %p73 = scmp.ne.s32.totalorder %s65, %s67
    %p74 = scmp.eq.s32.totalorder %s15, 1
    %p75 = por %p73, %p74
    %p76 = scmp.ne.s32.totalorder %s67, %s68
    %p77 = scmp.eq.s32.totalorder %s15, 0
    %p78 = por %p76, %p77
    %p79 = scmp.ne.s32.totalorder %s67, %s68
    %p80 = scmp.eq.s32.totalorder %s16, 1
    %p81 = por %p79, %p80
    %p83 = scmp.ne.s32.totalorder %s68, %s82
    %p84 = scmp.eq.s32.totalorder %s16, 0
    %p85 = por %p83, %p84
    %s87 = sadd.s32 %s86, 1
    %p90 = scmp.eq.s32.totalorder %s10, 1
    %p91 = scmp.ne.s32.totalorder %s86, %s88
    %p92 = scmp.eq.s32.totalorder %s10, 0
    %p93 = por %p91, %p92
    %p94 = scmp.ne.s32.totalorder %s86, %s88
    %p95 = scmp.eq.s32.totalorder %s15, 1
    %p96 = por %p94, %p95
    %p97 = scmp.ne.s32.totalorder %s88, %s89
    %p98 = scmp.eq.s32.totalorder %s15, 0
    %p99 = por %p97, %p98
    %p100 = scmp.ne.s32.totalorder %s88, %s89
    %p101 = scmp.eq.s32.totalorder %s16, 1
    %p102 = por %p100, %p101
    %p104 = scmp.ne.s32.totalorder %s89, %s103
    %p105 = scmp.eq.s32.totalorder %s16, 0
    %p106 = por %p104, %p105
    %s107 = ssub.s32 %s10, %s17
    %p108 = scmp.eq.s32.totalorder %s107, 0
    %s110 = sadd.s32 %s109, 1
    %s111 = scalar_select %p108, %s109, %s110
    %p114 = pneg %p108
    %p115 = scmp.eq.s32.totalorder %s10, 1
    %p116 = por %p114, %p115
    %p117 = scmp.ne.s32.totalorder %s109, %s112
    %p118 = scmp.eq.s32.totalorder %s10, 0
    %p119 = por %p117, %p118
    %p120 = scmp.ne.s32.totalorder %s109, %s112
    %p121 = scmp.eq.s32.totalorder %s15, 1
    %p122 = por %p120, %p121
    %p123 = scmp.ne.s32.totalorder %s112, %s113
    %p124 = scmp.eq.s32.totalorder %s15, 0
    %p125 = por %p123, %p124
    %p126 = scmp.ne.s32.totalorder %s112, %s113
    %p127 = scmp.eq.s32.totalorder %s16, 1
    %p128 = por %p126, %p127
    %p130 = scmp.ne.s32.totalorder %s113, %s129
    %p131 = scmp.eq.s32.totalorder %s16, 0
    %p132 = por %p130, %p131
    %p133 = scmp.le.s32.totalorder 1, %s10
    %p134 = scmp.lt.s32.totalorder %s10, 3
    %p135 = pnand %p133, %p134
    %p136 = pneg %p135
    // Predicated region
    $region9: #{_lambda_.33} parent=5 // pred_check
      _
    $region10: #{_lambda_.33} parent=5 // pred_check_branch
      %138 = sbr.rel (%p135) target = $region12
    $region11: #{_lambda_.33} parent=5 // pred_region
      %s139 = ssub.s32 %s10, 1
      // Predicated region
      $region13: #{_lambda_.33} parent=11 // pred_check
        %p140 = pneg %p57
      $region14: #{_lambda_.33} parent=11 // pred_check_branch
        %142 = sbr.rel (%p140) target = $region16
      $region15: #{_lambda_.33} parent=11 // pred_region
        _
      $region16: #{_lambda_.33} parent=11 // pred_fallthru
        _
      // Predicated region
      $region17: #{_lambda_.33} parent=11 // pred_check
        %p143 = pneg %p78
      $region18: #{_lambda_.33} parent=11 // pred_check_branch
        %145 = sbr.rel (%p143) target = $region20
      $region19: #{_lambda_.33} parent=11 // pred_region
        _
      $region20: #{_lambda_.33} parent=11 // pred_fallthru
        _
      // Predicated region
      $region21: #{_lambda_.33} parent=11 // pred_check
        %p146 = pneg %p99
      $region22: #{_lambda_.33} parent=11 // pred_check_branch
        %148 = sbr.rel (%p146) target = $region24
      $region23: #{_lambda_.33} parent=11 // pred_region
        _
      $region24: #{_lambda_.33} parent=11 // pred_fallthru
        _
    $region12: #{_lambda_.33} parent=5 // pred_fallthru
      _
    %p149 = scmp.lt.s32.totalorder %s10, 2
    // Predicated region
    $region25: #{_lambda_.33} parent=5 // pred_check
      %p150 = pneg %p149
    $region26: #{_lambda_.33} parent=5 // pred_check_branch
      %152 = sbr.rel (%p150) target = $region28
    $region27: #{_lambda_.33} parent=5 // pred_region
      // Predicated region
      $region29: #{_lambda_.33} parent=27 // pred_check
        %p153 = pneg %p30
      $region30: #{_lambda_.33} parent=27 // pred_check_branch
        %155 = sbr.rel (%p153) target = $region32
      $region31: #{_lambda_.33} parent=27 // pred_region
        %s156 = smul.u32 32, %s10
        %p157 = scmp.lt.s32.totalorder %s156, 63
        %s158 = scalar_select %p157, %s156, 63
        %s159 = smul.addr %s158, 4
        %s160 = scalar_lea.vmem %s0, %s159
        %s161 = smul.u32 32, %s10
      $region32: #{_lambda_.33} parent=27 // pred_fallthru
        _
    $region28: #{_lambda_.33} parent=5 // pred_fallthru
      _
    %p162 = scmp.le.s32.totalorder 1, %s10
    %p163 = scmp.lt.s32.totalorder %s10, 3
    %p164 = pnand %p162, %p163
    %p165 = pneg %p164
    // Predicated region
    $region33: #{_lambda_.33} parent=5 // pred_check
      _
    $region34: #{_lambda_.33} parent=5 // pred_check_branch
      %167 = sbr.rel (%p164) target = $region36
    $region35: #{_lambda_.33} parent=5 // pred_region
      %s168 = ssub.s32 %s10, 1
      %s169 = smul.u32 32, %s15
      %p170 = scmp.lt.s32.totalorder %s169, 63
      %s171 = scalar_select %p170, %s169, 63
      %s172 = smul.addr %s171, 4
      %s173 = scalar_lea.vmem %s0, %s172
      %p174 = pneg %p36
      %p175 = pneg %p33
      %p176 = pneg %p57
      %p177 = pneg %p54
      %p178 = pneg %p78
      %p179 = pneg %p75
      %p180 = pneg %p99
      %p181 = pneg %p96
      %p182 = pneg %p125
      %p183 = pneg %p122
      %s184 = smul.u32 32, %s15
      %p185 = scmp.lt.s32.totalorder %s184, 63
      %s186 = scalar_select %p185, %s184, 63
      %s187 = smul.addr %s186, 4
      %s188 = scalar_lea.vmem %s4, %s187
      %s189 = smul.u32 32, %s15
      %p190 = scmp.lt.s32.totalorder %s189, 63
      %s191 = scalar_select %p190, %s189, 63
      %s192 = smul.addr %s191, 4
      %s193 = scalar_lea.vmem %s0, %s192
      %s194 = smul.u32 32, %s15
      %s195 = smul.u32 32, %s15
      %p196 = scmp.lt.s32.totalorder %s195, 63
      %s197 = scalar_select %p196, %s195, 63
      %s198 = smul.addr %s197, 4
      %s199 = scalar_lea.vmem %s4, %s198
      %s200 = smul.u32 32, %s15
      %v202 = vld [vmem:[%s193] sm:$0xf]
      %v203 = vld [vmem:[%s193 + $0x4] sm:$0xf]
      %v204 = vld [vmem:[%s193 + $0x8] sm:$0xf]
      %v205 = vld [vmem:[%s193 + $0xc] sm:$0xf]
      %v206 = vld [vmem:[%s193 + $0x10] sm:$0xf]
      %v207 = vld [vmem:[%s193 + $0x14] sm:$0xf]
      %v208 = vld [vmem:[%s193 + $0x18] sm:$0xf]
      %v209 = vld [vmem:[%s193 + $0x1c] sm:$0xf]
      %v210 = vld [vmem:[%s193 + $0x20] sm:$0xf]
      %v211 = vld [vmem:[%s193 + $0x24] sm:$0xf]
      %v212 = vld [vmem:[%s193 + $0x28] sm:$0xf]
      %v213 = vld [vmem:[%s193 + $0x2c] sm:$0xf]
      %v214 = vld [vmem:[%s193 + $0x30] sm:$0xf]
      %v215 = vld [vmem:[%s193 + $0x34] sm:$0xf]
      %v216 = vld [vmem:[%s193 + $0x38] sm:$0xf]
      %v217 = vld [vmem:[%s193 + $0x3c] sm:$0xf]
      %v218 = vld [vmem:[%s193 + $0x40] sm:$0xf]
      %v219 = vld [vmem:[%s193 + $0x44] sm:$0xf]
      %v220 = vld [vmem:[%s193 + $0x48] sm:$0xf]
      %v221 = vld [vmem:[%s193 + $0x4c] sm:$0xf]
      %v222 = vld [vmem:[%s193 + $0x50] sm:$0xf]
      %v223 = vld [vmem:[%s193 + $0x54] sm:$0xf]
      %v224 = vld [vmem:[%s193 + $0x58] sm:$0xf]
      %v225 = vld [vmem:[%s193 + $0x5c] sm:$0xf]
      %v226 = vld [vmem:[%s193 + $0x60] sm:$0xf]
      %v227 = vld [vmem:[%s193 + $0x64] sm:$0xf]
      %v228 = vld [vmem:[%s193 + $0x68] sm:$0xf]
      %v229 = vld [vmem:[%s193 + $0x6c] sm:$0xf]
      %v230 = vld [vmem:[%s193 + $0x70] sm:$0xf]
      %v231 = vld [vmem:[%s193 + $0x74] sm:$0xf]
      %v232 = vld [vmem:[%s193 + $0x78] sm:$0xf]
      %v233 = vld [vmem:[%s193 + $0x7c] sm:$0xf]
      %v234 = vunpack.c.l.bf16 %v202
      %v235 = vunpack.c.l.bf16 %v203
      %v236 = vunpack.c.l.bf16 %v204
      %v237 = vunpack.c.l.bf16 %v205
      %v238 = vunpack.c.l.bf16 %v206
      %v239 = vunpack.c.l.bf16 %v207
      %v240 = vunpack.c.l.bf16 %v208
      %v241 = vunpack.c.l.bf16 %v209
      %v242 = vunpack.c.l.bf16 %v210
      %v243 = vunpack.c.l.bf16 %v211
      %v244 = vunpack.c.l.bf16 %v212
      %v245 = vunpack.c.l.bf16 %v213
      %v246 = vunpack.c.l.bf16 %v214
      %v247 = vunpack.c.l.bf16 %v215
      %v248 = vunpack.c.l.bf16 %v216
      %v249 = vunpack.c.l.bf16 %v217
      %v250 = vunpack.c.l.bf16 %v218
      %v251 = vunpack.c.l.bf16 %v219
      %v252 = vunpack.c.l.bf16 %v220
      %v253 = vunpack.c.l.bf16 %v221
      %v254 = vunpack.c.l.bf16 %v222
      %v255 = vunpack.c.l.bf16 %v223
      %v256 = vunpack.c.l.bf16 %v224
      %v257 = vunpack.c.l.bf16 %v225
      %v258 = vunpack.c.l.bf16 %v226
      %v259 = vunpack.c.l.bf16 %v227
      %v260 = vunpack.c.l.bf16 %v228
      %v261 = vunpack.c.l.bf16 %v229
      %v262 = vunpack.c.l.bf16 %v230
      %v263 = vunpack.c.l.bf16 %v231
      %v264 = vunpack.c.l.bf16 %v232
      %v265 = vunpack.c.l.bf16 %v233
      %v266 = vmax.f32 %v234, 0.0
      %v267 = vmax.f32 %v235, 0.0
      %v268 = vmax.f32 %v236, 0.0
      %v269 = vmax.f32 %v237, 0.0
      %v270 = vmax.f32 %v238, 0.0
      %v271 = vmax.f32 %v239, 0.0
      %v272 = vmax.f32 %v240, 0.0
      %v273 = vmax.f32 %v241, 0.0
      %v274 = vmax.f32 %v242, 0.0
      %v275 = vmax.f32 %v243, 0.0
      %v276 = vmax.f32 %v244, 0.0
      %v277 = vmax.f32 %v245, 0.0
      %v278 = vmax.f32 %v246, 0.0
      %v279 = vmax.f32 %v247, 0.0
      %v280 = vmax.f32 %v248, 0.0
      %v281 = vmax.f32 %v249, 0.0
      %v282 = vmax.f32 %v250, 0.0
      %v283 = vmax.f32 %v251, 0.0
      %v284 = vmax.f32 %v252, 0.0
      %v285 = vmax.f32 %v253, 0.0
      %v286 = vmax.f32 %v254, 0.0
      %v287 = vmax.f32 %v255, 0.0
      %v288 = vmax.f32 %v256, 0.0
      %v289 = vmax.f32 %v257, 0.0
      %v290 = vmax.f32 %v258, 0.0
      %v291 = vmax.f32 %v259, 0.0
      %v292 = vmax.f32 %v260, 0.0
      %v293 = vmax.f32 %v261, 0.0
      %v294 = vmax.f32 %v262, 0.0
      %v295 = vmax.f32 %v263, 0.0
      %v296 = vmax.f32 %v264, 0.0
      %v297 = vmax.f32 %v265, 0.0
      %v298 = vpack.c.bf16 %v267, %v266
      %v299 = vpack.c.bf16 %v269, %v268
      %v300 = vpack.c.bf16 %v271, %v270
      %v301 = vpack.c.bf16 %v273, %v272
      %v302 = vpack.c.bf16 %v275, %v274
      %v303 = vpack.c.bf16 %v277, %v276
      %v304 = vpack.c.bf16 %v279, %v278
      %v305 = vpack.c.bf16 %v281, %v280
      %v306 = vpack.c.bf16 %v283, %v282
      %v307 = vpack.c.bf16 %v285, %v284
      %v308 = vpack.c.bf16 %v287, %v286
      %v309 = vpack.c.bf16 %v289, %v288
      %v310 = vpack.c.bf16 %v291, %v290
      %v311 = vpack.c.bf16 %v293, %v292
      %v312 = vpack.c.bf16 %v295, %v294
      %v313 = vpack.c.bf16 %v297, %v296
      %v314 = vld [vmem:[%s1] sm:$0xf]
      %v315 = vld [vmem:[%s1 + $0x4] sm:$0xf]
      %v316 = vld [vmem:[%s1 + $0x8] sm:$0xf]
      %v317 = vld [vmem:[%s1 + $0xc] sm:$0xf]
      %v318 = vld [vmem:[%s1 + $0x10] sm:$0xf]
      %v319 = vld [vmem:[%s1 + $0x14] sm:$0xf]
      %v320 = vld [vmem:[%s1 + $0x18] sm:$0xf]
      %v321 = vld [vmem:[%s1 + $0x1c] sm:$0xf]
      %v322 = vld [vmem:[%s1 + $0x20] sm:$0xf]
      %v323 = vld [vmem:[%s1 + $0x24] sm:$0xf]
      %v334 = vunpack.c.l.b16 %v314
      %v335 = vunpack.c.l.b16 %v315
      %v336 = vunpack.c.l.b16 %v316
      %v337 = vunpack.c.l.b16 %v317
      %v338 = vunpack.c.l.b16 %v318
      %v339 = vunpack.c.l.b16 %v319
      %v340 = vunpack.c.l.b16 %v320
      %v341 = vunpack.c.l.b16 %v321
      %v342 = vunpack.c.l.b16 %v322
      %v343 = vunpack.c.l.b16 %v323
      %v344 = vpack.c.b16 %v335, %v334
      %v345 = vpack.c.b16 %v337, %v336
      %v346 = vpack.c.b16 %v339, %v338
      %v347 = vpack.c.b16 %v341, %v340
      %v348 = vpack.c.b16 %v343, %v342
      %vm354 = vcmask 654336
      %v356 = vsel %vm354, %v298, 0
      %v359 = vsel %vm354, %v299, 0
      %v362 = vsel %vm354, %v300, 0
      %v365 = vsel %vm354, %v301, 0
      %v368 = vsel %vm354, %v302, 0
      %v371 = vsel %vm354, %v303, 0
      %v374 = vsel %vm354, %v304, 0
      %v377 = vsel %vm354, %v305, 0
      %v380 = vsel %vm354, %v306, 0
      %v383 = vsel %vm354, %v307, 0
      %v386 = vsel %vm354, %v308, 0
      %v389 = vsel %vm354, %v309, 0
      %v392 = vsel %vm354, %v310, 0
      %v395 = vsel %vm354, %v311, 0
      %v398 = vsel %vm354, %v312, 0
      %v401 = vsel %vm354, %v313, 0
      %403 = vmatprep.subr.bf16.mxu0 0
      %404 = vmatpush1.bf16.msra.mxu0 0
      %405 = vmatprep.subr.bf16.mxu0 0
      %406 = vmatpush1.bf16.msra.mxu0 0
      %407 = vmatprep.subr.bf16.mxu0 0
      %408 = vmatpush1.bf16.msra.mxu0 0
      %409 = vmatprep.subr.bf16.mxu0 0
      %410 = vmatpush1.bf16.msra.mxu0 %v348
      %411 = vmatprep.subr.bf16.mxu0 0
      %412 = vmatpush1.bf16.msra.mxu0 %v347
      %413 = vmatprep.subr.bf16.mxu0 0
      %414 = vmatpush1.bf16.msra.mxu0 %v346
      %415 = vmatprep.subr.bf16.mxu0 0
      %416 = vmatpush1.bf16.msra.mxu0 %v345
      %417 = vmatprep.subr.bf16.mxu0 0
      %418 = vmatpush1.bf16.msra.mxu0 %v344
      %419 = vmatprep.subr.bf16.mxu0 0
      %420 = vmatpush2.bf16.msra.mxu0 0
      %421 = vmatprep.subr.bf16.mxu0 0
      %422 = vmatpush2.bf16.msra.mxu0 0
      %423 = vmatprep.subr.bf16.mxu0 0
      %424 = vmatpush2.bf16.msra.mxu0 0
      %425 = vmatprep.subr.bf16.mxu0 0
      %426 = vmatpush2.bf16.msra.mxu0 0
      %427 = vmatprep.subr.bf16.mxu0 0
      %428 = vmatpush2.bf16.msra.mxu0 0
      %429 = vmatprep.subr.bf16.mxu0 0
      %430 = vmatpush2.bf16.msra.mxu0 0
      %431 = vmatprep.subr.bf16.mxu0 0
      %432 = vmatpush2.bf16.msra.mxu0 0
      %433 = vmatprep.subr.bf16.mxu0 0
      %434 = vmatpush2.bf16.msra.mxu0 0
      %435 = vmatprep.mubr.bf16.mxu0 0
      %436 = vmatmul.mubr.bf16.gmra.mxu0 %v356
      %v437 = vpop.f32.mrf.mxu0
      %v438 = vadd.f32 0.0, %v437
      %v439 = vpop.f32.mrf.mxu0
      %v440 = vpop.f32.mrf.mxu0
      %v441 = vadd.f32 0.0, %v440
      %v442 = vpop.f32.mrf.mxu0
      %443 = vmatprep.mubr.bf16.mxu0 0
      %444 = vmatmul.mubr.bf16.gmra.mxu0 %v359
      %v445 = vpop.f32.mrf.mxu0
      %v446 = vadd.f32 0.0, %v445
      %v447 = vpop.f32.mrf.mxu0
      %v448 = vpop.f32.mrf.mxu0
      %v449 = vadd.f32 0.0, %v448
      %v450 = vpop.f32.mrf.mxu0
      %451 = vmatprep.mubr.bf16.mxu0 0
      %452 = vmatmul.mubr.bf16.gmra.mxu0 %v362
      %v453 = vpop.f32.mrf.mxu0
      %v454 = vadd.f32 0.0, %v453
      %v455 = vpop.f32.mrf.mxu0
      %v456 = vpop.f32.mrf.mxu0
      %v457 = vadd.f32 0.0, %v456
      %v458 = vpop.f32.mrf.mxu0
      %459 = vmatprep.mubr.bf16.mxu0 0
      %460 = vmatmul.mubr.bf16.gmra.mxu0 %v365
      %v461 = vpop.f32.mrf.mxu0
      %v462 = vadd.f32 0.0, %v461
      %v463 = vpop.f32.mrf.mxu0
      %v464 = vpop.f32.mrf.mxu0
      %v465 = vadd.f32 0.0, %v464
      %v466 = vpop.f32.mrf.mxu0
      %467 = vmatprep.mubr.bf16.mxu0 0
      %468 = vmatmul.mubr.bf16.gmra.mxu0 %v368
      %v469 = vpop.f32.mrf.mxu0
      %v470 = vadd.f32 0.0, %v469
      %v471 = vpop.f32.mrf.mxu0
      %v472 = vpop.f32.mrf.mxu0
      %v473 = vadd.f32 0.0, %v472
      %v474 = vpop.f32.mrf.mxu0
      %475 = vmatprep.mubr.bf16.mxu0 0
      %476 = vmatmul.mubr.bf16.gmra.mxu0 %v371
      %v477 = vpop.f32.mrf.mxu0
      %v478 = vadd.f32 0.0, %v477
      %v479 = vpop.f32.mrf.mxu0
      %v480 = vpop.f32.mrf.mxu0
      %v481 = vadd.f32 0.0, %v480
      %v482 = vpop.f32.mrf.mxu0
      %483 = vmatprep.mubr.bf16.mxu0 0
      %484 = vmatmul.mubr.bf16.gmra.mxu0 %v374
      %v485 = vpop.f32.mrf.mxu0
      %v486 = vadd.f32 0.0, %v485
      %v487 = vpop.f32.mrf.mxu0
      %v488 = vpop.f32.mrf.mxu0
      %v489 = vadd.f32 0.0, %v488
      %v490 = vpop.f32.mrf.mxu0
      %491 = vmatprep.mubr.bf16.mxu0 0
      %492 = vmatmul.mubr.bf16.gmra.mxu0 %v377
      %v493 = vpop.f32.mrf.mxu0
      %v494 = vadd.f32 0.0, %v493
      %v495 = vpop.f32.mrf.mxu0
      %v496 = vpop.f32.mrf.mxu0
      %v497 = vadd.f32 0.0, %v496
      %v498 = vpop.f32.mrf.mxu0
      %499 = vmatprep.mubr.bf16.mxu0 0
      %500 = vmatmul.mubr.bf16.gmra.mxu0 %v380
      %v501 = vpop.f32.mrf.mxu0
      %v502 = vadd.f32 0.0, %v501
      %v503 = vpop.f32.mrf.mxu0
      %v504 = vpop.f32.mrf.mxu0
      %v505 = vadd.f32 0.0, %v504
      %v506 = vpop.f32.mrf.mxu0
      %507 = vmatprep.mubr.bf16.mxu0 0
      %508 = vmatmul.mubr.bf16.gmra.mxu0 %v383
      %v509 = vpop.f32.mrf.mxu0
      %v510 = vadd.f32 0.0, %v509
      %v511 = vpop.f32.mrf.mxu0
      %v512 = vpop.f32.mrf.mxu0
      %v513 = vadd.f32 0.0, %v512
      %v514 = vpop.f32.mrf.mxu0
      %515 = vmatprep.mubr.bf16.mxu0 0
      %516 = vmatmul.mubr.bf16.gmra.mxu0 %v386
      %v517 = vpop.f32.mrf.mxu0
      %v518 = vadd.f32 0.0, %v517
      %v519 = vpop.f32.mrf.mxu0
      %v520 = vpop.f32.mrf.mxu0
      %v521 = vadd.f32 0.0, %v520
      %v522 = vpop.f32.mrf.mxu0
      %523 = vmatprep.mubr.bf16.mxu0 0
      %524 = vmatmul.mubr.bf16.gmra.mxu0 %v389
      %v525 = vpop.f32.mrf.mxu0
      %v526 = vadd.f32 0.0, %v525
      %v527 = vpop.f32.mrf.mxu0
      %v528 = vpop.f32.mrf.mxu0
      %v529 = vadd.f32 0.0, %v528
      %v530 = vpop.f32.mrf.mxu0
      %531 = vmatprep.mubr.bf16.mxu0 0
      %532 = vmatmul.mubr.bf16.gmra.mxu0 %v392
      %v533 = vpop.f32.mrf.mxu0
      %v534 = vadd.f32 0.0, %v533
      %v535 = vpop.f32.mrf.mxu0
      %v536 = vpop.f32.mrf.mxu0
      %v537 = vadd.f32 0.0, %v536
      %v538 = vpop.f32.mrf.mxu0
      %539 = vmatprep.mubr.bf16.mxu0 0
      %540 = vmatmul.mubr.bf16.gmra.mxu0 %v395
      %v541 = vpop.f32.mrf.mxu0
      %v542 = vadd.f32 0.0, %v541
      %v543 = vpop.f32.mrf.mxu0
      %v544 = vpop.f32.mrf.mxu0
      %v545 = vadd.f32 0.0, %v544
      %v546 = vpop.f32.mrf.mxu0
      %547 = vmatprep.mubr.bf16.mxu0 0
      %548 = vmatmul.mubr.bf16.gmra.mxu0 %v398
      %v549 = vpop.f32.mrf.mxu0
      %v550 = vadd.f32 0.0, %v549
      %v551 = vpop.f32.mrf.mxu0
      %v552 = vpop.f32.mrf.mxu0
      %v553 = vadd.f32 0.0, %v552
      %v554 = vpop.f32.mrf.mxu0
      %555 = vmatprep.mubr.bf16.mxu0 0
      %556 = vmatmul.mubr.bf16.gmra.mxu0 %v401
      %v557 = vpop.f32.mrf.mxu0
      %v558 = vadd.f32 0.0, %v557
      %v559 = vpop.f32.mrf.mxu0
      %v560 = vpop.f32.mrf.mxu0
      %v561 = vadd.f32 0.0, %v560
      %v562 = vpop.f32.mrf.mxu0
      %563 = vdwg.mxu0
      %v564 = vld [vmem:[%s2] sm:$0x1]
      %v566 = vlaneseq
      %v567 = vshrl.u32 %v566, 7
      %v568 = vsub.s32 0, %v567
      %v569 = vrot.slane %v564, %v568
      %v571 = vmul.f32 %v438, %v569
      %v572 = vmul.f32 %v441, %v569
      %v573 = vmul.f32 %v446, %v569
      %v574 = vmul.f32 %v449, %v569
      %v575 = vmul.f32 %v454, %v569
      %v576 = vmul.f32 %v457, %v569
      %v577 = vmul.f32 %v462, %v569
      %v578 = vmul.f32 %v465, %v569
      %v579 = vmul.f32 %v470, %v569
      %v580 = vmul.f32 %v473, %v569
      %v581 = vmul.f32 %v478, %v569
      %v582 = vmul.f32 %v481, %v569
      %v583 = vmul.f32 %v486, %v569
      %v584 = vmul.f32 %v489, %v569
      %v585 = vmul.f32 %v494, %v569
      %v586 = vmul.f32 %v497, %v569
      %v587 = vmul.f32 %v502, %v569
      %v588 = vmul.f32 %v505, %v569
      %v589 = vmul.f32 %v510, %v569
      %v590 = vmul.f32 %v513, %v569
      %v591 = vmul.f32 %v518, %v569
      %v592 = vmul.f32 %v521, %v569
      %v593 = vmul.f32 %v526, %v569
      %v594 = vmul.f32 %v529, %v569
      %v595 = vmul.f32 %v534, %v569
      %v596 = vmul.f32 %v537, %v569
      %v597 = vmul.f32 %v542, %v569
      %v598 = vmul.f32 %v545, %v569
      %v599 = vmul.f32 %v550, %v569
      %v600 = vmul.f32 %v553, %v569
      %v601 = vmul.f32 %v558, %v569
      %v602 = vmul.f32 %v561, %v569
      %v603 = vld [vmem:[%s3] sm:$0x1]
      %v605 = vlaneseq
      %v606 = vshrl.u32 %v605, 7
      %v607 = vsub.s32 0, %v606
      %v608 = vrot.slane %v603, %v607
      %v610 = vadd.f32 %v571, %v608
      %v611 = vadd.f32 %v572, %v608
      %v612 = vadd.f32 %v573, %v608
      %v613 = vadd.f32 %v574, %v608
      %v614 = vadd.f32 %v575, %v608
      %v615 = vadd.f32 %v576, %v608
      %v616 = vadd.f32 %v577, %v608
      %v617 = vadd.f32 %v578, %v608
      %v618 = vadd.f32 %v579, %v608
      %v619 = vadd.f32 %v580, %v608
      %v620 = vadd.f32 %v581, %v608
      %v621 = vadd.f32 %v582, %v608
      %v622 = vadd.f32 %v583, %v608
      %v623 = vadd.f32 %v584, %v608
      %v624 = vadd.f32 %v585, %v608
      %v625 = vadd.f32 %v586, %v608
      %v626 = vadd.f32 %v587, %v608
      %v627 = vadd.f32 %v588, %v608
      %v628 = vadd.f32 %v589, %v608
      %v629 = vadd.f32 %v590, %v608
      %v630 = vadd.f32 %v591, %v608
      %v631 = vadd.f32 %v592, %v608
      %v632 = vadd.f32 %v593, %v608
      %v633 = vadd.f32 %v594, %v608
      %v634 = vadd.f32 %v595, %v608
      %v635 = vadd.f32 %v596, %v608
      %v636 = vadd.f32 %v597, %v608
      %v637 = vadd.f32 %v598, %v608
      %v638 = vadd.f32 %v599, %v608
      %v639 = vadd.f32 %v600, %v608
      %v640 = vadd.f32 %v601, %v608
      %v641 = vadd.f32 %v602, %v608
      %v642 = vpack.c.bf16 %v611, %v610
      %v643 = vpack.c.bf16 %v613, %v612
      %v644 = vpack.c.bf16 %v615, %v614
      %v645 = vpack.c.bf16 %v617, %v616
      %v646 = vpack.c.bf16 %v619, %v618
      %v647 = vpack.c.bf16 %v621, %v620
      %v648 = vpack.c.bf16 %v623, %v622
      %v649 = vpack.c.bf16 %v625, %v624
      %v650 = vpack.c.bf16 %v627, %v626
      %v651 = vpack.c.bf16 %v629, %v628
      %v652 = vpack.c.bf16 %v631, %v630
      %v653 = vpack.c.bf16 %v633, %v632
      %v654 = vpack.c.bf16 %v635, %v634
      %v655 = vpack.c.bf16 %v637, %v636
      %v656 = vpack.c.bf16 %v639, %v638
      %v657 = vpack.c.bf16 %v641, %v640
      %v674 = vunpack.c.l.b16 %v642
      %v675 = vunpack.c.h.b16 %v642
      %v676 = vunpack.c.l.b16 %v643
      %v677 = vunpack.c.h.b16 %v643
      %v678 = vunpack.c.l.b16 %v644
      %v679 = vunpack.c.h.b16 %v644
      %v680 = vunpack.c.l.b16 %v645
      %v681 = vunpack.c.h.b16 %v645
      %v682 = vunpack.c.l.b16 %v646
      %v683 = vunpack.c.h.b16 %v646
      %v684 = vunpack.c.l.b16 %v647
      %v685 = vunpack.c.h.b16 %v647
      %v686 = vunpack.c.l.b16 %v648
      %v687 = vunpack.c.h.b16 %v648
      %v688 = vunpack.c.l.b16 %v649
      %v689 = vunpack.c.h.b16 %v649
      %v690 = vunpack.c.l.b16 %v650
      %v691 = vunpack.c.h.b16 %v650
      %v692 = vunpack.c.l.b16 %v651
      %v693 = vunpack.c.h.b16 %v651
      %v694 = vunpack.c.l.b16 %v652
      %v695 = vunpack.c.h.b16 %v652
      %v696 = vunpack.c.l.b16 %v653
      %v697 = vunpack.c.h.b16 %v653
      %v698 = vunpack.c.l.b16 %v654
      %v699 = vunpack.c.h.b16 %v654
      %v700 = vunpack.c.l.b16 %v655
      %v701 = vunpack.c.h.b16 %v655
      %v702 = vunpack.c.l.b16 %v656
      %v703 = vunpack.c.h.b16 %v656
      %v704 = vunpack.c.l.b16 %v657
      %v705 = vunpack.c.h.b16 %v657
      %v706 = vpack.c.b16 %v674, %v674
      %v707 = vpack.c.b16 %v675, %v675
      %v708 = vpack.c.b16 %v676, %v676
      %v709 = vpack.c.b16 %v677, %v677
      %v710 = vpack.c.b16 %v678, %v678
      %v711 = vpack.c.b16 %v679, %v679
      %v712 = vpack.c.b16 %v680, %v680
      %v713 = vpack.c.b16 %v681, %v681
      %v714 = vpack.c.b16 %v682, %v682
      %v715 = vpack.c.b16 %v683, %v683
      %v716 = vpack.c.b16 %v684, %v684
      %v717 = vpack.c.b16 %v685, %v685
      %v718 = vpack.c.b16 %v686, %v686
      %v719 = vpack.c.b16 %v687, %v687
      %v720 = vpack.c.b16 %v688, %v688
      %v721 = vpack.c.b16 %v689, %v689
      %v722 = vpack.c.b16 %v690, %v690
      %v723 = vpack.c.b16 %v691, %v691
      %v724 = vpack.c.b16 %v692, %v692
      %v725 = vpack.c.b16 %v693, %v693
      %v726 = vpack.c.b16 %v694, %v694
      %v727 = vpack.c.b16 %v695, %v695
      %v728 = vpack.c.b16 %v696, %v696
      %v729 = vpack.c.b16 %v697, %v697
      %v730 = vpack.c.b16 %v698, %v698
      %v731 = vpack.c.b16 %v699, %v699
      %v732 = vpack.c.b16 %v700, %v700
      %v733 = vpack.c.b16 %v701, %v701
      %v734 = vpack.c.b16 %v702, %v702
      %v735 = vpack.c.b16 %v703, %v703
      %v736 = vpack.c.b16 %v704, %v704
      %v737 = vpack.c.b16 %v705, %v705
      %vm770 = vcmask 60416
      %771 = vst.msk [vmem:[%s199] sm:$0xf] %vm770, %v706
      %772 = vst.msk [vmem:[%s199 + $0x4] sm:$0xf] %vm770, %v707
      %773 = vst.msk [vmem:[%s199 + $0x8] sm:$0xf] %vm770, %v708
      %774 = vst.msk [vmem:[%s199 + $0xc] sm:$0xf] %vm770, %v709
      %775 = vst.msk [vmem:[%s199 + $0x10] sm:$0xf] %vm770, %v710
      %776 = vst.msk [vmem:[%s199 + $0x14] sm:$0xf] %vm770, %v711
      %777 = vst.msk [vmem:[%s199 + $0x18] sm:$0xf] %vm770, %v712
      %778 = vst.msk [vmem:[%s199 + $0x1c] sm:$0xf] %vm770, %v713
      %779 = vst.msk [vmem:[%s199 + $0x20] sm:$0xf] %vm770, %v714
      %780 = vst.msk [vmem:[%s199 + $0x24] sm:$0xf] %vm770, %v715
      %781 = vst.msk [vmem:[%s199 + $0x28] sm:$0xf] %vm770, %v716
      %782 = vst.msk [vmem:[%s199 + $0x2c] sm:$0xf] %vm770, %v717
      %783 = vst.msk [vmem:[%s199 + $0x30] sm:$0xf] %vm770, %v718
      %784 = vst.msk [vmem:[%s199 + $0x34] sm:$0xf] %vm770, %v719
      %785 = vst.msk [vmem:[%s199 + $0x38] sm:$0xf] %vm770, %v720
      %786 = vst.msk [vmem:[%s199 + $0x3c] sm:$0xf] %vm770, %v721
      %787 = vst.msk [vmem:[%s199 + $0x40] sm:$0xf] %vm770, %v722
      %788 = vst.msk [vmem:[%s199 + $0x44] sm:$0xf] %vm770, %v723
      %789 = vst.msk [vmem:[%s199 + $0x48] sm:$0xf] %vm770, %v724
      %790 = vst.msk [vmem:[%s199 + $0x4c] sm:$0xf] %vm770, %v725
      %791 = vst.msk [vmem:[%s199 + $0x50] sm:$0xf] %vm770, %v726
      %792 = vst.msk [vmem:[%s199 + $0x54] sm:$0xf] %vm770, %v727
      %793 = vst.msk [vmem:[%s199 + $0x58] sm:$0xf] %vm770, %v728
      %794 = vst.msk [vmem:[%s199 + $0x5c] sm:$0xf] %vm770, %v729
      %795 = vst.msk [vmem:[%s199 + $0x60] sm:$0xf] %vm770, %v730
      %796 = vst.msk [vmem:[%s199 + $0x64] sm:$0xf] %vm770, %v731
      %797 = vst.msk [vmem:[%s199 + $0x68] sm:$0xf] %vm770, %v732
      %798 = vst.msk [vmem:[%s199 + $0x6c] sm:$0xf] %vm770, %v733
      %799 = vst.msk [vmem:[%s199 + $0x70] sm:$0xf] %vm770, %v734
      %800 = vst.msk [vmem:[%s199 + $0x74] sm:$0xf] %vm770, %v735
      %801 = vst.msk [vmem:[%s199 + $0x78] sm:$0xf] %vm770, %v736
      %802 = vst.msk [vmem:[%s199 + $0x7c] sm:$0xf] %vm770, %v737
      %s803 = smul.u32 32, %s15
      %p804 = scmp.lt.s32.totalorder %s803, 63
      %s805 = scalar_select %p804, %s803, 63
      %s806 = smul.addr %s805, 4
      %s807 = scalar_lea.vmem %s4, %s806
      // Predicated region
      $region37: #{_lambda_.33} parent=35 // pred_check
        %p808 = pneg %p122
      $region38: #{_lambda_.33} parent=35 // pred_check_branch
        %810 = sbr.rel (%p808) target = $region40
      $region39: #{_lambda_.33} parent=35 // pred_region
        %s811 = smul.u32 32, %s15
      $region40: #{_lambda_.33} parent=35 // pred_fallthru
        _
    $region36: #{_lambda_.33} parent=5 // pred_fallthru
      _
    %p812 = scmp.le.s32.totalorder 2, %s10
    // Predicated region
    $region41: #{_lambda_.33} parent=5 // pred_check
      %p813 = pneg %p812
    $region42: #{_lambda_.33} parent=5 // pred_check_branch
      %815 = sbr.rel (%p813) target = $region44
    $region43: #{_lambda_.33} parent=5 // pred_region
      %s816 = ssub.s32 %s10, 2
      // Predicated region
      $region45: #{_lambda_.33} parent=43 // pred_check
        %p817 = pneg %p128
      $region46: #{_lambda_.33} parent=43 // pred_check_branch
        %819 = sbr.rel (%p817) target = $region48
      $region47: #{_lambda_.33} parent=43 // pred_region
        %s820 = smul.u32 32, %s16
        %p821 = scmp.lt.s32.totalorder %s820, 63
        %s822 = scalar_select %p821, %s820, 63
        %s823 = smul.addr %s822, 4
        %s824 = scalar_lea.vmem %s4, %s823
      $region48: #{_lambda_.33} parent=43 // pred_fallthru
        _
    $region44: #{_lambda_.33} parent=5 // pred_fallthru
      _
  $region6: #{_lambda_.33} parent=0 // loop_footer
    %s14 = sadd.s32 1, %s10
  $region7: #{_lambda_.33} parent=0 // loop_footer_branch
    %9 = sbr.rel target = $region3
  $region8: #{_lambda_.33} parent=0 // loop_exit
    _

// kernel: _lambda_.31
$region0: #{_lambda_.31}
  #allocation0 [shape = 'u32[]', space=smem, size = 0x4, offset = 0x4, fixed_abs, tag = 'smem constant byte address 0x4 - core index']
  #allocation1 [shape = 'u32[144,128]{1,0:T(1,128)}', space=vmem, size = 0x12000, scoped, tag = 'internal scratch']
  %s0 = inlined_call_operand.vmem [shape: bf16[2,18,144], index: 0, kind: input, shape index: {}]
  %s1 = inlined_call_operand.vmem [shape: f32[1,16,128], index: 1, kind: input, shape index: {}]
  %s2 = inlined_call_operand.vmem [shape: f32[1,1,128], index: 2, kind: input, shape index: {}]
  %s3 = inlined_call_operand.vmem [shape: bf16[2,16,128], index: 3, kind: output, shape index: {}]
  %s4 = sld [smem:[#allocation0]]
  $region22: #{_lambda_.31} parent=0
    _
  %s6 = ssub.s32 1, %s4
  %s7 = scalar_select 0, %s6, %s4
  // Predicated region
  $region2: #{_lambda_.31} parent=0 // pred_check
    _
  $region3: #{_lambda_.31} parent=0 // pred_check_branch
    %9 = sbr.rel (0) target = $region5
  $region4: #{_lambda_.31} parent=0 // pred_region
    _
  $region5: #{_lambda_.31} parent=0 // pred_fallthru
    _
  // Predicated region
  $region6: #{_lambda_.31} parent=0 // pred_check
    _
  $region7: #{_lambda_.31} parent=0 // pred_check_branch
    %11 = sbr.rel (0) target = $region9
  $region8: #{_lambda_.31} parent=0 // pred_region
    _
  $region9: #{_lambda_.31} parent=0 // pred_fallthru
    _
  // Predicated region
  $region10: #{_lambda_.31} parent=0 // pred_check
    _
  $region11: #{_lambda_.31} parent=0 // pred_check_branch
    %13 = sbr.rel (0) target = $region13
  $region12: #{_lambda_.31} parent=0 // pred_region
    _
  $region13: #{_lambda_.31} parent=0 // pred_fallthru
    _
  %v14 = vld [vmem:[%s0] sm:$0xff]
  %v15 = vld [vmem:[%s0 + $0x8] sm:$0xff]
  %v16 = vld [vmem:[%s0 + $0x10] sm:$0x11]
  %v17 = vld [vmem:[%s0 + $0x18] sm:$0xff]
  %v18 = vld [vmem:[%s0 + $0x20] sm:$0xff]
  %v19 = vld [vmem:[%s0 + $0x28] sm:$0x11]
  %v20 = vunpack.c.l.bf16 %v14
  %v21 = vunpack.c.h.bf16 %v14
  %v22 = vunpack.c.l.bf16 %v15
  %v23 = vunpack.c.h.bf16 %v15
  %v24 = vunpack.c.l.bf16 %v16
  %v25 = vunpack.c.h.bf16 %v16
  %v26 = vunpack.c.l.bf16 %v17
  %v27 = vunpack.c.h.bf16 %v17
  %v28 = vunpack.c.l.bf16 %v18
  %v29 = vunpack.c.h.bf16 %v18
  %v30 = vunpack.c.l.bf16 %v19
  %v31 = vunpack.c.h.bf16 %v19
  %40 = vrot.lane.b32.xlu0 %v20, 120
  %v41 = vpop.permute.xlu0 %40
  %42 = vrot.lane.b32.xlu0 %v21, 120
  %v43 = vpop.permute.xlu0 %42
  %44 = vrot.lane.b32.xlu0 %v22, 120
  %v45 = vpop.permute.xlu0 %44
  %46 = vrot.lane.b32.xlu0 %v23, 120
  %v47 = vpop.permute.xlu0 %46
  %48 = vrot.lane.b32.xlu0 %v26, 120
  %v49 = vpop.permute.xlu0 %48
  %50 = vrot.lane.b32.xlu0 %v27, 120
  %v51 = vpop.permute.xlu0 %50
  %52 = vrot.lane.b32.xlu0 %v28, 120
  %v53 = vpop.permute.xlu0 %52
  %54 = vrot.lane.b32.xlu0 %v29, 120
  %v55 = vpop.permute.xlu0 %54
  %vm56 = vcmask 982016
  %v57 = vsel %vm56, %v41, %v43
  %v58 = vsel %vm56, %v45, %v47
  %v59 = vsel %vm56, %v49, %v51
  %v60 = vsel %vm56, %v53, %v55
  %v65 = vadd.f32 %v20, %v57
  %v66 = vadd.f32 %v22, %v58
  %v67 = vadd.f32 %v26, %v59
  %v68 = vadd.f32 %v28, %v60
  %69 = vrot.lane.b32.xlu0 %v20, 112
  %v70 = vpop.permute.xlu0 %69
  %71 = vrot.lane.b32.xlu0 %v21, 112
  %v72 = vpop.permute.xlu0 %71
  %73 = vrot.lane.b32.xlu0 %v22, 112
  %v74 = vpop.permute.xlu0 %73
  %75 = vrot.lane.b32.xlu0 %v23, 112
  %v76 = vpop.permute.xlu0 %75
  %77 = vrot.lane.b32.xlu0 %v26, 112
  %v78 = vpop.permute.xlu0 %77
  %79 = vrot.lane.b32.xlu0 %v27, 112
  %v80 = vpop.permute.xlu0 %79
  %81 = vrot.lane.b32.xlu0 %v28, 112
  %v82 = vpop.permute.xlu0 %81
  %83 = vrot.lane.b32.xlu0 %v29, 112
  %v84 = vpop.permute.xlu0 %83
  %vm85 = vcmask 916480
  %v86 = vsel %vm85, %v70, %v72
  %v87 = vsel %vm85, %v74, %v76
  %v88 = vsel %vm85, %v78, %v80
  %v89 = vsel %vm85, %v82, %v84
  %v94 = vadd.f32 %v65, %v86
  %v95 = vadd.f32 %v66, %v87
  %v96 = vadd.f32 %v67, %v88
  %v97 = vadd.f32 %v68, %v89
  %vm100 = vcmask 1046528
  %v101 = vrot.slane %v20, 1
  %v102 = vrot.slane %v22, 1
  %v103 = vsel %vm100, %v101, %v102
  %v104 = vrot.slane %v24, 1
  %v105 = vsel %vm100, %v102, %v104
  %v106 = vrot.slane %v26, 1
  %v107 = vrot.slane %v28, 1
  %v108 = vsel %vm100, %v106, %v107
  %v109 = vrot.slane %v30, 1
  %v110 = vsel %vm100, %v107, %v109
  %v115 = vadd.f32 %v94, %v103
  %v116 = vadd.f32 %v95, %v105
  %v117 = vadd.f32 %v96, %v108
  %v118 = vadd.f32 %v97, %v110
  %v121 = vrot.slane %v21, 1
  %v122 = vrot.slane %v23, 1
  %v123 = vsel %vm100, %v121, %v122
  %v124 = vrot.slane %v25, 1
  %v125 = vsel %vm100, %v122, %v124
  %v126 = vrot.slane %v27, 1
  %v127 = vrot.slane %v29, 1
  %v128 = vsel %vm100, %v126, %v127
  %v129 = vrot.slane %v31, 1
  %v130 = vsel %vm100, %v127, %v129
  %131 = vrot.lane.b32.xlu0 %v103, 120
  %v132 = vpop.permute.xlu0 %131
  %133 = vrot.lane.b32.xlu0 %v123, 120
  %v134 = vpop.permute.xlu0 %133
  %135 = vrot.lane.b32.xlu0 %v105, 120
  %v136 = vpop.permute.xlu0 %135
  %137 = vrot.lane.b32.xlu0 %v125, 120
  %v138 = vpop.permute.xlu0 %137
  %139 = vrot.lane.b32.xlu0 %v108, 120
  %v140 = vpop.permute.xlu0 %139
  %141 = vrot.lane.b32.xlu0 %v128, 120
  %v142 = vpop.permute.xlu0 %141
  %143 = vrot.lane.b32.xlu0 %v110, 120
  %v144 = vpop.permute.xlu0 %143
  %145 = vrot.lane.b32.xlu0 %v130, 120
  %v146 = vpop.permute.xlu0 %145
  %v147 = vsel %vm56, %v132, %v134
  %v148 = vsel %vm56, %v136, %v138
  %v149 = vsel %vm56, %v140, %v142
  %v150 = vsel %vm56, %v144, %v146
  %v155 = vadd.f32 %v115, %v147
  %v156 = vadd.f32 %v116, %v148
  %v157 = vadd.f32 %v117, %v149
  %v158 = vadd.f32 %v118, %v150
  %159 = vrot.lane.b32.xlu0 %v103, 112
  %v160 = vpop.permute.xlu0 %159
  %161 = vrot.lane.b32.xlu0 %v123, 112
  %v162 = vpop.permute.xlu0 %161
  %163 = vrot.lane.b32.xlu0 %v105, 112
  %v164 = vpop.permute.xlu0 %163
  %165 = vrot.lane.b32.xlu0 %v125, 112
  %v166 = vpop.permute.xlu0 %165
  %167 = vrot.lane.b32.xlu0 %v108, 112
  %v168 = vpop.permute.xlu0 %167
  %169 = vrot.lane.b32.xlu0 %v128, 112
  %v170 = vpop.permute.xlu0 %169
  %171 = vrot.lane.b32.xlu0 %v110, 112
  %v172 = vpop.permute.xlu0 %171
  %173 = vrot.lane.b32.xlu0 %v130, 112
  %v174 = vpop.permute.xlu0 %173
  %v175 = vsel %vm85, %v160, %v162
  %v176 = vsel %vm85, %v164, %v166
  %v177 = vsel %vm85, %v168, %v170
  %v178 = vsel %vm85, %v172, %v174
  %v183 = vadd.f32 %v155, %v175
  %v184 = vadd.f32 %v156, %v176
  %v185 = vadd.f32 %v157, %v177
  %v186 = vadd.f32 %v158, %v178
  %vm187 = vcmask 1045504
  %v188 = vrot.slane %v20, 2
  %v189 = vrot.slane %v22, 2
  %v190 = vsel %vm187, %v188, %v189
  %v191 = vrot.slane %v24, 2
  %v192 = vsel %vm187, %v189, %v191
  %v193 = vrot.slane %v26, 2
  %v194 = vrot.slane %v28, 2
  %v195 = vsel %vm187, %v193, %v194
  %v196 = vrot.slane %v30, 2
  %v197 = vsel %vm187, %v194, %v196
  %v202 = vadd.f32 %v183, %v190
  %v203 = vadd.f32 %v184, %v192
  %v204 = vadd.f32 %v185, %v195
  %v205 = vadd.f32 %v186, %v197
  %v206 = vrot.slane %v21, 2
  %v207 = vrot.slane %v23, 2
  %v208 = vsel %vm187, %v206, %v207
  %v209 = vrot.slane %v25, 2
  %v210 = vsel %vm187, %v207, %v209
  %v211 = vrot.slane %v27, 2
  %v212 = vrot.slane %v29, 2
  %v213 = vsel %vm187, %v211, %v212
  %v214 = vrot.slane %v31, 2
  %v215 = vsel %vm187, %v212, %v214
  %216 = vrot.lane.b32.xlu0 %v190, 120
  %v217 = vpop.permute.xlu0 %216
  %218 = vrot.lane.b32.xlu0 %v208, 120
  %v219 = vpop.permute.xlu0 %218
  %220 = vrot.lane.b32.xlu0 %v192, 120
  %v221 = vpop.permute.xlu0 %220
  %222 = vrot.lane.b32.xlu0 %v210, 120
  %v223 = vpop.permute.xlu0 %222
  %224 = vrot.lane.b32.xlu0 %v195, 120
  %v225 = vpop.permute.xlu0 %224
  %226 = vrot.lane.b32.xlu0 %v213, 120
  %v227 = vpop.permute.xlu0 %226
  %228 = vrot.lane.b32.xlu0 %v197, 120
  %v229 = vpop.permute.xlu0 %228
  %230 = vrot.lane.b32.xlu0 %v215, 120
  %v231 = vpop.permute.xlu0 %230
  %v232 = vsel %vm56, %v217, %v219
  %v233 = vsel %vm56, %v221, %v223
  %v234 = vsel %vm56, %v225, %v227
  %v235 = vsel %vm56, %v229, %v231
  %v240 = vadd.f32 %v202, %v232
  %v241 = vadd.f32 %v203, %v233
  %v242 = vadd.f32 %v204, %v234
  %v243 = vadd.f32 %v205, %v235
  %244 = vrot.lane.b32.xlu0 %v190, 112
  %v245 = vpop.permute.xlu0 %244
  %246 = vrot.lane.b32.xlu0 %v208, 112
  %v247 = vpop.permute.xlu0 %246
  %248 = vrot.lane.b32.xlu0 %v192, 112
  %v249 = vpop.permute.xlu0 %248
  %250 = vrot.lane.b32.xlu0 %v210, 112
  %v251 = vpop.permute.xlu0 %250
  %252 = vrot.lane.b32.xlu0 %v195, 112
  %v253 = vpop.permute.xlu0 %252
  %254 = vrot.lane.b32.xlu0 %v213, 112
  %v255 = vpop.permute.xlu0 %254
  %256 = vrot.lane.b32.xlu0 %v197, 112
  %v257 = vpop.permute.xlu0 %256
  %258 = vrot.lane.b32.xlu0 %v215, 112
  %v259 = vpop.permute.xlu0 %258
  %v260 = vsel %vm85, %v245, %v247
  %v261 = vsel %vm85, %v249, %v251
  %v262 = vsel %vm85, %v253, %v255
  %v263 = vsel %vm85, %v257, %v259
  %v268 = vadd.f32 %v240, %v260
  %v269 = vadd.f32 %v241, %v261
  %v270 = vadd.f32 %v242, %v262
  %v271 = vadd.f32 %v243, %v263
  %v272 = vld [vmem:[%s1] sm:$0xff]
  %v273 = vld [vmem:[%s1 + $0x8] sm:$0xff]
  %v274 = vmul.f32 %v268, %v272
  %v275 = vmul.f32 %v269, %v273
  %v276 = vmul.f32 %v270, %v272
  %v277 = vmul.f32 %v271, %v273
  %v278 = vld [vmem:[%s2] sm:$0x1]
  %v280 = vlaneseq
  %v281 = vshrl.u32 %v280, 7
  %v282 = vsub.s32 0, %v281
  %v283 = vrot.slane %v278, %v282
  %v285 = vadd.f32 %v274, %v283
  %v286 = vadd.f32 %v275, %v283
  %v287 = vadd.f32 %v276, %v283
  %v288 = vadd.f32 %v277, %v283
  %v289 = vpack.c.bf16 %v286, %v285
  %v290 = vpack.c.bf16 %v288, %v287
  %v293 = vunpack.c.l.b16 %v289
  %v294 = vunpack.c.h.b16 %v289
  %v295 = vunpack.c.l.b16 %v290
  %v296 = vunpack.c.h.b16 %v290
  %v297 = vpack.c.b16 %v293, %v293
  %v298 = vpack.c.b16 %v294, %v294
  %v299 = vpack.c.b16 %v295, %v295
  %v300 = vpack.c.b16 %v296, %v296
  %305 = vst [vmem:[%s3] sm:$0xf] %v297
  %306 = vst [vmem:[%s3 + $0x4] sm:$0xf] %v298
  %307 = vst [vmem:[%s3 + $0x8] sm:$0xf] %v299
  %308 = vst [vmem:[%s3 + $0xc] sm:$0xf] %v300
  // Predicated region
  $region14: #{_lambda_.31} parent=0 // pred_check
    _
  $region15: #{_lambda_.31} parent=0 // pred_check_branch
    %310 = sbr.rel (0) target = $region17
  $region16: #{_lambda_.31} parent=0 // pred_region
    _
  $region17: #{_lambda_.31} parent=0 // pred_fallthru
    _
  // Predicated region
  $region18: #{_lambda_.31} parent=0 // pred_check
    _
  $region19: #{_lambda_.31} parent=0 // pred_check_branch
    %312 = sbr.rel (0) target = $region21
  $region20: #{_lambda_.31} parent=0 // pred_region
    _
  $region21: #{_lambda_.31} parent=0 // pred_fallthru
    _

// kernel: _lambda_.35
$region0: #{_lambda_.35}
  #allocation0 [shape = 'u32[]', space=smem, size = 0x4, offset = 0x4, fixed_abs, tag = 'smem constant byte address 0x4 - core index']
  #allocation1 [shape = 'u32[144,128]{1,0:T(1,128)}', space=vmem, size = 0x12000, scoped, tag = 'internal scratch']
  %s0 = inlined_call_operand.vmem [shape: bf16[512,32], index: 0, kind: input, shape index: {}]
  %s1 = inlined_call_operand.vmem [shape: bf16[32,16], index: 1, kind: input, shape index: {}]
  %s2 = inlined_call_operand.vmem [shape: f32[1,16], index: 2, kind: input, shape index: {}]
  %s3 = inlined_call_operand.vmem [shape: f32[1,16], index: 3, kind: input, shape index: {}]
  %s4 = inlined_call_operand.vmem [shape: bf16[512,16], index: 4, kind: output, shape index: {}]
  %s5 = sld [smem:[#allocation0]]
  $region49: #{_lambda_.35} parent=0
    _
  %s7 = ssub.s32 1, %s5
  %s8 = scalar_select 0, %s7, %s5
  loop: start=0, step=1, limit=4
  $region2: #{_lambda_.35} parent=0 // loop_pre_header
    _
  $region3: #{_lambda_.35} parent=0 // loop_header
    %s10 = sphi 0, %s14
    %p11 = scmp.ge.s32.totalorder %s10, 4
    %s20 = sphi 0, %s22
    %s23 = sphi 0, %s20
    %s24 = sphi 0, %s23
    %s40 = sphi 0, %s24
    %s44 = sphi 0, %s44
    %s46 = sphi 0, %s44
    %s47 = sphi 0, %s46
    %s61 = sphi 0, %s47
    %s65 = sphi 0, %s65
    %s67 = sphi 0, %s65
    %s68 = sphi 0, %s67
    %s82 = sphi 0, %s68
    %s86 = sphi 0, %s86
    %s88 = sphi 0, %s86
    %s89 = sphi 0, %s88
    %s103 = sphi 0, %s89
    %s109 = sphi 0, %s111
    %s112 = sphi 0, %s109
    %s113 = sphi 0, %s112
    %s129 = sphi 0, %s113
  $region4: #{_lambda_.35} parent=0 // loop_header_branch
    %13 = sbr.rel (%p11) target = $region8
  $region5: #{_lambda_.35} parent=0 // loop_body
    %s15 = ssub.s32 %s10, 1
    %s16 = ssub.s32 %s10, 2
    %s17 = sadd.s32 %s10, 1
    %s18 = ssub.s32 %s10, %s17
    %p19 = scmp.eq.s32.totalorder %s18, 0
    %s21 = sadd.s32 %s20, 1
    %s22 = scalar_select %p19, %s20, %s21
    %p25 = pneg %p19
    %p26 = scmp.eq.s32.totalorder %s10, 1
    %p27 = por %p25, %p26
    %p28 = scmp.ne.s32.totalorder %s20, %s23
    %p29 = scmp.eq.s32.totalorder %s10, 0
    %p30 = por %p28, %p29
    %p31 = scmp.ne.s32.totalorder %s20, %s23
    %p32 = scmp.eq.s32.totalorder %s15, 1
    %p33 = por %p31, %p32
    %p34 = scmp.ne.s32.totalorder %s23, %s24
    %p35 = scmp.eq.s32.totalorder %s15, 0
    %p36 = por %p34, %p35
    %p37 = scmp.ne.s32.totalorder %s23, %s24
    %p38 = scmp.eq.s32.totalorder %s16, 1
    %p39 = por %p37, %p38
    %p41 = scmp.ne.s32.totalorder %s24, %s40
    %p42 = scmp.eq.s32.totalorder %s16, 0
    %p43 = por %p41, %p42
    %s45 = sadd.s32 %s44, 1
    %p48 = scmp.eq.s32.totalorder %s10, 1
    %p49 = scmp.ne.s32.totalorder %s44, %s46
    %p50 = scmp.eq.s32.totalorder %s10, 0
    %p51 = por %p49, %p50
    %p52 = scmp.ne.s32.totalorder %s44, %s46
    %p53 = scmp.eq.s32.totalorder %s15, 1
    %p54 = por %p52, %p53
    %p55 = scmp.ne.s32.totalorder %s46, %s47
    %p56 = scmp.eq.s32.totalorder %s15, 0
    %p57 = por %p55, %p56
    %p58 = scmp.ne.s32.totalorder %s46, %s47
    %p59 = scmp.eq.s32.totalorder %s16, 1
    %p60 = por %p58, %p59
    %p62 = scmp.ne.s32.totalorder %s47, %s61
    %p63 = scmp.eq.s32.totalorder %s16, 0
    %p64 = por %p62, %p63
    %s66 = sadd.s32 %s65, 1
    %p69 = scmp.eq.s32.totalorder %s10, 1
    %p70 = scmp.ne.s32.totalorder %s65, %s67
    %p71 = scmp.eq.s32.totalorder %s10, 0
    %p72 = por %p70, %p71
    %p73 = scmp.ne.s32.totalorder %s65, %s67
    %p74 = scmp.eq.s32.totalorder %s15, 1
    %p75 = por %p73, %p74
    %p76 = scmp.ne.s32.totalorder %s67, %s68
    %p77 = scmp.eq.s32.totalorder %s15, 0
    %p78 = por %p76, %p77
    %p79 = scmp.ne.s32.totalorder %s67, %s68
    %p80 = scmp.eq.s32.totalorder %s16, 1
    %p81 = por %p79, %p80
    %p83 = scmp.ne.s32.totalorder %s68, %s82
    %p84 = scmp.eq.s32.totalorder %s16, 0
    %p85 = por %p83, %p84
    %s87 = sadd.s32 %s86, 1
    %p90 = scmp.eq.s32.totalorder %s10, 1
    %p91 = scmp.ne.s32.totalorder %s86, %s88
    %p92 = scmp.eq.s32.totalorder %s10, 0
    %p93 = por %p91, %p92
    %p94 = scmp.ne.s32.totalorder %s86, %s88
    %p95 = scmp.eq.s32.totalorder %s15, 1
    %p96 = por %p94, %p95
    %p97 = scmp.ne.s32.totalorder %s88, %s89
    %p98 = scmp.eq.s32.totalorder %s15, 0
    %p99 = por %p97, %p98
    %p100 = scmp.ne.s32.totalorder %s88, %s89
    %p101 = scmp.eq.s32.totalorder %s16, 1
    %p102 = por %p100, %p101
    %p104 = scmp.ne.s32.totalorder %s89, %s103
    %p105 = scmp.eq.s32.totalorder %s16, 0
    %p106 = por %p104, %p105
    %s107 = ssub.s32 %s10, %s17
    %p108 = scmp.eq.s32.totalorder %s107, 0
    %s110 = sadd.s32 %s109, 1
    %s111 = scalar_select %p108, %s109, %s110
    %p114 = pneg %p108
    %p115 = scmp.eq.s32.totalorder %s10, 1
    %p116 = por %p114, %p115
    %p117 = scmp.ne.s32.totalorder %s109, %s112
    %p118 = scmp.eq.s32.totalorder %s10, 0
    %p119 = por %p117, %p118
    %p120 = scmp.ne.s32.totalorder %s109, %s112
    %p121 = scmp.eq.s32.totalorder %s15, 1
    %p122 = por %p120, %p121
    %p123 = scmp.ne.s32.totalorder %s112, %s113
    %p124 = scmp.eq.s32.totalorder %s15, 0
    %p125 = por %p123, %p124
    %p126 = scmp.ne.s32.totalorder %s112, %s113
    %p127 = scmp.eq.s32.totalorder %s16, 1
    %p128 = por %p126, %p127
    %p130 = scmp.ne.s32.totalorder %s113, %s129
    %p131 = scmp.eq.s32.totalorder %s16, 0
    %p132 = por %p130, %p131
    %p133 = scmp.le.s32.totalorder 1, %s10
    %p134 = scmp.lt.s32.totalorder %s10, 3
    %p135 = pnand %p133, %p134
    %p136 = pneg %p135
    // Predicated region
    $region9: #{_lambda_.35} parent=5 // pred_check
      _
    $region10: #{_lambda_.35} parent=5 // pred_check_branch
      %138 = sbr.rel (%p135) target = $region12
    $region11: #{_lambda_.35} parent=5 // pred_region
      %s139 = ssub.s32 %s10, 1
      // Predicated region
      $region13: #{_lambda_.35} parent=11 // pred_check
        %p140 = pneg %p57
      $region14: #{_lambda_.35} parent=11 // pred_check_branch
        %142 = sbr.rel (%p140) target = $region16
      $region15: #{_lambda_.35} parent=11 // pred_region
        _
      $region16: #{_lambda_.35} parent=11 // pred_fallthru
        _
      // Predicated region
      $region17: #{_lambda_.35} parent=11 // pred_check
        %p143 = pneg %p78
      $region18: #{_lambda_.35} parent=11 // pred_check_branch
        %145 = sbr.rel (%p143) target = $region20
      $region19: #{_lambda_.35} parent=11 // pred_region
        _
      $region20: #{_lambda_.35} parent=11 // pred_fallthru
        _
      // Predicated region
      $region21: #{_lambda_.35} parent=11 // pred_check
        %p146 = pneg %p99
      $region22: #{_lambda_.35} parent=11 // pred_check_branch
        %148 = sbr.rel (%p146) target = $region24
      $region23: #{_lambda_.35} parent=11 // pred_region
        _
      $region24: #{_lambda_.35} parent=11 // pred_fallthru
        _
    $region12: #{_lambda_.35} parent=5 // pred_fallthru
      _
    %p149 = scmp.lt.s32.totalorder %s10, 2
    // Predicated region
    $region25: #{_lambda_.35} parent=5 // pred_check
      %p150 = pneg %p149
    $region26: #{_lambda_.35} parent=5 // pred_check_branch
      %152 = sbr.rel (%p150) target = $region28
    $region27: #{_lambda_.35} parent=5 // pred_region
      // Predicated region
      $region29: #{_lambda_.35} parent=27 // pred_check
        %p153 = pneg %p30
      $region30: #{_lambda_.35} parent=27 // pred_check_branch
        %155 = sbr.rel (%p153) target = $region32
      $region31: #{_lambda_.35} parent=27 // pred_region
        %s156 = smul.u32 32, %s10
        %p157 = scmp.lt.s32.totalorder %s156, 63
        %s158 = scalar_select %p157, %s156, 63
        %s159 = smul.addr %s158, 4
        %s160 = scalar_lea.vmem %s0, %s159
        %s161 = smul.u32 32, %s10
      $region32: #{_lambda_.35} parent=27 // pred_fallthru
        _
    $region28: #{_lambda_.35} parent=5 // pred_fallthru
      _
    %p162 = scmp.le.s32.totalorder 1, %s10
    %p163 = scmp.lt.s32.totalorder %s10, 3
    %p164 = pnand %p162, %p163
    %p165 = pneg %p164
    // Predicated region
    $region33: #{_lambda_.35} parent=5 // pred_check
      _
    $region34: #{_lambda_.35} parent=5 // pred_check_branch
      %167 = sbr.rel (%p164) target = $region36
    $region35: #{_lambda_.35} parent=5 // pred_region
      %s168 = ssub.s32 %s10, 1
      %s169 = smul.u32 32, %s15
      %p170 = scmp.lt.s32.totalorder %s169, 63
      %s171 = scalar_select %p170, %s169, 63
      %s172 = smul.addr %s171, 4
      %s173 = scalar_lea.vmem %s0, %s172
      %p174 = pneg %p36
      %p175 = pneg %p33
      %p176 = pneg %p57
      %p177 = pneg %p54
      %p178 = pneg %p78
      %p179 = pneg %p75
      %p180 = pneg %p99
      %p181 = pneg %p96
      %p182 = pneg %p125
      %p183 = pneg %p122
      %s184 = smul.u32 32, %s15
      %p185 = scmp.lt.s32.totalorder %s184, 63
      %s186 = scalar_select %p185, %s184, 63
      %s187 = smul.addr %s186, 4
      %s188 = scalar_lea.vmem %s4, %s187
      %s189 = smul.u32 32, %s15
      %p190 = scmp.lt.s32.totalorder %s189, 63
      %s191 = scalar_select %p190, %s189, 63
      %s192 = smul.addr %s191, 4
      %s193 = scalar_lea.vmem %s0, %s192
      %s194 = smul.u32 32, %s15
      %s195 = smul.u32 32, %s15
      %p196 = scmp.lt.s32.totalorder %s195, 63
      %s197 = scalar_select %p196, %s195, 63
      %s198 = smul.addr %s197, 4
      %s199 = scalar_lea.vmem %s4, %s198
      %s200 = smul.u32 32, %s15
      %v202 = vld [vmem:[%s193] sm:$0xf]
      %v203 = vld [vmem:[%s193 + $0x4] sm:$0xf]
      %v204 = vld [vmem:[%s193 + $0x8] sm:$0xf]
      %v205 = vld [vmem:[%s193 + $0xc] sm:$0xf]
      %v206 = vld [vmem:[%s193 + $0x10] sm:$0xf]
      %v207 = vld [vmem:[%s193 + $0x14] sm:$0xf]
      %v208 = vld [vmem:[%s193 + $0x18] sm:$0xf]
      %v209 = vld [vmem:[%s193 + $0x1c] sm:$0xf]
      %v210 = vld [vmem:[%s193 + $0x20] sm:$0xf]
      %v211 = vld [vmem:[%s193 + $0x24] sm:$0xf]
      %v212 = vld [vmem:[%s193 + $0x28] sm:$0xf]
      %v213 = vld [vmem:[%s193 + $0x2c] sm:$0xf]
      %v214 = vld [vmem:[%s193 + $0x30] sm:$0xf]
      %v215 = vld [vmem:[%s193 + $0x34] sm:$0xf]
      %v216 = vld [vmem:[%s193 + $0x38] sm:$0xf]
      %v217 = vld [vmem:[%s193 + $0x3c] sm:$0xf]
      %v218 = vld [vmem:[%s193 + $0x40] sm:$0xf]
      %v219 = vld [vmem:[%s193 + $0x44] sm:$0xf]
      %v220 = vld [vmem:[%s193 + $0x48] sm:$0xf]
      %v221 = vld [vmem:[%s193 + $0x4c] sm:$0xf]
      %v222 = vld [vmem:[%s193 + $0x50] sm:$0xf]
      %v223 = vld [vmem:[%s193 + $0x54] sm:$0xf]
      %v224 = vld [vmem:[%s193 + $0x58] sm:$0xf]
      %v225 = vld [vmem:[%s193 + $0x5c] sm:$0xf]
      %v226 = vld [vmem:[%s193 + $0x60] sm:$0xf]
      %v227 = vld [vmem:[%s193 + $0x64] sm:$0xf]
      %v228 = vld [vmem:[%s193 + $0x68] sm:$0xf]
      %v229 = vld [vmem:[%s193 + $0x6c] sm:$0xf]
      %v230 = vld [vmem:[%s193 + $0x70] sm:$0xf]
      %v231 = vld [vmem:[%s193 + $0x74] sm:$0xf]
      %v232 = vld [vmem:[%s193 + $0x78] sm:$0xf]
      %v233 = vld [vmem:[%s193 + $0x7c] sm:$0xf]
      %v234 = vunpack.c.l.bf16 %v202
      %v235 = vunpack.c.l.bf16 %v203
      %v236 = vunpack.c.l.bf16 %v204
      %v237 = vunpack.c.l.bf16 %v205
      %v238 = vunpack.c.l.bf16 %v206
      %v239 = vunpack.c.l.bf16 %v207
      %v240 = vunpack.c.l.bf16 %v208
      %v241 = vunpack.c.l.bf16 %v209
      %v242 = vunpack.c.l.bf16 %v210
      %v243 = vunpack.c.l.bf16 %v211
      %v244 = vunpack.c.l.bf16 %v212
      %v245 = vunpack.c.l.bf16 %v213
      %v246 = vunpack.c.l.bf16 %v214
      %v247 = vunpack.c.l.bf16 %v215
      %v248 = vunpack.c.l.bf16 %v216
      %v249 = vunpack.c.l.bf16 %v217
      %v250 = vunpack.c.l.bf16 %v218
      %v251 = vunpack.c.l.bf16 %v219
      %v252 = vunpack.c.l.bf16 %v220
      %v253 = vunpack.c.l.bf16 %v221
      %v254 = vunpack.c.l.bf16 %v222
      %v255 = vunpack.c.l.bf16 %v223
      %v256 = vunpack.c.l.bf16 %v224
      %v257 = vunpack.c.l.bf16 %v225
      %v258 = vunpack.c.l.bf16 %v226
      %v259 = vunpack.c.l.bf16 %v227
      %v260 = vunpack.c.l.bf16 %v228
      %v261 = vunpack.c.l.bf16 %v229
      %v262 = vunpack.c.l.bf16 %v230
      %v263 = vunpack.c.l.bf16 %v231
      %v264 = vunpack.c.l.bf16 %v232
      %v265 = vunpack.c.l.bf16 %v233
      %v266 = vmax.f32 %v234, 0.0
      %v267 = vmax.f32 %v235, 0.0
      %v268 = vmax.f32 %v236, 0.0
      %v269 = vmax.f32 %v237, 0.0
      %v270 = vmax.f32 %v238, 0.0
      %v271 = vmax.f32 %v239, 0.0
      %v272 = vmax.f32 %v240, 0.0
      %v273 = vmax.f32 %v241, 0.0
      %v274 = vmax.f32 %v242, 0.0
      %v275 = vmax.f32 %v243, 0.0
      %v276 = vmax.f32 %v244, 0.0
      %v277 = vmax.f32 %v245, 0.0
      %v278 = vmax.f32 %v246, 0.0
      %v279 = vmax.f32 %v247, 0.0
      %v280 = vmax.f32 %v248, 0.0
      %v281 = vmax.f32 %v249, 0.0
      %v282 = vmax.f32 %v250, 0.0
      %v283 = vmax.f32 %v251, 0.0
      %v284 = vmax.f32 %v252, 0.0
      %v285 = vmax.f32 %v253, 0.0
      %v286 = vmax.f32 %v254, 0.0
      %v287 = vmax.f32 %v255, 0.0
      %v288 = vmax.f32 %v256, 0.0
      %v289 = vmax.f32 %v257, 0.0
      %v290 = vmax.f32 %v258, 0.0
      %v291 = vmax.f32 %v259, 0.0
      %v292 = vmax.f32 %v260, 0.0
      %v293 = vmax.f32 %v261, 0.0
      %v294 = vmax.f32 %v262, 0.0
      %v295 = vmax.f32 %v263, 0.0
      %v296 = vmax.f32 %v264, 0.0
      %v297 = vmax.f32 %v265, 0.0
      %v298 = vpack.c.bf16 %v267, %v266
      %v299 = vpack.c.bf16 %v269, %v268
      %v300 = vpack.c.bf16 %v271, %v270
      %v301 = vpack.c.bf16 %v273, %v272
      %v302 = vpack.c.bf16 %v275, %v274
      %v303 = vpack.c.bf16 %v277, %v276
      %v304 = vpack.c.bf16 %v279, %v278
      %v305 = vpack.c.bf16 %v281, %v280
      %v306 = vpack.c.bf16 %v283, %v282
      %v307 = vpack.c.bf16 %v285, %v284
      %v308 = vpack.c.bf16 %v287, %v286
      %v309 = vpack.c.bf16 %v289, %v288
      %v310 = vpack.c.bf16 %v291, %v290
      %v311 = vpack.c.bf16 %v293, %v292
      %v312 = vpack.c.bf16 %v295, %v294
      %v313 = vpack.c.bf16 %v297, %v296
      %v314 = vld [vmem:[%s1] sm:$0xf]
      %v315 = vld [vmem:[%s1 + $0x4] sm:$0xf]
      %v316 = vld [vmem:[%s1 + $0x8] sm:$0xf]
      %v317 = vld [vmem:[%s1 + $0xc] sm:$0xf]
      %v322 = vunpack.c.l.b16 %v314
      %v323 = vunpack.c.l.b16 %v315
      %v324 = vunpack.c.l.b16 %v316
      %v325 = vunpack.c.l.b16 %v317
      %v326 = vpack.c.b16 %v323, %v322
      %v327 = vpack.c.b16 %v325, %v324
      %vm330 = vcmask 261120
      %v332 = vsel %vm330, %v298, 0
      %v335 = vsel %vm330, %v299, 0
      %v338 = vsel %vm330, %v300, 0
      %v341 = vsel %vm330, %v301, 0
      %v344 = vsel %vm330, %v302, 0
      %v347 = vsel %vm330, %v303, 0
      %v350 = vsel %vm330, %v304, 0
      %v353 = vsel %vm330, %v305, 0
      %v356 = vsel %vm330, %v306, 0
      %v359 = vsel %vm330, %v307, 0
      %v362 = vsel %vm330, %v308, 0
      %v365 = vsel %vm330, %v309, 0
      %v368 = vsel %vm330, %v310, 0
      %v371 = vsel %vm330, %v311, 0
      %v374 = vsel %vm330, %v312, 0
      %v377 = vsel %vm330, %v313, 0
      %379 = vmatprep.subr.bf16.mxu0 0
      %380 = vmatpush1.bf16.msra.mxu0 0
      %381 = vmatprep.subr.bf16.mxu0 0
      %382 = vmatpush1.bf16.msra.mxu0 0
      %383 = vmatprep.subr.bf16.mxu0 0
      %384 = vmatpush1.bf16.msra.mxu0 0
      %385 = vmatprep.subr.bf16.mxu0 0
      %386 = vmatpush1.bf16.msra.mxu0 0
      %387 = vmatprep.subr.bf16.mxu0 0
      %388 = vmatpush1.bf16.msra.mxu0 0
      %389 = vmatprep.subr.bf16.mxu0 0
      %390 = vmatpush1.bf16.msra.mxu0 0
      %391 = vmatprep.subr.bf16.mxu0 0
      %392 = vmatpush1.bf16.msra.mxu0 %v327
      %393 = vmatprep.subr.bf16.mxu0 0
      %394 = vmatpush1.bf16.msra.mxu0 %v326
      %395 = vmatprep.subr.bf16.mxu0 0
      %396 = vmatpush2.bf16.msra.mxu0 0
      %397 = vmatprep.subr.bf16.mxu0 0
      %398 = vmatpush2.bf16.msra.mxu0 0
      %399 = vmatprep.subr.bf16.mxu0 0
      %400 = vmatpush2.bf16.msra.mxu0 0
      %401 = vmatprep.subr.bf16.mxu0 0
      %402 = vmatpush2.bf16.msra.mxu0 0
      %403 = vmatprep.subr.bf16.mxu0 0
      %404 = vmatpush2.bf16.msra.mxu0 0
      %405 = vmatprep.subr.bf16.mxu0 0
      %406 = vmatpush2.bf16.msra.mxu0 0
      %407 = vmatprep.subr.bf16.mxu0 0
      %408 = vmatpush2.bf16.msra.mxu0 0
      %409 = vmatprep.subr.bf16.mxu0 0
      %410 = vmatpush2.bf16.msra.mxu0 0
      %411 = vmatprep.mubr.bf16.mxu0 0
      %412 = vmatmul.mubr.bf16.gmra.mxu0 %v332
      %v413 = vpop.f32.mrf.mxu0
      %v414 = vadd.f32 0.0, %v413
      %v415 = vpop.f32.mrf.mxu0
      %v416 = vpop.f32.mrf.mxu0
      %v417 = vadd.f32 0.0, %v416
      %v418 = vpop.f32.mrf.mxu0
      %419 = vmatprep.mubr.bf16.mxu0 0
      %420 = vmatmul.mubr.bf16.gmra.mxu0 %v335
      %v421 = vpop.f32.mrf.mxu0
      %v422 = vadd.f32 0.0, %v421
      %v423 = vpop.f32.mrf.mxu0
      %v424 = vpop.f32.mrf.mxu0
      %v425 = vadd.f32 0.0, %v424
      %v426 = vpop.f32.mrf.mxu0
      %427 = vmatprep.mubr.bf16.mxu0 0
      %428 = vmatmul.mubr.bf16.gmra.mxu0 %v338
      %v429 = vpop.f32.mrf.mxu0
      %v430 = vadd.f32 0.0, %v429
      %v431 = vpop.f32.mrf.mxu0
      %v432 = vpop.f32.mrf.mxu0
      %v433 = vadd.f32 0.0, %v432
      %v434 = vpop.f32.mrf.mxu0
      %435 = vmatprep.mubr.bf16.mxu0 0
      %436 = vmatmul.mubr.bf16.gmra.mxu0 %v341
      %v437 = vpop.f32.mrf.mxu0
      %v438 = vadd.f32 0.0, %v437
      %v439 = vpop.f32.mrf.mxu0
      %v440 = vpop.f32.mrf.mxu0
      %v441 = vadd.f32 0.0, %v440
      %v442 = vpop.f32.mrf.mxu0
      %443 = vmatprep.mubr.bf16.mxu0 0
      %444 = vmatmul.mubr.bf16.gmra.mxu0 %v344
      %v445 = vpop.f32.mrf.mxu0
      %v446 = vadd.f32 0.0, %v445
      %v447 = vpop.f32.mrf.mxu0
      %v448 = vpop.f32.mrf.mxu0
      %v449 = vadd.f32 0.0, %v448
      %v450 = vpop.f32.mrf.mxu0
      %451 = vmatprep.mubr.bf16.mxu0 0
      %452 = vmatmul.mubr.bf16.gmra.mxu0 %v347
      %v453 = vpop.f32.mrf.mxu0
      %v454 = vadd.f32 0.0, %v453
      %v455 = vpop.f32.mrf.mxu0
      %v456 = vpop.f32.mrf.mxu0
      %v457 = vadd.f32 0.0, %v456
      %v458 = vpop.f32.mrf.mxu0
      %459 = vmatprep.mubr.bf16.mxu0 0
      %460 = vmatmul.mubr.bf16.gmra.mxu0 %v350
      %v461 = vpop.f32.mrf.mxu0
      %v462 = vadd.f32 0.0, %v461
      %v463 = vpop.f32.mrf.mxu0
      %v464 = vpop.f32.mrf.mxu0
      %v465 = vadd.f32 0.0, %v464
      %v466 = vpop.f32.mrf.mxu0
      %467 = vmatprep.mubr.bf16.mxu0 0
      %468 = vmatmul.mubr.bf16.gmra.mxu0 %v353
      %v469 = vpop.f32.mrf.mxu0
      %v470 = vadd.f32 0.0, %v469
      %v471 = vpop.f32.mrf.mxu0
      %v472 = vpop.f32.mrf.mxu0
      %v473 = vadd.f32 0.0, %v472
      %v474 = vpop.f32.mrf.mxu0
      %475 = vmatprep.mubr.bf16.mxu0 0
      %476 = vmatmul.mubr.bf16.gmra.mxu0 %v356
      %v477 = vpop.f32.mrf.mxu0
      %v478 = vadd.f32 0.0, %v477
      %v479 = vpop.f32.mrf.mxu0
      %v480 = vpop.f32.mrf.mxu0
      %v481 = vadd.f32 0.0, %v480
      %v482 = vpop.f32.mrf.mxu0
      %483 = vmatprep.mubr.bf16.mxu0 0
      %484 = vmatmul.mubr.bf16.gmra.mxu0 %v359
      %v485 = vpop.f32.mrf.mxu0
      %v486 = vadd.f32 0.0, %v485
      %v487 = vpop.f32.mrf.mxu0
      %v488 = vpop.f32.mrf.mxu0
      %v489 = vadd.f32 0.0, %v488
      %v490 = vpop.f32.mrf.mxu0
      %491 = vmatprep.mubr.bf16.mxu0 0
      %492 = vmatmul.mubr.bf16.gmra.mxu0 %v362
      %v493 = vpop.f32.mrf.mxu0
      %v494 = vadd.f32 0.0, %v493
      %v495 = vpop.f32.mrf.mxu0
      %v496 = vpop.f32.mrf.mxu0
      %v497 = vadd.f32 0.0, %v496
      %v498 = vpop.f32.mrf.mxu0
      %499 = vmatprep.mubr.bf16.mxu0 0
      %500 = vmatmul.mubr.bf16.gmra.mxu0 %v365
      %v501 = vpop.f32.mrf.mxu0
      %v502 = vadd.f32 0.0, %v501
      %v503 = vpop.f32.mrf.mxu0
      %v504 = vpop.f32.mrf.mxu0
      %v505 = vadd.f32 0.0, %v504
      %v506 = vpop.f32.mrf.mxu0
      %507 = vmatprep.mubr.bf16.mxu0 0
      %508 = vmatmul.mubr.bf16.gmra.mxu0 %v368
      %v509 = vpop.f32.mrf.mxu0
      %v510 = vadd.f32 0.0, %v509
      %v511 = vpop.f32.mrf.mxu0
      %v512 = vpop.f32.mrf.mxu0
      %v513 = vadd.f32 0.0, %v512
      %v514 = vpop.f32.mrf.mxu0
      %515 = vmatprep.mubr.bf16.mxu0 0
      %516 = vmatmul.mubr.bf16.gmra.mxu0 %v371
      %v517 = vpop.f32.mrf.mxu0
      %v518 = vadd.f32 0.0, %v517
      %v519 = vpop.f32.mrf.mxu0
      %v520 = vpop.f32.mrf.mxu0
      %v521 = vadd.f32 0.0, %v520
      %v522 = vpop.f32.mrf.mxu0
      %523 = vmatprep.mubr.bf16.mxu0 0
      %524 = vmatmul.mubr.bf16.gmra.mxu0 %v374
      %v525 = vpop.f32.mrf.mxu0
      %v526 = vadd.f32 0.0, %v525
      %v527 = vpop.f32.mrf.mxu0
      %v528 = vpop.f32.mrf.mxu0
      %v529 = vadd.f32 0.0, %v528
      %v530 = vpop.f32.mrf.mxu0
      %531 = vmatprep.mubr.bf16.mxu0 0
      %532 = vmatmul.mubr.bf16.gmra.mxu0 %v377
      %v533 = vpop.f32.mrf.mxu0
      %v534 = vadd.f32 0.0, %v533
      %v535 = vpop.f32.mrf.mxu0
      %v536 = vpop.f32.mrf.mxu0
      %v537 = vadd.f32 0.0, %v536
      %v538 = vpop.f32.mrf.mxu0
      %539 = vdwg.mxu0
      %v540 = vld [vmem:[%s2] sm:$0x1]
      %v542 = vlaneseq
      %v543 = vshrl.u32 %v542, 7
      %v544 = vsub.s32 0, %v543
      %v545 = vrot.slane %v540, %v544
      %v547 = vmul.f32 %v414, %v545
      %v548 = vmul.f32 %v417, %v545
      %v549 = vmul.f32 %v422, %v545
      %v550 = vmul.f32 %v425, %v545
      %v551 = vmul.f32 %v430, %v545
      %v552 = vmul.f32 %v433, %v545
      %v553 = vmul.f32 %v438, %v545
      %v554 = vmul.f32 %v441, %v545
      %v555 = vmul.f32 %v446, %v545
      %v556 = vmul.f32 %v449, %v545
      %v557 = vmul.f32 %v454, %v545
      %v558 = vmul.f32 %v457, %v545
      %v559 = vmul.f32 %v462, %v545
      %v560 = vmul.f32 %v465, %v545
      %v561 = vmul.f32 %v470, %v545
      %v562 = vmul.f32 %v473, %v545
      %v563 = vmul.f32 %v478, %v545
      %v564 = vmul.f32 %v481, %v545
      %v565 = vmul.f32 %v486, %v545
      %v566 = vmul.f32 %v489, %v545
      %v567 = vmul.f32 %v494, %v545
      %v568 = vmul.f32 %v497, %v545
      %v569 = vmul.f32 %v502, %v545
      %v570 = vmul.f32 %v505, %v545
      %v571 = vmul.f32 %v510, %v545
      %v572 = vmul.f32 %v513, %v545
      %v573 = vmul.f32 %v518, %v545
      %v574 = vmul.f32 %v521, %v545
      %v575 = vmul.f32 %v526, %v545
      %v576 = vmul.f32 %v529, %v545
      %v577 = vmul.f32 %v534, %v545
      %v578 = vmul.f32 %v537, %v545
      %v579 = vld [vmem:[%s3] sm:$0x1]
      %v581 = vlaneseq
      %v582 = vshrl.u32 %v581, 7
      %v583 = vsub.s32 0, %v582
      %v584 = vrot.slane %v579, %v583
      %v586 = vadd.f32 %v547, %v584
      %v587 = vadd.f32 %v548, %v584
      %v588 = vadd.f32 %v549, %v584
      %v589 = vadd.f32 %v550, %v584
      %v590 = vadd.f32 %v551, %v584
      %v591 = vadd.f32 %v552, %v584
      %v592 = vadd.f32 %v553, %v584
      %v593 = vadd.f32 %v554, %v584
      %v594 = vadd.f32 %v555, %v584
      %v595 = vadd.f32 %v556, %v584
      %v596 = vadd.f32 %v557, %v584
      %v597 = vadd.f32 %v558, %v584
      %v598 = vadd.f32 %v559, %v584
      %v599 = vadd.f32 %v560, %v584
      %v600 = vadd.f32 %v561, %v584
      %v601 = vadd.f32 %v562, %v584
      %v602 = vadd.f32 %v563, %v584
      %v603 = vadd.f32 %v564, %v584
      %v604 = vadd.f32 %v565, %v584
      %v605 = vadd.f32 %v566, %v584
      %v606 = vadd.f32 %v567, %v584
      %v607 = vadd.f32 %v568, %v584
      %v608 = vadd.f32 %v569, %v584
      %v609 = vadd.f32 %v570, %v584
      %v610 = vadd.f32 %v571, %v584
      %v611 = vadd.f32 %v572, %v584
      %v612 = vadd.f32 %v573, %v584
      %v613 = vadd.f32 %v574, %v584
      %v614 = vadd.f32 %v575, %v584
      %v615 = vadd.f32 %v576, %v584
      %v616 = vadd.f32 %v577, %v584
      %v617 = vadd.f32 %v578, %v584
      %v618 = vpack.c.bf16 %v587, %v586
      %v619 = vpack.c.bf16 %v589, %v588
      %v620 = vpack.c.bf16 %v591, %v590
      %v621 = vpack.c.bf16 %v593, %v592
      %v622 = vpack.c.bf16 %v595, %v594
      %v623 = vpack.c.bf16 %v597, %v596
      %v624 = vpack.c.bf16 %v599, %v598
      %v625 = vpack.c.bf16 %v601, %v600
      %v626 = vpack.c.bf16 %v603, %v602
      %v627 = vpack.c.bf16 %v605, %v604
      %v628 = vpack.c.bf16 %v607, %v606
      %v629 = vpack.c.bf16 %v609, %v608
      %v630 = vpack.c.bf16 %v611, %v610
      %v631 = vpack.c.bf16 %v613, %v612
      %v632 = vpack.c.bf16 %v615, %v614
      %v633 = vpack.c.bf16 %v617, %v616
      %v650 = vunpack.c.l.b16 %v618
      %v651 = vunpack.c.h.b16 %v618
      %v652 = vunpack.c.l.b16 %v619
      %v653 = vunpack.c.h.b16 %v619
      %v654 = vunpack.c.l.b16 %v620
      %v655 = vunpack.c.h.b16 %v620
      %v656 = vunpack.c.l.b16 %v621
      %v657 = vunpack.c.h.b16 %v621
      %v658 = vunpack.c.l.b16 %v622
      %v659 = vunpack.c.h.b16 %v622
      %v660 = vunpack.c.l.b16 %v623
      %v661 = vunpack.c.h.b16 %v623
      %v662 = vunpack.c.l.b16 %v624
      %v663 = vunpack.c.h.b16 %v624
      %v664 = vunpack.c.l.b16 %v625
      %v665 = vunpack.c.h.b16 %v625
      %v666 = vunpack.c.l.b16 %v626
      %v667 = vunpack.c.h.b16 %v626
      %v668 = vunpack.c.l.b16 %v627
      %v669 = vunpack.c.h.b16 %v627
      %v670 = vunpack.c.l.b16 %v628
      %v671 = vunpack.c.h.b16 %v628
      %v672 = vunpack.c.l.b16 %v629
      %v673 = vunpack.c.h.b16 %v629
      %v674 = vunpack.c.l.b16 %v630
      %v675 = vunpack.c.h.b16 %v630
      %v676 = vunpack.c.l.b16 %v631
      %v677 = vunpack.c.h.b16 %v631
      %v678 = vunpack.c.l.b16 %v632
      %v679 = vunpack.c.h.b16 %v632
      %v680 = vunpack.c.l.b16 %v633
      %v681 = vunpack.c.h.b16 %v633
      %v682 = vpack.c.b16 %v650, %v650
      %v683 = vpack.c.b16 %v651, %v651
      %v684 = vpack.c.b16 %v652, %v652
      %v685 = vpack.c.b16 %v653, %v653
      %v686 = vpack.c.b16 %v654, %v654
      %v687 = vpack.c.b16 %v655, %v655
      %v688 = vpack.c.b16 %v656, %v656
      %v689 = vpack.c.b16 %v657, %v657
      %v690 = vpack.c.b16 %v658, %v658
      %v691 = vpack.c.b16 %v659, %v659
      %v692 = vpack.c.b16 %v660, %v660
      %v693 = vpack.c.b16 %v661, %v661
      %v694 = vpack.c.b16 %v662, %v662
      %v695 = vpack.c.b16 %v663, %v663
      %v696 = vpack.c.b16 %v664, %v664
      %v697 = vpack.c.b16 %v665, %v665
      %v698 = vpack.c.b16 %v666, %v666
      %v699 = vpack.c.b16 %v667, %v667
      %v700 = vpack.c.b16 %v668, %v668
      %v701 = vpack.c.b16 %v669, %v669
      %v702 = vpack.c.b16 %v670, %v670
      %v703 = vpack.c.b16 %v671, %v671
      %v704 = vpack.c.b16 %v672, %v672
      %v705 = vpack.c.b16 %v673, %v673
      %v706 = vpack.c.b16 %v674, %v674
      %v707 = vpack.c.b16 %v675, %v675
      %v708 = vpack.c.b16 %v676, %v676
      %v709 = vpack.c.b16 %v677, %v677
      %v710 = vpack.c.b16 %v678, %v678
      %v711 = vpack.c.b16 %v679, %v679
      %v712 = vpack.c.b16 %v680, %v680
      %v713 = vpack.c.b16 %v681, %v681
      %vm746 = vcmask 125952
      %747 = vst.msk [vmem:[%s199] sm:$0xf] %vm746, %v682
      %748 = vst.msk [vmem:[%s199 + $0x4] sm:$0xf] %vm746, %v683
      %749 = vst.msk [vmem:[%s199 + $0x8] sm:$0xf] %vm746, %v684
      %750 = vst.msk [vmem:[%s199 + $0xc] sm:$0xf] %vm746, %v685
      %751 = vst.msk [vmem:[%s199 + $0x10] sm:$0xf] %vm746, %v686
      %752 = vst.msk [vmem:[%s199 + $0x14] sm:$0xf] %vm746, %v687
      %753 = vst.msk [vmem:[%s199 + $0x18] sm:$0xf] %vm746, %v688
      %754 = vst.msk [vmem:[%s199 + $0x1c] sm:$0xf] %vm746, %v689
      %755 = vst.msk [vmem:[%s199 + $0x20] sm:$0xf] %vm746, %v690
      %756 = vst.msk [vmem:[%s199 + $0x24] sm:$0xf] %vm746, %v691
      %757 = vst.msk [vmem:[%s199 + $0x28] sm:$0xf] %vm746, %v692
      %758 = vst.msk [vmem:[%s199 + $0x2c] sm:$0xf] %vm746, %v693
      %759 = vst.msk [vmem:[%s199 + $0x30] sm:$0xf] %vm746, %v694
      %760 = vst.msk [vmem:[%s199 + $0x34] sm:$0xf] %vm746, %v695
      %761 = vst.msk [vmem:[%s199 + $0x38] sm:$0xf] %vm746, %v696
      %762 = vst.msk [vmem:[%s199 + $0x3c] sm:$0xf] %vm746, %v697
      %763 = vst.msk [vmem:[%s199 + $0x40] sm:$0xf] %vm746, %v698
      %764 = vst.msk [vmem:[%s199 + $0x44] sm:$0xf] %vm746, %v699
      %765 = vst.msk [vmem:[%s199 + $0x48] sm:$0xf] %vm746, %v700
      %766 = vst.msk [vmem:[%s199 + $0x4c] sm:$0xf] %vm746, %v701
      %767 = vst.msk [vmem:[%s199 + $0x50] sm:$0xf] %vm746, %v702
      %768 = vst.msk [vmem:[%s199 + $0x54] sm:$0xf] %vm746, %v703
      %769 = vst.msk [vmem:[%s199 + $0x58] sm:$0xf] %vm746, %v704
      %770 = vst.msk [vmem:[%s199 + $0x5c] sm:$0xf] %vm746, %v705
      %771 = vst.msk [vmem:[%s199 + $0x60] sm:$0xf] %vm746, %v706
      %772 = vst.msk [vmem:[%s199 + $0x64] sm:$0xf] %vm746, %v707
      %773 = vst.msk [vmem:[%s199 + $0x68] sm:$0xf] %vm746, %v708
      %774 = vst.msk [vmem:[%s199 + $0x6c] sm:$0xf] %vm746, %v709
      %775 = vst.msk [vmem:[%s199 + $0x70] sm:$0xf] %vm746, %v710
      %776 = vst.msk [vmem:[%s199 + $0x74] sm:$0xf] %vm746, %v711
      %777 = vst.msk [vmem:[%s199 + $0x78] sm:$0xf] %vm746, %v712
      %778 = vst.msk [vmem:[%s199 + $0x7c] sm:$0xf] %vm746, %v713
      %s779 = smul.u32 32, %s15
      %p780 = scmp.lt.s32.totalorder %s779, 63
      %s781 = scalar_select %p780, %s779, 63
      %s782 = smul.addr %s781, 4
      %s783 = scalar_lea.vmem %s4, %s782
      // Predicated region
      $region37: #{_lambda_.35} parent=35 // pred_check
        %p784 = pneg %p122
      $region38: #{_lambda_.35} parent=35 // pred_check_branch
        %786 = sbr.rel (%p784) target = $region40
      $region39: #{_lambda_.35} parent=35 // pred_region
        %s787 = smul.u32 32, %s15
      $region40: #{_lambda_.35} parent=35 // pred_fallthru
        _
    $region36: #{_lambda_.35} parent=5 // pred_fallthru
      _
    %p788 = scmp.le.s32.totalorder 2, %s10
    // Predicated region
    $region41: #{_lambda_.35} parent=5 // pred_check
      %p789 = pneg %p788
    $region42: #{_lambda_.35} parent=5 // pred_check_branch
      %791 = sbr.rel (%p789) target = $region44
    $region43: #{_lambda_.35} parent=5 // pred_region
      %s792 = ssub.s32 %s10, 2
      // Predicated region
      $region45: #{_lambda_.35} parent=43 // pred_check
        %p793 = pneg %p128
      $region46: #{_lambda_.35} parent=43 // pred_check_branch
        %795 = sbr.rel (%p793) target = $region48
      $region47: #{_lambda_.35} parent=43 // pred_region
        %s796 = smul.u32 32, %s16
        %p797 = scmp.lt.s32.totalorder %s796, 63
        %s798 = scalar_select %p797, %s796, 63
        %s799 = smul.addr %s798, 4
        %s800 = scalar_lea.vmem %s4, %s799
      $region48: #{_lambda_.35} parent=43 // pred_fallthru
        _
    $region44: #{_lambda_.35} parent=5 // pred_fallthru
      _
  $region6: #{_lambda_.35} parent=0 // loop_footer
    %s14 = sadd.s32 1, %s10
  $region7: #{_lambda_.35} parent=0 // loop_footer_branch
    %9 = sbr.rel target = $region3
  $region8: #{_lambda_.35} parent=0 // loop_exit
    _

// kernel: _lambda_.39
$region0: #{_lambda_.39}
  #allocation0 [shape = 'u32[]', space=smem, size = 0x4, offset = 0x4, fixed_abs, tag = 'smem constant byte address 0x4 - core index']
  #allocation1 [shape = 'u32[144,128]{1,0:T(1,128)}', space=vmem, size = 0x12000, scoped, tag = 'internal scratch']
  %s0 = inlined_call_operand.vmem [shape: bf16[128,32], index: 0, kind: input, shape index: {}]
  %s1 = inlined_call_operand.vmem [shape: bf16[32,16], index: 1, kind: input, shape index: {}]
  %s2 = inlined_call_operand.vmem [shape: f32[1,16], index: 2, kind: input, shape index: {}]
  %s3 = inlined_call_operand.vmem [shape: f32[1,16], index: 3, kind: input, shape index: {}]
  %s4 = inlined_call_operand.vmem [shape: bf16[128,16], index: 4, kind: output, shape index: {}]
  %s5 = sld [smem:[#allocation0]]
  $region26: #{_lambda_.39} parent=0
    _
  %s7 = ssub.s32 1, %s5
  %s8 = scalar_select 0, %s7, %s5
  // Predicated region
  $region2: #{_lambda_.39} parent=0 // pred_check
    _
  $region3: #{_lambda_.39} parent=0 // pred_check_branch
    %10 = sbr.rel (0) target = $region5
  $region4: #{_lambda_.39} parent=0 // pred_region
    _
  $region5: #{_lambda_.39} parent=0 // pred_fallthru
    _
  // Predicated region
  $region6: #{_lambda_.39} parent=0 // pred_check
    _
  $region7: #{_lambda_.39} parent=0 // pred_check_branch
    %12 = sbr.rel (0) target = $region9
  $region8: #{_lambda_.39} parent=0 // pred_region
    _
  $region9: #{_lambda_.39} parent=0 // pred_fallthru
    _
  // Predicated region
  $region10: #{_lambda_.39} parent=0 // pred_check
    _
  $region11: #{_lambda_.39} parent=0 // pred_check_branch
    %14 = sbr.rel (0) target = $region13
  $region12: #{_lambda_.39} parent=0 // pred_region
    _
  $region13: #{_lambda_.39} parent=0 // pred_fallthru
    _
  // Predicated region
  $region14: #{_lambda_.39} parent=0 // pred_check
    _
  $region15: #{_lambda_.39} parent=0 // pred_check_branch
    %16 = sbr.rel (0) target = $region17
  $region16: #{_lambda_.39} parent=0 // pred_region
    _
  $region17: #{_lambda_.39} parent=0 // pred_fallthru
    _
  %v18 = vld [vmem:[%s0] sm:$0xf]
  %v19 = vld [vmem:[%s0 + $0x4] sm:$0xf]
  %v20 = vld [vmem:[%s0 + $0x8] sm:$0xf]
  %v21 = vld [vmem:[%s0 + $0xc] sm:$0xf]
  %v22 = vld [vmem:[%s0 + $0x10] sm:$0xf]
  %v23 = vld [vmem:[%s0 + $0x14] sm:$0xf]
  %v24 = vld [vmem:[%s0 + $0x18] sm:$0xf]
  %v25 = vld [vmem:[%s0 + $0x1c] sm:$0xf]
  %v26 = vld [vmem:[%s0 + $0x20] sm:$0xf]
  %v27 = vld [vmem:[%s0 + $0x24] sm:$0xf]
  %v28 = vld [vmem:[%s0 + $0x28] sm:$0xf]
  %v29 = vld [vmem:[%s0 + $0x2c] sm:$0xf]
  %v30 = vld [vmem:[%s0 + $0x30] sm:$0xf]
  %v31 = vld [vmem:[%s0 + $0x34] sm:$0xf]
  %v32 = vld [vmem:[%s0 + $0x38] sm:$0xf]
  %v33 = vld [vmem:[%s0 + $0x3c] sm:$0xf]
  %v34 = vunpack.c.l.bf16 %v18
  %v35 = vunpack.c.l.bf16 %v19
  %v36 = vunpack.c.l.bf16 %v20
  %v37 = vunpack.c.l.bf16 %v21
  %v38 = vunpack.c.l.bf16 %v22
  %v39 = vunpack.c.l.bf16 %v23
  %v40 = vunpack.c.l.bf16 %v24
  %v41 = vunpack.c.l.bf16 %v25
  %v42 = vunpack.c.l.bf16 %v26
  %v43 = vunpack.c.l.bf16 %v27
  %v44 = vunpack.c.l.bf16 %v28
  %v45 = vunpack.c.l.bf16 %v29
  %v46 = vunpack.c.l.bf16 %v30
  %v47 = vunpack.c.l.bf16 %v31
  %v48 = vunpack.c.l.bf16 %v32
  %v49 = vunpack.c.l.bf16 %v33
  %v50 = vmax.f32 %v34, 0.0
  %v51 = vmax.f32 %v35, 0.0
  %v52 = vmax.f32 %v36, 0.0
  %v53 = vmax.f32 %v37, 0.0
  %v54 = vmax.f32 %v38, 0.0
  %v55 = vmax.f32 %v39, 0.0
  %v56 = vmax.f32 %v40, 0.0
  %v57 = vmax.f32 %v41, 0.0
  %v58 = vmax.f32 %v42, 0.0
  %v59 = vmax.f32 %v43, 0.0
  %v60 = vmax.f32 %v44, 0.0
  %v61 = vmax.f32 %v45, 0.0
  %v62 = vmax.f32 %v46, 0.0
  %v63 = vmax.f32 %v47, 0.0
  %v64 = vmax.f32 %v48, 0.0
  %v65 = vmax.f32 %v49, 0.0
  %v66 = vpack.c.bf16 %v51, %v50
  %v67 = vpack.c.bf16 %v53, %v52
  %v68 = vpack.c.bf16 %v55, %v54
  %v69 = vpack.c.bf16 %v57, %v56
  %v70 = vpack.c.bf16 %v59, %v58
  %v71 = vpack.c.bf16 %v61, %v60
  %v72 = vpack.c.bf16 %v63, %v62
  %v73 = vpack.c.bf16 %v65, %v64
  %v74 = vld [vmem:[%s1] sm:$0xf]
  %v75 = vld [vmem:[%s1 + $0x4] sm:$0xf]
  %v76 = vld [vmem:[%s1 + $0x8] sm:$0xf]
  %v77 = vld [vmem:[%s1 + $0xc] sm:$0xf]
  %v82 = vunpack.c.l.b16 %v74
  %v83 = vunpack.c.l.b16 %v75
  %v84 = vunpack.c.l.b16 %v76
  %v85 = vunpack.c.l.b16 %v77
  %v86 = vpack.c.b16 %v83, %v82
  %v87 = vpack.c.b16 %v85, %v84
  %vm90 = vcmask 261120
  %v92 = vsel %vm90, %v66, 0
  %v95 = vsel %vm90, %v67, 0
  %v98 = vsel %vm90, %v68, 0
  %v101 = vsel %vm90, %v69, 0
  %v104 = vsel %vm90, %v70, 0
  %v107 = vsel %vm90, %v71, 0
  %v110 = vsel %vm90, %v72, 0
  %v113 = vsel %vm90, %v73, 0
  %115 = vmatprep.subr.bf16.mxu0 0
  %116 = vmatpush1.bf16.msra.mxu0 0
  %117 = vmatprep.subr.bf16.mxu0 0
  %118 = vmatpush1.bf16.msra.mxu0 0
  %119 = vmatprep.subr.bf16.mxu0 0
  %120 = vmatpush1.bf16.msra.mxu0 0
  %121 = vmatprep.subr.bf16.mxu0 0
  %122 = vmatpush1.bf16.msra.mxu0 0
  %123 = vmatprep.subr.bf16.mxu0 0
  %124 = vmatpush1.bf16.msra.mxu0 0
  %125 = vmatprep.subr.bf16.mxu0 0
  %126 = vmatpush1.bf16.msra.mxu0 0
  %127 = vmatprep.subr.bf16.mxu0 0
  %128 = vmatpush1.bf16.msra.mxu0 %v87
  %129 = vmatprep.subr.bf16.mxu0 0
  %130 = vmatpush1.bf16.msra.mxu0 %v86
  %131 = vmatprep.subr.bf16.mxu0 0
  %132 = vmatpush2.bf16.msra.mxu0 0
  %133 = vmatprep.subr.bf16.mxu0 0
  %134 = vmatpush2.bf16.msra.mxu0 0
  %135 = vmatprep.subr.bf16.mxu0 0
  %136 = vmatpush2.bf16.msra.mxu0 0
  %137 = vmatprep.subr.bf16.mxu0 0
  %138 = vmatpush2.bf16.msra.mxu0 0
  %139 = vmatprep.subr.bf16.mxu0 0
  %140 = vmatpush2.bf16.msra.mxu0 0
  %141 = vmatprep.subr.bf16.mxu0 0
  %142 = vmatpush2.bf16.msra.mxu0 0
  %143 = vmatprep.subr.bf16.mxu0 0
  %144 = vmatpush2.bf16.msra.mxu0 0
  %145 = vmatprep.subr.bf16.mxu0 0
  %146 = vmatpush2.bf16.msra.mxu0 0
  %147 = vmatprep.mubr.bf16.mxu0 0
  %148 = vmatmul.mubr.bf16.gmra.mxu0 %v92
  %v149 = vpop.f32.mrf.mxu0
  %v150 = vadd.f32 0.0, %v149
  %v151 = vpop.f32.mrf.mxu0
  %v152 = vpop.f32.mrf.mxu0
  %v153 = vadd.f32 0.0, %v152
  %v154 = vpop.f32.mrf.mxu0
  %155 = vmatprep.mubr.bf16.mxu0 0
  %156 = vmatmul.mubr.bf16.gmra.mxu0 %v95
  %v157 = vpop.f32.mrf.mxu0
  %v158 = vadd.f32 0.0, %v157
  %v159 = vpop.f32.mrf.mxu0
  %v160 = vpop.f32.mrf.mxu0
  %v161 = vadd.f32 0.0, %v160
  %v162 = vpop.f32.mrf.mxu0
  %163 = vmatprep.mubr.bf16.mxu0 0
  %164 = vmatmul.mubr.bf16.gmra.mxu0 %v98
  %v165 = vpop.f32.mrf.mxu0
  %v166 = vadd.f32 0.0, %v165
  %v167 = vpop.f32.mrf.mxu0
  %v168 = vpop.f32.mrf.mxu0
  %v169 = vadd.f32 0.0, %v168
  %v170 = vpop.f32.mrf.mxu0
  %171 = vmatprep.mubr.bf16.mxu0 0
  %172 = vmatmul.mubr.bf16.gmra.mxu0 %v101
  %v173 = vpop.f32.mrf.mxu0
  %v174 = vadd.f32 0.0, %v173
  %v175 = vpop.f32.mrf.mxu0
  %v176 = vpop.f32.mrf.mxu0
  %v177 = vadd.f32 0.0, %v176
  %v178 = vpop.f32.mrf.mxu0
  %179 = vmatprep.mubr.bf16.mxu0 0
  %180 = vmatmul.mubr.bf16.gmra.mxu0 %v104
  %v181 = vpop.f32.mrf.mxu0
  %v182 = vadd.f32 0.0, %v181
  %v183 = vpop.f32.mrf.mxu0
  %v184 = vpop.f32.mrf.mxu0
  %v185 = vadd.f32 0.0, %v184
  %v186 = vpop.f32.mrf.mxu0
  %187 = vmatprep.mubr.bf16.mxu0 0
  %188 = vmatmul.mubr.bf16.gmra.mxu0 %v107
  %v189 = vpop.f32.mrf.mxu0
  %v190 = vadd.f32 0.0, %v189
  %v191 = vpop.f32.mrf.mxu0
  %v192 = vpop.f32.mrf.mxu0
  %v193 = vadd.f32 0.0, %v192
  %v194 = vpop.f32.mrf.mxu0
  %195 = vmatprep.mubr.bf16.mxu0 0
  %196 = vmatmul.mubr.bf16.gmra.mxu0 %v110
  %v197 = vpop.f32.mrf.mxu0
  %v198 = vadd.f32 0.0, %v197
  %v199 = vpop.f32.mrf.mxu0
  %v200 = vpop.f32.mrf.mxu0
  %v201 = vadd.f32 0.0, %v200
  %v202 = vpop.f32.mrf.mxu0
  %203 = vmatprep.mubr.bf16.mxu0 0
  %204 = vmatmul.mubr.bf16.gmra.mxu0 %v113
  %v205 = vpop.f32.mrf.mxu0
  %v206 = vadd.f32 0.0, %v205
  %v207 = vpop.f32.mrf.mxu0
  %v208 = vpop.f32.mrf.mxu0
  %v209 = vadd.f32 0.0, %v208
  %v210 = vpop.f32.mrf.mxu0
  %211 = vdwg.mxu0
  %v212 = vld [vmem:[%s2] sm:$0x1]
  %v214 = vlaneseq
  %v215 = vshrl.u32 %v214, 7
  %v216 = vsub.s32 0, %v215
  %v217 = vrot.slane %v212, %v216
  %v219 = vmul.f32 %v150, %v217
  %v220 = vmul.f32 %v153, %v217
  %v221 = vmul.f32 %v158, %v217
  %v222 = vmul.f32 %v161, %v217
  %v223 = vmul.f32 %v166, %v217
  %v224 = vmul.f32 %v169, %v217
  %v225 = vmul.f32 %v174, %v217
  %v226 = vmul.f32 %v177, %v217
  %v227 = vmul.f32 %v182, %v217
  %v228 = vmul.f32 %v185, %v217
  %v229 = vmul.f32 %v190, %v217
  %v230 = vmul.f32 %v193, %v217
  %v231 = vmul.f32 %v198, %v217
  %v232 = vmul.f32 %v201, %v217
  %v233 = vmul.f32 %v206, %v217
  %v234 = vmul.f32 %v209, %v217
  %v235 = vld [vmem:[%s3] sm:$0x1]
  %v237 = vlaneseq
  %v238 = vshrl.u32 %v237, 7
  %v239 = vsub.s32 0, %v238
  %v240 = vrot.slane %v235, %v239
  %v242 = vadd.f32 %v219, %v240
  %v243 = vadd.f32 %v220, %v240
  %v244 = vadd.f32 %v221, %v240
  %v245 = vadd.f32 %v222, %v240
  %v246 = vadd.f32 %v223, %v240
  %v247 = vadd.f32 %v224, %v240
  %v248 = vadd.f32 %v225, %v240
  %v249 = vadd.f32 %v226, %v240
  %v250 = vadd.f32 %v227, %v240
  %v251 = vadd.f32 %v228, %v240
  %v252 = vadd.f32 %v229, %v240
  %v253 = vadd.f32 %v230, %v240
  %v254 = vadd.f32 %v231, %v240
  %v255 = vadd.f32 %v232, %v240
  %v256 = vadd.f32 %v233, %v240
  %v257 = vadd.f32 %v234, %v240
  %v258 = vpack.c.bf16 %v243, %v242
  %v259 = vpack.c.bf16 %v245, %v244
  %v260 = vpack.c.bf16 %v247, %v246
  %v261 = vpack.c.bf16 %v249, %v248
  %v262 = vpack.c.bf16 %v251, %v250
  %v263 = vpack.c.bf16 %v253, %v252
  %v264 = vpack.c.bf16 %v255, %v254
  %v265 = vpack.c.bf16 %v257, %v256
  %v274 = vunpack.c.l.b16 %v258
  %v275 = vunpack.c.h.b16 %v258
  %v276 = vunpack.c.l.b16 %v259
  %v277 = vunpack.c.h.b16 %v259
  %v278 = vunpack.c.l.b16 %v260
  %v279 = vunpack.c.h.b16 %v260
  %v280 = vunpack.c.l.b16 %v261
  %v281 = vunpack.c.h.b16 %v261
  %v282 = vunpack.c.l.b16 %v262
  %v283 = vunpack.c.h.b16 %v262
  %v284 = vunpack.c.l.b16 %v263
  %v285 = vunpack.c.h.b16 %v263
  %v286 = vunpack.c.l.b16 %v264
  %v287 = vunpack.c.h.b16 %v264
  %v288 = vunpack.c.l.b16 %v265
  %v289 = vunpack.c.h.b16 %v265
  %v290 = vpack.c.b16 %v274, %v274
  %v291 = vpack.c.b16 %v275, %v275
  %v292 = vpack.c.b16 %v276, %v276
  %v293 = vpack.c.b16 %v277, %v277
  %v294 = vpack.c.b16 %v278, %v278
  %v295 = vpack.c.b16 %v279, %v279
  %v296 = vpack.c.b16 %v280, %v280
  %v297 = vpack.c.b16 %v281, %v281
  %v298 = vpack.c.b16 %v282, %v282
  %v299 = vpack.c.b16 %v283, %v283
  %v300 = vpack.c.b16 %v284, %v284
  %v301 = vpack.c.b16 %v285, %v285
  %v302 = vpack.c.b16 %v286, %v286
  %v303 = vpack.c.b16 %v287, %v287
  %v304 = vpack.c.b16 %v288, %v288
  %v305 = vpack.c.b16 %v289, %v289
  %vm322 = vcmask 125952
  %323 = vst.msk [vmem:[%s4] sm:$0xf] %vm322, %v290
  %324 = vst.msk [vmem:[%s4 + $0x4] sm:$0xf] %vm322, %v291
  %325 = vst.msk [vmem:[%s4 + $0x8] sm:$0xf] %vm322, %v292
  %326 = vst.msk [vmem:[%s4 + $0xc] sm:$0xf] %vm322, %v293
  %327 = vst.msk [vmem:[%s4 + $0x10] sm:$0xf] %vm322, %v294
  %328 = vst.msk [vmem:[%s4 + $0x14] sm:$0xf] %vm322, %v295
  %329 = vst.msk [vmem:[%s4 + $0x18] sm:$0xf] %vm322, %v296
  %330 = vst.msk [vmem:[%s4 + $0x1c] sm:$0xf] %vm322, %v297
  %331 = vst.msk [vmem:[%s4 + $0x20] sm:$0xf] %vm322, %v298
  %332 = vst.msk [vmem:[%s4 + $0x24] sm:$0xf] %vm322, %v299
  %333 = vst.msk [vmem:[%s4 + $0x28] sm:$0xf] %vm322, %v300
  %334 = vst.msk [vmem:[%s4 + $0x2c] sm:$0xf] %vm322, %v301
  %335 = vst.msk [vmem:[%s4 + $0x30] sm:$0xf] %vm322, %v302
  %336 = vst.msk [vmem:[%s4 + $0x34] sm:$0xf] %vm322, %v303
  %337 = vst.msk [vmem:[%s4 + $0x38] sm:$0xf] %vm322, %v304
  %338 = vst.msk [vmem:[%s4 + $0x3c] sm:$0xf] %vm322, %v305
  // Predicated region
  $region18: #{_lambda_.39} parent=0 // pred_check
    _
  $region19: #{_lambda_.39} parent=0 // pred_check_branch
    %340 = sbr.rel (0) target = $region21
  $region20: #{_lambda_.39} parent=0 // pred_region
    _
  $region21: #{_lambda_.39} parent=0 // pred_fallthru
    _
  // Predicated region
  $region22: #{_lambda_.39} parent=0 // pred_check
    _
  $region23: #{_lambda_.39} parent=0 // pred_check_branch
    %342 = sbr.rel (0) target = $region25
  $region24: #{_lambda_.39} parent=0 // pred_region
    _
  $region25: #{_lambda_.39} parent=0 // pred_fallthru
    _

// kernel: _lambda_.34
$region0: #{_lambda_.34}
  #allocation0 [shape = 'u32[]', space=smem, size = 0x4, offset = 0x4, fixed_abs, tag = 'smem constant byte address 0x4 - core index']
  #allocation1 [shape = 'u32[144,128]{1,0:T(1,128)}', space=vmem, size = 0x12000, scoped, tag = 'internal scratch']
  %s0 = inlined_call_operand.vmem [shape: bf16[512,16], index: 0, kind: input, shape index: {}]
  %s1 = inlined_call_operand.vmem [shape: bf16[16,16], index: 1, kind: input, shape index: {}]
  %s2 = inlined_call_operand.vmem [shape: f32[1,16], index: 2, kind: input, shape index: {}]
  %s3 = inlined_call_operand.vmem [shape: f32[1,16], index: 3, kind: input, shape index: {}]
  %s4 = inlined_call_operand.vmem [shape: bf16[512,16], index: 4, kind: output, shape index: {}]
  %s5 = sld [smem:[#allocation0]]
  $region49: #{_lambda_.34} parent=0
    _
  %s7 = ssub.s32 1, %s5
  %s8 = scalar_select 0, %s7, %s5
  loop: start=0, step=1, limit=4
  $region2: #{_lambda_.34} parent=0 // loop_pre_header
    _
  $region3: #{_lambda_.34} parent=0 // loop_header
    %s10 = sphi 0, %s14
    %p11 = scmp.ge.s32.totalorder %s10, 4
    %s20 = sphi 0, %s22
    %s23 = sphi 0, %s20
    %s24 = sphi 0, %s23
    %s40 = sphi 0, %s24
    %s44 = sphi 0, %s44
    %s46 = sphi 0, %s44
    %s47 = sphi 0, %s46
    %s61 = sphi 0, %s47
    %s65 = sphi 0, %s65
    %s67 = sphi 0, %s65
    %s68 = sphi 0, %s67
    %s82 = sphi 0, %s68
    %s86 = sphi 0, %s86
    %s88 = sphi 0, %s86
    %s89 = sphi 0, %s88
    %s103 = sphi 0, %s89
    %s109 = sphi 0, %s111
    %s112 = sphi 0, %s109
    %s113 = sphi 0, %s112
    %s129 = sphi 0, %s113
  $region4: #{_lambda_.34} parent=0 // loop_header_branch
    %13 = sbr.rel (%p11) target = $region8
  $region5: #{_lambda_.34} parent=0 // loop_body
    %s15 = ssub.s32 %s10, 1
    %s16 = ssub.s32 %s10, 2
    %s17 = sadd.s32 %s10, 1
    %s18 = ssub.s32 %s10, %s17
    %p19 = scmp.eq.s32.totalorder %s18, 0
    %s21 = sadd.s32 %s20, 1
    %s22 = scalar_select %p19, %s20, %s21
    %p25 = pneg %p19
    %p26 = scmp.eq.s32.totalorder %s10, 1
    %p27 = por %p25, %p26
    %p28 = scmp.ne.s32.totalorder %s20, %s23
    %p29 = scmp.eq.s32.totalorder %s10, 0
    %p30 = por %p28, %p29
    %p31 = scmp.ne.s32.totalorder %s20, %s23
    %p32 = scmp.eq.s32.totalorder %s15, 1
    %p33 = por %p31, %p32
    %p34 = scmp.ne.s32.totalorder %s23, %s24
    %p35 = scmp.eq.s32.totalorder %s15, 0
    %p36 = por %p34, %p35
    %p37 = scmp.ne.s32.totalorder %s23, %s24
    %p38 = scmp.eq.s32.totalorder %s16, 1
    %p39 = por %p37, %p38
    %p41 = scmp.ne.s32.totalorder %s24, %s40
    %p42 = scmp.eq.s32.totalorder %s16, 0
    %p43 = por %p41, %p42
    %s45 = sadd.s32 %s44, 1
    %p48 = scmp.eq.s32.totalorder %s10, 1
    %p49 = scmp.ne.s32.totalorder %s44, %s46
    %p50 = scmp.eq.s32.totalorder %s10, 0
    %p51 = por %p49, %p50
    %p52 = scmp.ne.s32.totalorder %s44, %s46
    %p53 = scmp.eq.s32.totalorder %s15, 1
    %p54 = por %p52, %p53
    %p55 = scmp.ne.s32.totalorder %s46, %s47
    %p56 = scmp.eq.s32.totalorder %s15, 0
    %p57 = por %p55, %p56
    %p58 = scmp.ne.s32.totalorder %s46, %s47
    %p59 = scmp.eq.s32.totalorder %s16, 1
    %p60 = por %p58, %p59
    %p62 = scmp.ne.s32.totalorder %s47, %s61
    %p63 = scmp.eq.s32.totalorder %s16, 0
    %p64 = por %p62, %p63
    %s66 = sadd.s32 %s65, 1
    %p69 = scmp.eq.s32.totalorder %s10, 1
    %p70 = scmp.ne.s32.totalorder %s65, %s67
    %p71 = scmp.eq.s32.totalorder %s10, 0
    %p72 = por %p70, %p71
    %p73 = scmp.ne.s32.totalorder %s65, %s67
    %p74 = scmp.eq.s32.totalorder %s15, 1
    %p75 = por %p73, %p74
    %p76 = scmp.ne.s32.totalorder %s67, %s68
    %p77 = scmp.eq.s32.totalorder %s15, 0
    %p78 = por %p76, %p77
    %p79 = scmp.ne.s32.totalorder %s67, %s68
    %p80 = scmp.eq.s32.totalorder %s16, 1
    %p81 = por %p79, %p80
    %p83 = scmp.ne.s32.totalorder %s68, %s82
    %p84 = scmp.eq.s32.totalorder %s16, 0
    %p85 = por %p83, %p84
    %s87 = sadd.s32 %s86, 1
    %p90 = scmp.eq.s32.totalorder %s10, 1
    %p91 = scmp.ne.s32.totalorder %s86, %s88
    %p92 = scmp.eq.s32.totalorder %s10, 0
    %p93 = por %p91, %p92
    %p94 = scmp.ne.s32.totalorder %s86, %s88
    %p95 = scmp.eq.s32.totalorder %s15, 1
    %p96 = por %p94, %p95
    %p97 = scmp.ne.s32.totalorder %s88, %s89
    %p98 = scmp.eq.s32.totalorder %s15, 0
    %p99 = por %p97, %p98
    %p100 = scmp.ne.s32.totalorder %s88, %s89
    %p101 = scmp.eq.s32.totalorder %s16, 1
    %p102 = por %p100, %p101
    %p104 = scmp.ne.s32.totalorder %s89, %s103
    %p105 = scmp.eq.s32.totalorder %s16, 0
    %p106 = por %p104, %p105
    %s107 = ssub.s32 %s10, %s17
    %p108 = scmp.eq.s32.totalorder %s107, 0
    %s110 = sadd.s32 %s109, 1
    %s111 = scalar_select %p108, %s109, %s110
    %p114 = pneg %p108
    %p115 = scmp.eq.s32.totalorder %s10, 1
    %p116 = por %p114, %p115
    %p117 = scmp.ne.s32.totalorder %s109, %s112
    %p118 = scmp.eq.s32.totalorder %s10, 0
    %p119 = por %p117, %p118
    %p120 = scmp.ne.s32.totalorder %s109, %s112
    %p121 = scmp.eq.s32.totalorder %s15, 1
    %p122 = por %p120, %p121
    %p123 = scmp.ne.s32.totalorder %s112, %s113
    %p124 = scmp.eq.s32.totalorder %s15, 0
    %p125 = por %p123, %p124
    %p126 = scmp.ne.s32.totalorder %s112, %s113
    %p127 = scmp.eq.s32.totalorder %s16, 1
    %p128 = por %p126, %p127
    %p130 = scmp.ne.s32.totalorder %s113, %s129
    %p131 = scmp.eq.s32.totalorder %s16, 0
    %p132 = por %p130, %p131
    %p133 = scmp.le.s32.totalorder 1, %s10
    %p134 = scmp.lt.s32.totalorder %s10, 3
    %p135 = pnand %p133, %p134
    %p136 = pneg %p135
    // Predicated region
    $region9: #{_lambda_.34} parent=5 // pred_check
      _
    $region10: #{_lambda_.34} parent=5 // pred_check_branch
      %138 = sbr.rel (%p135) target = $region12
    $region11: #{_lambda_.34} parent=5 // pred_region
      %s139 = ssub.s32 %s10, 1
      // Predicated region
      $region13: #{_lambda_.34} parent=11 // pred_check
        %p140 = pneg %p57
      $region14: #{_lambda_.34} parent=11 // pred_check_branch
        %142 = sbr.rel (%p140) target = $region16
      $region15: #{_lambda_.34} parent=11 // pred_region
        _
      $region16: #{_lambda_.34} parent=11 // pred_fallthru
        _
      // Predicated region
      $region17: #{_lambda_.34} parent=11 // pred_check
        %p143 = pneg %p78
      $region18: #{_lambda_.34} parent=11 // pred_check_branch
        %145 = sbr.rel (%p143) target = $region20
      $region19: #{_lambda_.34} parent=11 // pred_region
        _
      $region20: #{_lambda_.34} parent=11 // pred_fallthru
        _
      // Predicated region
      $region21: #{_lambda_.34} parent=11 // pred_check
        %p146 = pneg %p99
      $region22: #{_lambda_.34} parent=11 // pred_check_branch
        %148 = sbr.rel (%p146) target = $region24
      $region23: #{_lambda_.34} parent=11 // pred_region
        _
      $region24: #{_lambda_.34} parent=11 // pred_fallthru
        _
    $region12: #{_lambda_.34} parent=5 // pred_fallthru
      _
    %p149 = scmp.lt.s32.totalorder %s10, 2
    // Predicated region
    $region25: #{_lambda_.34} parent=5 // pred_check
      %p150 = pneg %p149
    $region26: #{_lambda_.34} parent=5 // pred_check_branch
      %152 = sbr.rel (%p150) target = $region28
    $region27: #{_lambda_.34} parent=5 // pred_region
      // Predicated region
      $region29: #{_lambda_.34} parent=27 // pred_check
        %p153 = pneg %p30
      $region30: #{_lambda_.34} parent=27 // pred_check_branch
        %155 = sbr.rel (%p153) target = $region32
      $region31: #{_lambda_.34} parent=27 // pred_region
        %s156 = smul.u32 32, %s10
        %p157 = scmp.lt.s32.totalorder %s156, 63
        %s158 = scalar_select %p157, %s156, 63
        %s159 = smul.addr %s158, 4
        %s160 = scalar_lea.vmem %s0, %s159
        %s161 = smul.u32 32, %s10
      $region32: #{_lambda_.34} parent=27 // pred_fallthru
        _
    $region28: #{_lambda_.34} parent=5 // pred_fallthru
      _
    %p162 = scmp.le.s32.totalorder 1, %s10
    %p163 = scmp.lt.s32.totalorder %s10, 3
    %p164 = pnand %p162, %p163
    %p165 = pneg %p164
    // Predicated region
    $region33: #{_lambda_.34} parent=5 // pred_check
      _
    $region34: #{_lambda_.34} parent=5 // pred_check_branch
      %167 = sbr.rel (%p164) target = $region36
    $region35: #{_lambda_.34} parent=5 // pred_region
      %s168 = ssub.s32 %s10, 1
      %s169 = smul.u32 32, %s15
      %p170 = scmp.lt.s32.totalorder %s169, 63
      %s171 = scalar_select %p170, %s169, 63
      %s172 = smul.addr %s171, 4
      %s173 = scalar_lea.vmem %s0, %s172
      %p174 = pneg %p36
      %p175 = pneg %p33
      %p176 = pneg %p57
      %p177 = pneg %p54
      %p178 = pneg %p78
      %p179 = pneg %p75
      %p180 = pneg %p99
      %p181 = pneg %p96
      %p182 = pneg %p125
      %p183 = pneg %p122
      %s184 = smul.u32 32, %s15
      %p185 = scmp.lt.s32.totalorder %s184, 63
      %s186 = scalar_select %p185, %s184, 63
      %s187 = smul.addr %s186, 4
      %s188 = scalar_lea.vmem %s4, %s187
      %s189 = smul.u32 32, %s15
      %p190 = scmp.lt.s32.totalorder %s189, 63
      %s191 = scalar_select %p190, %s189, 63
      %s192 = smul.addr %s191, 4
      %s193 = scalar_lea.vmem %s0, %s192
      %s194 = smul.u32 32, %s15
      %s195 = smul.u32 32, %s15
      %p196 = scmp.lt.s32.totalorder %s195, 63
      %s197 = scalar_select %p196, %s195, 63
      %s198 = smul.addr %s197, 4
      %s199 = scalar_lea.vmem %s4, %s198
      %s200 = smul.u32 32, %s15
      %v202 = vld [vmem:[%s193] sm:$0xf]
      %v203 = vld [vmem:[%s193 + $0x4] sm:$0xf]
      %v204 = vld [vmem:[%s193 + $0x8] sm:$0xf]
      %v205 = vld [vmem:[%s193 + $0xc] sm:$0xf]
      %v206 = vld [vmem:[%s193 + $0x10] sm:$0xf]
      %v207 = vld [vmem:[%s193 + $0x14] sm:$0xf]
      %v208 = vld [vmem:[%s193 + $0x18] sm:$0xf]
      %v209 = vld [vmem:[%s193 + $0x1c] sm:$0xf]
      %v210 = vld [vmem:[%s193 + $0x20] sm:$0xf]
      %v211 = vld [vmem:[%s193 + $0x24] sm:$0xf]
      %v212 = vld [vmem:[%s193 + $0x28] sm:$0xf]
      %v213 = vld [vmem:[%s193 + $0x2c] sm:$0xf]
      %v214 = vld [vmem:[%s193 + $0x30] sm:$0xf]
      %v215 = vld [vmem:[%s193 + $0x34] sm:$0xf]
      %v216 = vld [vmem:[%s193 + $0x38] sm:$0xf]
      %v217 = vld [vmem:[%s193 + $0x3c] sm:$0xf]
      %v218 = vld [vmem:[%s193 + $0x40] sm:$0xf]
      %v219 = vld [vmem:[%s193 + $0x44] sm:$0xf]
      %v220 = vld [vmem:[%s193 + $0x48] sm:$0xf]
      %v221 = vld [vmem:[%s193 + $0x4c] sm:$0xf]
      %v222 = vld [vmem:[%s193 + $0x50] sm:$0xf]
      %v223 = vld [vmem:[%s193 + $0x54] sm:$0xf]
      %v224 = vld [vmem:[%s193 + $0x58] sm:$0xf]
      %v225 = vld [vmem:[%s193 + $0x5c] sm:$0xf]
      %v226 = vld [vmem:[%s193 + $0x60] sm:$0xf]
      %v227 = vld [vmem:[%s193 + $0x64] sm:$0xf]
      %v228 = vld [vmem:[%s193 + $0x68] sm:$0xf]
      %v229 = vld [vmem:[%s193 + $0x6c] sm:$0xf]
      %v230 = vld [vmem:[%s193 + $0x70] sm:$0xf]
      %v231 = vld [vmem:[%s193 + $0x74] sm:$0xf]
      %v232 = vld [vmem:[%s193 + $0x78] sm:$0xf]
      %v233 = vld [vmem:[%s193 + $0x7c] sm:$0xf]
      %v234 = vunpack.c.l.bf16 %v202
      %v235 = vunpack.c.l.bf16 %v203
      %v236 = vunpack.c.l.bf16 %v204
      %v237 = vunpack.c.l.bf16 %v205
      %v238 = vunpack.c.l.bf16 %v206
      %v239 = vunpack.c.l.bf16 %v207
      %v240 = vunpack.c.l.bf16 %v208
      %v241 = vunpack.c.l.bf16 %v209
      %v242 = vunpack.c.l.bf16 %v210
      %v243 = vunpack.c.l.bf16 %v211
      %v244 = vunpack.c.l.bf16 %v212
      %v245 = vunpack.c.l.bf16 %v213
      %v246 = vunpack.c.l.bf16 %v214
      %v247 = vunpack.c.l.bf16 %v215
      %v248 = vunpack.c.l.bf16 %v216
      %v249 = vunpack.c.l.bf16 %v217
      %v250 = vunpack.c.l.bf16 %v218
      %v251 = vunpack.c.l.bf16 %v219
      %v252 = vunpack.c.l.bf16 %v220
      %v253 = vunpack.c.l.bf16 %v221
      %v254 = vunpack.c.l.bf16 %v222
      %v255 = vunpack.c.l.bf16 %v223
      %v256 = vunpack.c.l.bf16 %v224
      %v257 = vunpack.c.l.bf16 %v225
      %v258 = vunpack.c.l.bf16 %v226
      %v259 = vunpack.c.l.bf16 %v227
      %v260 = vunpack.c.l.bf16 %v228
      %v261 = vunpack.c.l.bf16 %v229
      %v262 = vunpack.c.l.bf16 %v230
      %v263 = vunpack.c.l.bf16 %v231
      %v264 = vunpack.c.l.bf16 %v232
      %v265 = vunpack.c.l.bf16 %v233
      %v266 = vmax.f32 %v234, 0.0
      %v267 = vmax.f32 %v235, 0.0
      %v268 = vmax.f32 %v236, 0.0
      %v269 = vmax.f32 %v237, 0.0
      %v270 = vmax.f32 %v238, 0.0
      %v271 = vmax.f32 %v239, 0.0
      %v272 = vmax.f32 %v240, 0.0
      %v273 = vmax.f32 %v241, 0.0
      %v274 = vmax.f32 %v242, 0.0
      %v275 = vmax.f32 %v243, 0.0
      %v276 = vmax.f32 %v244, 0.0
      %v277 = vmax.f32 %v245, 0.0
      %v278 = vmax.f32 %v246, 0.0
      %v279 = vmax.f32 %v247, 0.0
      %v280 = vmax.f32 %v248, 0.0
      %v281 = vmax.f32 %v249, 0.0
      %v282 = vmax.f32 %v250, 0.0
      %v283 = vmax.f32 %v251, 0.0
      %v284 = vmax.f32 %v252, 0.0
      %v285 = vmax.f32 %v253, 0.0
      %v286 = vmax.f32 %v254, 0.0
      %v287 = vmax.f32 %v255, 0.0
      %v288 = vmax.f32 %v256, 0.0
      %v289 = vmax.f32 %v257, 0.0
      %v290 = vmax.f32 %v258, 0.0
      %v291 = vmax.f32 %v259, 0.0
      %v292 = vmax.f32 %v260, 0.0
      %v293 = vmax.f32 %v261, 0.0
      %v294 = vmax.f32 %v262, 0.0
      %v295 = vmax.f32 %v263, 0.0
      %v296 = vmax.f32 %v264, 0.0
      %v297 = vmax.f32 %v265, 0.0
      %v298 = vpack.c.bf16 %v267, %v266
      %v299 = vpack.c.bf16 %v269, %v268
      %v300 = vpack.c.bf16 %v271, %v270
      %v301 = vpack.c.bf16 %v273, %v272
      %v302 = vpack.c.bf16 %v275, %v274
      %v303 = vpack.c.bf16 %v277, %v276
      %v304 = vpack.c.bf16 %v279, %v278
      %v305 = vpack.c.bf16 %v281, %v280
      %v306 = vpack.c.bf16 %v283, %v282
      %v307 = vpack.c.bf16 %v285, %v284
      %v308 = vpack.c.bf16 %v287, %v286
      %v309 = vpack.c.bf16 %v289, %v288
      %v310 = vpack.c.bf16 %v291, %v290
      %v311 = vpack.c.bf16 %v293, %v292
      %v312 = vpack.c.bf16 %v295, %v294
      %v313 = vpack.c.bf16 %v297, %v296
      %v314 = vld [vmem:[%s1] sm:$0xf]
      %v315 = vld [vmem:[%s1 + $0x4] sm:$0xf]
      %v318 = vunpack.c.l.b16 %v314
      %v319 = vunpack.c.l.b16 %v315
      %v320 = vpack.c.b16 %v319, %v318
      %vm322 = vcmask 130048
      %v324 = vsel %vm322, %v298, 0
      %v327 = vsel %vm322, %v299, 0
      %v330 = vsel %vm322, %v300, 0
      %v333 = vsel %vm322, %v301, 0
      %v336 = vsel %vm322, %v302, 0
      %v339 = vsel %vm322, %v303, 0
      %v342 = vsel %vm322, %v304, 0
      %v345 = vsel %vm322, %v305, 0
      %v348 = vsel %vm322, %v306, 0
      %v351 = vsel %vm322, %v307, 0
      %v354 = vsel %vm322, %v308, 0
      %v357 = vsel %vm322, %v309, 0
      %v360 = vsel %vm322, %v310, 0
      %v363 = vsel %vm322, %v311, 0
      %v366 = vsel %vm322, %v312, 0
      %v369 = vsel %vm322, %v313, 0
      %371 = vmatprep.subr.bf16.mxu0 0
      %372 = vmatpush1.bf16.msra.mxu0 0
      %373 = vmatprep.subr.bf16.mxu0 0
      %374 = vmatpush1.bf16.msra.mxu0 0
      %375 = vmatprep.subr.bf16.mxu0 0
      %376 = vmatpush1.bf16.msra.mxu0 0
      %377 = vmatprep.subr.bf16.mxu0 0
      %378 = vmatpush1.bf16.msra.mxu0 0
      %379 = vmatprep.subr.bf16.mxu0 0
      %380 = vmatpush1.bf16.msra.mxu0 0
      %381 = vmatprep.subr.bf16.mxu0 0
      %382 = vmatpush1.bf16.msra.mxu0 0
      %383 = vmatprep.subr.bf16.mxu0 0
      %384 = vmatpush1.bf16.msra.mxu0 0
      %385 = vmatprep.subr.bf16.mxu0 0
      %386 = vmatpush1.bf16.msra.mxu0 %v320
      %387 = vmatprep.subr.bf16.mxu0 0
      %388 = vmatpush2.bf16.msra.mxu0 0
      %389 = vmatprep.subr.bf16.mxu0 0
      %390 = vmatpush2.bf16.msra.mxu0 0
      %391 = vmatprep.subr.bf16.mxu0 0
      %392 = vmatpush2.bf16.msra.mxu0 0
      %393 = vmatprep.subr.bf16.mxu0 0
      %394 = vmatpush2.bf16.msra.mxu0 0
      %395 = vmatprep.subr.bf16.mxu0 0
      %396 = vmatpush2.bf16.msra.mxu0 0
      %397 = vmatprep.subr.bf16.mxu0 0
      %398 = vmatpush2.bf16.msra.mxu0 0
      %399 = vmatprep.subr.bf16.mxu0 0
      %400 = vmatpush2.bf16.msra.mxu0 0
      %401 = vmatprep.subr.bf16.mxu0 0
      %402 = vmatpush2.bf16.msra.mxu0 0
      %403 = vmatprep.mubr.bf16.mxu0 0
      %404 = vmatmul.mubr.bf16.gmra.mxu0 %v324
      %v405 = vpop.f32.mrf.mxu0
      %v406 = vadd.f32 0.0, %v405
      %v407 = vpop.f32.mrf.mxu0
      %v408 = vpop.f32.mrf.mxu0
      %v409 = vadd.f32 0.0, %v408
      %v410 = vpop.f32.mrf.mxu0
      %411 = vmatprep.mubr.bf16.mxu0 0
      %412 = vmatmul.mubr.bf16.gmra.mxu0 %v327
      %v413 = vpop.f32.mrf.mxu0
      %v414 = vadd.f32 0.0, %v413
      %v415 = vpop.f32.mrf.mxu0
      %v416 = vpop.f32.mrf.mxu0
      %v417 = vadd.f32 0.0, %v416
      %v418 = vpop.f32.mrf.mxu0
      %419 = vmatprep.mubr.bf16.mxu0 0
      %420 = vmatmul.mubr.bf16.gmra.mxu0 %v330
      %v421 = vpop.f32.mrf.mxu0
      %v422 = vadd.f32 0.0, %v421
      %v423 = vpop.f32.mrf.mxu0
      %v424 = vpop.f32.mrf.mxu0
      %v425 = vadd.f32 0.0, %v424
      %v426 = vpop.f32.mrf.mxu0
      %427 = vmatprep.mubr.bf16.mxu0 0
      %428 = vmatmul.mubr.bf16.gmra.mxu0 %v333
      %v429 = vpop.f32.mrf.mxu0
      %v430 = vadd.f32 0.0, %v429
      %v431 = vpop.f32.mrf.mxu0
      %v432 = vpop.f32.mrf.mxu0
      %v433 = vadd.f32 0.0, %v432
      %v434 = vpop.f32.mrf.mxu0
      %435 = vmatprep.mubr.bf16.mxu0 0
      %436 = vmatmul.mubr.bf16.gmra.mxu0 %v336
      %v437 = vpop.f32.mrf.mxu0
      %v438 = vadd.f32 0.0, %v437
      %v439 = vpop.f32.mrf.mxu0
      %v440 = vpop.f32.mrf.mxu0
      %v441 = vadd.f32 0.0, %v440
      %v442 = vpop.f32.mrf.mxu0
      %443 = vmatprep.mubr.bf16.mxu0 0
      %444 = vmatmul.mubr.bf16.gmra.mxu0 %v339
      %v445 = vpop.f32.mrf.mxu0
      %v446 = vadd.f32 0.0, %v445
      %v447 = vpop.f32.mrf.mxu0
      %v448 = vpop.f32.mrf.mxu0
      %v449 = vadd.f32 0.0, %v448
      %v450 = vpop.f32.mrf.mxu0
      %451 = vmatprep.mubr.bf16.mxu0 0
      %452 = vmatmul.mubr.bf16.gmra.mxu0 %v342
      %v453 = vpop.f32.mrf.mxu0
      %v454 = vadd.f32 0.0, %v453
      %v455 = vpop.f32.mrf.mxu0
      %v456 = vpop.f32.mrf.mxu0
      %v457 = vadd.f32 0.0, %v456
      %v458 = vpop.f32.mrf.mxu0
      %459 = vmatprep.mubr.bf16.mxu0 0
      %460 = vmatmul.mubr.bf16.gmra.mxu0 %v345
      %v461 = vpop.f32.mrf.mxu0
      %v462 = vadd.f32 0.0, %v461
      %v463 = vpop.f32.mrf.mxu0
      %v464 = vpop.f32.mrf.mxu0
      %v465 = vadd.f32 0.0, %v464
      %v466 = vpop.f32.mrf.mxu0
      %467 = vmatprep.mubr.bf16.mxu0 0
      %468 = vmatmul.mubr.bf16.gmra.mxu0 %v348
      %v469 = vpop.f32.mrf.mxu0
      %v470 = vadd.f32 0.0, %v469
      %v471 = vpop.f32.mrf.mxu0
      %v472 = vpop.f32.mrf.mxu0
      %v473 = vadd.f32 0.0, %v472
      %v474 = vpop.f32.mrf.mxu0
      %475 = vmatprep.mubr.bf16.mxu0 0
      %476 = vmatmul.mubr.bf16.gmra.mxu0 %v351
      %v477 = vpop.f32.mrf.mxu0
      %v478 = vadd.f32 0.0, %v477
      %v479 = vpop.f32.mrf.mxu0
      %v480 = vpop.f32.mrf.mxu0
      %v481 = vadd.f32 0.0, %v480
      %v482 = vpop.f32.mrf.mxu0
      %483 = vmatprep.mubr.bf16.mxu0 0
      %484 = vmatmul.mubr.bf16.gmra.mxu0 %v354
      %v485 = vpop.f32.mrf.mxu0
      %v486 = vadd.f32 0.0, %v485
      %v487 = vpop.f32.mrf.mxu0
      %v488 = vpop.f32.mrf.mxu0
      %v489 = vadd.f32 0.0, %v488
      %v490 = vpop.f32.mrf.mxu0
      %491 = vmatprep.mubr.bf16.mxu0 0
      %492 = vmatmul.mubr.bf16.gmra.mxu0 %v357
      %v493 = vpop.f32.mrf.mxu0
      %v494 = vadd.f32 0.0, %v493
      %v495 = vpop.f32.mrf.mxu0
      %v496 = vpop.f32.mrf.mxu0
      %v497 = vadd.f32 0.0, %v496
      %v498 = vpop.f32.mrf.mxu0
      %499 = vmatprep.mubr.bf16.mxu0 0
      %500 = vmatmul.mubr.bf16.gmra.mxu0 %v360
      %v501 = vpop.f32.mrf.mxu0
      %v502 = vadd.f32 0.0, %v501
      %v503 = vpop.f32.mrf.mxu0
      %v504 = vpop.f32.mrf.mxu0
      %v505 = vadd.f32 0.0, %v504
      %v506 = vpop.f32.mrf.mxu0
      %507 = vmatprep.mubr.bf16.mxu0 0
      %508 = vmatmul.mubr.bf16.gmra.mxu0 %v363
      %v509 = vpop.f32.mrf.mxu0
      %v510 = vadd.f32 0.0, %v509
      %v511 = vpop.f32.mrf.mxu0
      %v512 = vpop.f32.mrf.mxu0
      %v513 = vadd.f32 0.0, %v512
      %v514 = vpop.f32.mrf.mxu0
      %515 = vmatprep.mubr.bf16.mxu0 0
      %516 = vmatmul.mubr.bf16.gmra.mxu0 %v366
      %v517 = vpop.f32.mrf.mxu0
      %v518 = vadd.f32 0.0, %v517
      %v519 = vpop.f32.mrf.mxu0
      %v520 = vpop.f32.mrf.mxu0
      %v521 = vadd.f32 0.0, %v520
      %v522 = vpop.f32.mrf.mxu0
      %523 = vmatprep.mubr.bf16.mxu0 0
      %524 = vmatmul.mubr.bf16.gmra.mxu0 %v369
      %v525 = vpop.f32.mrf.mxu0
      %v526 = vadd.f32 0.0, %v525
      %v527 = vpop.f32.mrf.mxu0
      %v528 = vpop.f32.mrf.mxu0
      %v529 = vadd.f32 0.0, %v528
      %v530 = vpop.f32.mrf.mxu0
      %531 = vdwg.mxu0
      %v532 = vld [vmem:[%s2] sm:$0x1]
      %v534 = vlaneseq
      %v535 = vshrl.u32 %v534, 7
      %v536 = vsub.s32 0, %v535
      %v537 = vrot.slane %v532, %v536
      %v539 = vmul.f32 %v406, %v537
      %v540 = vmul.f32 %v409, %v537
      %v541 = vmul.f32 %v414, %v537
      %v542 = vmul.f32 %v417, %v537
      %v543 = vmul.f32 %v422, %v537
      %v544 = vmul.f32 %v425, %v537
      %v545 = vmul.f32 %v430, %v537
      %v546 = vmul.f32 %v433, %v537
      %v547 = vmul.f32 %v438, %v537
      %v548 = vmul.f32 %v441, %v537
      %v549 = vmul.f32 %v446, %v537
      %v550 = vmul.f32 %v449, %v537
      %v551 = vmul.f32 %v454, %v537
      %v552 = vmul.f32 %v457, %v537
      %v553 = vmul.f32 %v462, %v537
      %v554 = vmul.f32 %v465, %v537
      %v555 = vmul.f32 %v470, %v537
      %v556 = vmul.f32 %v473, %v537
      %v557 = vmul.f32 %v478, %v537
      %v558 = vmul.f32 %v481, %v537
      %v559 = vmul.f32 %v486, %v537
      %v560 = vmul.f32 %v489, %v537
      %v561 = vmul.f32 %v494, %v537
      %v562 = vmul.f32 %v497, %v537
      %v563 = vmul.f32 %v502, %v537
      %v564 = vmul.f32 %v505, %v537
      %v565 = vmul.f32 %v510, %v537
      %v566 = vmul.f32 %v513, %v537
      %v567 = vmul.f32 %v518, %v537
      %v568 = vmul.f32 %v521, %v537
      %v569 = vmul.f32 %v526, %v537
      %v570 = vmul.f32 %v529, %v537
      %v571 = vld [vmem:[%s3] sm:$0x1]
      %v573 = vlaneseq
      %v574 = vshrl.u32 %v573, 7
      %v575 = vsub.s32 0, %v574
      %v576 = vrot.slane %v571, %v575
      %v578 = vadd.f32 %v539, %v576
      %v579 = vadd.f32 %v540, %v576
      %v580 = vadd.f32 %v541, %v576
      %v581 = vadd.f32 %v542, %v576
      %v582 = vadd.f32 %v543, %v576
      %v583 = vadd.f32 %v544, %v576
      %v584 = vadd.f32 %v545, %v576
      %v585 = vadd.f32 %v546, %v576
      %v586 = vadd.f32 %v547, %v576
      %v587 = vadd.f32 %v548, %v576
      %v588 = vadd.f32 %v549, %v576
      %v589 = vadd.f32 %v550, %v576
      %v590 = vadd.f32 %v551, %v576
      %v591 = vadd.f32 %v552, %v576
      %v592 = vadd.f32 %v553, %v576
      %v593 = vadd.f32 %v554, %v576
      %v594 = vadd.f32 %v555, %v576
      %v595 = vadd.f32 %v556, %v576
      %v596 = vadd.f32 %v557, %v576
      %v597 = vadd.f32 %v558, %v576
      %v598 = vadd.f32 %v559, %v576
      %v599 = vadd.f32 %v560, %v576
      %v600 = vadd.f32 %v561, %v576
      %v601 = vadd.f32 %v562, %v576
      %v602 = vadd.f32 %v563, %v576
      %v603 = vadd.f32 %v564, %v576
      %v604 = vadd.f32 %v565, %v576
      %v605 = vadd.f32 %v566, %v576
      %v606 = vadd.f32 %v567, %v576
      %v607 = vadd.f32 %v568, %v576
      %v608 = vadd.f32 %v569, %v576
      %v609 = vadd.f32 %v570, %v576
      %v610 = vpack.c.bf16 %v579, %v578
      %v611 = vpack.c.bf16 %v581, %v580
      %v612 = vpack.c.bf16 %v583, %v582
      %v613 = vpack.c.bf16 %v585, %v584
      %v614 = vpack.c.bf16 %v587, %v586
      %v615 = vpack.c.bf16 %v589, %v588
      %v616 = vpack.c.bf16 %v591, %v590
      %v617 = vpack.c.bf16 %v593, %v592
      %v618 = vpack.c.bf16 %v595, %v594
      %v619 = vpack.c.bf16 %v597, %v596
      %v620 = vpack.c.bf16 %v599, %v598
      %v621 = vpack.c.bf16 %v601, %v600
      %v622 = vpack.c.bf16 %v603, %v602
      %v623 = vpack.c.bf16 %v605, %v604
      %v624 = vpack.c.bf16 %v607, %v606
      %v625 = vpack.c.bf16 %v609, %v608
      %v642 = vunpack.c.l.b16 %v610
      %v643 = vunpack.c.h.b16 %v610
      %v644 = vunpack.c.l.b16 %v611
      %v645 = vunpack.c.h.b16 %v611
      %v646 = vunpack.c.l.b16 %v612
      %v647 = vunpack.c.h.b16 %v612
      %v648 = vunpack.c.l.b16 %v613
      %v649 = vunpack.c.h.b16 %v613
      %v650 = vunpack.c.l.b16 %v614
      %v651 = vunpack.c.h.b16 %v614
      %v652 = vunpack.c.l.b16 %v615
      %v653 = vunpack.c.h.b16 %v615
      %v654 = vunpack.c.l.b16 %v616
      %v655 = vunpack.c.h.b16 %v616
      %v656 = vunpack.c.l.b16 %v617
      %v657 = vunpack.c.h.b16 %v617
      %v658 = vunpack.c.l.b16 %v618
      %v659 = vunpack.c.h.b16 %v618
      %v660 = vunpack.c.l.b16 %v619
      %v661 = vunpack.c.h.b16 %v619
      %v662 = vunpack.c.l.b16 %v620
      %v663 = vunpack.c.h.b16 %v620
      %v664 = vunpack.c.l.b16 %v621
      %v665 = vunpack.c.h.b16 %v621
      %v666 = vunpack.c.l.b16 %v622
      %v667 = vunpack.c.h.b16 %v622
      %v668 = vunpack.c.l.b16 %v623
      %v669 = vunpack.c.h.b16 %v623
      %v670 = vunpack.c.l.b16 %v624
      %v671 = vunpack.c.h.b16 %v624
      %v672 = vunpack.c.l.b16 %v625
      %v673 = vunpack.c.h.b16 %v625
      %v674 = vpack.c.b16 %v642, %v642
      %v675 = vpack.c.b16 %v643, %v643
      %v676 = vpack.c.b16 %v644, %v644
      %v677 = vpack.c.b16 %v645, %v645
      %v678 = vpack.c.b16 %v646, %v646
      %v679 = vpack.c.b16 %v647, %v647
      %v680 = vpack.c.b16 %v648, %v648
      %v681 = vpack.c.b16 %v649, %v649
      %v682 = vpack.c.b16 %v650, %v650
      %v683 = vpack.c.b16 %v651, %v651
      %v684 = vpack.c.b16 %v652, %v652
      %v685 = vpack.c.b16 %v653, %v653
      %v686 = vpack.c.b16 %v654, %v654
      %v687 = vpack.c.b16 %v655, %v655
      %v688 = vpack.c.b16 %v656, %v656
      %v689 = vpack.c.b16 %v657, %v657
      %v690 = vpack.c.b16 %v658, %v658
      %v691 = vpack.c.b16 %v659, %v659
      %v692 = vpack.c.b16 %v660, %v660
      %v693 = vpack.c.b16 %v661, %v661
      %v694 = vpack.c.b16 %v662, %v662
      %v695 = vpack.c.b16 %v663, %v663
      %v696 = vpack.c.b16 %v664, %v664
      %v697 = vpack.c.b16 %v665, %v665
      %v698 = vpack.c.b16 %v666, %v666
      %v699 = vpack.c.b16 %v667, %v667
      %v700 = vpack.c.b16 %v668, %v668
      %v701 = vpack.c.b16 %v669, %v669
      %v702 = vpack.c.b16 %v670, %v670
      %v703 = vpack.c.b16 %v671, %v671
      %v704 = vpack.c.b16 %v672, %v672
      %v705 = vpack.c.b16 %v673, %v673
      %vm738 = vcmask 125952
      %739 = vst.msk [vmem:[%s199] sm:$0xf] %vm738, %v674
      %740 = vst.msk [vmem:[%s199 + $0x4] sm:$0xf] %vm738, %v675
      %741 = vst.msk [vmem:[%s199 + $0x8] sm:$0xf] %vm738, %v676
      %742 = vst.msk [vmem:[%s199 + $0xc] sm:$0xf] %vm738, %v677
      %743 = vst.msk [vmem:[%s199 + $0x10] sm:$0xf] %vm738, %v678
      %744 = vst.msk [vmem:[%s199 + $0x14] sm:$0xf] %vm738, %v679
      %745 = vst.msk [vmem:[%s199 + $0x18] sm:$0xf] %vm738, %v680
      %746 = vst.msk [vmem:[%s199 + $0x1c] sm:$0xf] %vm738, %v681
      %747 = vst.msk [vmem:[%s199 + $0x20] sm:$0xf] %vm738, %v682
      %748 = vst.msk [vmem:[%s199 + $0x24] sm:$0xf] %vm738, %v683
      %749 = vst.msk [vmem:[%s199 + $0x28] sm:$0xf] %vm738, %v684
      %750 = vst.msk [vmem:[%s199 + $0x2c] sm:$0xf] %vm738, %v685
      %751 = vst.msk [vmem:[%s199 + $0x30] sm:$0xf] %vm738, %v686
      %752 = vst.msk [vmem:[%s199 + $0x34] sm:$0xf] %vm738, %v687
      %753 = vst.msk [vmem:[%s199 + $0x38] sm:$0xf] %vm738, %v688
      %754 = vst.msk [vmem:[%s199 + $0x3c] sm:$0xf] %vm738, %v689
      %755 = vst.msk [vmem:[%s199 + $0x40] sm:$0xf] %vm738, %v690
      %756 = vst.msk [vmem:[%s199 + $0x44] sm:$0xf] %vm738, %v691
      %757 = vst.msk [vmem:[%s199 + $0x48] sm:$0xf] %vm738, %v692
      %758 = vst.msk [vmem:[%s199 + $0x4c] sm:$0xf] %vm738, %v693
      %759 = vst.msk [vmem:[%s199 + $0x50] sm:$0xf] %vm738, %v694
      %760 = vst.msk [vmem:[%s199 + $0x54] sm:$0xf] %vm738, %v695
      %761 = vst.msk [vmem:[%s199 + $0x58] sm:$0xf] %vm738, %v696
      %762 = vst.msk [vmem:[%s199 + $0x5c] sm:$0xf] %vm738, %v697
      %763 = vst.msk [vmem:[%s199 + $0x60] sm:$0xf] %vm738, %v698
      %764 = vst.msk [vmem:[%s199 + $0x64] sm:$0xf] %vm738, %v699
      %765 = vst.msk [vmem:[%s199 + $0x68] sm:$0xf] %vm738, %v700
      %766 = vst.msk [vmem:[%s199 + $0x6c] sm:$0xf] %vm738, %v701
      %767 = vst.msk [vmem:[%s199 + $0x70] sm:$0xf] %vm738, %v702
      %768 = vst.msk [vmem:[%s199 + $0x74] sm:$0xf] %vm738, %v703
      %769 = vst.msk [vmem:[%s199 + $0x78] sm:$0xf] %vm738, %v704
      %770 = vst.msk [vmem:[%s199 + $0x7c] sm:$0xf] %vm738, %v705
      %s771 = smul.u32 32, %s15
      %p772 = scmp.lt.s32.totalorder %s771, 63
      %s773 = scalar_select %p772, %s771, 63
      %s774 = smul.addr %s773, 4
      %s775 = scalar_lea.vmem %s4, %s774
      // Predicated region
      $region37: #{_lambda_.34} parent=35 // pred_check
        %p776 = pneg %p122
      $region38: #{_lambda_.34} parent=35 // pred_check_branch
        %778 = sbr.rel (%p776) target = $region40
      $region39: #{_lambda_.34} parent=35 // pred_region
        %s779 = smul.u32 32, %s15
      $region40: #{_lambda_.34} parent=35 // pred_fallthru
        _
    $region36: #{_lambda_.34} parent=5 // pred_fallthru
      _
    %p780 = scmp.le.s32.totalorder 2, %s10
    // Predicated region
    $region41: #{_lambda_.34} parent=5 // pred_check
      %p781 = pneg %p780
    $region42: #{_lambda_.34} parent=5 // pred_check_branch
      %783 = sbr.rel (%p781) target = $region44
    $region43: #{_lambda_.34} parent=5 // pred_region
      %s784 = ssub.s32 %s10, 2
      // Predicated region
      $region45: #{_lambda_.34} parent=43 // pred_check
        %p785 = pneg %p128
      $region46: #{_lambda_.34} parent=43 // pred_check_branch
        %787 = sbr.rel (%p785) target = $region48
      $region47: #{_lambda_.34} parent=43 // pred_region
        %s788 = smul.u32 32, %s16
        %p789 = scmp.lt.s32.totalorder %s788, 63
        %s790 = scalar_select %p789, %s788, 63
        %s791 = smul.addr %s790, 4
        %s792 = scalar_lea.vmem %s4, %s791
      $region48: #{_lambda_.34} parent=43 // pred_fallthru
        _
    $region44: #{_lambda_.34} parent=5 // pred_fallthru
      _
  $region6: #{_lambda_.34} parent=0 // loop_footer
    %s14 = sadd.s32 1, %s10
  $region7: #{_lambda_.34} parent=0 // loop_footer_branch
    %9 = sbr.rel target = $region3
  $region8: #{_lambda_.34} parent=0 // loop_exit
    _

// kernel: _lambda_.37
$region0: #{_lambda_.37}
  #allocation0 [shape = 'u32[]', space=smem, size = 0x4, offset = 0x4, fixed_abs, tag = 'smem constant byte address 0x4 - core index']
  #allocation1 [shape = 'u32[144,128]{1,0:T(1,128)}', space=vmem, size = 0x12000, scoped, tag = 'internal scratch']
  %s0 = inlined_call_operand.vmem [shape: bf16[9,2,8,128], index: 0, kind: input, shape index: {}]
  %s1 = inlined_call_operand.vmem [shape: f32[1,8,128], index: 1, kind: input, shape index: {}]
  %s2 = inlined_call_operand.vmem [shape: f32[1,1,128], index: 2, kind: input, shape index: {}]
  %s3 = inlined_call_operand.vmem [shape: bf16[2,8,128], index: 3, kind: output, shape index: {}]
  %s4 = sld [smem:[#allocation0]]
  $region22: #{_lambda_.37} parent=0
    _
  %s6 = ssub.s32 1, %s4
  %s7 = scalar_select 0, %s6, %s4
  // Predicated region
  $region2: #{_lambda_.37} parent=0 // pred_check
    _
  $region3: #{_lambda_.37} parent=0 // pred_check_branch
    %9 = sbr.rel (0) target = $region5
  $region4: #{_lambda_.37} parent=0 // pred_region
    _
  $region5: #{_lambda_.37} parent=0 // pred_fallthru
    _
  // Predicated region
  $region6: #{_lambda_.37} parent=0 // pred_check
    _
  $region7: #{_lambda_.37} parent=0 // pred_check_branch
    %11 = sbr.rel (0) target = $region9
  $region8: #{_lambda_.37} parent=0 // pred_region
    _
  $region9: #{_lambda_.37} parent=0 // pred_fallthru
    _
  // Predicated region
  $region10: #{_lambda_.37} parent=0 // pred_check
    _
  $region11: #{_lambda_.37} parent=0 // pred_check_branch
    %13 = sbr.rel (0) target = $region13
  $region12: #{_lambda_.37} parent=0 // pred_region
    _
  $region13: #{_lambda_.37} parent=0 // pred_fallthru
    _
  %v14 = vld [vmem:[%s0] sm:$0xf]
  %v15 = vld [vmem:[%s0 + $0x4] sm:$0xf]
  %v16 = vunpack.c.l.bf16 %v14
  %v17 = vunpack.c.l.bf16 %v15
  %s18 = scalar_lea.vmem %s0, 8
  %v19 = vld [vmem:[%s18] sm:$0xf]
  %v20 = vld [vmem:[%s18 + $0x4] sm:$0xf]
  %v21 = vunpack.c.l.bf16 %v19
  %v22 = vunpack.c.l.bf16 %v20
  %v23 = vadd.f32 %v16, %v21
  %v24 = vadd.f32 %v17, %v22
  %s25 = scalar_lea.vmem %s0, 16
  %v26 = vld [vmem:[%s25] sm:$0xf]
  %v27 = vld [vmem:[%s25 + $0x4] sm:$0xf]
  %v28 = vunpack.c.l.bf16 %v26
  %v29 = vunpack.c.l.bf16 %v27
  %v30 = vadd.f32 %v23, %v28
  %v31 = vadd.f32 %v24, %v29
  %s32 = scalar_lea.vmem %s0, 24
  %v33 = vld [vmem:[%s32] sm:$0xf]
  %v34 = vld [vmem:[%s32 + $0x4] sm:$0xf]
  %v35 = vunpack.c.l.bf16 %v33
  %v36 = vunpack.c.l.bf16 %v34
  %v37 = vadd.f32 %v30, %v35
  %v38 = vadd.f32 %v31, %v36
  %s39 = scalar_lea.vmem %s0, 32
  %v40 = vld [vmem:[%s39] sm:$0xf]
  %v41 = vld [vmem:[%s39 + $0x4] sm:$0xf]
  %v42 = vunpack.c.l.bf16 %v40
  %v43 = vunpack.c.l.bf16 %v41
  %v44 = vadd.f32 %v37, %v42
  %v45 = vadd.f32 %v38, %v43
  %s46 = scalar_lea.vmem %s0, 40
  %v47 = vld [vmem:[%s46] sm:$0xf]
  %v48 = vld [vmem:[%s46 + $0x4] sm:$0xf]
  %v49 = vunpack.c.l.bf16 %v47
  %v50 = vunpack.c.l.bf16 %v48
  %v51 = vadd.f32 %v44, %v49
  %v52 = vadd.f32 %v45, %v50
  %s53 = scalar_lea.vmem %s0, 48
  %v54 = vld [vmem:[%s53] sm:$0xf]
  %v55 = vld [vmem:[%s53 + $0x4] sm:$0xf]
  %v56 = vunpack.c.l.bf16 %v54
  %v57 = vunpack.c.l.bf16 %v55
  %v58 = vadd.f32 %v51, %v56
  %v59 = vadd.f32 %v52, %v57
  %s60 = scalar_lea.vmem %s0, 56
  %v61 = vld [vmem:[%s60] sm:$0xf]
  %v62 = vld [vmem:[%s60 + $0x4] sm:$0xf]
  %v63 = vunpack.c.l.bf16 %v61
  %v64 = vunpack.c.l.bf16 %v62
  %v65 = vadd.f32 %v58, %v63
  %v66 = vadd.f32 %v59, %v64
  %s67 = scalar_lea.vmem %s0, 64
  %v68 = vld [vmem:[%s67] sm:$0xf]
  %v69 = vld [vmem:[%s67 + $0x4] sm:$0xf]
  %v70 = vunpack.c.l.bf16 %v68
  %v71 = vunpack.c.l.bf16 %v69
  %v72 = vadd.f32 %v65, %v70
  %v73 = vadd.f32 %v66, %v71
  %v74 = vld [vmem:[%s1] sm:$0xff]
  %v75 = vmul.f32 %v72, %v74
  %v76 = vmul.f32 %v73, %v74
  %v77 = vld [vmem:[%s2] sm:$0x1]
  %v79 = vlaneseq
  %v80 = vshrl.u32 %v79, 7
  %v81 = vsub.s32 0, %v80
  %v82 = vrot.slane %v77, %v81
  %v84 = vadd.f32 %v75, %v82
  %v85 = vadd.f32 %v76, %v82
  %v86 = vpack.c.bf16 %v84, %v84
  %v87 = vpack.c.bf16 %v85, %v85
  %88 = vst [vmem:[%s3] sm:$0xf] %v86
  %89 = vst [vmem:[%s3 + $0x4] sm:$0xf] %v87
  // Predicated region
  $region14: #{_lambda_.37} parent=0 // pred_check
    _
  $region15: #{_lambda_.37} parent=0 // pred_check_branch
    %91 = sbr.rel (0) target = $region17
  $region16: #{_lambda_.37} parent=0 // pred_region
    _
  $region17: #{_lambda_.37} parent=0 // pred_fallthru
    _
  // Predicated region
  $region18: #{_lambda_.37} parent=0 // pred_check
    _
  $region19: #{_lambda_.37} parent=0 // pred_check_branch
    %93 = sbr.rel (0) target = $region21
  $region20: #{_lambda_.37} parent=0 // pred_region
    _
  $region21: #{_lambda_.37} parent=0 // pred_fallthru
    _

// kernel: _lambda_.38
$region0: #{_lambda_.38}
  #allocation0 [shape = 'u32[]', space=smem, size = 0x4, offset = 0x4, fixed_abs, tag = 'smem constant byte address 0x4 - core index']
  #allocation1 [shape = 'u32[144,128]{1,0:T(1,128)}', space=vmem, size = 0x12000, scoped, tag = 'internal scratch']
  %s0 = inlined_call_operand.vmem [shape: bf16[128,144], index: 0, kind: input, shape index: {}]
  %s1 = inlined_call_operand.vmem [shape: bf16[144,16], index: 1, kind: input, shape index: {}]
  %s2 = inlined_call_operand.vmem [shape: f32[1,16], index: 2, kind: input, shape index: {}]
  %s3 = inlined_call_operand.vmem [shape: f32[1,16], index: 3, kind: input, shape index: {}]
  %s4 = inlined_call_operand.vmem [shape: bf16[128,16], index: 4, kind: output, shape index: {}]
  %s5 = sld [smem:[#allocation0]]
  $region26: #{_lambda_.38} parent=0
    _
  %s7 = ssub.s32 1, %s5
  %s8 = scalar_select 0, %s7, %s5
  // Predicated region
  $region2: #{_lambda_.38} parent=0 // pred_check
    _
  $region3: #{_lambda_.38} parent=0 // pred_check_branch
    %10 = sbr.rel (0) target = $region5
  $region4: #{_lambda_.38} parent=0 // pred_region
    _
  $region5: #{_lambda_.38} parent=0 // pred_fallthru
    _
  // Predicated region
  $region6: #{_lambda_.38} parent=0 // pred_check
    _
  $region7: #{_lambda_.38} parent=0 // pred_check_branch
    %12 = sbr.rel (0) target = $region9
  $region8: #{_lambda_.38} parent=0 // pred_region
    _
  $region9: #{_lambda_.38} parent=0 // pred_fallthru
    _
  // Predicated region
  $region10: #{_lambda_.38} parent=0 // pred_check
    _
  $region11: #{_lambda_.38} parent=0 // pred_check_branch
    %14 = sbr.rel (0) target = $region13
  $region12: #{_lambda_.38} parent=0 // pred_region
    _
  $region13: #{_lambda_.38} parent=0 // pred_fallthru
    _
  // Predicated region
  $region14: #{_lambda_.38} parent=0 // pred_check
    _
  $region15: #{_lambda_.38} parent=0 // pred_check_branch
    %16 = sbr.rel (0) target = $region17
  $region16: #{_lambda_.38} parent=0 // pred_region
    _
  $region17: #{_lambda_.38} parent=0 // pred_fallthru
    _
  %v18 = vld [vmem:[%s0] sm:$0xff]
  %v19 = vld [vmem:[%s0 + $0x8] sm:$0xff]
  %v20 = vld [vmem:[%s0 + $0x10] sm:$0xff]
  %v21 = vld [vmem:[%s0 + $0x18] sm:$0xff]
  %v22 = vld [vmem:[%s0 + $0x20] sm:$0xff]
  %v23 = vld [vmem:[%s0 + $0x28] sm:$0xff]
  %v24 = vld [vmem:[%s0 + $0x30] sm:$0xff]
  %v25 = vld [vmem:[%s0 + $0x38] sm:$0xff]
  %v26 = vld [vmem:[%s0 + $0x40] sm:$0xff]
  %v27 = vld [vmem:[%s0 + $0x48] sm:$0xff]
  %v28 = vld [vmem:[%s0 + $0x50] sm:$0xff]
  %v29 = vld [vmem:[%s0 + $0x58] sm:$0xff]
  %v30 = vld [vmem:[%s0 + $0x60] sm:$0xff]
  %v31 = vld [vmem:[%s0 + $0x68] sm:$0xff]
  %v32 = vld [vmem:[%s0 + $0x70] sm:$0xff]
  %v33 = vld [vmem:[%s0 + $0x78] sm:$0xff]
  %v34 = vunpack.c.l.bf16 %v18
  %v35 = vunpack.c.h.bf16 %v18
  %v36 = vunpack.c.l.bf16 %v19
  %v37 = vunpack.c.h.bf16 %v19
  %v38 = vunpack.c.l.bf16 %v20
  %v39 = vunpack.c.h.bf16 %v20
  %v40 = vunpack.c.l.bf16 %v21
  %v41 = vunpack.c.h.bf16 %v21
  %v42 = vunpack.c.l.bf16 %v22
  %v43 = vunpack.c.h.bf16 %v22
  %v44 = vunpack.c.l.bf16 %v23
  %v45 = vunpack.c.h.bf16 %v23
  %v46 = vunpack.c.l.bf16 %v24
  %v47 = vunpack.c.h.bf16 %v24
  %v48 = vunpack.c.l.bf16 %v25
  %v49 = vunpack.c.h.bf16 %v25
  %v50 = vunpack.c.l.bf16 %v26
  %v51 = vunpack.c.h.bf16 %v26
  %v52 = vunpack.c.l.bf16 %v27
  %v53 = vunpack.c.h.bf16 %v27
  %v54 = vunpack.c.l.bf16 %v28
  %v55 = vunpack.c.h.bf16 %v28
  %v56 = vunpack.c.l.bf16 %v29
  %v57 = vunpack.c.h.bf16 %v29
  %v58 = vunpack.c.l.bf16 %v30
  %v59 = vunpack.c.h.bf16 %v30
  %v60 = vunpack.c.l.bf16 %v31
  %v61 = vunpack.c.h.bf16 %v31
  %v62 = vunpack.c.l.bf16 %v32
  %v63 = vunpack.c.h.bf16 %v32
  %v64 = vunpack.c.l.bf16 %v33
  %v65 = vunpack.c.h.bf16 %v33
  %v66 = vmax.f32 %v34, 0.0
  %v67 = vmax.f32 %v35, 0.0
  %v68 = vmax.f32 %v36, 0.0
  %v69 = vmax.f32 %v37, 0.0
  %v70 = vmax.f32 %v38, 0.0
  %v71 = vmax.f32 %v39, 0.0
  %v72 = vmax.f32 %v40, 0.0
  %v73 = vmax.f32 %v41, 0.0
  %v74 = vmax.f32 %v42, 0.0
  %v75 = vmax.f32 %v43, 0.0
  %v76 = vmax.f32 %v44, 0.0
  %v77 = vmax.f32 %v45, 0.0
  %v78 = vmax.f32 %v46, 0.0
  %v79 = vmax.f32 %v47, 0.0
  %v80 = vmax.f32 %v48, 0.0
  %v81 = vmax.f32 %v49, 0.0
  %v82 = vmax.f32 %v50, 0.0
  %v83 = vmax.f32 %v51, 0.0
  %v84 = vmax.f32 %v52, 0.0
  %v85 = vmax.f32 %v53, 0.0
  %v86 = vmax.f32 %v54, 0.0
  %v87 = vmax.f32 %v55, 0.0
  %v88 = vmax.f32 %v56, 0.0
  %v89 = vmax.f32 %v57, 0.0
  %v90 = vmax.f32 %v58, 0.0
  %v91 = vmax.f32 %v59, 0.0
  %v92 = vmax.f32 %v60, 0.0
  %v93 = vmax.f32 %v61, 0.0
  %v94 = vmax.f32 %v62, 0.0
  %v95 = vmax.f32 %v63, 0.0
  %v96 = vmax.f32 %v64, 0.0
  %v97 = vmax.f32 %v65, 0.0
  %v98 = vpack.c.bf16 %v68, %v66
  %v99 = vpack.c.bf16 %v69, %v67
  %v100 = vpack.c.bf16 %v72, %v70
  %v101 = vpack.c.bf16 %v73, %v71
  %v102 = vpack.c.bf16 %v76, %v74
  %v103 = vpack.c.bf16 %v77, %v75
  %v104 = vpack.c.bf16 %v80, %v78
  %v105 = vpack.c.bf16 %v81, %v79
  %v106 = vpack.c.bf16 %v84, %v82
  %v107 = vpack.c.bf16 %v85, %v83
  %v108 = vpack.c.bf16 %v88, %v86
  %v109 = vpack.c.bf16 %v89, %v87
  %v110 = vpack.c.bf16 %v92, %v90
  %v111 = vpack.c.bf16 %v93, %v91
  %v112 = vpack.c.bf16 %v96, %v94
  %v113 = vpack.c.bf16 %v97, %v95
  %v114 = vld [vmem:[%s1] sm:$0xf]
  %v115 = vld [vmem:[%s1 + $0x4] sm:$0xf]
  %v116 = vld [vmem:[%s1 + $0x8] sm:$0xf]
  %v117 = vld [vmem:[%s1 + $0xc] sm:$0xf]
  %v118 = vld [vmem:[%s1 + $0x10] sm:$0xf]
  %v119 = vld [vmem:[%s1 + $0x14] sm:$0xf]
  %v120 = vld [vmem:[%s1 + $0x18] sm:$0xf]
  %v121 = vld [vmem:[%s1 + $0x1c] sm:$0xf]
  %v122 = vld [vmem:[%s1 + $0x20] sm:$0xf]
  %v123 = vld [vmem:[%s1 + $0x24] sm:$0xf]
  %v124 = vld [vmem:[%s1 + $0x28] sm:$0xf]
  %v125 = vld [vmem:[%s1 + $0x2c] sm:$0xf]
  %v126 = vld [vmem:[%s1 + $0x30] sm:$0xf]
  %v127 = vld [vmem:[%s1 + $0x34] sm:$0xf]
  %v128 = vld [vmem:[%s1 + $0x38] sm:$0xf]
  %v129 = vld [vmem:[%s1 + $0x3c] sm:$0xf]
  %v130 = vld [vmem:[%s1 + $0x40] sm:$0xf]
  %v131 = vld [vmem:[%s1 + $0x44] sm:$0xf]
  %v150 = vunpack.c.l.b16 %v114
  %v151 = vunpack.c.l.b16 %v115
  %v152 = vunpack.c.l.b16 %v116
  %v153 = vunpack.c.l.b16 %v117
  %v154 = vunpack.c.l.b16 %v118
  %v155 = vunpack.c.l.b16 %v119
  %v156 = vunpack.c.l.b16 %v120
  %v157 = vunpack.c.l.b16 %v121
  %v158 = vunpack.c.l.b16 %v122
  %v159 = vunpack.c.l.b16 %v123
  %v160 = vunpack.c.l.b16 %v124
  %v161 = vunpack.c.l.b16 %v125
  %v162 = vunpack.c.l.b16 %v126
  %v163 = vunpack.c.l.b16 %v127
  %v164 = vunpack.c.l.b16 %v128
  %v165 = vunpack.c.l.b16 %v129
  %v166 = vunpack.c.l.b16 %v130
  %v167 = vunpack.c.l.b16 %v131
  %v168 = vpack.c.b16 %v151, %v150
  %v169 = vpack.c.b16 %v153, %v152
  %v170 = vpack.c.b16 %v155, %v154
  %v171 = vpack.c.b16 %v157, %v156
  %v172 = vpack.c.b16 %v159, %v158
  %v173 = vpack.c.b16 %v161, %v160
  %v174 = vpack.c.b16 %v163, %v162
  %v175 = vpack.c.b16 %v165, %v164
  %v176 = vpack.c.b16 %v167, %v166
  %vm186 = vcmask 130048
  %v188 = vsel %vm186, %v99, 0
  %v191 = vsel %vm186, %v101, 0
  %v194 = vsel %vm186, %v103, 0
  %v197 = vsel %vm186, %v105, 0
  %v200 = vsel %vm186, %v107, 0
  %v203 = vsel %vm186, %v109, 0
  %v206 = vsel %vm186, %v111, 0
  %v209 = vsel %vm186, %v113, 0
  %211 = vmatprep.subr.bf16.mxu0 0
  %212 = vmatpush1.bf16.msra.mxu0 %v175
  %213 = vmatprep.subr.bf16.mxu0 0
  %214 = vmatpush1.bf16.msra.mxu0 %v174
  %215 = vmatprep.subr.bf16.mxu0 0
  %216 = vmatpush1.bf16.msra.mxu0 %v173
  %217 = vmatprep.subr.bf16.mxu0 0
  %218 = vmatpush1.bf16.msra.mxu0 %v172
  %219 = vmatprep.subr.bf16.mxu0 0
  %220 = vmatpush1.bf16.msra.mxu0 %v171
  %221 = vmatprep.subr.bf16.mxu0 0
  %222 = vmatpush1.bf16.msra.mxu0 %v170
  %223 = vmatprep.subr.bf16.mxu0 0
  %224 = vmatpush1.bf16.msra.mxu0 %v169
  %225 = vmatprep.subr.bf16.mxu0 0
  %226 = vmatpush1.bf16.msra.mxu0 %v168
  %227 = vmatprep.subr.bf16.mxu0 0
  %228 = vmatpush2.bf16.msra.mxu0 0
  %229 = vmatprep.subr.bf16.mxu0 0
  %230 = vmatpush2.bf16.msra.mxu0 0
  %231 = vmatprep.subr.bf16.mxu0 0
  %232 = vmatpush2.bf16.msra.mxu0 0
  %233 = vmatprep.subr.bf16.mxu0 0
  %234 = vmatpush2.bf16.msra.mxu0 0
  %235 = vmatprep.subr.bf16.mxu0 0
  %236 = vmatpush2.bf16.msra.mxu0 0
  %237 = vmatprep.subr.bf16.mxu0 0
  %238 = vmatpush2.bf16.msra.mxu0 0
  %239 = vmatprep.subr.bf16.mxu0 0
  %240 = vmatpush2.bf16.msra.mxu0 0
  %241 = vmatprep.subr.bf16.mxu0 0
  %242 = vmatpush2.bf16.msra.mxu0 %v176
  %243 = vmatprep.mubr.bf16.mxu0 %v188
  %244 = vmatmul.mubr.bf16.gmra.mxu0 %v98
  %v245 = vpop.f32.mrf.mxu0
  %v246 = vadd.f32 0.0, %v245
  %v247 = vpop.f32.mrf.mxu0
  %v248 = vpop.f32.mrf.mxu0
  %v249 = vadd.f32 0.0, %v248
  %v250 = vpop.f32.mrf.mxu0
  %251 = vmatprep.mubr.bf16.mxu0 %v191
  %252 = vmatmul.mubr.bf16.gmra.mxu0 %v100
  %v253 = vpop.f32.mrf.mxu0
  %v254 = vadd.f32 0.0, %v253
  %v255 = vpop.f32.mrf.mxu0
  %v256 = vpop.f32.mrf.mxu0
  %v257 = vadd.f32 0.0, %v256
  %v258 = vpop.f32.mrf.mxu0
  %259 = vmatprep.mubr.bf16.mxu0 %v194
  %260 = vmatmul.mubr.bf16.gmra.mxu0 %v102
  %v261 = vpop.f32.mrf.mxu0
  %v262 = vadd.f32 0.0, %v261
  %v263 = vpop.f32.mrf.mxu0
  %v264 = vpop.f32.mrf.mxu0
  %v265 = vadd.f32 0.0, %v264
  %v266 = vpop.f32.mrf.mxu0
  %267 = vmatprep.mubr.bf16.mxu0 %v197
  %268 = vmatmul.mubr.bf16.gmra.mxu0 %v104
  %v269 = vpop.f32.mrf.mxu0
  %v270 = vadd.f32 0.0, %v269
  %v271 = vpop.f32.mrf.mxu0
  %v272 = vpop.f32.mrf.mxu0
  %v273 = vadd.f32 0.0, %v272
  %v274 = vpop.f32.mrf.mxu0
  %275 = vmatprep.mubr.bf16.mxu0 %v200
  %276 = vmatmul.mubr.bf16.gmra.mxu0 %v106
  %v277 = vpop.f32.mrf.mxu0
  %v278 = vadd.f32 0.0, %v277
  %v279 = vpop.f32.mrf.mxu0
  %v280 = vpop.f32.mrf.mxu0
  %v281 = vadd.f32 0.0, %v280
  %v282 = vpop.f32.mrf.mxu0
  %283 = vmatprep.mubr.bf16.mxu0 %v203
  %284 = vmatmul.mubr.bf16.gmra.mxu0 %v108
  %v285 = vpop.f32.mrf.mxu0
  %v286 = vadd.f32 0.0, %v285
  %v287 = vpop.f32.mrf.mxu0
  %v288 = vpop.f32.mrf.mxu0
  %v289 = vadd.f32 0.0, %v288
  %v290 = vpop.f32.mrf.mxu0
  %291 = vmatprep.mubr.bf16.mxu0 %v206
  %292 = vmatmul.mubr.bf16.gmra.mxu0 %v110
  %v293 = vpop.f32.mrf.mxu0
  %v294 = vadd.f32 0.0, %v293
  %v295 = vpop.f32.mrf.mxu0
  %v296 = vpop.f32.mrf.mxu0
  %v297 = vadd.f32 0.0, %v296
  %v298 = vpop.f32.mrf.mxu0
  %299 = vmatprep.mubr.bf16.mxu0 %v209
  %300 = vmatmul.mubr.bf16.gmra.mxu0 %v112
  %v301 = vpop.f32.mrf.mxu0
  %v302 = vadd.f32 0.0, %v301
  %v303 = vpop.f32.mrf.mxu0
  %v304 = vpop.f32.mrf.mxu0
  %v305 = vadd.f32 0.0, %v304
  %v306 = vpop.f32.mrf.mxu0
  %307 = vdwg.mxu0
  %v308 = vld [vmem:[%s2] sm:$0x1]
  %v310 = vlaneseq
  %v311 = vshrl.u32 %v310, 7
  %v312 = vsub.s32 0, %v311
  %v313 = vrot.slane %v308, %v312
  %v315 = vmul.f32 %v246, %v313
  %v316 = vmul.f32 %v249, %v313
  %v317 = vmul.f32 %v254, %v313
  %v318 = vmul.f32 %v257, %v313
  %v319 = vmul.f32 %v262, %v313
  %v320 = vmul.f32 %v265, %v313
  %v321 = vmul.f32 %v270, %v313
  %v322 = vmul.f32 %v273, %v313
  %v323 = vmul.f32 %v278, %v313
  %v324 = vmul.f32 %v281, %v313
  %v325 = vmul.f32 %v286, %v313
  %v326 = vmul.f32 %v289, %v313
  %v327 = vmul.f32 %v294, %v313
  %v328 = vmul.f32 %v297, %v313
  %v329 = vmul.f32 %v302, %v313
  %v330 = vmul.f32 %v305, %v313
  %v331 = vld [vmem:[%s3] sm:$0x1]
  %v333 = vlaneseq
  %v334 = vshrl.u32 %v333, 7
  %v335 = vsub.s32 0, %v334
  %v336 = vrot.slane %v331, %v335
  %v338 = vadd.f32 %v315, %v336
  %v339 = vadd.f32 %v316, %v336
  %v340 = vadd.f32 %v317, %v336
  %v341 = vadd.f32 %v318, %v336
  %v342 = vadd.f32 %v319, %v336
  %v343 = vadd.f32 %v320, %v336
  %v344 = vadd.f32 %v321, %v336
  %v345 = vadd.f32 %v322, %v336
  %v346 = vadd.f32 %v323, %v336
  %v347 = vadd.f32 %v324, %v336
  %v348 = vadd.f32 %v325, %v336
  %v349 = vadd.f32 %v326, %v336
  %v350 = vadd.f32 %v327, %v336
  %v351 = vadd.f32 %v328, %v336
  %v352 = vadd.f32 %v329, %v336
  %v353 = vadd.f32 %v330, %v336
  %v354 = vpack.c.bf16 %v339, %v338
  %v355 = vpack.c.bf16 %v341, %v340
  %v356 = vpack.c.bf16 %v343, %v342
  %v357 = vpack.c.bf16 %v345, %v344
  %v358 = vpack.c.bf16 %v347, %v346
  %v359 = vpack.c.bf16 %v349, %v348
  %v360 = vpack.c.bf16 %v351, %v350
  %v361 = vpack.c.bf16 %v353, %v352
  %v370 = vunpack.c.l.b16 %v354
  %v371 = vunpack.c.h.b16 %v354
  %v372 = vunpack.c.l.b16 %v355
  %v373 = vunpack.c.h.b16 %v355
  %v374 = vunpack.c.l.b16 %v356
  %v375 = vunpack.c.h.b16 %v356
  %v376 = vunpack.c.l.b16 %v357
  %v377 = vunpack.c.h.b16 %v357
  %v378 = vunpack.c.l.b16 %v358
  %v379 = vunpack.c.h.b16 %v358
  %v380 = vunpack.c.l.b16 %v359
  %v381 = vunpack.c.h.b16 %v359
  %v382 = vunpack.c.l.b16 %v360
  %v383 = vunpack.c.h.b16 %v360
  %v384 = vunpack.c.l.b16 %v361
  %v385 = vunpack.c.h.b16 %v361
  %v386 = vpack.c.b16 %v370, %v370
  %v387 = vpack.c.b16 %v371, %v371
  %v388 = vpack.c.b16 %v372, %v372
  %v389 = vpack.c.b16 %v373, %v373
  %v390 = vpack.c.b16 %v374, %v374
  %v391 = vpack.c.b16 %v375, %v375
  %v392 = vpack.c.b16 %v376, %v376
  %v393 = vpack.c.b16 %v377, %v377
  %v394 = vpack.c.b16 %v378, %v378
  %v395 = vpack.c.b16 %v379, %v379
  %v396 = vpack.c.b16 %v380, %v380
  %v397 = vpack.c.b16 %v381, %v381
  %v398 = vpack.c.b16 %v382, %v382
  %v399 = vpack.c.b16 %v383, %v383
  %v400 = vpack.c.b16 %v384, %v384
  %v401 = vpack.c.b16 %v385, %v385
  %vm418 = vcmask 125952
  %419 = vst.msk [vmem:[%s4] sm:$0xf] %vm418, %v386
  %420 = vst.msk [vmem:[%s4 + $0x4] sm:$0xf] %vm418, %v387
  %421 = vst.msk [vmem:[%s4 + $0x8] sm:$0xf] %vm418, %v388
  %422 = vst.msk [vmem:[%s4 + $0xc] sm:$0xf] %vm418, %v389
  %423 = vst.msk [vmem:[%s4 + $0x10] sm:$0xf] %vm418, %v390
  %424 = vst.msk [vmem:[%s4 + $0x14] sm:$0xf] %vm418, %v391
  %425 = vst.msk [vmem:[%s4 + $0x18] sm:$0xf] %vm418, %v392
  %426 = vst.msk [vmem:[%s4 + $0x1c] sm:$0xf] %vm418, %v393
  %427 = vst.msk [vmem:[%s4 + $0x20] sm:$0xf] %vm418, %v394
  %428 = vst.msk [vmem:[%s4 + $0x24] sm:$0xf] %vm418, %v395
  %429 = vst.msk [vmem:[%s4 + $0x28] sm:$0xf] %vm418, %v396
  %430 = vst.msk [vmem:[%s4 + $0x2c] sm:$0xf] %vm418, %v397
  %431 = vst.msk [vmem:[%s4 + $0x30] sm:$0xf] %vm418, %v398
  %432 = vst.msk [vmem:[%s4 + $0x34] sm:$0xf] %vm418, %v399
  %433 = vst.msk [vmem:[%s4 + $0x38] sm:$0xf] %vm418, %v400
  %434 = vst.msk [vmem:[%s4 + $0x3c] sm:$0xf] %vm418, %v401
  // Predicated region
  $region18: #{_lambda_.38} parent=0 // pred_check
    _
  $region19: #{_lambda_.38} parent=0 // pred_check_branch
    %436 = sbr.rel (0) target = $region21
  $region20: #{_lambda_.38} parent=0 // pred_region
    _
  $region21: #{_lambda_.38} parent=0 // pred_fallthru
    _
  // Predicated region
  $region22: #{_lambda_.38} parent=0 // pred_check
    _
  $region23: #{_lambda_.38} parent=0 // pred_check_branch
    %438 = sbr.rel (0) target = $region25
  $region24: #{_lambda_.38} parent=0 // pred_region
    _
  $region25: #{_lambda_.38} parent=0 // pred_fallthru
    _

// kernel: _lambda_.44
$region0: #{_lambda_.44}
  #allocation0 [shape = 'u32[]', space=smem, size = 0x4, offset = 0x4, fixed_abs, tag = 'smem constant byte address 0x4 - core index']
  #allocation1 [shape = 'u32[144,128]{1,0:T(1,128)}', space=vmem, size = 0x12000, scoped, tag = 'internal scratch']
  %s0 = inlined_call_operand.vmem [shape: bf16[128,64], index: 0, kind: input, shape index: {}]
  %s1 = inlined_call_operand.vmem [shape: bf16[64,32], index: 1, kind: input, shape index: {}]
  %s2 = inlined_call_operand.vmem [shape: f32[1,32], index: 2, kind: input, shape index: {}]
  %s3 = inlined_call_operand.vmem [shape: f32[1,32], index: 3, kind: input, shape index: {}]
  %s4 = inlined_call_operand.vmem [shape: bf16[128,32], index: 4, kind: output, shape index: {}]
  %s5 = sld [smem:[#allocation0]]
  $region26: #{_lambda_.44} parent=0
    _
  %s7 = ssub.s32 1, %s5
  %s8 = scalar_select 0, %s7, %s5
  // Predicated region
  $region2: #{_lambda_.44} parent=0 // pred_check
    _
  $region3: #{_lambda_.44} parent=0 // pred_check_branch
    %10 = sbr.rel (0) target = $region5
  $region4: #{_lambda_.44} parent=0 // pred_region
    _
  $region5: #{_lambda_.44} parent=0 // pred_fallthru
    _
  // Predicated region
  $region6: #{_lambda_.44} parent=0 // pred_check
    _
  $region7: #{_lambda_.44} parent=0 // pred_check_branch
    %12 = sbr.rel (0) target = $region9
  $region8: #{_lambda_.44} parent=0 // pred_region
    _
  $region9: #{_lambda_.44} parent=0 // pred_fallthru
    _
  // Predicated region
  $region10: #{_lambda_.44} parent=0 // pred_check
    _
  $region11: #{_lambda_.44} parent=0 // pred_check_branch
    %14 = sbr.rel (0) target = $region13
  $region12: #{_lambda_.44} parent=0 // pred_region
    _
  $region13: #{_lambda_.44} parent=0 // pred_fallthru
    _
  // Predicated region
  $region14: #{_lambda_.44} parent=0 // pred_check
    _
  $region15: #{_lambda_.44} parent=0 // pred_check_branch
    %16 = sbr.rel (0) target = $region17
  $region16: #{_lambda_.44} parent=0 // pred_region
    _
  $region17: #{_lambda_.44} parent=0 // pred_fallthru
    _
  %v18 = vld [vmem:[%s0] sm:$0xf]
  %v19 = vld [vmem:[%s0 + $0x4] sm:$0xf]
  %v20 = vld [vmem:[%s0 + $0x8] sm:$0xf]
  %v21 = vld [vmem:[%s0 + $0xc] sm:$0xf]
  %v22 = vld [vmem:[%s0 + $0x10] sm:$0xf]
  %v23 = vld [vmem:[%s0 + $0x14] sm:$0xf]
  %v24 = vld [vmem:[%s0 + $0x18] sm:$0xf]
  %v25 = vld [vmem:[%s0 + $0x1c] sm:$0xf]
  %v26 = vld [vmem:[%s0 + $0x20] sm:$0xf]
  %v27 = vld [vmem:[%s0 + $0x24] sm:$0xf]
  %v28 = vld [vmem:[%s0 + $0x28] sm:$0xf]
  %v29 = vld [vmem:[%s0 + $0x2c] sm:$0xf]
  %v30 = vld [vmem:[%s0 + $0x30] sm:$0xf]
  %v31 = vld [vmem:[%s0 + $0x34] sm:$0xf]
  %v32 = vld [vmem:[%s0 + $0x38] sm:$0xf]
  %v33 = vld [vmem:[%s0 + $0x3c] sm:$0xf]
  %v34 = vunpack.c.l.bf16 %v18
  %v35 = vunpack.c.l.bf16 %v19
  %v36 = vunpack.c.l.bf16 %v20
  %v37 = vunpack.c.l.bf16 %v21
  %v38 = vunpack.c.l.bf16 %v22
  %v39 = vunpack.c.l.bf16 %v23
  %v40 = vunpack.c.l.bf16 %v24
  %v41 = vunpack.c.l.bf16 %v25
  %v42 = vunpack.c.l.bf16 %v26
  %v43 = vunpack.c.l.bf16 %v27
  %v44 = vunpack.c.l.bf16 %v28
  %v45 = vunpack.c.l.bf16 %v29
  %v46 = vunpack.c.l.bf16 %v30
  %v47 = vunpack.c.l.bf16 %v31
  %v48 = vunpack.c.l.bf16 %v32
  %v49 = vunpack.c.l.bf16 %v33
  %v50 = vmax.f32 %v34, 0.0
  %v51 = vmax.f32 %v35, 0.0
  %v52 = vmax.f32 %v36, 0.0
  %v53 = vmax.f32 %v37, 0.0
  %v54 = vmax.f32 %v38, 0.0
  %v55 = vmax.f32 %v39, 0.0
  %v56 = vmax.f32 %v40, 0.0
  %v57 = vmax.f32 %v41, 0.0
  %v58 = vmax.f32 %v42, 0.0
  %v59 = vmax.f32 %v43, 0.0
  %v60 = vmax.f32 %v44, 0.0
  %v61 = vmax.f32 %v45, 0.0
  %v62 = vmax.f32 %v46, 0.0
  %v63 = vmax.f32 %v47, 0.0
  %v64 = vmax.f32 %v48, 0.0
  %v65 = vmax.f32 %v49, 0.0
  %v66 = vpack.c.bf16 %v51, %v50
  %v67 = vpack.c.bf16 %v53, %v52
  %v68 = vpack.c.bf16 %v55, %v54
  %v69 = vpack.c.bf16 %v57, %v56
  %v70 = vpack.c.bf16 %v59, %v58
  %v71 = vpack.c.bf16 %v61, %v60
  %v72 = vpack.c.bf16 %v63, %v62
  %v73 = vpack.c.bf16 %v65, %v64
  %v74 = vld [vmem:[%s1] sm:$0xf]
  %v75 = vld [vmem:[%s1 + $0x4] sm:$0xf]
  %v76 = vld [vmem:[%s1 + $0x8] sm:$0xf]
  %v77 = vld [vmem:[%s1 + $0xc] sm:$0xf]
  %v78 = vld [vmem:[%s1 + $0x10] sm:$0xf]
  %v79 = vld [vmem:[%s1 + $0x14] sm:$0xf]
  %v80 = vld [vmem:[%s1 + $0x18] sm:$0xf]
  %v81 = vld [vmem:[%s1 + $0x1c] sm:$0xf]
  %v90 = vunpack.c.l.b16 %v74
  %v91 = vunpack.c.l.b16 %v75
  %v92 = vunpack.c.l.b16 %v76
  %v93 = vunpack.c.l.b16 %v77
  %v94 = vunpack.c.l.b16 %v78
  %v95 = vunpack.c.l.b16 %v79
  %v96 = vunpack.c.l.b16 %v80
  %v97 = vunpack.c.l.b16 %v81
  %v98 = vpack.c.b16 %v91, %v90
  %v99 = vpack.c.b16 %v93, %v92
  %v100 = vpack.c.b16 %v95, %v94
  %v101 = vpack.c.b16 %v97, %v96
  %vm106 = vcmask 523264
  %v108 = vsel %vm106, %v66, 0
  %v111 = vsel %vm106, %v67, 0
  %v114 = vsel %vm106, %v68, 0
  %v117 = vsel %vm106, %v69, 0
  %v120 = vsel %vm106, %v70, 0
  %v123 = vsel %vm106, %v71, 0
  %v126 = vsel %vm106, %v72, 0
  %v129 = vsel %vm106, %v73, 0
  %131 = vmatprep.subr.bf16.mxu0 0
  %132 = vmatpush1.bf16.msra.mxu0 0
  %133 = vmatprep.subr.bf16.mxu0 0
  %134 = vmatpush1.bf16.msra.mxu0 0
  %135 = vmatprep.subr.bf16.mxu0 0
  %136 = vmatpush1.bf16.msra.mxu0 0
  %137 = vmatprep.subr.bf16.mxu0 0
  %138 = vmatpush1.bf16.msra.mxu0 0
  %139 = vmatprep.subr.bf16.mxu0 0
  %140 = vmatpush1.bf16.msra.mxu0 %v101
  %141 = vmatprep.subr.bf16.mxu0 0
  %142 = vmatpush1.bf16.msra.mxu0 %v100
  %143 = vmatprep.subr.bf16.mxu0 0
  %144 = vmatpush1.bf16.msra.mxu0 %v99
  %145 = vmatprep.subr.bf16.mxu0 0
  %146 = vmatpush1.bf16.msra.mxu0 %v98
  %147 = vmatprep.subr.bf16.mxu0 0
  %148 = vmatpush2.bf16.msra.mxu0 0
  %149 = vmatprep.subr.bf16.mxu0 0
  %150 = vmatpush2.bf16.msra.mxu0 0
  %151 = vmatprep.subr.bf16.mxu0 0
  %152 = vmatpush2.bf16.msra.mxu0 0
  %153 = vmatprep.subr.bf16.mxu0 0
  %154 = vmatpush2.bf16.msra.mxu0 0
  %155 = vmatprep.subr.bf16.mxu0 0
  %156 = vmatpush2.bf16.msra.mxu0 0
  %157 = vmatprep.subr.bf16.mxu0 0
  %158 = vmatpush2.bf16.msra.mxu0 0
  %159 = vmatprep.subr.bf16.mxu0 0
  %160 = vmatpush2.bf16.msra.mxu0 0
  %161 = vmatprep.subr.bf16.mxu0 0
  %162 = vmatpush2.bf16.msra.mxu0 0
  %163 = vmatprep.mubr.bf16.mxu0 0
  %164 = vmatmul.mubr.bf16.gmra.mxu0 %v108
  %v165 = vpop.f32.mrf.mxu0
  %v166 = vadd.f32 0.0, %v165
  %v167 = vpop.f32.mrf.mxu0
  %v168 = vpop.f32.mrf.mxu0
  %v169 = vadd.f32 0.0, %v168
  %v170 = vpop.f32.mrf.mxu0
  %171 = vmatprep.mubr.bf16.mxu0 0
  %172 = vmatmul.mubr.bf16.gmra.mxu0 %v111
  %v173 = vpop.f32.mrf.mxu0
  %v174 = vadd.f32 0.0, %v173
  %v175 = vpop.f32.mrf.mxu0
  %v176 = vpop.f32.mrf.mxu0
  %v177 = vadd.f32 0.0, %v176
  %v178 = vpop.f32.mrf.mxu0
  %179 = vmatprep.mubr.bf16.mxu0 0
  %180 = vmatmul.mubr.bf16.gmra.mxu0 %v114
  %v181 = vpop.f32.mrf.mxu0
  %v182 = vadd.f32 0.0, %v181
  %v183 = vpop.f32.mrf.mxu0
  %v184 = vpop.f32.mrf.mxu0
  %v185 = vadd.f32 0.0, %v184
  %v186 = vpop.f32.mrf.mxu0
  %187 = vmatprep.mubr.bf16.mxu0 0
  %188 = vmatmul.mubr.bf16.gmra.mxu0 %v117
  %v189 = vpop.f32.mrf.mxu0
  %v190 = vadd.f32 0.0, %v189
  %v191 = vpop.f32.mrf.mxu0
  %v192 = vpop.f32.mrf.mxu0
  %v193 = vadd.f32 0.0, %v192
  %v194 = vpop.f32.mrf.mxu0
  %195 = vmatprep.mubr.bf16.mxu0 0
  %196 = vmatmul.mubr.bf16.gmra.mxu0 %v120
  %v197 = vpop.f32.mrf.mxu0
  %v198 = vadd.f32 0.0, %v197
  %v199 = vpop.f32.mrf.mxu0
  %v200 = vpop.f32.mrf.mxu0
  %v201 = vadd.f32 0.0, %v200
  %v202 = vpop.f32.mrf.mxu0
  %203 = vmatprep.mubr.bf16.mxu0 0
  %204 = vmatmul.mubr.bf16.gmra.mxu0 %v123
  %v205 = vpop.f32.mrf.mxu0
  %v206 = vadd.f32 0.0, %v205
  %v207 = vpop.f32.mrf.mxu0
  %v208 = vpop.f32.mrf.mxu0
  %v209 = vadd.f32 0.0, %v208
  %v210 = vpop.f32.mrf.mxu0
  %211 = vmatprep.mubr.bf16.mxu0 0
  %212 = vmatmul.mubr.bf16.gmra.mxu0 %v126
  %v213 = vpop.f32.mrf.mxu0
  %v214 = vadd.f32 0.0, %v213
  %v215 = vpop.f32.mrf.mxu0
  %v216 = vpop.f32.mrf.mxu0
  %v217 = vadd.f32 0.0, %v216
  %v218 = vpop.f32.mrf.mxu0
  %219 = vmatprep.mubr.bf16.mxu0 0
  %220 = vmatmul.mubr.bf16.gmra.mxu0 %v129
  %v221 = vpop.f32.mrf.mxu0
  %v222 = vadd.f32 0.0, %v221
  %v223 = vpop.f32.mrf.mxu0
  %v224 = vpop.f32.mrf.mxu0
  %v225 = vadd.f32 0.0, %v224
  %v226 = vpop.f32.mrf.mxu0
  %227 = vdwg.mxu0
  %v228 = vld [vmem:[%s2] sm:$0x1]
  %v230 = vlaneseq
  %v231 = vshrl.u32 %v230, 7
  %v232 = vsub.s32 0, %v231
  %v233 = vrot.slane %v228, %v232
  %v235 = vmul.f32 %v166, %v233
  %v236 = vmul.f32 %v169, %v233
  %v237 = vmul.f32 %v174, %v233
  %v238 = vmul.f32 %v177, %v233
  %v239 = vmul.f32 %v182, %v233
  %v240 = vmul.f32 %v185, %v233
  %v241 = vmul.f32 %v190, %v233
  %v242 = vmul.f32 %v193, %v233
  %v243 = vmul.f32 %v198, %v233
  %v244 = vmul.f32 %v201, %v233
  %v245 = vmul.f32 %v206, %v233
  %v246 = vmul.f32 %v209, %v233
  %v247 = vmul.f32 %v214, %v233
  %v248 = vmul.f32 %v217, %v233
  %v249 = vmul.f32 %v222, %v233
  %v250 = vmul.f32 %v225, %v233
  %v251 = vld [vmem:[%s3] sm:$0x1]
  %v253 = vlaneseq
  %v254 = vshrl.u32 %v253, 7
  %v255 = vsub.s32 0, %v254
  %v256 = vrot.slane %v251, %v255
  %v258 = vadd.f32 %v235, %v256
  %v259 = vadd.f32 %v236, %v256
  %v260 = vadd.f32 %v237, %v256
  %v261 = vadd.f32 %v238, %v256
  %v262 = vadd.f32 %v239, %v256
  %v263 = vadd.f32 %v240, %v256
  %v264 = vadd.f32 %v241, %v256
  %v265 = vadd.f32 %v242, %v256
  %v266 = vadd.f32 %v243, %v256
  %v267 = vadd.f32 %v244, %v256
  %v268 = vadd.f32 %v245, %v256
  %v269 = vadd.f32 %v246, %v256
  %v270 = vadd.f32 %v247, %v256
  %v271 = vadd.f32 %v248, %v256
  %v272 = vadd.f32 %v249, %v256
  %v273 = vadd.f32 %v250, %v256
  %v274 = vpack.c.bf16 %v259, %v258
  %v275 = vpack.c.bf16 %v261, %v260
  %v276 = vpack.c.bf16 %v263, %v262
  %v277 = vpack.c.bf16 %v265, %v264
  %v278 = vpack.c.bf16 %v267, %v266
  %v279 = vpack.c.bf16 %v269, %v268
  %v280 = vpack.c.bf16 %v271, %v270
  %v281 = vpack.c.bf16 %v273, %v272
  %v290 = vunpack.c.l.b16 %v274
  %v291 = vunpack.c.h.b16 %v274
  %v292 = vunpack.c.l.b16 %v275
  %v293 = vunpack.c.h.b16 %v275
  %v294 = vunpack.c.l.b16 %v276
  %v295 = vunpack.c.h.b16 %v276
  %v296 = vunpack.c.l.b16 %v277
  %v297 = vunpack.c.h.b16 %v277
  %v298 = vunpack.c.l.b16 %v278
  %v299 = vunpack.c.h.b16 %v278
  %v300 = vunpack.c.l.b16 %v279
  %v301 = vunpack.c.h.b16 %v279
  %v302 = vunpack.c.l.b16 %v280
  %v303 = vunpack.c.h.b16 %v280
  %v304 = vunpack.c.l.b16 %v281
  %v305 = vunpack.c.h.b16 %v281
  %v306 = vpack.c.b16 %v290, %v290
  %v307 = vpack.c.b16 %v291, %v291
  %v308 = vpack.c.b16 %v292, %v292
  %v309 = vpack.c.b16 %v293, %v293
  %v310 = vpack.c.b16 %v294, %v294
  %v311 = vpack.c.b16 %v295, %v295
  %v312 = vpack.c.b16 %v296, %v296
  %v313 = vpack.c.b16 %v297, %v297
  %v314 = vpack.c.b16 %v298, %v298
  %v315 = vpack.c.b16 %v299, %v299
  %v316 = vpack.c.b16 %v300, %v300
  %v317 = vpack.c.b16 %v301, %v301
  %v318 = vpack.c.b16 %v302, %v302
  %v319 = vpack.c.b16 %v303, %v303
  %v320 = vpack.c.b16 %v304, %v304
  %v321 = vpack.c.b16 %v305, %v305
  %vm338 = vcmask 257024
  %339 = vst.msk [vmem:[%s4] sm:$0xf] %vm338, %v306
  %340 = vst.msk [vmem:[%s4 + $0x4] sm:$0xf] %vm338, %v307
  %341 = vst.msk [vmem:[%s4 + $0x8] sm:$0xf] %vm338, %v308
  %342 = vst.msk [vmem:[%s4 + $0xc] sm:$0xf] %vm338, %v309
  %343 = vst.msk [vmem:[%s4 + $0x10] sm:$0xf] %vm338, %v310
  %344 = vst.msk [vmem:[%s4 + $0x14] sm:$0xf] %vm338, %v311
  %345 = vst.msk [vmem:[%s4 + $0x18] sm:$0xf] %vm338, %v312
  %346 = vst.msk [vmem:[%s4 + $0x1c] sm:$0xf] %vm338, %v313
  %347 = vst.msk [vmem:[%s4 + $0x20] sm:$0xf] %vm338, %v314
  %348 = vst.msk [vmem:[%s4 + $0x24] sm:$0xf] %vm338, %v315
  %349 = vst.msk [vmem:[%s4 + $0x28] sm:$0xf] %vm338, %v316
  %350 = vst.msk [vmem:[%s4 + $0x2c] sm:$0xf] %vm338, %v317
  %351 = vst.msk [vmem:[%s4 + $0x30] sm:$0xf] %vm338, %v318
  %352 = vst.msk [vmem:[%s4 + $0x34] sm:$0xf] %vm338, %v319
  %353 = vst.msk [vmem:[%s4 + $0x38] sm:$0xf] %vm338, %v320
  %354 = vst.msk [vmem:[%s4 + $0x3c] sm:$0xf] %vm338, %v321
  // Predicated region
  $region18: #{_lambda_.44} parent=0 // pred_check
    _
  $region19: #{_lambda_.44} parent=0 // pred_check_branch
    %356 = sbr.rel (0) target = $region21
  $region20: #{_lambda_.44} parent=0 // pred_region
    _
  $region21: #{_lambda_.44} parent=0 // pred_fallthru
    _
  // Predicated region
  $region22: #{_lambda_.44} parent=0 // pred_check
    _
  $region23: #{_lambda_.44} parent=0 // pred_check_branch
    %358 = sbr.rel (0) target = $region25
  $region24: #{_lambda_.44} parent=0 // pred_region
    _
  $region25: #{_lambda_.44} parent=0 // pred_fallthru
    _

// kernel: _lambda_.48
$region0: #{_lambda_.48}
  #allocation0 [shape = 'u32[]', space=smem, size = 0x4, offset = 0x4, fixed_abs, tag = 'smem constant byte address 0x4 - core index']
  #allocation1 [shape = 'u32[144,128]{1,0:T(1,128)}', space=vmem, size = 0x12000, scoped, tag = 'internal scratch']
  %s0 = inlined_call_operand.vmem [shape: bf16[32,64], index: 0, kind: input, shape index: {}]
  %s1 = inlined_call_operand.vmem [shape: bf16[64,32], index: 1, kind: input, shape index: {}]
  %s2 = inlined_call_operand.vmem [shape: f32[1,32], index: 2, kind: input, shape index: {}]
  %s3 = inlined_call_operand.vmem [shape: f32[1,32], index: 3, kind: input, shape index: {}]
  %s4 = inlined_call_operand.vmem [shape: bf16[32,32], index: 4, kind: output, shape index: {}]
  %s5 = sld [smem:[#allocation0]]
  $region26: #{_lambda_.48} parent=0
    _
  %s7 = ssub.s32 1, %s5
  %s8 = scalar_select 0, %s7, %s5
  // Predicated region
  $region2: #{_lambda_.48} parent=0 // pred_check
    _
  $region3: #{_lambda_.48} parent=0 // pred_check_branch
    %10 = sbr.rel (0) target = $region5
  $region4: #{_lambda_.48} parent=0 // pred_region
    _
  $region5: #{_lambda_.48} parent=0 // pred_fallthru
    _
  // Predicated region
  $region6: #{_lambda_.48} parent=0 // pred_check
    _
  $region7: #{_lambda_.48} parent=0 // pred_check_branch
    %12 = sbr.rel (0) target = $region9
  $region8: #{_lambda_.48} parent=0 // pred_region
    _
  $region9: #{_lambda_.48} parent=0 // pred_fallthru
    _
  // Predicated region
  $region10: #{_lambda_.48} parent=0 // pred_check
    _
  $region11: #{_lambda_.48} parent=0 // pred_check_branch
    %14 = sbr.rel (0) target = $region13
  $region12: #{_lambda_.48} parent=0 // pred_region
    _
  $region13: #{_lambda_.48} parent=0 // pred_fallthru
    _
  // Predicated region
  $region14: #{_lambda_.48} parent=0 // pred_check
    _
  $region15: #{_lambda_.48} parent=0 // pred_check_branch
    %16 = sbr.rel (0) target = $region17
  $region16: #{_lambda_.48} parent=0 // pred_region
    _
  $region17: #{_lambda_.48} parent=0 // pred_fallthru
    _
  %v18 = vld [vmem:[%s0] sm:$0xf]
  %v19 = vld [vmem:[%s0 + $0x4] sm:$0xf]
  %v20 = vld [vmem:[%s0 + $0x8] sm:$0xf]
  %v21 = vld [vmem:[%s0 + $0xc] sm:$0xf]
  %v22 = vunpack.c.l.bf16 %v18
  %v23 = vunpack.c.l.bf16 %v19
  %v24 = vunpack.c.l.bf16 %v20
  %v25 = vunpack.c.l.bf16 %v21
  %v26 = vmax.f32 %v22, 0.0
  %v27 = vmax.f32 %v23, 0.0
  %v28 = vmax.f32 %v24, 0.0
  %v29 = vmax.f32 %v25, 0.0
  %v30 = vpack.c.bf16 %v27, %v26
  %v31 = vpack.c.bf16 %v29, %v28
  %v32 = vld [vmem:[%s1] sm:$0xf]
  %v33 = vld [vmem:[%s1 + $0x4] sm:$0xf]
  %v34 = vld [vmem:[%s1 + $0x8] sm:$0xf]
  %v35 = vld [vmem:[%s1 + $0xc] sm:$0xf]
  %v36 = vld [vmem:[%s1 + $0x10] sm:$0xf]
  %v37 = vld [vmem:[%s1 + $0x14] sm:$0xf]
  %v38 = vld [vmem:[%s1 + $0x18] sm:$0xf]
  %v39 = vld [vmem:[%s1 + $0x1c] sm:$0xf]
  %v48 = vunpack.c.l.b16 %v32
  %v49 = vunpack.c.l.b16 %v33
  %v50 = vunpack.c.l.b16 %v34
  %v51 = vunpack.c.l.b16 %v35
  %v52 = vunpack.c.l.b16 %v36
  %v53 = vunpack.c.l.b16 %v37
  %v54 = vunpack.c.l.b16 %v38
  %v55 = vunpack.c.l.b16 %v39
  %v56 = vpack.c.b16 %v49, %v48
  %v57 = vpack.c.b16 %v51, %v50
  %v58 = vpack.c.b16 %v53, %v52
  %v59 = vpack.c.b16 %v55, %v54
  %vm64 = vcmask 523264
  %v66 = vsel %vm64, %v30, 0
  %v69 = vsel %vm64, %v31, 0
  %71 = vmatprep.subr.bf16.mxu0 0
  %72 = vmatpush1.bf16.msra.mxu0 0
  %73 = vmatprep.subr.bf16.mxu0 0
  %74 = vmatpush1.bf16.msra.mxu0 0
  %75 = vmatprep.subr.bf16.mxu0 0
  %76 = vmatpush1.bf16.msra.mxu0 0
  %77 = vmatprep.subr.bf16.mxu0 0
  %78 = vmatpush1.bf16.msra.mxu0 0
  %79 = vmatprep.subr.bf16.mxu0 0
  %80 = vmatpush1.bf16.msra.mxu0 %v59
  %81 = vmatprep.subr.bf16.mxu0 0
  %82 = vmatpush1.bf16.msra.mxu0 %v58
  %83 = vmatprep.subr.bf16.mxu0 0
  %84 = vmatpush1.bf16.msra.mxu0 %v57
  %85 = vmatprep.subr.bf16.mxu0 0
  %86 = vmatpush1.bf16.msra.mxu0 %v56
  %87 = vmatprep.subr.bf16.mxu0 0
  %88 = vmatpush2.bf16.msra.mxu0 0
  %89 = vmatprep.subr.bf16.mxu0 0
  %90 = vmatpush2.bf16.msra.mxu0 0
  %91 = vmatprep.subr.bf16.mxu0 0
  %92 = vmatpush2.bf16.msra.mxu0 0
  %93 = vmatprep.subr.bf16.mxu0 0
  %94 = vmatpush2.bf16.msra.mxu0 0
  %95 = vmatprep.subr.bf16.mxu0 0
  %96 = vmatpush2.bf16.msra.mxu0 0
  %97 = vmatprep.subr.bf16.mxu0 0
  %98 = vmatpush2.bf16.msra.mxu0 0
  %99 = vmatprep.subr.bf16.mxu0 0
  %100 = vmatpush2.bf16.msra.mxu0 0
  %101 = vmatprep.subr.bf16.mxu0 0
  %102 = vmatpush2.bf16.msra.mxu0 0
  %103 = vmatprep.mubr.bf16.mxu0 0
  %104 = vmatmul.mubr.bf16.gmra.mxu0 %v66
  %v105 = vpop.f32.mrf.mxu0
  %v106 = vadd.f32 0.0, %v105
  %v107 = vpop.f32.mrf.mxu0
  %v108 = vpop.f32.mrf.mxu0
  %v109 = vadd.f32 0.0, %v108
  %v110 = vpop.f32.mrf.mxu0
  %111 = vmatprep.mubr.bf16.mxu0 0
  %112 = vmatmul.mubr.bf16.gmra.mxu0 %v69
  %v113 = vpop.f32.mrf.mxu0
  %v114 = vadd.f32 0.0, %v113
  %v115 = vpop.f32.mrf.mxu0
  %v116 = vpop.f32.mrf.mxu0
  %v117 = vadd.f32 0.0, %v116
  %v118 = vpop.f32.mrf.mxu0
  %119 = vdwg.mxu0
  %v120 = vld [vmem:[%s2] sm:$0x1]
  %v122 = vlaneseq
  %v123 = vshrl.u32 %v122, 7
  %v124 = vsub.s32 0, %v123
  %v125 = vrot.slane %v120, %v124
  %v127 = vmul.f32 %v106, %v125
  %v128 = vmul.f32 %v109, %v125
  %v129 = vmul.f32 %v114, %v125
  %v130 = vmul.f32 %v117, %v125
  %v131 = vld [vmem:[%s3] sm:$0x1]
  %v133 = vlaneseq
  %v134 = vshrl.u32 %v133, 7
  %v135 = vsub.s32 0, %v134
  %v136 = vrot.slane %v131, %v135
  %v138 = vadd.f32 %v127, %v136
  %v139 = vadd.f32 %v128, %v136
  %v140 = vadd.f32 %v129, %v136
  %v141 = vadd.f32 %v130, %v136
  %v142 = vpack.c.bf16 %v139, %v138
  %v143 = vpack.c.bf16 %v141, %v140
  %v146 = vunpack.c.l.b16 %v142
  %v147 = vunpack.c.h.b16 %v142
  %v148 = vunpack.c.l.b16 %v143
  %v149 = vunpack.c.h.b16 %v143
  %v150 = vpack.c.b16 %v146, %v146
  %v151 = vpack.c.b16 %v147, %v147
  %v152 = vpack.c.b16 %v148, %v148
  %v153 = vpack.c.b16 %v149, %v149
  %vm158 = vcmask 257024
  %159 = vst.msk [vmem:[%s4] sm:$0xf] %vm158, %v150
  %160 = vst.msk [vmem:[%s4 + $0x4] sm:$0xf] %vm158, %v151
  %161 = vst.msk [vmem:[%s4 + $0x8] sm:$0xf] %vm158, %v152
  %162 = vst.msk [vmem:[%s4 + $0xc] sm:$0xf] %vm158, %v153
  // Predicated region
  $region18: #{_lambda_.48} parent=0 // pred_check
    _
  $region19: #{_lambda_.48} parent=0 // pred_check_branch
    %164 = sbr.rel (0) target = $region21
  $region20: #{_lambda_.48} parent=0 // pred_region
    _
  $region21: #{_lambda_.48} parent=0 // pred_fallthru
    _
  // Predicated region
  $region22: #{_lambda_.48} parent=0 // pred_check
    _
  $region23: #{_lambda_.48} parent=0 // pred_check_branch
    %166 = sbr.rel (0) target = $region25
  $region24: #{_lambda_.48} parent=0 // pred_region
    _
  $region25: #{_lambda_.48} parent=0 // pred_fallthru
    _

// kernel: _lambda_.46
$region0: #{_lambda_.46}
  #allocation0 [shape = 'u32[]', space=smem, size = 0x4, offset = 0x4, fixed_abs, tag = 'smem constant byte address 0x4 - core index']
  #allocation1 [shape = 'u32[144,128]{1,0:T(1,128)}', space=vmem, size = 0x12000, scoped, tag = 'internal scratch']
  %s0 = inlined_call_operand.vmem [shape: bf16[9,2,4,128], index: 0, kind: input, shape index: {}]
  %s1 = inlined_call_operand.vmem [shape: f32[1,4,128], index: 1, kind: input, shape index: {}]
  %s2 = inlined_call_operand.vmem [shape: f32[1,1,128], index: 2, kind: input, shape index: {}]
  %s3 = inlined_call_operand.vmem [shape: bf16[2,4,128], index: 3, kind: output, shape index: {}]
  %s4 = sld [smem:[#allocation0]]
  $region22: #{_lambda_.46} parent=0
    _
  %s6 = ssub.s32 1, %s4
  %s7 = scalar_select 0, %s6, %s4
  // Predicated region
  $region2: #{_lambda_.46} parent=0 // pred_check
    _
  $region3: #{_lambda_.46} parent=0 // pred_check_branch
    %9 = sbr.rel (0) target = $region5
  $region4: #{_lambda_.46} parent=0 // pred_region
    _
  $region5: #{_lambda_.46} parent=0 // pred_fallthru
    _
  // Predicated region
  $region6: #{_lambda_.46} parent=0 // pred_check
    _
  $region7: #{_lambda_.46} parent=0 // pred_check_branch
    %11 = sbr.rel (0) target = $region9
  $region8: #{_lambda_.46} parent=0 // pred_region
    _
  $region9: #{_lambda_.46} parent=0 // pred_fallthru
    _
  // Predicated region
  $region10: #{_lambda_.46} parent=0 // pred_check
    _
  $region11: #{_lambda_.46} parent=0 // pred_check_branch
    %13 = sbr.rel (0) target = $region13
  $region12: #{_lambda_.46} parent=0 // pred_region
    _
  $region13: #{_lambda_.46} parent=0 // pred_fallthru
    _
  %v14 = vld [vmem:[%s0] sm:$0x3]
  %v15 = vld [vmem:[%s0 + $0x2] sm:$0x3]
  %v16 = vunpack.c.l.bf16 %v14
  %v17 = vunpack.c.l.bf16 %v15
  %s18 = scalar_lea.vmem %s0, 4
  %v19 = vld [vmem:[%s18] sm:$0x3]
  %v20 = vld [vmem:[%s18 + $0x2] sm:$0x3]
  %v21 = vunpack.c.l.bf16 %v19
  %v22 = vunpack.c.l.bf16 %v20
  %v23 = vadd.f32 %v16, %v21
  %v24 = vadd.f32 %v17, %v22
  %s25 = scalar_lea.vmem %s0, 8
  %v26 = vld [vmem:[%s25] sm:$0x3]
  %v27 = vld [vmem:[%s25 + $0x2] sm:$0x3]
  %v28 = vunpack.c.l.bf16 %v26
  %v29 = vunpack.c.l.bf16 %v27
  %v30 = vadd.f32 %v23, %v28
  %v31 = vadd.f32 %v24, %v29
  %s32 = scalar_lea.vmem %s0, 12
  %v33 = vld [vmem:[%s32] sm:$0x3]
  %v34 = vld [vmem:[%s32 + $0x2] sm:$0x3]
  %v35 = vunpack.c.l.bf16 %v33
  %v36 = vunpack.c.l.bf16 %v34
  %v37 = vadd.f32 %v30, %v35
  %v38 = vadd.f32 %v31, %v36
  %s39 = scalar_lea.vmem %s0, 16
  %v40 = vld [vmem:[%s39] sm:$0x3]
  %v41 = vld [vmem:[%s39 + $0x2] sm:$0x3]
  %v42 = vunpack.c.l.bf16 %v40
  %v43 = vunpack.c.l.bf16 %v41
  %v44 = vadd.f32 %v37, %v42
  %v45 = vadd.f32 %v38, %v43
  %s46 = scalar_lea.vmem %s0, 20
  %v47 = vld [vmem:[%s46] sm:$0x3]
  %v48 = vld [vmem:[%s46 + $0x2] sm:$0x3]
  %v49 = vunpack.c.l.bf16 %v47
  %v50 = vunpack.c.l.bf16 %v48
  %v51 = vadd.f32 %v44, %v49
  %v52 = vadd.f32 %v45, %v50
  %s53 = scalar_lea.vmem %s0, 24
  %v54 = vld [vmem:[%s53] sm:$0x3]
  %v55 = vld [vmem:[%s53 + $0x2] sm:$0x3]
  %v56 = vunpack.c.l.bf16 %v54
  %v57 = vunpack.c.l.bf16 %v55
  %v58 = vadd.f32 %v51, %v56
  %v59 = vadd.f32 %v52, %v57
  %s60 = scalar_lea.vmem %s0, 28
  %v61 = vld [vmem:[%s60] sm:$0x3]
  %v62 = vld [vmem:[%s60 + $0x2] sm:$0x3]
  %v63 = vunpack.c.l.bf16 %v61
  %v64 = vunpack.c.l.bf16 %v62
  %v65 = vadd.f32 %v58, %v63
  %v66 = vadd.f32 %v59, %v64
  %s67 = scalar_lea.vmem %s0, 32
  %v68 = vld [vmem:[%s67] sm:$0x3]
  %v69 = vld [vmem:[%s67 + $0x2] sm:$0x3]
  %v70 = vunpack.c.l.bf16 %v68
  %v71 = vunpack.c.l.bf16 %v69
  %v72 = vadd.f32 %v65, %v70
  %v73 = vadd.f32 %v66, %v71
  %v74 = vld [vmem:[%s1] sm:$0xf]
  %v75 = vmul.f32 %v72, %v74
  %v76 = vmul.f32 %v73, %v74
  %v77 = vld [vmem:[%s2] sm:$0x1]
  %v79 = vlaneseq
  %v80 = vshrl.u32 %v79, 7
  %v81 = vsub.s32 0, %v80
  %v82 = vrot.slane %v77, %v81
  %v84 = vadd.f32 %v75, %v82
  %v85 = vadd.f32 %v76, %v82
  %v86 = vpack.c.bf16 %v84, %v84
  %v87 = vpack.c.bf16 %v85, %v85
  %88 = vst [vmem:[%s3] sm:$0x3] %v86
  %89 = vst [vmem:[%s3 + $0x2] sm:$0x3] %v87
  // Predicated region
  $region14: #{_lambda_.46} parent=0 // pred_check
    _
  $region15: #{_lambda_.46} parent=0 // pred_check_branch
    %91 = sbr.rel (0) target = $region17
  $region16: #{_lambda_.46} parent=0 // pred_region
    _
  $region17: #{_lambda_.46} parent=0 // pred_fallthru
    _
  // Predicated region
  $region18: #{_lambda_.46} parent=0 // pred_check
    _
  $region19: #{_lambda_.46} parent=0 // pred_check_branch
    %93 = sbr.rel (0) target = $region21
  $region20: #{_lambda_.46} parent=0 // pred_region
    _
  $region21: #{_lambda_.46} parent=0 // pred_fallthru
    _

// kernel: _lambda_.47
$region0: #{_lambda_.47}
  #allocation0 [shape = 'u32[]', space=smem, size = 0x4, offset = 0x4, fixed_abs, tag = 'smem constant byte address 0x4 - core index']
  #allocation1 [shape = 'u32[144,128]{1,0:T(1,128)}', space=vmem, size = 0x12000, scoped, tag = 'internal scratch']
  %s0 = inlined_call_operand.vmem [shape: bf16[32,288], index: 0, kind: input, shape index: {}]
  %s1 = inlined_call_operand.vmem [shape: bf16[288,32], index: 1, kind: input, shape index: {}]
  %s2 = inlined_call_operand.vmem [shape: f32[1,32], index: 2, kind: input, shape index: {}]
  %s3 = inlined_call_operand.vmem [shape: f32[1,32], index: 3, kind: input, shape index: {}]
  %s4 = inlined_call_operand.vmem [shape: bf16[32,32], index: 4, kind: output, shape index: {}]
  %s5 = sld [smem:[#allocation0]]
  $region26: #{_lambda_.47} parent=0
    _
  %s7 = ssub.s32 1, %s5
  %s8 = scalar_select 0, %s7, %s5
  // Predicated region
  $region2: #{_lambda_.47} parent=0 // pred_check
    _
  $region3: #{_lambda_.47} parent=0 // pred_check_branch
    %10 = sbr.rel (0) target = $region5
  $region4: #{_lambda_.47} parent=0 // pred_region
    _
  $region5: #{_lambda_.47} parent=0 // pred_fallthru
    _
  // Predicated region
  $region6: #{_lambda_.47} parent=0 // pred_check
    _
  $region7: #{_lambda_.47} parent=0 // pred_check_branch
    %12 = sbr.rel (0) target = $region9
  $region8: #{_lambda_.47} parent=0 // pred_region
    _
  $region9: #{_lambda_.47} parent=0 // pred_fallthru
    _
  // Predicated region
  $region10: #{_lambda_.47} parent=0 // pred_check
    _
  $region11: #{_lambda_.47} parent=0 // pred_check_branch
    %14 = sbr.rel (0) target = $region13
  $region12: #{_lambda_.47} parent=0 // pred_region
    _
  $region13: #{_lambda_.47} parent=0 // pred_fallthru
    _
  // Predicated region
  $region14: #{_lambda_.47} parent=0 // pred_check
    _
  $region15: #{_lambda_.47} parent=0 // pred_check_branch
    %16 = sbr.rel (0) target = $region17
  $region16: #{_lambda_.47} parent=0 // pred_region
    _
  $region17: #{_lambda_.47} parent=0 // pred_fallthru
    _
  %v18 = vld [vmem:[%s0] sm:$0xff]
  %v19 = vld [vmem:[%s0 + $0x8] sm:$0xf]
  %v20 = vld [vmem:[%s0 + $0xc] sm:$0xff]
  %v21 = vld [vmem:[%s0 + $0x14] sm:$0xf]
  %v22 = vld [vmem:[%s0 + $0x18] sm:$0xff]
  %v23 = vld [vmem:[%s0 + $0x20] sm:$0xf]
  %v24 = vld [vmem:[%s0 + $0x24] sm:$0xff]
  %v25 = vld [vmem:[%s0 + $0x2c] sm:$0xf]
  %v26 = vunpack.c.l.bf16 %v18
  %v27 = vunpack.c.h.bf16 %v18
  %v28 = vunpack.c.l.bf16 %v19
  %v29 = vunpack.c.l.bf16 %v20
  %v30 = vunpack.c.h.bf16 %v20
  %v31 = vunpack.c.l.bf16 %v21
  %v32 = vunpack.c.l.bf16 %v22
  %v33 = vunpack.c.h.bf16 %v22
  %v34 = vunpack.c.l.bf16 %v23
  %v35 = vunpack.c.l.bf16 %v24
  %v36 = vunpack.c.h.bf16 %v24
  %v37 = vunpack.c.l.bf16 %v25
  %v38 = vmax.f32 %v26, 0.0
  %v39 = vmax.f32 %v27, 0.0
  %v40 = vmax.f32 %v28, 0.0
  %v41 = vmax.f32 %v29, 0.0
  %v42 = vmax.f32 %v30, 0.0
  %v43 = vmax.f32 %v31, 0.0
  %v44 = vmax.f32 %v32, 0.0
  %v45 = vmax.f32 %v33, 0.0
  %v46 = vmax.f32 %v34, 0.0
  %v47 = vmax.f32 %v35, 0.0
  %v48 = vmax.f32 %v36, 0.0
  %v49 = vmax.f32 %v37, 0.0
  %v50 = vpack.c.bf16 %v41, %v38
  %v51 = vpack.c.bf16 %v42, %v39
  %v52 = vpack.c.bf16 %v43, %v40
  %v53 = vpack.c.bf16 %v47, %v44
  %v54 = vpack.c.bf16 %v48, %v45
  %v55 = vpack.c.bf16 %v49, %v46
  %v56 = vld [vmem:[%s1] sm:$0xf]
  %v57 = vld [vmem:[%s1 + $0x4] sm:$0xf]
  %v58 = vld [vmem:[%s1 + $0x8] sm:$0xf]
  %v59 = vld [vmem:[%s1 + $0xc] sm:$0xf]
  %v60 = vld [vmem:[%s1 + $0x10] sm:$0xf]
  %v61 = vld [vmem:[%s1 + $0x14] sm:$0xf]
  %v62 = vld [vmem:[%s1 + $0x18] sm:$0xf]
  %v63 = vld [vmem:[%s1 + $0x1c] sm:$0xf]
  %v64 = vld [vmem:[%s1 + $0x20] sm:$0xf]
  %v65 = vld [vmem:[%s1 + $0x24] sm:$0xf]
  %v66 = vld [vmem:[%s1 + $0x28] sm:$0xf]
  %v67 = vld [vmem:[%s1 + $0x2c] sm:$0xf]
  %v68 = vld [vmem:[%s1 + $0x30] sm:$0xf]
  %v69 = vld [vmem:[%s1 + $0x34] sm:$0xf]
  %v70 = vld [vmem:[%s1 + $0x38] sm:$0xf]
  %v71 = vld [vmem:[%s1 + $0x3c] sm:$0xf]
  %v72 = vld [vmem:[%s1 + $0x40] sm:$0xf]
  %v73 = vld [vmem:[%s1 + $0x44] sm:$0xf]
  %v74 = vld [vmem:[%s1 + $0x48] sm:$0xf]
  %v75 = vld [vmem:[%s1 + $0x4c] sm:$0xf]
  %v76 = vld [vmem:[%s1 + $0x50] sm:$0xf]
  %v77 = vld [vmem:[%s1 + $0x54] sm:$0xf]
  %v78 = vld [vmem:[%s1 + $0x58] sm:$0xf]
  %v79 = vld [vmem:[%s1 + $0x5c] sm:$0xf]
  %v80 = vld [vmem:[%s1 + $0x60] sm:$0xf]
  %v81 = vld [vmem:[%s1 + $0x64] sm:$0xf]
  %v82 = vld [vmem:[%s1 + $0x68] sm:$0xf]
  %v83 = vld [vmem:[%s1 + $0x6c] sm:$0xf]
  %v84 = vld [vmem:[%s1 + $0x70] sm:$0xf]
  %v85 = vld [vmem:[%s1 + $0x74] sm:$0xf]
  %v86 = vld [vmem:[%s1 + $0x78] sm:$0xf]
  %v87 = vld [vmem:[%s1 + $0x7c] sm:$0xf]
  %v88 = vld [vmem:[%s1 + $0x80] sm:$0xf]
  %v89 = vld [vmem:[%s1 + $0x84] sm:$0xf]
  %v90 = vld [vmem:[%s1 + $0x88] sm:$0xf]
  %v91 = vld [vmem:[%s1 + $0x8c] sm:$0xf]
  %v128 = vunpack.c.l.b16 %v56
  %v129 = vunpack.c.l.b16 %v57
  %v130 = vunpack.c.l.b16 %v58
  %v131 = vunpack.c.l.b16 %v59
  %v132 = vunpack.c.l.b16 %v60
  %v133 = vunpack.c.l.b16 %v61
  %v134 = vunpack.c.l.b16 %v62
  %v135 = vunpack.c.l.b16 %v63
  %v136 = vunpack.c.l.b16 %v64
  %v137 = vunpack.c.l.b16 %v65
  %v138 = vunpack.c.l.b16 %v66
  %v139 = vunpack.c.l.b16 %v67
  %v140 = vunpack.c.l.b16 %v68
  %v141 = vunpack.c.l.b16 %v69
  %v142 = vunpack.c.l.b16 %v70
  %v143 = vunpack.c.l.b16 %v71
  %v144 = vunpack.c.l.b16 %v72
  %v145 = vunpack.c.l.b16 %v73
  %v146 = vunpack.c.l.b16 %v74
  %v147 = vunpack.c.l.b16 %v75
  %v148 = vunpack.c.l.b16 %v76
  %v149 = vunpack.c.l.b16 %v77
  %v150 = vunpack.c.l.b16 %v78
  %v151 = vunpack.c.l.b16 %v79
  %v152 = vunpack.c.l.b16 %v80
  %v153 = vunpack.c.l.b16 %v81
  %v154 = vunpack.c.l.b16 %v82
  %v155 = vunpack.c.l.b16 %v83
  %v156 = vunpack.c.l.b16 %v84
  %v157 = vunpack.c.l.b16 %v85
  %v158 = vunpack.c.l.b16 %v86
  %v159 = vunpack.c.l.b16 %v87
  %v160 = vunpack.c.l.b16 %v88
  %v161 = vunpack.c.l.b16 %v89
  %v162 = vunpack.c.l.b16 %v90
  %v163 = vunpack.c.l.b16 %v91
  %v164 = vpack.c.b16 %v129, %v128
  %v165 = vpack.c.b16 %v131, %v130
  %v166 = vpack.c.b16 %v133, %v132
  %v167 = vpack.c.b16 %v135, %v134
  %v168 = vpack.c.b16 %v137, %v136
  %v169 = vpack.c.b16 %v139, %v138
  %v170 = vpack.c.b16 %v141, %v140
  %v171 = vpack.c.b16 %v143, %v142
  %v172 = vpack.c.b16 %v145, %v144
  %v173 = vpack.c.b16 %v147, %v146
  %v174 = vpack.c.b16 %v149, %v148
  %v175 = vpack.c.b16 %v151, %v150
  %v176 = vpack.c.b16 %v153, %v152
  %v177 = vpack.c.b16 %v155, %v154
  %v178 = vpack.c.b16 %v157, %v156
  %v179 = vpack.c.b16 %v159, %v158
  %v180 = vpack.c.b16 %v161, %v160
  %v181 = vpack.c.b16 %v163, %v162
  %vm200 = vcmask 261120
  %v202 = vsel %vm200, %v52, 0
  %v205 = vsel %vm200, %v55, 0
  %207 = vmatprep.subr.bf16.mxu0 0
  %208 = vmatpush1.bf16.msra.mxu0 %v171
  %209 = vmatprep.subr.bf16.mxu0 0
  %210 = vmatpush1.bf16.msra.mxu0 %v170
  %211 = vmatprep.subr.bf16.mxu0 0
  %212 = vmatpush1.bf16.msra.mxu0 %v169
  %213 = vmatprep.subr.bf16.mxu0 0
  %214 = vmatpush1.bf16.msra.mxu0 %v168
  %215 = vmatprep.subr.bf16.mxu0 0
  %216 = vmatpush1.bf16.msra.mxu0 %v167
  %217 = vmatprep.subr.bf16.mxu0 0
  %218 = vmatpush1.bf16.msra.mxu0 %v166
  %219 = vmatprep.subr.bf16.mxu0 0
  %220 = vmatpush1.bf16.msra.mxu0 %v165
  %221 = vmatprep.subr.bf16.mxu0 0
  %222 = vmatpush1.bf16.msra.mxu0 %v164
  %223 = vmatprep.subr.bf16.mxu0 0
  %224 = vmatpush2.bf16.msra.mxu0 %v179
  %225 = vmatprep.subr.bf16.mxu0 0
  %226 = vmatpush2.bf16.msra.mxu0 %v178
  %227 = vmatprep.subr.bf16.mxu0 0
  %228 = vmatpush2.bf16.msra.mxu0 %v177
  %229 = vmatprep.subr.bf16.mxu0 0
  %230 = vmatpush2.bf16.msra.mxu0 %v176
  %231 = vmatprep.subr.bf16.mxu0 0
  %232 = vmatpush2.bf16.msra.mxu0 %v175
  %233 = vmatprep.subr.bf16.mxu0 0
  %234 = vmatpush2.bf16.msra.mxu0 %v174
  %235 = vmatprep.subr.bf16.mxu0 0
  %236 = vmatpush2.bf16.msra.mxu0 %v173
  %237 = vmatprep.subr.bf16.mxu0 0
  %238 = vmatpush2.bf16.msra.mxu0 %v172
  %239 = vmatprep.mubr.bf16.mxu0 %v51
  %240 = vmatmul.mubr.bf16.gmra.mxu0 %v50
  %v241 = vpop.f32.mrf.mxu0
  %v242 = vadd.f32 0.0, %v241
  %v243 = vpop.f32.mrf.mxu0
  %v244 = vpop.f32.mrf.mxu0
  %v245 = vadd.f32 0.0, %v244
  %v246 = vpop.f32.mrf.mxu0
  %247 = vmatprep.mubr.bf16.mxu0 %v54
  %248 = vmatmul.mubr.bf16.gmra.mxu0 %v53
  %v249 = vpop.f32.mrf.mxu0
  %v250 = vadd.f32 0.0, %v249
  %v251 = vpop.f32.mrf.mxu0
  %v252 = vpop.f32.mrf.mxu0
  %v253 = vadd.f32 0.0, %v252
  %v254 = vpop.f32.mrf.mxu0
  %255 = vdwg.mxu0
  %256 = vmatprep.subr.bf16.mxu0 0
  %257 = vmatpush1.bf16.msra.mxu0 0
  %258 = vmatprep.subr.bf16.mxu0 0
  %259 = vmatpush1.bf16.msra.mxu0 0
  %260 = vmatprep.subr.bf16.mxu0 0
  %261 = vmatpush1.bf16.msra.mxu0 0
  %262 = vmatprep.subr.bf16.mxu0 0
  %263 = vmatpush1.bf16.msra.mxu0 0
  %264 = vmatprep.subr.bf16.mxu0 0
  %265 = vmatpush1.bf16.msra.mxu0 0
  %266 = vmatprep.subr.bf16.mxu0 0
  %267 = vmatpush1.bf16.msra.mxu0 0
  %268 = vmatprep.subr.bf16.mxu0 0
  %269 = vmatpush1.bf16.msra.mxu0 %v181
  %270 = vmatprep.subr.bf16.mxu0 0
  %271 = vmatpush1.bf16.msra.mxu0 %v180
  %272 = vmatprep.subr.bf16.mxu0 0
  %273 = vmatpush2.bf16.msra.mxu0 0
  %274 = vmatprep.subr.bf16.mxu0 0
  %275 = vmatpush2.bf16.msra.mxu0 0
  %276 = vmatprep.subr.bf16.mxu0 0
  %277 = vmatpush2.bf16.msra.mxu0 0
  %278 = vmatprep.subr.bf16.mxu0 0
  %279 = vmatpush2.bf16.msra.mxu0 0
  %280 = vmatprep.subr.bf16.mxu0 0
  %281 = vmatpush2.bf16.msra.mxu0 0
  %282 = vmatprep.subr.bf16.mxu0 0
  %283 = vmatpush2.bf16.msra.mxu0 0
  %284 = vmatprep.subr.bf16.mxu0 0
  %285 = vmatpush2.bf16.msra.mxu0 0
  %286 = vmatprep.subr.bf16.mxu0 0
  %287 = vmatpush2.bf16.msra.mxu0 0
  %288 = vmatprep.mubr.bf16.mxu0 0
  %289 = vmatmul.mubr.bf16.gmra.mxu0 %v202
  %v290 = vpop.f32.mrf.mxu0
  %v291 = vadd.f32 %v242, %v290
  %v292 = vpop.f32.mrf.mxu0
  %v293 = vpop.f32.mrf.mxu0
  %v294 = vadd.f32 %v245, %v293
  %v295 = vpop.f32.mrf.mxu0
  %296 = vmatprep.mubr.bf16.mxu0 0
  %297 = vmatmul.mubr.bf16.gmra.mxu0 %v205
  %v298 = vpop.f32.mrf.mxu0
  %v299 = vadd.f32 %v250, %v298
  %v300 = vpop.f32.mrf.mxu0
  %v301 = vpop.f32.mrf.mxu0
  %v302 = vadd.f32 %v253, %v301
  %v303 = vpop.f32.mrf.mxu0
  %304 = vdwg.mxu0
  %v305 = vld [vmem:[%s2] sm:$0x1]
  %v307 = vlaneseq
  %v308 = vshrl.u32 %v307, 7
  %v309 = vsub.s32 0, %v308
  %v310 = vrot.slane %v305, %v309
  %v312 = vmul.f32 %v291, %v310
  %v313 = vmul.f32 %v294, %v310
  %v314 = vmul.f32 %v299, %v310
  %v315 = vmul.f32 %v302, %v310
  %v316 = vld [vmem:[%s3] sm:$0x1]
  %v318 = vlaneseq
  %v319 = vshrl.u32 %v318, 7
  %v320 = vsub.s32 0, %v319
  %v321 = vrot.slane %v316, %v320
  %v323 = vadd.f32 %v312, %v321
  %v324 = vadd.f32 %v313, %v321
  %v325 = vadd.f32 %v314, %v321
  %v326 = vadd.f32 %v315, %v321
  %v327 = vpack.c.bf16 %v324, %v323
  %v328 = vpack.c.bf16 %v326, %v325
  %v331 = vunpack.c.l.b16 %v327
  %v332 = vunpack.c.h.b16 %v327
  %v333 = vunpack.c.l.b16 %v328
  %v334 = vunpack.c.h.b16 %v328
  %v335 = vpack.c.b16 %v331, %v331
  %v336 = vpack.c.b16 %v332, %v332
  %v337 = vpack.c.b16 %v333, %v333
  %v338 = vpack.c.b16 %v334, %v334
  %vm343 = vcmask 257024
  %344 = vst.msk [vmem:[%s4] sm:$0xf] %vm343, %v335
  %345 = vst.msk [vmem:[%s4 + $0x4] sm:$0xf] %vm343, %v336
  %346 = vst.msk [vmem:[%s4 + $0x8] sm:$0xf] %vm343, %v337
  %347 = vst.msk [vmem:[%s4 + $0xc] sm:$0xf] %vm343, %v338
  // Predicated region
  $region18: #{_lambda_.47} parent=0 // pred_check
    _
  $region19: #{_lambda_.47} parent=0 // pred_check_branch
    %349 = sbr.rel (0) target = $region21
  $region20: #{_lambda_.47} parent=0 // pred_region
    _
  $region21: #{_lambda_.47} parent=0 // pred_fallthru
    _
  // Predicated region
  $region22: #{_lambda_.47} parent=0 // pred_check
    _
  $region23: #{_lambda_.47} parent=0 // pred_check_branch
    %351 = sbr.rel (0) target = $region25
  $region24: #{_lambda_.47} parent=0 // pred_region
    _
  $region25: #{_lambda_.47} parent=0 // pred_fallthru
    _

// kernel: _lambda_.52
$region0: #{_lambda_.52}
  #allocation0 [shape = 'u32[]', space=smem, size = 0x4, offset = 0x4, fixed_abs, tag = 'smem constant byte address 0x4 - core index']
  #allocation1 [shape = 'u32[144,128]{1,0:T(1,128)}', space=vmem, size = 0x12000, scoped, tag = 'internal scratch']
  %s0 = inlined_call_operand.vmem [shape: bf16[2,16,128], index: 0, kind: input, shape index: {}]
  %s1 = inlined_call_operand.vmem [shape: bf16[128,10], index: 1, kind: input, shape index: {}]
  %s2 = inlined_call_operand.vmem [shape: f32[1,10], index: 2, kind: input, shape index: {}]
  %s3 = inlined_call_operand.hbm [shape: f32[2,10], index: 3, kind: output, shape index: {}]
  %s4 = sld [smem:[#allocation0]]
  $region22: #{_lambda_.52} parent=0
    _
  %s6 = ssub.s32 1, %s4
  %s7 = scalar_select 0, %s6, %s4
  $region1: #{_lambda_.52} parent=0
    #allocation2 [shape = 'u8[1024]{0}', space=vmem, size = 0x400, scoped, tag = 'output window, operand 0, single buffered']
    #allocation3 [shape = 's32[1]{0}', space=sflag, size = 0x4, scoped, tag = 'scoped memory for _lambda_.52']
    %8 = vsyncpa [#allocation3], 0
    // Predicated region
    $region2: #{_lambda_.52} parent=1 // pred_check
      _
    $region3: #{_lambda_.52} parent=1 // pred_check_branch
      %10 = sbr.rel (0) target = $region5
    $region4: #{_lambda_.52} parent=1 // pred_region
      _
    $region5: #{_lambda_.52} parent=1 // pred_fallthru
      _
    // Predicated region
    $region6: #{_lambda_.52} parent=1 // pred_check
      _
    $region7: #{_lambda_.52} parent=1 // pred_check_branch
      %12 = sbr.rel (0) target = $region9
    $region8: #{_lambda_.52} parent=1 // pred_region
      _
    $region9: #{_lambda_.52} parent=1 // pred_fallthru
      _
    // Predicated region
    $region10: #{_lambda_.52} parent=1 // pred_check
      _
    $region11: #{_lambda_.52} parent=1 // pred_check_branch
      %14 = sbr.rel (0) target = $region13
    $region12: #{_lambda_.52} parent=1 // pred_region
      _
    $region13: #{_lambda_.52} parent=1 // pred_fallthru
      _
    %v16 = vld [vmem:[%s0] sm:$0xf]
    %v17 = vld [vmem:[%s0 + $0x4] sm:$0xf]
    %v18 = vld [vmem:[%s0 + $0x8] sm:$0xf]
    %v19 = vld [vmem:[%s0 + $0xc] sm:$0xf]
    %v20 = vunpack.c.l.bf16 %v16
    %v21 = vunpack.c.l.bf16 %v17
    %v22 = vunpack.c.l.bf16 %v18
    %v23 = vunpack.c.l.bf16 %v19
    %v24 = vadd.f32 %v20, %v21
    %v25 = vrot.slane %v24, 4
    %v26 = vadd.f32 %v24, %v25
    %v27 = vrot.slane %v26, 2
    %v28 = vadd.f32 %v26, %v27
    %v29 = vrot.slane %v28, 1
    %v30 = vadd.f32 %v28, %v29
    %v31 = vadd.f32 %v22, %v23
    %v32 = vrot.slane %v31, 4
    %v33 = vadd.f32 %v31, %v32
    %v34 = vrot.slane %v33, 2
    %v35 = vadd.f32 %v33, %v34
    %v36 = vrot.slane %v35, 1
    %v37 = vadd.f32 %v35, %v36
    %v38 = vmul.f32 %v30, 0.0625
    %v39 = vmul.f32 %v37, 0.0625
    %v40 = vpack.c.bf16 %v38, %v38
    %v41 = vpack.c.bf16 %v39, %v39
    %v42 = vld [vmem:[%s1] sm:$0xf]
    %v43 = vld [vmem:[%s1 + $0x4] sm:$0xf]
    %v44 = vld [vmem:[%s1 + $0x8] sm:$0xf]
    %v45 = vld [vmem:[%s1 + $0xc] sm:$0xf]
    %v46 = vld [vmem:[%s1 + $0x10] sm:$0xf]
    %v47 = vld [vmem:[%s1 + $0x14] sm:$0xf]
    %v48 = vld [vmem:[%s1 + $0x18] sm:$0xf]
    %v49 = vld [vmem:[%s1 + $0x1c] sm:$0xf]
    %v50 = vld [vmem:[%s1 + $0x20] sm:$0xf]
    %v51 = vld [vmem:[%s1 + $0x24] sm:$0xf]
    %v52 = vld [vmem:[%s1 + $0x28] sm:$0xf]
    %v53 = vld [vmem:[%s1 + $0x2c] sm:$0xf]
    %v54 = vld [vmem:[%s1 + $0x30] sm:$0xf]
    %v55 = vld [vmem:[%s1 + $0x34] sm:$0xf]
    %v56 = vld [vmem:[%s1 + $0x38] sm:$0xf]
    %v57 = vld [vmem:[%s1 + $0x3c] sm:$0xf]
    %v58 = vld [vmem:[%s2] sm:$0x1]
    %v60 = vlaneseq
    %v61 = vshrl.u32 %v60, 7
    %v62 = vsub.s32 0, %v61
    %v63 = vrot.slane %v58, %v62
    %v67 = vunpack.c.l.b16 %v40
    %v68 = vunpack.c.l.b16 %v41
    %vm69 = vcmask 1041409
    %v70 = vsel %vm69, %v68, %v67
    %v71 = vpack.c.b16 %v70, %v70
    %v89 = vunpack.c.l.b16 %v42
    %v90 = vunpack.c.l.b16 %v43
    %v91 = vunpack.c.l.b16 %v44
    %v92 = vunpack.c.l.b16 %v45
    %v93 = vunpack.c.l.b16 %v46
    %v94 = vunpack.c.l.b16 %v47
    %v95 = vunpack.c.l.b16 %v48
    %v96 = vunpack.c.l.b16 %v49
    %v97 = vunpack.c.l.b16 %v50
    %v98 = vunpack.c.l.b16 %v51
    %v99 = vunpack.c.l.b16 %v52
    %v100 = vunpack.c.l.b16 %v53
    %v101 = vunpack.c.l.b16 %v54
    %v102 = vunpack.c.l.b16 %v55
    %v103 = vunpack.c.l.b16 %v56
    %v104 = vunpack.c.l.b16 %v57
    %v105 = vpack.c.b16 %v90, %v89
    %v106 = vpack.c.b16 %v92, %v91
    %v107 = vpack.c.b16 %v94, %v93
    %v108 = vpack.c.b16 %v96, %v95
    %v109 = vpack.c.b16 %v98, %v97
    %v110 = vpack.c.b16 %v100, %v99
    %v111 = vpack.c.b16 %v102, %v101
    %v112 = vpack.c.b16 %v104, %v103
    %121 = vmatprep.subr.bf16.mxu0 0
    %122 = vmatpush1.bf16.msra.mxu0 %v112
    %123 = vmatprep.subr.bf16.mxu0 0
    %124 = vmatpush1.bf16.msra.mxu0 %v111
    %125 = vmatprep.subr.bf16.mxu0 0
    %126 = vmatpush1.bf16.msra.mxu0 %v110
    %127 = vmatprep.subr.bf16.mxu0 0
    %128 = vmatpush1.bf16.msra.mxu0 %v109
    %129 = vmatprep.subr.bf16.mxu0 0
    %130 = vmatpush1.bf16.msra.mxu0 %v108
    %131 = vmatprep.subr.bf16.mxu0 0
    %132 = vmatpush1.bf16.msra.mxu0 %v107
    %133 = vmatprep.subr.bf16.mxu0 0
    %134 = vmatpush1.bf16.msra.mxu0 %v106
    %135 = vmatprep.subr.bf16.mxu0 0
    %136 = vmatpush1.bf16.msra.mxu0 %v105
    %137 = vmatprep.subr.bf16.mxu0 0
    %138 = vmatpush2.bf16.msra.mxu0 0
    %139 = vmatprep.subr.bf16.mxu0 0
    %140 = vmatpush2.bf16.msra.mxu0 0
    %141 = vmatprep.subr.bf16.mxu0 0
    %142 = vmatpush2.bf16.msra.mxu0 0
    %143 = vmatprep.subr.bf16.mxu0 0
    %144 = vmatpush2.bf16.msra.mxu0 0
    %145 = vmatprep.subr.bf16.mxu0 0
    %146 = vmatpush2.bf16.msra.mxu0 0
    %147 = vmatprep.subr.bf16.mxu0 0
    %148 = vmatpush2.bf16.msra.mxu0 0
    %149 = vmatprep.subr.bf16.mxu0 0
    %150 = vmatpush2.bf16.msra.mxu0 0
    %151 = vmatprep.subr.bf16.mxu0 0
    %152 = vmatpush2.bf16.msra.mxu0 0
    %153 = vmatprep.mubr.bf16.mxu0 0
    %154 = vmatmul.mubr.bf16.gmra.mxu0 %v71
    %v155 = vpop.f32.mrf.mxu0
    %v156 = vadd.f32 %v63, %v155
    %v157 = vpop.f32.mrf.mxu0
    %v158 = vpop.f32.mrf.mxu0
    %v159 = vpop.f32.mrf.mxu0
    %160 = vdwg.mxu0
    %vm161 = vcmask 74752
    %162 = vst.msk [vmem:[#allocation2] sm:$0x3] %vm161, %v156
    // Predicated region
    $region14: #{_lambda_.52} parent=1 // pred_check
      _
    $region15: #{_lambda_.52} parent=1 // pred_check_branch
      %164 = sbr.rel (0) target = $region17
    $region16: #{_lambda_.52} parent=1 // pred_region
      %s166 = ssub.s32 32, 32
      %167 = vsyncadd [#allocation3], %s166
      %s169 = sshll.u32 [#allocation2], 4
      %s170 = int_to_ptr.vmem [resolvable:$true] %s169
      %172 = dma.vmem_to_hbm [thread:$0]  %s170, 32, %s3, [#allocation3]
    $region17: #{_lambda_.52} parent=1 // pred_fallthru
      _
    // Predicated region
    $region18: #{_lambda_.52} parent=1 // pred_check
      _
    $region19: #{_lambda_.52} parent=1 // pred_check_branch
      %174 = sbr.rel (0) target = $region21
    $region20: #{_lambda_.52} parent=1 // pred_region
      %175 = dma.done [#allocation3], 32
    $region21: #{_lambda_.52} parent=1 // pred_fallthru
      _
    %176 = vsyncpa [#allocation3], 1

</llo_original>
